<compile_context>
chip_gen: v5e
topology: v5e:2x2
jax: 0.10.0
libtpu: 0.0.40
codegen_flags: <defaults>
</compile_context>

<pallas_src>
import math
import jax
import jax.numpy as jnp
from jax.experimental import pallas as pl
from jax.experimental.pallas import tpu as pltpu  # noqa: F401  (kept for TPU-specific tuning)

# ---- Config (mirrors the argparse `opt` values in the PyTorch script) ----
N_CLASSES = 10
CHANNELS = 1
IMG_SIZE = 8
LATENT_DIM = 16
EMBEDDING_SIZE = 16
USE_WORD_EMBEDDING = False
LABEL_DIM = 50 if USE_WORD_EMBEDDING else 100

IMG_SHAPE = (CHANNELS, IMG_SIZE, IMG_SIZE) if N_CLASSES == 10 else (CHANNELS, IMG_SIZE, IMG_SIZE * 2)
IMG_PROD = int(math.prod(IMG_SHAPE))
OUT_PAD = 128                       # lane-dense padded output width (IMG_PROD=64 < 128)

BN_EPS = 0.8                        # nn.BatchNorm1d(out_feat, 0.8): 2nd positional arg is eps
LEAKY_SLOPE = 0.2                   # nn.LeakyReLU(0.2)

H1, H2, H3, H4 = 128, 256, 512, 1024


def generator_kernel(labels_ref, noise_ref,
                     wlbl_ref, wnz_ref, b1_ref,        # fused (label_emb + block-1) weights
                     w2_ref, g2_ref, bt2_ref,          # block 2: Linear (no bias) + BN
                     w3_ref, g3_ref, bt3_ref,          # block 3
                     w4_ref, g4_ref, bt4_ref,          # block 4
                     w5_ref, b5_ref,                   # output Linear (padded to 128 cols)
                     out_ref):
    def mm(x, w_ref):
        # Weights live in VMEM as bf16 (half the HBM DMA); widen to f32 for the matmul,
        # activations stay f32 end to end.
        return jnp.dot(x, w_ref[...].astype(jnp.float32),
                       preferred_element_type=jnp.float32)

    def leaky_relu(x):
        # For 0 < slope < 1:  max(x, slope*x) == LeakyReLU(x)
        return jnp.maximum(x, LEAKY_SLOPE * x)

    def bn_leaky(x, g_ref, bt_ref):
        # BatchNorm1d training mode: batch mean, biased batch variance, eps=0.8.
        # One-pass stats + fused scale/shift (half the sublane reductions per layer).
        m = jnp.mean(x, axis=0, keepdims=True)
        m2 = jnp.mean(x * x, axis=0, keepdims=True)
        var = m2 - m * m
        scale = g_ref[...] * jax.lax.rsqrt(var + BN_EPS)
        shift = bt_ref[...] - m * scale
        return leaky_relu(x * scale + shift)

    # Block 1 (no BN). Embedding Linear folded into the weights:
    #   cat(label_emb(labels), noise) @ W1 + b1
    #     == labels @ (We @ W1[:E]) + noise @ W1[E:] + (be @ W1[:E] + b1)
    x = leaky_relu(mm(labels_ref[...], wlbl_ref)
                   + mm(noise_ref[...], wnz_ref)
                   + b1_ref[...])
    # Pre-BN Linear biases are omitted: (y + b) - mean(y + b) == y - mean(y).
    x = bn_leaky(mm(x, w2_ref), g2_ref, bt2_ref)     # block(128, 256)
    x = bn_leaky(mm(x, w3_ref), g3_ref, bt3_ref)     # block(256, 512)
    x = bn_leaky(mm(x, w4_ref), g4_ref, bt4_ref)     # block(512, 1024)
    # Linear(1024, prod(img_shape)) + Tanh, zero-padded to 128 lanes for unmasked stores.
    out_ref[...] = jnp.tanh(mm(x, w5_ref) + b5_ref[...])


def init_params(key):
    """f32 parameters mirroring the PyTorch module (uniform +/- 1/sqrt(fan_in))."""
    def linear_init(k, fan_in, fan_out):
        kw, kb = jax.random.split(k)
        bound = 1.0 / math.sqrt(fan_in)
        w = jax.random.uniform(kw, (fan_in, fan_out), jnp.float32, -bound, bound)
        b = jax.random.uniform(kb, (1, fan_out), jnp.float32, -bound, bound)
        return w, b

    keys = jax.random.split(key, 6)
    p = {}
    p["we"], p["be"] = linear_init(keys[0], LABEL_DIM, EMBEDDING_SIZE)
    p["w1"], p["b1"] = linear_init(keys[1], LATENT_DIM + EMBEDDING_SIZE, H1)
    p["w2"], p["b2"] = linear_init(keys[2], H1, H2)      # b2/b3/b4 cancelled by BN
    p["w3"], p["b3"] = linear_init(keys[3], H2, H3)
    p["w4"], p["b4"] = linear_init(keys[4], H3, H4)
    p["w5"], p["b5"] = linear_init(keys[5], H4, IMG_PROD)
    for name, dim in (("2", H2), ("3", H3), ("4", H4)):   # BN affine (PyTorch defaults)
        p["g" + name] = jnp.ones((1, dim), jnp.float32)
        p["bt" + name] = jnp.zeros((1, dim), jnp.float32)
    return p


def prepare_kernel_params(p):
    """Host-side pre-fusion + dtype/layout prep (runs once, outside the kernel)."""
    w1_emb = p["w1"][:EMBEDDING_SIZE, :]                 # rows for the embedding half of cat
    w1_noise = p["w1"][EMBEDDING_SIZE:, :]               # rows for the noise half
    w_lbl = p["we"] @ w1_emb                             # (LABEL_DIM, H1)
    b1_fused = p["be"] @ w1_emb + p["b1"]                # (1, H1), stays f32

    # Zero-pad the 64-wide output layer to 128 lanes (lane-dense stores).
    w5p = jnp.zeros((H4, OUT_PAD), jnp.float32).at[:, :IMG_PROD].set(p["w5"])
    b5p = jnp.zeros((1, OUT_PAD), jnp.float32).at[:, :IMG_PROD].set(p["b5"])

    wdt = jnp.bfloat16
    return dict(
        w_lbl=w_lbl.astype(wdt), w_noise=w1_noise.astype(wdt), b1=b1_fused,
        w2=p["w2"].astype(wdt), g2=p["g2"], bt2=p["bt2"],
        w3=p["w3"].astype(wdt), g3=p["g3"], bt3=p["bt3"],
        w4=p["w4"].astype(wdt), g4=p["g4"], bt4=p["bt4"],
        w5=w5p.astype(wdt), b5=b5p,
    )


@jax.jit
def generator_forward(noise, labels, kp):
    B = noise.shape[0]
    # Single grid-less invocation: all weights (~1.6 MB bf16) and the whole batch of
    # activations fit easily in VMEM on v5e/v6e/v7x, and BatchNorm needs the full
    # batch resident anyway. No grid -> no pointless double-buffering of the weights.
    flat = pl.pallas_call(
        generator_kernel,
        out_shape=jax.ShapeDtypeStruct((B, OUT_PAD), jnp.float32),
    )(labels, noise,
      kp["w_lbl"], kp["w_noise"], kp["b1"],
      kp["w2"], kp["g2"], kp["bt2"],
      kp["w3"], kp["g3"], kp["bt3"],
      kp["w4"], kp["g4"], kp["bt4"],
      kp["w5"], kp["b5"])
    # img = img.view(img.size(0), *img_shape)  -> NCHW (drop the lane padding first)
    return flat[:, :IMG_PROD].reshape(B, *IMG_SHAPE)


def reference_forward(noise, labels, kp):
    """Pure-JAX reference on the same prepared params (canonical two-pass BN)."""
    def mm(x, w):
        return jnp.dot(x, w.astype(jnp.float32), preferred_element_type=jnp.float32)

    def leaky(x):
        return jnp.maximum(x, LEAKY_SLOPE * x)

    def bn(x, g, bt):
        m = jnp.mean(x, axis=0, keepdims=True)
        v = jnp.mean((x - m) ** 2, axis=0, keepdims=True)
        return (x - m) * jax.lax.rsqrt(v + BN_EPS) * g + bt

    x = leaky(mm(labels, kp["w_lbl"]) + mm(noise, kp["w_noise"]) + kp["b1"])
    x = leaky(bn(mm(x, kp["w2"]), kp["g2"], kp["bt2"]))
    x = leaky(bn(mm(x, kp["w3"]), kp["g3"], kp["bt3"]))
    x = leaky(bn(mm(x, kp["w4"]), kp["g4"], kp["bt4"]))
    x = jnp.tanh(mm(x, kp["w5"]) + kp["b5"])
    return x[:, :IMG_PROD].reshape(x.shape[0], *IMG_SHAPE)


if __name__ == "__main__":
    key = jax.random.PRNGKey(0)
    k_params, k_noise, k_labels = jax.random.split(key, 3)

    # B >= 128 so the fixed weight DMA + launch overhead is amortized and the MXU rows
    # are actually filled (B=8 used <6% of MXU rows); B=256 keeps activations << VMEM.
    B = 256
    params = init_params(k_params)
    kp = prepare_kernel_params(params)
    noise = jax.random.normal(k_noise, (B, LATENT_DIM), jnp.float32)
    labels = jax.random.normal(k_labels, (B, LABEL_DIM), jnp.float32)

    img = generator_forward(noise, labels, kp)
    img = jax.block_until_ready(img)

    assert img.shape == (B, *IMG_SHAPE), img.shape
    assert img.dtype == jnp.float32
    assert bool(jnp.all(jnp.isfinite(img)))
    assert bool(jnp.all(jnp.abs(img) <= 1.0))          # tanh output range

    ref = reference_forward(noise, labels, kp)
    assert bool(jnp.allclose(img, ref, atol=5e-3, rtol=0.0)), \
        float(jnp.max(jnp.abs(img - ref)))

    print("KERNEL_OK")
</pallas_src>

<mosaic_0001>
module attributes {stable_mosaic.version = 11 : i64} {
  func.func @generator_kernel(%arg0: memref<256x100xf32, #tpu.memory_space<vmem>>, %arg1: memref<256x16xf32, #tpu.memory_space<vmem>>, %arg2: memref<100x128xbf16, #tpu.memory_space<vmem>>, %arg3: memref<16x128xbf16, #tpu.memory_space<vmem>>, %arg4: memref<1x128xf32, #tpu.memory_space<vmem>>, %arg5: memref<128x256xbf16, #tpu.memory_space<vmem>>, %arg6: memref<1x256xf32, #tpu.memory_space<vmem>>, %arg7: memref<1x256xf32, #tpu.memory_space<vmem>>, %arg8: memref<256x512xbf16, #tpu.memory_space<vmem>>, %arg9: memref<1x512xf32, #tpu.memory_space<vmem>>, %arg10: memref<1x512xf32, #tpu.memory_space<vmem>>, %arg11: memref<512x1024xbf16, #tpu.memory_space<vmem>>, %arg12: memref<1x1024xf32, #tpu.memory_space<vmem>>, %arg13: memref<1x1024xf32, #tpu.memory_space<vmem>>, %arg14: memref<1024x128xbf16, #tpu.memory_space<vmem>>, %arg15: memref<1x128xf32, #tpu.memory_space<vmem>>, %arg16: memref<256x128xf32, #tpu.memory_space<vmem>>) attributes {dimension_semantics = [], scalar_prefetch = 0 : i64, scratch_operands = 0 : i64, tpu.core_type = #tpu.core_type<tc>} {
    %c0 = arith.constant 0 : index
    %c0_0 = arith.constant 0 : index
    %0 = vector.load %arg0[%c0, %c0_0] : memref<256x100xf32, #tpu.memory_space<vmem>>, vector<256x100xf32>
    %c0_1 = arith.constant 0 : index
    %c0_2 = arith.constant 0 : index
    %1 = vector.load %arg2[%c0_1, %c0_2] : memref<100x128xbf16, #tpu.memory_space<vmem>>, vector<100x128xbf16>
    %2 = arith.extf %1 : vector<100x128xbf16> to vector<100x128xf32>
    %cst = arith.constant dense<0.000000e+00> : vector<256x128xf32>
    %3 = tpu.matmul %0, %2, %cst {dimension_numbers = #tpu.dot_dimension_numbers<[1], [0], [0], [1], [0, 0, 1, 1], [], []>} : vector<256x100xf32>, vector<100x128xf32>, vector<256x128xf32> -> vector<256x128xf32>
    %c0_3 = arith.constant 0 : index
    %c0_4 = arith.constant 0 : index
    %4 = vector.load %arg1[%c0_3, %c0_4] : memref<256x16xf32, #tpu.memory_space<vmem>>, vector<256x16xf32>
    %c0_5 = arith.constant 0 : index
    %c0_6 = arith.constant 0 : index
    %5 = vector.load %arg3[%c0_5, %c0_6] : memref<16x128xbf16, #tpu.memory_space<vmem>>, vector<16x128xbf16>
    %6 = arith.extf %5 : vector<16x128xbf16> to vector<16x128xf32>
    %cst_7 = arith.constant dense<0.000000e+00> : vector<256x128xf32>
    %7 = tpu.matmul %4, %6, %cst_7 {dimension_numbers = #tpu.dot_dimension_numbers<[1], [0], [0], [1], [0, 0, 1, 1], [], []>} : vector<256x16xf32>, vector<16x128xf32>, vector<256x128xf32> -> vector<256x128xf32>
    %8 = arith.addf %3, %7 : vector<256x128xf32>
    %c0_8 = arith.constant 0 : index
    %c0_9 = arith.constant 0 : index
    %9 = vector.load %arg4[%c0_8, %c0_9] : memref<1x128xf32, #tpu.memory_space<vmem>>, vector<1x128xf32>
    %10 = vector.broadcast %9 : vector<1x128xf32> to vector<256x128xf32>
    %11 = arith.addf %8, %10 : vector<256x128xf32>
    %cst_10 = arith.constant 2.000000e-01 : f32
    %12 = vector.broadcast %cst_10 : f32 to vector<256x128xf32>
    %13 = arith.mulf %12, %11 : vector<256x128xf32>
    %14 = arith.maximumf %11, %13 : vector<256x128xf32>
    %c0_11 = arith.constant 0 : index
    %c0_12 = arith.constant 0 : index
    %15 = vector.load %arg5[%c0_11, %c0_12] : memref<128x256xbf16, #tpu.memory_space<vmem>>, vector<128x256xbf16>
    %16 = arith.extf %15 : vector<128x256xbf16> to vector<128x256xf32>
    %cst_13 = arith.constant dense<0.000000e+00> : vector<256x256xf32>
    %17 = tpu.matmul %14, %16, %cst_13 {dimension_numbers = #tpu.dot_dimension_numbers<[1], [0], [0], [1], [0, 0, 1, 1], [], []>} : vector<256x128xf32>, vector<128x256xf32>, vector<256x256xf32> -> vector<256x256xf32>
    %cst_14 = arith.constant dense<0.000000e+00> : vector<256xf32>
    %18 = vector.multi_reduction <add>, %17, %cst_14 [0] : vector<256x256xf32> to vector<256xf32>
    %19 = vector.shape_cast %18 : vector<256xf32> to vector<1x256xf32>
    %cst_15 = arith.constant 2.560000e+02 : f32
    %20 = vector.broadcast %cst_15 : f32 to vector<1x256xf32>
    %21 = arith.divf %19, %20 : vector<1x256xf32>
    %22 = arith.mulf %17, %17 : vector<256x256xf32>
    %cst_16 = arith.constant dense<0.000000e+00> : vector<256xf32>
    %23 = vector.multi_reduction <add>, %22, %cst_16 [0] : vector<256x256xf32> to vector<256xf32>
    %24 = vector.shape_cast %23 : vector<256xf32> to vector<1x256xf32>
    %cst_17 = arith.constant 2.560000e+02 : f32
    %25 = vector.broadcast %cst_17 : f32 to vector<1x256xf32>
    %26 = arith.divf %24, %25 : vector<1x256xf32>
    %27 = arith.mulf %21, %21 : vector<1x256xf32>
    %28 = arith.subf %26, %27 : vector<1x256xf32>
    %c0_18 = arith.constant 0 : index
    %c0_19 = arith.constant 0 : index
    %29 = vector.load %arg6[%c0_18, %c0_19] : memref<1x256xf32, #tpu.memory_space<vmem>>, vector<1x256xf32>
    %cst_20 = arith.constant 8.000000e-01 : f32
    %30 = vector.broadcast %cst_20 : f32 to vector<1x256xf32>
    %31 = arith.addf %28, %30 : vector<1x256xf32>
    %32 = math.rsqrt %31 : vector<1x256xf32>
    %33 = arith.mulf %29, %32 : vector<1x256xf32>
    %c0_21 = arith.constant 0 : index
    %c0_22 = arith.constant 0 : index
    %34 = vector.load %arg7[%c0_21, %c0_22] : memref<1x256xf32, #tpu.memory_space<vmem>>, vector<1x256xf32>
    %35 = arith.mulf %21, %33 : vector<1x256xf32>
    %36 = arith.subf %34, %35 : vector<1x256xf32>
    %37 = vector.broadcast %33 : vector<1x256xf32> to vector<256x256xf32>
    %38 = arith.mulf %17, %37 : vector<256x256xf32>
    %39 = vector.broadcast %36 : vector<1x256xf32> to vector<256x256xf32>
    %40 = arith.addf %38, %39 : vector<256x256xf32>
    %cst_23 = arith.constant 2.000000e-01 : f32
    %41 = vector.broadcast %cst_23 : f32 to vector<256x256xf32>
    %42 = arith.mulf %41, %40 : vector<256x256xf32>
    %43 = arith.maximumf %40, %42 : vector<256x256xf32>
    %c0_24 = arith.constant 0 : index
    %c0_25 = arith.constant 0 : index
    %44 = vector.load %arg8[%c0_24, %c0_25] : memref<256x512xbf16, #tpu.memory_space<vmem>>, vector<256x512xbf16>
    %45 = arith.extf %44 : vector<256x512xbf16> to vector<256x512xf32>
    %cst_26 = arith.constant dense<0.000000e+00> : vector<256x512xf32>
    %46 = tpu.matmul %43, %45, %cst_26 {dimension_numbers = #tpu.dot_dimension_numbers<[1], [0], [0], [1], [0, 0, 1, 1], [], []>} : vector<256x256xf32>, vector<256x512xf32>, vector<256x512xf32> -> vector<256x512xf32>
    %cst_27 = arith.constant dense<0.000000e+00> : vector<512xf32>
    %47 = vector.multi_reduction <add>, %46, %cst_27 [0] : vector<256x512xf32> to vector<512xf32>
    %48 = vector.shape_cast %47 : vector<512xf32> to vector<1x512xf32>
    %cst_28 = arith.constant 2.560000e+02 : f32
    %49 = vector.broadcast %cst_28 : f32 to vector<1x512xf32>
    %50 = arith.divf %48, %49 : vector<1x512xf32>
    %51 = arith.mulf %46, %46 : vector<256x512xf32>
    %cst_29 = arith.constant dense<0.000000e+00> : vector<512xf32>
    %52 = vector.multi_reduction <add>, %51, %cst_29 [0] : vector<256x512xf32> to vector<512xf32>
    %53 = vector.shape_cast %52 : vector<512xf32> to vector<1x512xf32>
    %cst_30 = arith.constant 2.560000e+02 : f32
    %54 = vector.broadcast %cst_30 : f32 to vector<1x512xf32>
    %55 = arith.divf %53, %54 : vector<1x512xf32>
    %56 = arith.mulf %50, %50 : vector<1x512xf32>
    %57 = arith.subf %55, %56 : vector<1x512xf32>
    %c0_31 = arith.constant 0 : index
    %c0_32 = arith.constant 0 : index
    %58 = vector.load %arg9[%c0_31, %c0_32] : memref<1x512xf32, #tpu.memory_space<vmem>>, vector<1x512xf32>
    %cst_33 = arith.constant 8.000000e-01 : f32
    %59 = vector.broadcast %cst_33 : f32 to vector<1x512xf32>
    %60 = arith.addf %57, %59 : vector<1x512xf32>
    %61 = math.rsqrt %60 : vector<1x512xf32>
    %62 = arith.mulf %58, %61 : vector<1x512xf32>
    %c0_34 = arith.constant 0 : index
    %c0_35 = arith.constant 0 : index
    %63 = vector.load %arg10[%c0_34, %c0_35] : memref<1x512xf32, #tpu.memory_space<vmem>>, vector<1x512xf32>
    %64 = arith.mulf %50, %62 : vector<1x512xf32>
    %65 = arith.subf %63, %64 : vector<1x512xf32>
    %66 = vector.broadcast %62 : vector<1x512xf32> to vector<256x512xf32>
    %67 = arith.mulf %46, %66 : vector<256x512xf32>
    %68 = vector.broadcast %65 : vector<1x512xf32> to vector<256x512xf32>
    %69 = arith.addf %67, %68 : vector<256x512xf32>
    %cst_36 = arith.constant 2.000000e-01 : f32
    %70 = vector.broadcast %cst_36 : f32 to vector<256x512xf32>
    %71 = arith.mulf %70, %69 : vector<256x512xf32>
    %72 = arith.maximumf %69, %71 : vector<256x512xf32>
    %c0_37 = arith.constant 0 : index
    %c0_38 = arith.constant 0 : index
    %73 = vector.load %arg11[%c0_37, %c0_38] : memref<512x1024xbf16, #tpu.memory_space<vmem>>, vector<512x1024xbf16>
    %74 = arith.extf %73 : vector<512x1024xbf16> to vector<512x1024xf32>
    %cst_39 = arith.constant dense<0.000000e+00> : vector<256x1024xf32>
    %75 = tpu.matmul %72, %74, %cst_39 {dimension_numbers = #tpu.dot_dimension_numbers<[1], [0], [0], [1], [0, 0, 1, 1], [], []>} : vector<256x512xf32>, vector<512x1024xf32>, vector<256x1024xf32> -> vector<256x1024xf32>
    %cst_40 = arith.constant dense<0.000000e+00> : vector<1024xf32>
    %76 = vector.multi_reduction <add>, %75, %cst_40 [0] : vector<256x1024xf32> to vector<1024xf32>
    %77 = vector.shape_cast %76 : vector<1024xf32> to vector<1x1024xf32>
    %cst_41 = arith.constant 2.560000e+02 : f32
    %78 = vector.broadcast %cst_41 : f32 to vector<1x1024xf32>
    %79 = arith.divf %77, %78 : vector<1x1024xf32>
    %80 = arith.mulf %75, %75 : vector<256x1024xf32>
    %cst_42 = arith.constant dense<0.000000e+00> : vector<1024xf32>
    %81 = vector.multi_reduction <add>, %80, %cst_42 [0] : vector<256x1024xf32> to vector<1024xf32>
    %82 = vector.shape_cast %81 : vector<1024xf32> to vector<1x1024xf32>
    %cst_43 = arith.constant 2.560000e+02 : f32
    %83 = vector.broadcast %cst_43 : f32 to vector<1x1024xf32>
    %84 = arith.divf %82, %83 : vector<1x1024xf32>
    %85 = arith.mulf %79, %79 : vector<1x1024xf32>
    %86 = arith.subf %84, %85 : vector<1x1024xf32>
    %c0_44 = arith.constant 0 : index
    %c0_45 = arith.constant 0 : index
    %87 = vector.load %arg12[%c0_44, %c0_45] : memref<1x1024xf32, #tpu.memory_space<vmem>>, vector<1x1024xf32>
    %cst_46 = arith.constant 8.000000e-01 : f32
    %88 = vector.broadcast %cst_46 : f32 to vector<1x1024xf32>
    %89 = arith.addf %86, %88 : vector<1x1024xf32>
    %90 = math.rsqrt %89 : vector<1x1024xf32>
    %91 = arith.mulf %87, %90 : vector<1x1024xf32>
    %c0_47 = arith.constant 0 : index
    %c0_48 = arith.constant 0 : index
    %92 = vector.load %arg13[%c0_47, %c0_48] : memref<1x1024xf32, #tpu.memory_space<vmem>>, vector<1x1024xf32>
    %93 = arith.mulf %79, %91 : vector<1x1024xf32>
    %94 = arith.subf %92, %93 : vector<1x1024xf32>
    %95 = vector.broadcast %91 : vector<1x1024xf32> to vector<256x1024xf32>
    %96 = arith.mulf %75, %95 : vector<256x1024xf32>
    %97 = vector.broadcast %94 : vector<1x1024xf32> to vector<256x1024xf32>
    %98 = arith.addf %96, %97 : vector<256x1024xf32>
    %cst_49 = arith.constant 2.000000e-01 : f32
    %99 = vector.broadcast %cst_49 : f32 to vector<256x1024xf32>
    %100 = arith.mulf %99, %98 : vector<256x1024xf32>
    %101 = arith.maximumf %98, %100 : vector<256x1024xf32>
    %c0_50 = arith.constant 0 : index
    %c0_51 = arith.constant 0 : index
    %102 = vector.load %arg14[%c0_50, %c0_51] : memref<1024x128xbf16, #tpu.memory_space<vmem>>, vector<1024x128xbf16>
    %103 = arith.extf %102 : vector<1024x128xbf16> to vector<1024x128xf32>
    %cst_52 = arith.constant dense<0.000000e+00> : vector<256x128xf32>
    %104 = tpu.matmul %101, %103, %cst_52 {dimension_numbers = #tpu.dot_dimension_numbers<[1], [0], [0], [1], [0, 0, 1, 1], [], []>} : vector<256x1024xf32>, vector<1024x128xf32>, vector<256x128xf32> -> vector<256x128xf32>
    %c0_53 = arith.constant 0 : index
    %c0_54 = arith.constant 0 : index
    %105 = vector.load %arg15[%c0_53, %c0_54] : memref<1x128xf32, #tpu.memory_space<vmem>>, vector<1x128xf32>
    %106 = vector.broadcast %105 : vector<1x128xf32> to vector<256x128xf32>
    %107 = arith.addf %104, %106 : vector<256x128xf32>
    %108 = math.tanh %107 : vector<256x128xf32>
    %c0_55 = arith.constant 0 : index
    %c0_56 = arith.constant 0 : index
    %109 = vector.load %arg16[%c0_55, %c0_56] : memref<256x128xf32, #tpu.memory_space<vmem>>, vector<256x128xf32>
    tpu.vector_store %arg16[%c0_55, %c0_56], %108 {strides = array<i32>} : memref<256x128xf32, #tpu.memory_space<vmem>>, vector<256x128xf32>,
    return
  }
}

</mosaic_0001>

<llo_original>
// kernel: generator_forward.1
$region0: #{generator_forward.1}
  #allocation0 [shape = 'u32[]', space=smem, size = 0x4, offset = 0x4, fixed_abs, tag = 'smem constant byte address 0x4 - core index']
  #allocation1 [shape = 'u32[72,128]{1,0:T(1,128)}', space=vmem, size = 0x9000, scoped, tag = 'internal scratch']
  %s0 = inlined_call_operand.vmem [shape: f32[256,100], index: 0, kind: input, shape index: {}]
  %s1 = inlined_call_operand.vmem [shape: f32[256,16], index: 1, kind: input, shape index: {}]
  %s2 = inlined_call_operand.hbm [shape: bf16[100,128], index: 2, kind: input, shape index: {}]
  %s3 = inlined_call_operand.vmem [shape: bf16[16,128], index: 3, kind: input, shape index: {}]
  %s4 = inlined_call_operand.hbm [shape: f32[1,128], index: 4, kind: input, shape index: {}]
  %s5 = inlined_call_operand.hbm [shape: bf16[128,256], index: 5, kind: input, shape index: {}]
  %s6 = inlined_call_operand.hbm [shape: f32[1,256], index: 6, kind: input, shape index: {}]
  %s7 = inlined_call_operand.hbm [shape: f32[1,256], index: 7, kind: input, shape index: {}]
  %s8 = inlined_call_operand.vmem [shape: bf16[256,512], index: 8, kind: input, shape index: {}]
  %s9 = inlined_call_operand.vmem [shape: f32[1,512], index: 9, kind: input, shape index: {}]
  %s10 = inlined_call_operand.vmem [shape: f32[1,512], index: 10, kind: input, shape index: {}]
  %s11 = inlined_call_operand.hbm [shape: bf16[512,1024], index: 11, kind: input, shape index: {}]
  %s12 = inlined_call_operand.vmem [shape: f32[1,1024], index: 12, kind: input, shape index: {}]
  %s13 = inlined_call_operand.vmem [shape: f32[1,1024], index: 13, kind: input, shape index: {}]
  %s14 = inlined_call_operand.hbm [shape: bf16[1024,128], index: 14, kind: input, shape index: {}]
  %s15 = inlined_call_operand.hbm [shape: f32[1,128], index: 15, kind: input, shape index: {}]
  %s16 = inlined_call_operand.vmem [shape: f32[256,128], index: 16, kind: output, shape index: {}]
  %s17 = sld [smem:[#allocation0]]
  $region106: #{generator_forward.1} parent=0
    _
  %s19 = ssub.s32 1, %s17
  %s20 = scalar_select 0, %s19, %s17
  $region1: #{generator_forward.1} parent=0
    #allocation2 [shape = 'u8[26624]{0}', space=vmem, size = 0x6800, scoped, tag = 'input window, operand 2, single buffered']
    #allocation3 [shape = 's32[1]{0}', space=sflag, size = 0x4, scoped, tag = 'scoped memory for generator_forward.1']
    #allocation4 [shape = 'u8[512]{0}', space=vmem, size = 0x400, scoped, tag = 'input window, operand 4, single buffered']
    #allocation5 [shape = 's32[1]{0}', space=sflag, size = 0x4, scoped, tag = 'scoped memory for generator_forward.1']
    #allocation6 [shape = 'u8[65536]{0}', space=vmem, size = 0x10000, scoped, tag = 'input window, operand 5, single buffered']
    #allocation7 [shape = 'u8[1024]{0}', space=vmem, size = 0x400, scoped, tag = 'input window, operand 6, single buffered']
    #allocation8 [shape = 's32[1]{0}', space=sflag, size = 0x4, scoped, tag = 'scoped memory for generator_forward.1']
    #allocation9 [shape = 'u8[1024]{0}', space=vmem, size = 0x400, scoped, tag = 'input window, operand 7, single buffered']
    #allocation10 [shape = 'u8[1048576]{0}', space=vmem, size = 0x100000, scoped, tag = 'input window, operand 11, single buffered']
    #allocation11 [shape = 's32[1]{0}', space=sflag, size = 0x4, scoped, tag = 'scoped memory for generator_forward.1']
    #allocation12 [shape = 'u8[262144]{0}', space=vmem, size = 0x40000, scoped, tag = 'input window, operand 14, single buffered']
    #allocation13 [shape = 'u8[512]{0}', space=vmem, size = 0x400, scoped, tag = 'input window, operand 15, single buffered']
    #allocation14 [shape = 's32[1]{0}', space=sflag, size = 0x4, scoped, tag = 'scoped memory for generator_forward.1']
    %21 = vsyncpa [#allocation3], 0
    %22 = vsyncpa [#allocation5], 0
    %23 = vsyncpa [#allocation8], 0
    %24 = vsyncpa [#allocation11], 0
    %25 = vsyncpa [#allocation14], 0
    // Predicated region
    $region2: #{generator_forward.1} parent=1 // pred_check
      _
    $region3: #{generator_forward.1} parent=1 // pred_check_branch
      %27 = sbr.rel (0) target = $region5
    $region4: #{generator_forward.1} parent=1 // pred_region
      _
    $region5: #{generator_forward.1} parent=1 // pred_fallthru
      _
    // Predicated region
    $region6: #{generator_forward.1} parent=1 // pred_check
      _
    $region7: #{generator_forward.1} parent=1 // pred_check_branch
      %29 = sbr.rel (0) target = $region9
    $region8: #{generator_forward.1} parent=1 // pred_region
      _
    $region9: #{generator_forward.1} parent=1 // pred_fallthru
      _
    // Predicated region
    $region10: #{generator_forward.1} parent=1 // pred_check
      _
    $region11: #{generator_forward.1} parent=1 // pred_check_branch
      %31 = sbr.rel (0) target = $region13
    $region12: #{generator_forward.1} parent=1 // pred_region
      %33 = vsyncadd [#allocation3], 0
      %s34 = sshll.u32 %s2, 4
      %s35 = int_to_ptr.hbm [resolvable:$true] %s34
      %s36 = sshll.u32 [#allocation2], 4
      %s37 = int_to_ptr.vmem [resolvable:$true] %s36
      %42 = dma.hbm_to_vmem [thread:$0]  %s35, 832, %s37, [#allocation3], 64, 64, 4
    $region13: #{generator_forward.1} parent=1 // pred_fallthru
      _
    // Predicated region
    $region14: #{generator_forward.1} parent=1 // pred_check
      _
    $region15: #{generator_forward.1} parent=1 // pred_check_branch
      %44 = sbr.rel (0) target = $region17
    $region16: #{generator_forward.1} parent=1 // pred_region
      _
    $region17: #{generator_forward.1} parent=1 // pred_fallthru
      _
    // Predicated region
    $region18: #{generator_forward.1} parent=1 // pred_check
      _
    $region19: #{generator_forward.1} parent=1 // pred_check_branch
      %46 = sbr.rel (0) target = $region21
    $region20: #{generator_forward.1} parent=1 // pred_region
      %48 = vsyncadd [#allocation5], 0
      %s50 = sshll.u32 %s4, 4
      %s51 = int_to_ptr.hbm [resolvable:$true] %s50
      %s52 = sshll.u32 [#allocation4], 4
      %s53 = int_to_ptr.vmem [resolvable:$true] %s52
      %55 = dma.hbm_to_vmem [thread:$0]  %s51, 16, %s53, [#allocation5]
    $region21: #{generator_forward.1} parent=1 // pred_fallthru
      _
    // Predicated region
    $region22: #{generator_forward.1} parent=1 // pred_check
      _
    $region23: #{generator_forward.1} parent=1 // pred_check_branch
      %57 = sbr.rel (0) target = $region25
    $region24: #{generator_forward.1} parent=1 // pred_region
      %59 = vsyncadd [#allocation5], 0
      %s60 = sshll.u32 %s5, 4
      %s61 = int_to_ptr.hbm [resolvable:$true] %s60
      %s62 = sshll.u32 [#allocation6], 4
      %s63 = int_to_ptr.vmem [resolvable:$true] %s62
      %68 = dma.hbm_to_vmem [thread:$0]  %s61, 2048, %s63, [#allocation5], 128, 128, 8
    $region25: #{generator_forward.1} parent=1 // pred_fallthru
      _
    // Predicated region
    $region26: #{generator_forward.1} parent=1 // pred_check
      _
    $region27: #{generator_forward.1} parent=1 // pred_check_branch
      %70 = sbr.rel (0) target = $region29
    $region28: #{generator_forward.1} parent=1 // pred_region
      %72 = vsyncadd [#allocation8], 0
      %s74 = sshll.u32 %s6, 4
      %s75 = int_to_ptr.hbm [resolvable:$true] %s74
      %s76 = sshll.u32 [#allocation7], 4
      %s77 = int_to_ptr.vmem [resolvable:$true] %s76
      %79 = dma.hbm_to_vmem [thread:$0]  %s75, 32, %s77, [#allocation8]
    $region29: #{generator_forward.1} parent=1 // pred_fallthru
      _
    // Predicated region
    $region30: #{generator_forward.1} parent=1 // pred_check
      _
    $region31: #{generator_forward.1} parent=1 // pred_check_branch
      %81 = sbr.rel (0) target = $region33
    $region32: #{generator_forward.1} parent=1 // pred_region
      %83 = vsyncadd [#allocation8], 0
      %s85 = sshll.u32 %s7, 4
      %s86 = int_to_ptr.hbm [resolvable:$true] %s85
      %s87 = sshll.u32 [#allocation9], 4
      %s88 = int_to_ptr.vmem [resolvable:$true] %s87
      %90 = dma.hbm_to_vmem [thread:$0]  %s86, 32, %s88, [#allocation8]
    $region33: #{generator_forward.1} parent=1 // pred_fallthru
      _
    // Predicated region
    $region34: #{generator_forward.1} parent=1 // pred_check
      _
    $region35: #{generator_forward.1} parent=1 // pred_check_branch
      %92 = sbr.rel (0) target = $region37
    $region36: #{generator_forward.1} parent=1 // pred_region
      _
    $region37: #{generator_forward.1} parent=1 // pred_fallthru
      _
    // Predicated region
    $region38: #{generator_forward.1} parent=1 // pred_check
      _
    $region39: #{generator_forward.1} parent=1 // pred_check_branch
      %94 = sbr.rel (0) target = $region41
    $region40: #{generator_forward.1} parent=1 // pred_region
      _
    $region41: #{generator_forward.1} parent=1 // pred_fallthru
      _
    // Predicated region
    $region42: #{generator_forward.1} parent=1 // pred_check
      _
    $region43: #{generator_forward.1} parent=1 // pred_check_branch
      %96 = sbr.rel (0) target = $region45
    $region44: #{generator_forward.1} parent=1 // pred_region
      _
    $region45: #{generator_forward.1} parent=1 // pred_fallthru
      _
    // Predicated region
    $region46: #{generator_forward.1} parent=1 // pred_check
      _
    $region47: #{generator_forward.1} parent=1 // pred_check_branch
      %98 = sbr.rel (0) target = $region49
    $region48: #{generator_forward.1} parent=1 // pred_region
      %100 = vsyncadd [#allocation11], 0
      %s101 = sshll.u32 %s11, 4
      %s102 = int_to_ptr.hbm [resolvable:$true] %s101
      %s103 = sshll.u32 [#allocation10], 4
      %s104 = int_to_ptr.vmem [resolvable:$true] %s103
      %109 = dma.hbm_to_vmem [thread:$0]  %s102, 32768, %s104, [#allocation11], 512, 512, 32
    $region49: #{generator_forward.1} parent=1 // pred_fallthru
      _
    // Predicated region
    $region50: #{generator_forward.1} parent=1 // pred_check
      _
    $region51: #{generator_forward.1} parent=1 // pred_check_branch
      %111 = sbr.rel (0) target = $region53
    $region52: #{generator_forward.1} parent=1 // pred_region
      _
    $region53: #{generator_forward.1} parent=1 // pred_fallthru
      _
    // Predicated region
    $region54: #{generator_forward.1} parent=1 // pred_check
      _
    $region55: #{generator_forward.1} parent=1 // pred_check_branch
      %113 = sbr.rel (0) target = $region57
    $region56: #{generator_forward.1} parent=1 // pred_region
      _
    $region57: #{generator_forward.1} parent=1 // pred_fallthru
      _
    // Predicated region
    $region58: #{generator_forward.1} parent=1 // pred_check
      _
    $region59: #{generator_forward.1} parent=1 // pred_check_branch
      %115 = sbr.rel (0) target = $region61
    $region60: #{generator_forward.1} parent=1 // pred_region
      %117 = vsyncadd [#allocation11], 0
      %s118 = sshll.u32 %s14, 4
      %s119 = int_to_ptr.hbm [resolvable:$true] %s118
      %s120 = sshll.u32 [#allocation12], 4
      %s121 = int_to_ptr.vmem [resolvable:$true] %s120
      %126 = dma.hbm_to_vmem [thread:$0]  %s119, 8192, %s121, [#allocation11], 64, 64, 4
    $region61: #{generator_forward.1} parent=1 // pred_fallthru
      _
    // Predicated region
    $region62: #{generator_forward.1} parent=1 // pred_check
      _
    $region63: #{generator_forward.1} parent=1 // pred_check_branch
      %128 = sbr.rel (0) target = $region65
    $region64: #{generator_forward.1} parent=1 // pred_region
      %130 = vsyncadd [#allocation14], 0
      %s132 = sshll.u32 %s15, 4
      %s133 = int_to_ptr.hbm [resolvable:$true] %s132
      %s134 = sshll.u32 [#allocation13], 4
      %s135 = int_to_ptr.vmem [resolvable:$true] %s134
      %137 = dma.hbm_to_vmem [thread:$0]  %s133, 16, %s135, [#allocation14]
    $region65: #{generator_forward.1} parent=1 // pred_fallthru
      _
    // Predicated region
    $region66: #{generator_forward.1} parent=1 // pred_check
      _
    $region67: #{generator_forward.1} parent=1 // pred_check_branch
      %139 = sbr.rel (0) target = $region69
    $region68: #{generator_forward.1} parent=1 // pred_region
      %141 = dma.done [#allocation3], 832
    $region69: #{generator_forward.1} parent=1 // pred_fallthru
      _
    // Predicated region
    $region70: #{generator_forward.1} parent=1 // pred_check
      _
    $region71: #{generator_forward.1} parent=1 // pred_check_branch
      %143 = sbr.rel (0) target = $region73
    $region72: #{generator_forward.1} parent=1 // pred_region
      %145 = dma.done [#allocation5], 16
    $region73: #{generator_forward.1} parent=1 // pred_fallthru
      _
    // Predicated region
    $region74: #{generator_forward.1} parent=1 // pred_check
      _
    $region75: #{generator_forward.1} parent=1 // pred_check_branch
      %147 = sbr.rel (0) target = $region77
    $region76: #{generator_forward.1} parent=1 // pred_region
      %149 = dma.done [#allocation5], 2048
    $region77: #{generator_forward.1} parent=1 // pred_fallthru
      _
    // Predicated region
    $region78: #{generator_forward.1} parent=1 // pred_check
      _
    $region79: #{generator_forward.1} parent=1 // pred_check_branch
      %151 = sbr.rel (0) target = $region81
    $region80: #{generator_forward.1} parent=1 // pred_region
      %153 = dma.done [#allocation8], 32
    $region81: #{generator_forward.1} parent=1 // pred_fallthru
      _
    // Predicated region
    $region82: #{generator_forward.1} parent=1 // pred_check
      _
    $region83: #{generator_forward.1} parent=1 // pred_check_branch
      %155 = sbr.rel (0) target = $region85
    $region84: #{generator_forward.1} parent=1 // pred_region
      %157 = dma.done [#allocation8], 32
    $region85: #{generator_forward.1} parent=1 // pred_fallthru
      _
    // Predicated region
    $region86: #{generator_forward.1} parent=1 // pred_check
      _
    $region87: #{generator_forward.1} parent=1 // pred_check_branch
      %159 = sbr.rel (0) target = $region89
    $region88: #{generator_forward.1} parent=1 // pred_region
      %161 = dma.done [#allocation11], 32768
    $region89: #{generator_forward.1} parent=1 // pred_fallthru
      _
    // Predicated region
    $region90: #{generator_forward.1} parent=1 // pred_check
      _
    $region91: #{generator_forward.1} parent=1 // pred_check_branch
      %163 = sbr.rel (0) target = $region93
    $region92: #{generator_forward.1} parent=1 // pred_region
      %165 = dma.done [#allocation11], 8192
    $region93: #{generator_forward.1} parent=1 // pred_fallthru
      _
    // Predicated region
    $region94: #{generator_forward.1} parent=1 // pred_check
      _
    $region95: #{generator_forward.1} parent=1 // pred_check_branch
      %167 = sbr.rel (0) target = $region97
    $region96: #{generator_forward.1} parent=1 // pred_region
      %169 = dma.done [#allocation14], 16
    $region97: #{generator_forward.1} parent=1 // pred_fallthru
      _
    %v170 = vld [vmem:[%s0] sm:$0xff]
    %v171 = vld [vmem:[%s0 + $0x8] sm:$0xff]
    %v172 = vld [vmem:[%s0 + $0x10] sm:$0xff]
    %v173 = vld [vmem:[%s0 + $0x18] sm:$0xff]
    %v174 = vld [vmem:[%s0 + $0x20] sm:$0xff]
    %v175 = vld [vmem:[%s0 + $0x28] sm:$0xff]
    %v176 = vld [vmem:[%s0 + $0x30] sm:$0xff]
    %v177 = vld [vmem:[%s0 + $0x38] sm:$0xff]
    %v178 = vld [vmem:[%s0 + $0x40] sm:$0xff]
    %v179 = vld [vmem:[%s0 + $0x48] sm:$0xff]
    %v180 = vld [vmem:[%s0 + $0x50] sm:$0xff]
    %v181 = vld [vmem:[%s0 + $0x58] sm:$0xff]
    %v182 = vld [vmem:[%s0 + $0x60] sm:$0xff]
    %v183 = vld [vmem:[%s0 + $0x68] sm:$0xff]
    %v184 = vld [vmem:[%s0 + $0x70] sm:$0xff]
    %v185 = vld [vmem:[%s0 + $0x78] sm:$0xff]
    %v186 = vld [vmem:[%s0 + $0x80] sm:$0xff]
    %v187 = vld [vmem:[%s0 + $0x88] sm:$0xff]
    %v188 = vld [vmem:[%s0 + $0x90] sm:$0xff]
    %v189 = vld [vmem:[%s0 + $0x98] sm:$0xff]
    %v190 = vld [vmem:[%s0 + $0xa0] sm:$0xff]
    %v191 = vld [vmem:[%s0 + $0xa8] sm:$0xff]
    %v192 = vld [vmem:[%s0 + $0xb0] sm:$0xff]
    %v193 = vld [vmem:[%s0 + $0xb8] sm:$0xff]
    %v194 = vld [vmem:[%s0 + $0xc0] sm:$0xff]
    %v195 = vld [vmem:[%s0 + $0xc8] sm:$0xff]
    %v196 = vld [vmem:[%s0 + $0xd0] sm:$0xff]
    %v197 = vld [vmem:[%s0 + $0xd8] sm:$0xff]
    %v198 = vld [vmem:[%s0 + $0xe0] sm:$0xff]
    %v199 = vld [vmem:[%s0 + $0xe8] sm:$0xff]
    %v200 = vld [vmem:[%s0 + $0xf0] sm:$0xff]
    %v201 = vld [vmem:[%s0 + $0xf8] sm:$0xff]
    %v202 = vld [vmem:[#allocation2] sm:$0xf]
    %v203 = vld [vmem:[#allocation2 + $0x4] sm:$0xf]
    %v204 = vld [vmem:[#allocation2 + $0x8] sm:$0xf]
    %v205 = vld [vmem:[#allocation2 + $0xc] sm:$0xf]
    %v206 = vld [vmem:[#allocation2 + $0x10] sm:$0xf]
    %v207 = vld [vmem:[#allocation2 + $0x14] sm:$0xf]
    %v208 = vld [vmem:[#allocation2 + $0x18] sm:$0xf]
    %v209 = vld [vmem:[#allocation2 + $0x1c] sm:$0xf]
    %v210 = vld [vmem:[#allocation2 + $0x20] sm:$0xf]
    %v211 = vld [vmem:[#allocation2 + $0x24] sm:$0xf]
    %v212 = vld [vmem:[#allocation2 + $0x28] sm:$0xf]
    %v213 = vld [vmem:[#allocation2 + $0x2c] sm:$0xf]
    %v214 = vld [vmem:[#allocation2 + $0x30] sm:$0x3]
    %v215 = vunpack.c.l.bf16 %v202
    %v216 = vunpack.c.l.bf16 %v203
    %v217 = vunpack.c.l.bf16 %v204
    %v218 = vunpack.c.l.bf16 %v205
    %v219 = vunpack.c.l.bf16 %v206
    %v220 = vunpack.c.l.bf16 %v207
    %v221 = vunpack.c.l.bf16 %v208
    %v222 = vunpack.c.l.bf16 %v209
    %v223 = vunpack.c.l.bf16 %v210
    %v224 = vunpack.c.l.bf16 %v211
    %v225 = vunpack.c.l.bf16 %v212
    %v226 = vunpack.c.l.bf16 %v213
    %v227 = vunpack.c.l.bf16 %v214
    %v228 = vld [vmem:[%s1] sm:$0xff]
    %v229 = vld [vmem:[%s1 + $0x8] sm:$0xff]
    %v230 = vld [vmem:[%s1 + $0x10] sm:$0xff]
    %v231 = vld [vmem:[%s1 + $0x18] sm:$0xff]
    %v232 = vld [vmem:[%s1 + $0x20] sm:$0xff]
    %v233 = vld [vmem:[%s1 + $0x28] sm:$0xff]
    %v234 = vld [vmem:[%s1 + $0x30] sm:$0xff]
    %v235 = vld [vmem:[%s1 + $0x38] sm:$0xff]
    %v236 = vld [vmem:[%s1 + $0x40] sm:$0xff]
    %v237 = vld [vmem:[%s1 + $0x48] sm:$0xff]
    %v238 = vld [vmem:[%s1 + $0x50] sm:$0xff]
    %v239 = vld [vmem:[%s1 + $0x58] sm:$0xff]
    %v240 = vld [vmem:[%s1 + $0x60] sm:$0xff]
    %v241 = vld [vmem:[%s1 + $0x68] sm:$0xff]
    %v242 = vld [vmem:[%s1 + $0x70] sm:$0xff]
    %v243 = vld [vmem:[%s1 + $0x78] sm:$0xff]
    %v244 = vld [vmem:[%s1 + $0x80] sm:$0xff]
    %v245 = vld [vmem:[%s1 + $0x88] sm:$0xff]
    %v246 = vld [vmem:[%s1 + $0x90] sm:$0xff]
    %v247 = vld [vmem:[%s1 + $0x98] sm:$0xff]
    %v248 = vld [vmem:[%s1 + $0xa0] sm:$0xff]
    %v249 = vld [vmem:[%s1 + $0xa8] sm:$0xff]
    %v250 = vld [vmem:[%s1 + $0xb0] sm:$0xff]
    %v251 = vld [vmem:[%s1 + $0xb8] sm:$0xff]
    %v252 = vld [vmem:[%s1 + $0xc0] sm:$0xff]
    %v253 = vld [vmem:[%s1 + $0xc8] sm:$0xff]
    %v254 = vld [vmem:[%s1 + $0xd0] sm:$0xff]
    %v255 = vld [vmem:[%s1 + $0xd8] sm:$0xff]
    %v256 = vld [vmem:[%s1 + $0xe0] sm:$0xff]
    %v257 = vld [vmem:[%s1 + $0xe8] sm:$0xff]
    %v258 = vld [vmem:[%s1 + $0xf0] sm:$0xff]
    %v259 = vld [vmem:[%s1 + $0xf8] sm:$0xff]
    %v260 = vld [vmem:[%s3] sm:$0xf]
    %v261 = vld [vmem:[%s3 + $0x4] sm:$0xf]
    %v262 = vunpack.c.l.bf16 %v260
    %v263 = vunpack.c.l.bf16 %v261
    %vm264 = vcmask 130048
    %v266 = vsel %vm264, %v228, 0
    %v269 = vsel %vm264, %v229, 0
    %v272 = vsel %vm264, %v230, 0
    %v275 = vsel %vm264, %v231, 0
    %v278 = vsel %vm264, %v232, 0
    %v281 = vsel %vm264, %v233, 0
    %v284 = vsel %vm264, %v234, 0
    %v287 = vsel %vm264, %v235, 0
    %v290 = vsel %vm264, %v236, 0
    %v293 = vsel %vm264, %v237, 0
    %v296 = vsel %vm264, %v238, 0
    %v299 = vsel %vm264, %v239, 0
    %v302 = vsel %vm264, %v240, 0
    %v305 = vsel %vm264, %v241, 0
    %v308 = vsel %vm264, %v242, 0
    %v311 = vsel %vm264, %v243, 0
    %v314 = vsel %vm264, %v244, 0
    %v317 = vsel %vm264, %v245, 0
    %v320 = vsel %vm264, %v246, 0
    %v323 = vsel %vm264, %v247, 0
    %v326 = vsel %vm264, %v248, 0
    %v329 = vsel %vm264, %v249, 0
    %v332 = vsel %vm264, %v250, 0
    %v335 = vsel %vm264, %v251, 0
    %v338 = vsel %vm264, %v252, 0
    %v341 = vsel %vm264, %v253, 0
    %v344 = vsel %vm264, %v254, 0
    %v347 = vsel %vm264, %v255, 0
    %v350 = vsel %vm264, %v256, 0
    %v353 = vsel %vm264, %v257, 0
    %v356 = vsel %vm264, %v258, 0
    %v359 = vsel %vm264, %v259, 0
    %361 = vmatpush.msra.mxu0 0.0
    %362 = vmatpush.msra.mxu0 0.0
    %363 = vmatpush.msra.mxu0 0.0
    %364 = vmatpush.msra.mxu0 0.0
    %365 = vmatpush.msra.mxu0 0.0
    %366 = vmatpush.msra.mxu0 0.0
    %367 = vmatpush.msra.mxu0 0.0
    %368 = vmatpush.msra.mxu0 0.0
    %369 = vmatpush.msra.mxu0 0.0
    %370 = vmatpush.msra.mxu0 0.0
    %371 = vmatpush.msra.mxu0 0.0
    %372 = vmatpush.msra.mxu0 0.0
    %373 = vmatpush.msra.mxu0 0.0
    %374 = vmatpush.msra.mxu0 0.0
    %375 = vmatpush.msra.mxu0 %v263
    %376 = vmatpush.msra.mxu0 %v262
    %377 = vmatmul.f32.gmra.mxu0 %v266
    %v378 = vpop.f32.mrf.mxu0
    %v379 = vadd.f32 0.0, %v378
    %380 = vmatmul.f32.gmra.mxu0 %v269
    %v381 = vpop.f32.mrf.mxu0
    %v382 = vadd.f32 0.0, %v381
    %383 = vmatmul.f32.gmra.mxu0 %v272
    %v384 = vpop.f32.mrf.mxu0
    %v385 = vadd.f32 0.0, %v384
    %386 = vmatmul.f32.gmra.mxu0 %v275
    %v387 = vpop.f32.mrf.mxu0
    %v388 = vadd.f32 0.0, %v387
    %389 = vmatmul.f32.gmra.mxu0 %v278
    %v390 = vpop.f32.mrf.mxu0
    %v391 = vadd.f32 0.0, %v390
    %392 = vmatmul.f32.gmra.mxu0 %v281
    %v393 = vpop.f32.mrf.mxu0
    %v394 = vadd.f32 0.0, %v393
    %395 = vmatmul.f32.gmra.mxu0 %v284
    %v396 = vpop.f32.mrf.mxu0
    %v397 = vadd.f32 0.0, %v396
    %398 = vmatmul.f32.gmra.mxu0 %v287
    %v399 = vpop.f32.mrf.mxu0
    %v400 = vadd.f32 0.0, %v399
    %401 = vmatmul.f32.gmra.mxu0 %v290
    %v402 = vpop.f32.mrf.mxu0
    %v403 = vadd.f32 0.0, %v402
    %404 = vmatmul.f32.gmra.mxu0 %v293
    %v405 = vpop.f32.mrf.mxu0
    %v406 = vadd.f32 0.0, %v405
    %407 = vmatmul.f32.gmra.mxu0 %v296
    %v408 = vpop.f32.mrf.mxu0
    %v409 = vadd.f32 0.0, %v408
    %410 = vmatmul.f32.gmra.mxu0 %v299
    %v411 = vpop.f32.mrf.mxu0
    %v412 = vadd.f32 0.0, %v411
    %413 = vmatmul.f32.gmra.mxu0 %v302
    %v414 = vpop.f32.mrf.mxu0
    %v415 = vadd.f32 0.0, %v414
    %416 = vmatmul.f32.gmra.mxu0 %v305
    %v417 = vpop.f32.mrf.mxu0
    %v418 = vadd.f32 0.0, %v417
    %419 = vmatmul.f32.gmra.mxu0 %v308
    %v420 = vpop.f32.mrf.mxu0
    %v421 = vadd.f32 0.0, %v420
    %422 = vmatmul.f32.gmra.mxu0 %v311
    %v423 = vpop.f32.mrf.mxu0
    %v424 = vadd.f32 0.0, %v423
    %425 = vmatmul.f32.gmra.mxu0 %v314
    %v426 = vpop.f32.mrf.mxu0
    %v427 = vadd.f32 0.0, %v426
    %428 = vmatmul.f32.gmra.mxu0 %v317
    %v429 = vpop.f32.mrf.mxu0
    %v430 = vadd.f32 0.0, %v429
    %431 = vmatmul.f32.gmra.mxu0 %v320
    %v432 = vpop.f32.mrf.mxu0
    %v433 = vadd.f32 0.0, %v432
    %434 = vmatmul.f32.gmra.mxu0 %v323
    %v435 = vpop.f32.mrf.mxu0
    %v436 = vadd.f32 0.0, %v435
    %437 = vmatmul.f32.gmra.mxu0 %v326
    %v438 = vpop.f32.mrf.mxu0
    %v439 = vadd.f32 0.0, %v438
    %440 = vmatmul.f32.gmra.mxu0 %v329
    %v441 = vpop.f32.mrf.mxu0
    %v442 = vadd.f32 0.0, %v441
    %443 = vmatmul.f32.gmra.mxu0 %v332
    %v444 = vpop.f32.mrf.mxu0
    %v445 = vadd.f32 0.0, %v444
    %446 = vmatmul.f32.gmra.mxu0 %v335
    %v447 = vpop.f32.mrf.mxu0
    %v448 = vadd.f32 0.0, %v447
    %449 = vmatmul.f32.gmra.mxu0 %v338
    %v450 = vpop.f32.mrf.mxu0
    %v451 = vadd.f32 0.0, %v450
    %452 = vmatmul.f32.gmra.mxu0 %v341
    %v453 = vpop.f32.mrf.mxu0
    %v454 = vadd.f32 0.0, %v453
    %455 = vmatmul.f32.gmra.mxu0 %v344
    %v456 = vpop.f32.mrf.mxu0
    %v457 = vadd.f32 0.0, %v456
    %458 = vmatmul.f32.gmra.mxu0 %v347
    %v459 = vpop.f32.mrf.mxu0
    %v460 = vadd.f32 0.0, %v459
    %461 = vmatmul.f32.gmra.mxu0 %v350
    %v462 = vpop.f32.mrf.mxu0
    %v463 = vadd.f32 0.0, %v462
    %464 = vmatmul.f32.gmra.mxu0 %v353
    %v465 = vpop.f32.mrf.mxu0
    %v466 = vadd.f32 0.0, %v465
    %467 = vmatmul.f32.gmra.mxu0 %v356
    %v468 = vpop.f32.mrf.mxu0
    %v469 = vadd.f32 0.0, %v468
    %470 = vmatmul.f32.gmra.mxu0 %v359
    %v471 = vpop.f32.mrf.mxu0
    %v472 = vadd.f32 0.0, %v471
    %473 = vdwg.mxu0
    %vm474 = vcmask 818176
    %v476 = vsel %vm474, %v170, 0
    %v479 = vsel %vm474, %v171, 0
    %v482 = vsel %vm474, %v172, 0
    %v485 = vsel %vm474, %v173, 0
    %v488 = vsel %vm474, %v174, 0
    %v491 = vsel %vm474, %v175, 0
    %v494 = vsel %vm474, %v176, 0
    %v497 = vsel %vm474, %v177, 0
    %v500 = vsel %vm474, %v178, 0
    %v503 = vsel %vm474, %v179, 0
    %v506 = vsel %vm474, %v180, 0
    %v509 = vsel %vm474, %v181, 0
    %v512 = vsel %vm474, %v182, 0
    %v515 = vsel %vm474, %v183, 0
    %v518 = vsel %vm474, %v184, 0
    %v521 = vsel %vm474, %v185, 0
    %v524 = vsel %vm474, %v186, 0
    %v527 = vsel %vm474, %v187, 0
    %v530 = vsel %vm474, %v188, 0
    %v533 = vsel %vm474, %v189, 0
    %v536 = vsel %vm474, %v190, 0
    %v539 = vsel %vm474, %v191, 0
    %v542 = vsel %vm474, %v192, 0
    %v545 = vsel %vm474, %v193, 0
    %v548 = vsel %vm474, %v194, 0
    %v551 = vsel %vm474, %v195, 0
    %v554 = vsel %vm474, %v196, 0
    %v557 = vsel %vm474, %v197, 0
    %v560 = vsel %vm474, %v198, 0
    %v563 = vsel %vm474, %v199, 0
    %v566 = vsel %vm474, %v200, 0
    %v569 = vsel %vm474, %v201, 0
    %vm571 = vcmask 1043456
    %v573 = vsel %vm571, %v227, 0
    %575 = vmatpush.msra.mxu0 0.0
    %576 = vmatpush.msra.mxu0 0.0
    %577 = vmatpush.msra.mxu0 0.0
    %578 = vmatpush.msra.mxu0 %v573
    %579 = vmatpush.msra.mxu0 %v226
    %580 = vmatpush.msra.mxu0 %v225
    %581 = vmatpush.msra.mxu0 %v224
    %582 = vmatpush.msra.mxu0 %v223
    %583 = vmatpush.msra.mxu0 %v222
    %584 = vmatpush.msra.mxu0 %v221
    %585 = vmatpush.msra.mxu0 %v220
    %586 = vmatpush.msra.mxu0 %v219
    %587 = vmatpush.msra.mxu0 %v218
    %588 = vmatpush.msra.mxu0 %v217
    %589 = vmatpush.msra.mxu0 %v216
    %590 = vmatpush.msra.mxu0 %v215
    %591 = vmatmul.f32.gmra.mxu0 %v476
    %v592 = vpop.f32.mrf.mxu0
    %v593 = vadd.f32 %v379, %v592
    %594 = vmatmul.f32.gmra.mxu0 %v479
    %v595 = vpop.f32.mrf.mxu0
    %v596 = vadd.f32 %v382, %v595
    %597 = vmatmul.f32.gmra.mxu0 %v482
    %v598 = vpop.f32.mrf.mxu0
    %v599 = vadd.f32 %v385, %v598
    %600 = vmatmul.f32.gmra.mxu0 %v485
    %v601 = vpop.f32.mrf.mxu0
    %v602 = vadd.f32 %v388, %v601
    %603 = vmatmul.f32.gmra.mxu0 %v488
    %v604 = vpop.f32.mrf.mxu0
    %v605 = vadd.f32 %v391, %v604
    %606 = vmatmul.f32.gmra.mxu0 %v491
    %v607 = vpop.f32.mrf.mxu0
    %v608 = vadd.f32 %v394, %v607
    %609 = vmatmul.f32.gmra.mxu0 %v494
    %v610 = vpop.f32.mrf.mxu0
    %v611 = vadd.f32 %v397, %v610
    %612 = vmatmul.f32.gmra.mxu0 %v497
    %v613 = vpop.f32.mrf.mxu0
    %v614 = vadd.f32 %v400, %v613
    %615 = vmatmul.f32.gmra.mxu0 %v500
    %v616 = vpop.f32.mrf.mxu0
    %v617 = vadd.f32 %v403, %v616
    %618 = vmatmul.f32.gmra.mxu0 %v503
    %v619 = vpop.f32.mrf.mxu0
    %v620 = vadd.f32 %v406, %v619
    %621 = vmatmul.f32.gmra.mxu0 %v506
    %v622 = vpop.f32.mrf.mxu0
    %v623 = vadd.f32 %v409, %v622
    %624 = vmatmul.f32.gmra.mxu0 %v509
    %v625 = vpop.f32.mrf.mxu0
    %v626 = vadd.f32 %v412, %v625
    %627 = vmatmul.f32.gmra.mxu0 %v512
    %v628 = vpop.f32.mrf.mxu0
    %v629 = vadd.f32 %v415, %v628
    %630 = vmatmul.f32.gmra.mxu0 %v515
    %v631 = vpop.f32.mrf.mxu0
    %v632 = vadd.f32 %v418, %v631
    %633 = vmatmul.f32.gmra.mxu0 %v518
    %v634 = vpop.f32.mrf.mxu0
    %v635 = vadd.f32 %v421, %v634
    %636 = vmatmul.f32.gmra.mxu0 %v521
    %v637 = vpop.f32.mrf.mxu0
    %v638 = vadd.f32 %v424, %v637
    %639 = vmatmul.f32.gmra.mxu0 %v524
    %v640 = vpop.f32.mrf.mxu0
    %v641 = vadd.f32 %v427, %v640
    %642 = vmatmul.f32.gmra.mxu0 %v527
    %v643 = vpop.f32.mrf.mxu0
    %v644 = vadd.f32 %v430, %v643
    %645 = vmatmul.f32.gmra.mxu0 %v530
    %v646 = vpop.f32.mrf.mxu0
    %v647 = vadd.f32 %v433, %v646
    %648 = vmatmul.f32.gmra.mxu0 %v533
    %v649 = vpop.f32.mrf.mxu0
    %v650 = vadd.f32 %v436, %v649
    %651 = vmatmul.f32.gmra.mxu0 %v536
    %v652 = vpop.f32.mrf.mxu0
    %v653 = vadd.f32 %v439, %v652
    %654 = vmatmul.f32.gmra.mxu0 %v539
    %v655 = vpop.f32.mrf.mxu0
    %v656 = vadd.f32 %v442, %v655
    %657 = vmatmul.f32.gmra.mxu0 %v542
    %v658 = vpop.f32.mrf.mxu0
    %v659 = vadd.f32 %v445, %v658
    %660 = vmatmul.f32.gmra.mxu0 %v545
    %v661 = vpop.f32.mrf.mxu0
    %v662 = vadd.f32 %v448, %v661
    %663 = vmatmul.f32.gmra.mxu0 %v548
    %v664 = vpop.f32.mrf.mxu0
    %v665 = vadd.f32 %v451, %v664
    %666 = vmatmul.f32.gmra.mxu0 %v551
    %v667 = vpop.f32.mrf.mxu0
    %v668 = vadd.f32 %v454, %v667
    %669 = vmatmul.f32.gmra.mxu0 %v554
    %v670 = vpop.f32.mrf.mxu0
    %v671 = vadd.f32 %v457, %v670
    %672 = vmatmul.f32.gmra.mxu0 %v557
    %v673 = vpop.f32.mrf.mxu0
    %v674 = vadd.f32 %v460, %v673
    %675 = vmatmul.f32.gmra.mxu0 %v560
    %v676 = vpop.f32.mrf.mxu0
    %v677 = vadd.f32 %v463, %v676
    %678 = vmatmul.f32.gmra.mxu0 %v563
    %v679 = vpop.f32.mrf.mxu0
    %v680 = vadd.f32 %v466, %v679
    %681 = vmatmul.f32.gmra.mxu0 %v566
    %v682 = vpop.f32.mrf.mxu0
    %v683 = vadd.f32 %v469, %v682
    %684 = vmatmul.f32.gmra.mxu0 %v569
    %v685 = vpop.f32.mrf.mxu0
    %v686 = vadd.f32 %v472, %v685
    %687 = vdwg.mxu0
    %v688 = vld [vmem:[#allocation4] sm:$0x1]
    %v690 = vperm.slane %v688, 0
    %v692 = vadd.f32 %v593, %v690
    %v693 = vadd.f32 %v596, %v690
    %v694 = vadd.f32 %v599, %v690
    %v695 = vadd.f32 %v602, %v690
    %v696 = vadd.f32 %v605, %v690
    %v697 = vadd.f32 %v608, %v690
    %v698 = vadd.f32 %v611, %v690
    %v699 = vadd.f32 %v614, %v690
    %v700 = vadd.f32 %v617, %v690
    %v701 = vadd.f32 %v620, %v690
    %v702 = vadd.f32 %v623, %v690
    %v703 = vadd.f32 %v626, %v690
    %v704 = vadd.f32 %v629, %v690
    %v705 = vadd.f32 %v632, %v690
    %v706 = vadd.f32 %v635, %v690
    %v707 = vadd.f32 %v638, %v690
    %v708 = vadd.f32 %v641, %v690
    %v709 = vadd.f32 %v644, %v690
    %v710 = vadd.f32 %v647, %v690
    %v711 = vadd.f32 %v650, %v690
    %v712 = vadd.f32 %v653, %v690
    %v713 = vadd.f32 %v656, %v690
    %v714 = vadd.f32 %v659, %v690
    %v715 = vadd.f32 %v662, %v690
    %v716 = vadd.f32 %v665, %v690
    %v717 = vadd.f32 %v668, %v690
    %v718 = vadd.f32 %v671, %v690
    %v719 = vadd.f32 %v674, %v690
    %v720 = vadd.f32 %v677, %v690
    %v721 = vadd.f32 %v680, %v690
    %v722 = vadd.f32 %v683, %v690
    %v723 = vadd.f32 %v686, %v690
    %v724 = vmul.f32 %v692, 0.2
    %v725 = vmul.f32 %v693, 0.2
    %v726 = vmul.f32 %v694, 0.2
    %v727 = vmul.f32 %v695, 0.2
    %v728 = vmul.f32 %v696, 0.2
    %v729 = vmul.f32 %v697, 0.2
    %v730 = vmul.f32 %v698, 0.2
    %v731 = vmul.f32 %v699, 0.2
    %v732 = vmul.f32 %v700, 0.2
    %v733 = vmul.f32 %v701, 0.2
    %v734 = vmul.f32 %v702, 0.2
    %v735 = vmul.f32 %v703, 0.2
    %v736 = vmul.f32 %v704, 0.2
    %v737 = vmul.f32 %v705, 0.2
    %v738 = vmul.f32 %v706, 0.2
    %v739 = vmul.f32 %v707, 0.2
    %v740 = vmul.f32 %v708, 0.2
    %v741 = vmul.f32 %v709, 0.2
    %v742 = vmul.f32 %v710, 0.2
    %v743 = vmul.f32 %v711, 0.2
    %v744 = vmul.f32 %v712, 0.2
    %v745 = vmul.f32 %v713, 0.2
    %v746 = vmul.f32 %v714, 0.2
    %v747 = vmul.f32 %v715, 0.2
    %v748 = vmul.f32 %v716, 0.2
    %v749 = vmul.f32 %v717, 0.2
    %v750 = vmul.f32 %v718, 0.2
    %v751 = vmul.f32 %v719, 0.2
    %v752 = vmul.f32 %v720, 0.2
    %v753 = vmul.f32 %v721, 0.2
    %v754 = vmul.f32 %v722, 0.2
    %v755 = vmul.f32 %v723, 0.2
    %v756 = vmax.f32 %v692, %v724
    %v757 = vmax.f32 %v693, %v725
    %v758 = vmax.f32 %v694, %v726
    %v759 = vmax.f32 %v695, %v727
    %v760 = vmax.f32 %v696, %v728
    %v761 = vmax.f32 %v697, %v729
    %v762 = vmax.f32 %v698, %v730
    %v763 = vmax.f32 %v699, %v731
    %v764 = vmax.f32 %v700, %v732
    %v765 = vmax.f32 %v701, %v733
    %v766 = vmax.f32 %v702, %v734
    %v767 = vmax.f32 %v703, %v735
    %v768 = vmax.f32 %v704, %v736
    %v769 = vmax.f32 %v705, %v737
    %v770 = vmax.f32 %v706, %v738
    %v771 = vmax.f32 %v707, %v739
    %v772 = vmax.f32 %v708, %v740
    %v773 = vmax.f32 %v709, %v741
    %v774 = vmax.f32 %v710, %v742
    %v775 = vmax.f32 %v711, %v743
    %v776 = vmax.f32 %v712, %v744
    %v777 = vmax.f32 %v713, %v745
    %v778 = vmax.f32 %v714, %v746
    %v779 = vmax.f32 %v715, %v747
    %v780 = vmax.f32 %v716, %v748
    %v781 = vmax.f32 %v717, %v749
    %v782 = vmax.f32 %v718, %v750
    %v783 = vmax.f32 %v719, %v751
    %v784 = vmax.f32 %v720, %v752
    %v785 = vmax.f32 %v721, %v753
    %v786 = vmax.f32 %v722, %v754
    %v787 = vmax.f32 %v723, %v755
    %v788 = vld [vmem:[#allocation6] sm:$0xff]
    %v789 = vld [vmem:[#allocation6 + $0x8] sm:$0xff]
    %v790 = vld [vmem:[#allocation6 + $0x10] sm:$0xff]
    %v791 = vld [vmem:[#allocation6 + $0x18] sm:$0xff]
    %v792 = vld [vmem:[#allocation6 + $0x20] sm:$0xff]
    %v793 = vld [vmem:[#allocation6 + $0x28] sm:$0xff]
    %v794 = vld [vmem:[#allocation6 + $0x30] sm:$0xff]
    %v795 = vld [vmem:[#allocation6 + $0x38] sm:$0xff]
    %v796 = vld [vmem:[#allocation6 + $0x40] sm:$0xff]
    %v797 = vld [vmem:[#allocation6 + $0x48] sm:$0xff]
    %v798 = vld [vmem:[#allocation6 + $0x50] sm:$0xff]
    %v799 = vld [vmem:[#allocation6 + $0x58] sm:$0xff]
    %v800 = vld [vmem:[#allocation6 + $0x60] sm:$0xff]
    %v801 = vld [vmem:[#allocation6 + $0x68] sm:$0xff]
    %v802 = vld [vmem:[#allocation6 + $0x70] sm:$0xff]
    %v803 = vld [vmem:[#allocation6 + $0x78] sm:$0xff]
    %v804 = vunpack.c.l.bf16 %v788
    %v805 = vunpack.c.h.bf16 %v788
    %v806 = vunpack.c.l.bf16 %v789
    %v807 = vunpack.c.h.bf16 %v789
    %v808 = vunpack.c.l.bf16 %v790
    %v809 = vunpack.c.h.bf16 %v790
    %v810 = vunpack.c.l.bf16 %v791
    %v811 = vunpack.c.h.bf16 %v791
    %v812 = vunpack.c.l.bf16 %v792
    %v813 = vunpack.c.h.bf16 %v792
    %v814 = vunpack.c.l.bf16 %v793
    %v815 = vunpack.c.h.bf16 %v793
    %v816 = vunpack.c.l.bf16 %v794
    %v817 = vunpack.c.h.bf16 %v794
    %v818 = vunpack.c.l.bf16 %v795
    %v819 = vunpack.c.h.bf16 %v795
    %v820 = vunpack.c.l.bf16 %v796
    %v821 = vunpack.c.h.bf16 %v796
    %v822 = vunpack.c.l.bf16 %v797
    %v823 = vunpack.c.h.bf16 %v797
    %v824 = vunpack.c.l.bf16 %v798
    %v825 = vunpack.c.h.bf16 %v798
    %v826 = vunpack.c.l.bf16 %v799
    %v827 = vunpack.c.h.bf16 %v799
    %v828 = vunpack.c.l.bf16 %v800
    %v829 = vunpack.c.h.bf16 %v800
    %v830 = vunpack.c.l.bf16 %v801
    %v831 = vunpack.c.h.bf16 %v801
    %v832 = vunpack.c.l.bf16 %v802
    %v833 = vunpack.c.h.bf16 %v802
    %v834 = vunpack.c.l.bf16 %v803
    %v835 = vunpack.c.h.bf16 %v803
    %836 = vmatpush.msra.mxu0 %v834
    %837 = vmatpush.msra.mxu0 %v832
    %838 = vmatpush.msra.mxu0 %v830
    %839 = vmatpush.msra.mxu0 %v828
    %840 = vmatpush.msra.mxu0 %v826
    %841 = vmatpush.msra.mxu0 %v824
    %842 = vmatpush.msra.mxu0 %v822
    %843 = vmatpush.msra.mxu0 %v820
    %844 = vmatpush.msra.mxu0 %v818
    %845 = vmatpush.msra.mxu0 %v816
    %846 = vmatpush.msra.mxu0 %v814
    %847 = vmatpush.msra.mxu0 %v812
    %848 = vmatpush.msra.mxu0 %v810
    %849 = vmatpush.msra.mxu0 %v808
    %850 = vmatpush.msra.mxu0 %v806
    %851 = vmatpush.msra.mxu0 %v804
    %852 = vmatmul.f32.gmra.mxu0 %v756
    %v853 = vpop.f32.mrf.mxu0
    %v854 = vadd.f32 0.0, %v853
    %855 = vmatmul.f32.gmra.mxu0 %v757
    %v856 = vpop.f32.mrf.mxu0
    %v857 = vadd.f32 0.0, %v856
    %858 = vmatmul.f32.gmra.mxu0 %v758
    %v859 = vpop.f32.mrf.mxu0
    %v860 = vadd.f32 0.0, %v859
    %861 = vmatmul.f32.gmra.mxu0 %v759
    %v862 = vpop.f32.mrf.mxu0
    %v863 = vadd.f32 0.0, %v862
    %864 = vmatmul.f32.gmra.mxu0 %v760
    %v865 = vpop.f32.mrf.mxu0
    %v866 = vadd.f32 0.0, %v865
    %867 = vmatmul.f32.gmra.mxu0 %v761
    %v868 = vpop.f32.mrf.mxu0
    %v869 = vadd.f32 0.0, %v868
    %870 = vmatmul.f32.gmra.mxu0 %v762
    %v871 = vpop.f32.mrf.mxu0
    %v872 = vadd.f32 0.0, %v871
    %873 = vmatmul.f32.gmra.mxu0 %v763
    %v874 = vpop.f32.mrf.mxu0
    %v875 = vadd.f32 0.0, %v874
    %876 = vmatmul.f32.gmra.mxu0 %v764
    %v877 = vpop.f32.mrf.mxu0
    %v878 = vadd.f32 0.0, %v877
    %879 = vmatmul.f32.gmra.mxu0 %v765
    %v880 = vpop.f32.mrf.mxu0
    %v881 = vadd.f32 0.0, %v880
    %882 = vmatmul.f32.gmra.mxu0 %v766
    %v883 = vpop.f32.mrf.mxu0
    %v884 = vadd.f32 0.0, %v883
    %885 = vmatmul.f32.gmra.mxu0 %v767
    %v886 = vpop.f32.mrf.mxu0
    %v887 = vadd.f32 0.0, %v886
    %888 = vmatmul.f32.gmra.mxu0 %v768
    %v889 = vpop.f32.mrf.mxu0
    %v890 = vadd.f32 0.0, %v889
    %891 = vmatmul.f32.gmra.mxu0 %v769
    %v892 = vpop.f32.mrf.mxu0
    %v893 = vadd.f32 0.0, %v892
    %894 = vmatmul.f32.gmra.mxu0 %v770
    %v895 = vpop.f32.mrf.mxu0
    %v896 = vadd.f32 0.0, %v895
    %897 = vmatmul.f32.gmra.mxu0 %v771
    %v898 = vpop.f32.mrf.mxu0
    %v899 = vadd.f32 0.0, %v898
    %900 = vmatmul.f32.gmra.mxu0 %v772
    %v901 = vpop.f32.mrf.mxu0
    %v902 = vadd.f32 0.0, %v901
    %903 = vmatmul.f32.gmra.mxu0 %v773
    %v904 = vpop.f32.mrf.mxu0
    %v905 = vadd.f32 0.0, %v904
    %906 = vmatmul.f32.gmra.mxu0 %v774
    %v907 = vpop.f32.mrf.mxu0
    %v908 = vadd.f32 0.0, %v907
    %909 = vmatmul.f32.gmra.mxu0 %v775
    %v910 = vpop.f32.mrf.mxu0
    %v911 = vadd.f32 0.0, %v910
    %912 = vmatmul.f32.gmra.mxu0 %v776
    %v913 = vpop.f32.mrf.mxu0
    %v914 = vadd.f32 0.0, %v913
    %915 = vmatmul.f32.gmra.mxu0 %v777
    %v916 = vpop.f32.mrf.mxu0
    %v917 = vadd.f32 0.0, %v916
    %918 = vmatmul.f32.gmra.mxu0 %v778
    %v919 = vpop.f32.mrf.mxu0
    %v920 = vadd.f32 0.0, %v919
    %921 = vmatmul.f32.gmra.mxu0 %v779
    %v922 = vpop.f32.mrf.mxu0
    %v923 = vadd.f32 0.0, %v922
    %924 = vmatmul.f32.gmra.mxu0 %v780
    %v925 = vpop.f32.mrf.mxu0
    %v926 = vadd.f32 0.0, %v925
    %927 = vmatmul.f32.gmra.mxu0 %v781
    %v928 = vpop.f32.mrf.mxu0
    %v929 = vadd.f32 0.0, %v928
    %930 = vmatmul.f32.gmra.mxu0 %v782
    %v931 = vpop.f32.mrf.mxu0
    %v932 = vadd.f32 0.0, %v931
    %933 = vmatmul.f32.gmra.mxu0 %v783
    %v934 = vpop.f32.mrf.mxu0
    %v935 = vadd.f32 0.0, %v934
    %936 = vmatmul.f32.gmra.mxu0 %v784
    %v937 = vpop.f32.mrf.mxu0
    %v938 = vadd.f32 0.0, %v937
    %939 = vmatmul.f32.gmra.mxu0 %v785
    %v940 = vpop.f32.mrf.mxu0
    %v941 = vadd.f32 0.0, %v940
    %942 = vmatmul.f32.gmra.mxu0 %v786
    %v943 = vpop.f32.mrf.mxu0
    %v944 = vadd.f32 0.0, %v943
    %945 = vmatmul.f32.gmra.mxu0 %v787
    %v946 = vpop.f32.mrf.mxu0
    %v947 = vadd.f32 0.0, %v946
    %948 = vdwg.mxu0
    %949 = vmatpush.msra.mxu0 %v835
    %950 = vmatpush.msra.mxu0 %v833
    %951 = vmatpush.msra.mxu0 %v831
    %952 = vmatpush.msra.mxu0 %v829
    %953 = vmatpush.msra.mxu0 %v827
    %954 = vmatpush.msra.mxu0 %v825
    %955 = vmatpush.msra.mxu0 %v823
    %956 = vmatpush.msra.mxu0 %v821
    %957 = vmatpush.msra.mxu0 %v819
    %958 = vmatpush.msra.mxu0 %v817
    %959 = vmatpush.msra.mxu0 %v815
    %960 = vmatpush.msra.mxu0 %v813
    %961 = vmatpush.msra.mxu0 %v811
    %962 = vmatpush.msra.mxu0 %v809
    %963 = vmatpush.msra.mxu0 %v807
    %964 = vmatpush.msra.mxu0 %v805
    %965 = vmatmul.f32.gmra.mxu0 %v756
    %v966 = vpop.f32.mrf.mxu0
    %v967 = vadd.f32 0.0, %v966
    %968 = vmatmul.f32.gmra.mxu0 %v757
    %v969 = vpop.f32.mrf.mxu0
    %v970 = vadd.f32 0.0, %v969
    %971 = vmatmul.f32.gmra.mxu0 %v758
    %v972 = vpop.f32.mrf.mxu0
    %v973 = vadd.f32 0.0, %v972
    %974 = vmatmul.f32.gmra.mxu0 %v759
    %v975 = vpop.f32.mrf.mxu0
    %v976 = vadd.f32 0.0, %v975
    %977 = vmatmul.f32.gmra.mxu0 %v760
    %v978 = vpop.f32.mrf.mxu0
    %v979 = vadd.f32 0.0, %v978
    %980 = vmatmul.f32.gmra.mxu0 %v761
    %v981 = vpop.f32.mrf.mxu0
    %v982 = vadd.f32 0.0, %v981
    %983 = vmatmul.f32.gmra.mxu0 %v762
    %v984 = vpop.f32.mrf.mxu0
    %v985 = vadd.f32 0.0, %v984
    %986 = vmatmul.f32.gmra.mxu0 %v763
    %v987 = vpop.f32.mrf.mxu0
    %v988 = vadd.f32 0.0, %v987
    %989 = vmatmul.f32.gmra.mxu0 %v764
    %v990 = vpop.f32.mrf.mxu0
    %v991 = vadd.f32 0.0, %v990
    %992 = vmatmul.f32.gmra.mxu0 %v765
    %v993 = vpop.f32.mrf.mxu0
    %v994 = vadd.f32 0.0, %v993
    %995 = vmatmul.f32.gmra.mxu0 %v766
    %v996 = vpop.f32.mrf.mxu0
    %v997 = vadd.f32 0.0, %v996
    %998 = vmatmul.f32.gmra.mxu0 %v767
    %v999 = vpop.f32.mrf.mxu0
    %v1000 = vadd.f32 0.0, %v999
    %1001 = vmatmul.f32.gmra.mxu0 %v768
    %v1002 = vpop.f32.mrf.mxu0
    %v1003 = vadd.f32 0.0, %v1002
    %1004 = vmatmul.f32.gmra.mxu0 %v769
    %v1005 = vpop.f32.mrf.mxu0
    %v1006 = vadd.f32 0.0, %v1005
    %1007 = vmatmul.f32.gmra.mxu0 %v770
    %v1008 = vpop.f32.mrf.mxu0
    %v1009 = vadd.f32 0.0, %v1008
    %1010 = vmatmul.f32.gmra.mxu0 %v771
    %v1011 = vpop.f32.mrf.mxu0
    %v1012 = vadd.f32 0.0, %v1011
    %1013 = vmatmul.f32.gmra.mxu0 %v772
    %v1014 = vpop.f32.mrf.mxu0
    %v1015 = vadd.f32 0.0, %v1014
    %1016 = vmatmul.f32.gmra.mxu0 %v773
    %v1017 = vpop.f32.mrf.mxu0
    %v1018 = vadd.f32 0.0, %v1017
    %1019 = vmatmul.f32.gmra.mxu0 %v774
    %v1020 = vpop.f32.mrf.mxu0
    %v1021 = vadd.f32 0.0, %v1020
    %1022 = vmatmul.f32.gmra.mxu0 %v775
    %v1023 = vpop.f32.mrf.mxu0
    %v1024 = vadd.f32 0.0, %v1023
    %1025 = vmatmul.f32.gmra.mxu0 %v776
    %v1026 = vpop.f32.mrf.mxu0
    %v1027 = vadd.f32 0.0, %v1026
    %1028 = vmatmul.f32.gmra.mxu0 %v777
    %v1029 = vpop.f32.mrf.mxu0
    %v1030 = vadd.f32 0.0, %v1029
    %1031 = vmatmul.f32.gmra.mxu0 %v778
    %v1032 = vpop.f32.mrf.mxu0
    %v1033 = vadd.f32 0.0, %v1032
    %1034 = vmatmul.f32.gmra.mxu0 %v779
    %v1035 = vpop.f32.mrf.mxu0
    %v1036 = vadd.f32 0.0, %v1035
    %1037 = vmatmul.f32.gmra.mxu0 %v780
    %v1038 = vpop.f32.mrf.mxu0
    %v1039 = vadd.f32 0.0, %v1038
    %1040 = vmatmul.f32.gmra.mxu0 %v781
    %v1041 = vpop.f32.mrf.mxu0
    %v1042 = vadd.f32 0.0, %v1041
    %1043 = vmatmul.f32.gmra.mxu0 %v782
    %v1044 = vpop.f32.mrf.mxu0
    %v1045 = vadd.f32 0.0, %v1044
    %1046 = vmatmul.f32.gmra.mxu0 %v783
    %v1047 = vpop.f32.mrf.mxu0
    %v1048 = vadd.f32 0.0, %v1047
    %1049 = vmatmul.f32.gmra.mxu0 %v784
    %v1050 = vpop.f32.mrf.mxu0
    %v1051 = vadd.f32 0.0, %v1050
    %1052 = vmatmul.f32.gmra.mxu0 %v785
    %v1053 = vpop.f32.mrf.mxu0
    %v1054 = vadd.f32 0.0, %v1053
    %1055 = vmatmul.f32.gmra.mxu0 %v786
    %v1056 = vpop.f32.mrf.mxu0
    %v1057 = vadd.f32 0.0, %v1056
    %1058 = vmatmul.f32.gmra.mxu0 %v787
    %v1059 = vpop.f32.mrf.mxu0
    %v1060 = vadd.f32 0.0, %v1059
    %1061 = vdwg.mxu0
    %v1062 = vadd.f32 %v854, %v857
    %v1063 = vadd.f32 %v1062, %v860
    %v1064 = vadd.f32 %v1063, %v863
    %v1065 = vadd.f32 %v1064, %v866
    %v1066 = vadd.f32 %v1065, %v869
    %v1067 = vadd.f32 %v1066, %v872
    %v1068 = vadd.f32 %v1067, %v875
    %v1069 = vadd.f32 %v1068, %v878
    %v1070 = vadd.f32 %v1069, %v881
    %v1071 = vadd.f32 %v1070, %v884
    %v1072 = vadd.f32 %v1071, %v887
    %v1073 = vadd.f32 %v1072, %v890
    %v1074 = vadd.f32 %v1073, %v893
    %v1075 = vadd.f32 %v1074, %v896
    %v1076 = vadd.f32 %v1075, %v899
    %v1077 = vadd.f32 %v1076, %v902
    %v1078 = vadd.f32 %v1077, %v905
    %v1079 = vadd.f32 %v1078, %v908
    %v1080 = vadd.f32 %v1079, %v911
    %v1081 = vadd.f32 %v1080, %v914
    %v1082 = vadd.f32 %v1081, %v917
    %v1083 = vadd.f32 %v1082, %v920
    %v1084 = vadd.f32 %v1083, %v923
    %v1085 = vadd.f32 %v1084, %v926
    %v1086 = vadd.f32 %v1085, %v929
    %v1087 = vadd.f32 %v1086, %v932
    %v1088 = vadd.f32 %v1087, %v935
    %v1089 = vadd.f32 %v1088, %v938
    %v1090 = vadd.f32 %v1089, %v941
    %v1091 = vadd.f32 %v1090, %v944
    %v1092 = vadd.f32 %v1091, %v947
    %v1093 = vrot.slane %v1092, 4
    %v1094 = vadd.f32 %v1092, %v1093
    %v1095 = vrot.slane %v1094, 2
    %v1096 = vadd.f32 %v1094, %v1095
    %v1097 = vrot.slane %v1096, 1
    %v1098 = vadd.f32 %v1096, %v1097
    %v1099 = vadd.f32 %v967, %v970
    %v1100 = vadd.f32 %v1099, %v973
    %v1101 = vadd.f32 %v1100, %v976
    %v1102 = vadd.f32 %v1101, %v979
    %v1103 = vadd.f32 %v1102, %v982
    %v1104 = vadd.f32 %v1103, %v985
    %v1105 = vadd.f32 %v1104, %v988
    %v1106 = vadd.f32 %v1105, %v991
    %v1107 = vadd.f32 %v1106, %v994
    %v1108 = vadd.f32 %v1107, %v997
    %v1109 = vadd.f32 %v1108, %v1000
    %v1110 = vadd.f32 %v1109, %v1003
    %v1111 = vadd.f32 %v1110, %v1006
    %v1112 = vadd.f32 %v1111, %v1009
    %v1113 = vadd.f32 %v1112, %v1012
    %v1114 = vadd.f32 %v1113, %v1015
    %v1115 = vadd.f32 %v1114, %v1018
    %v1116 = vadd.f32 %v1115, %v1021
    %v1117 = vadd.f32 %v1116, %v1024
    %v1118 = vadd.f32 %v1117, %v1027
    %v1119 = vadd.f32 %v1118, %v1030
    %v1120 = vadd.f32 %v1119, %v1033
    %v1121 = vadd.f32 %v1120, %v1036
    %v1122 = vadd.f32 %v1121, %v1039
    %v1123 = vadd.f32 %v1122, %v1042
    %v1124 = vadd.f32 %v1123, %v1045
    %v1125 = vadd.f32 %v1124, %v1048
    %v1126 = vadd.f32 %v1125, %v1051
    %v1127 = vadd.f32 %v1126, %v1054
    %v1128 = vadd.f32 %v1127, %v1057
    %v1129 = vadd.f32 %v1128, %v1060
    %v1130 = vrot.slane %v1129, 4
    %v1131 = vadd.f32 %v1129, %v1130
    %v1132 = vrot.slane %v1131, 2
    %v1133 = vadd.f32 %v1131, %v1132
    %v1134 = vrot.slane %v1133, 1
    %v1135 = vadd.f32 %v1133, %v1134
    %v1136 = vrcp.pop 256.0
    %v1137 = vmul.f32 256.0, %v1136
    %v1138 = vsub.f32 1.0, %v1137
    %v1139 = vmul.f32 %v1136, %v1138
    %v1140 = vadd.f32 %v1136, %v1139
    %vm1141 = vweird.f32 %v1136
    %v1142 = vsel %vm1141, %v1136, %v1140
    %v1143 = vmul.f32 %v1098, %v1142
    %v1144 = vmul.f32 %v1135, %v1142
    %v1145 = vmul.f32 %v854, %v854
    %v1146 = vmul.f32 %v967, %v967
    %v1147 = vmul.f32 %v857, %v857
    %v1148 = vmul.f32 %v970, %v970
    %v1149 = vmul.f32 %v860, %v860
    %v1150 = vmul.f32 %v973, %v973
    %v1151 = vmul.f32 %v863, %v863
    %v1152 = vmul.f32 %v976, %v976
    %v1153 = vmul.f32 %v866, %v866
    %v1154 = vmul.f32 %v979, %v979
    %v1155 = vmul.f32 %v869, %v869
    %v1156 = vmul.f32 %v982, %v982
    %v1157 = vmul.f32 %v872, %v872
    %v1158 = vmul.f32 %v985, %v985
    %v1159 = vmul.f32 %v875, %v875
    %v1160 = vmul.f32 %v988, %v988
    %v1161 = vmul.f32 %v878, %v878
    %v1162 = vmul.f32 %v991, %v991
    %v1163 = vmul.f32 %v881, %v881
    %v1164 = vmul.f32 %v994, %v994
    %v1165 = vmul.f32 %v884, %v884
    %v1166 = vmul.f32 %v997, %v997
    %v1167 = vmul.f32 %v887, %v887
    %v1168 = vmul.f32 %v1000, %v1000
    %v1169 = vmul.f32 %v890, %v890
    %v1170 = vmul.f32 %v1003, %v1003
    %v1171 = vmul.f32 %v893, %v893
    %v1172 = vmul.f32 %v1006, %v1006
    %v1173 = vmul.f32 %v896, %v896
    %v1174 = vmul.f32 %v1009, %v1009
    %v1175 = vmul.f32 %v899, %v899
    %v1176 = vmul.f32 %v1012, %v1012
    %v1177 = vmul.f32 %v902, %v902
    %v1178 = vmul.f32 %v1015, %v1015
    %v1179 = vmul.f32 %v905, %v905
    %v1180 = vmul.f32 %v1018, %v1018
    %v1181 = vmul.f32 %v908, %v908
    %v1182 = vmul.f32 %v1021, %v1021
    %v1183 = vmul.f32 %v911, %v911
    %v1184 = vmul.f32 %v1024, %v1024
    %v1185 = vmul.f32 %v914, %v914
    %v1186 = vmul.f32 %v1027, %v1027
    %v1187 = vmul.f32 %v917, %v917
    %v1188 = vmul.f32 %v1030, %v1030
    %v1189 = vmul.f32 %v920, %v920
    %v1190 = vmul.f32 %v1033, %v1033
    %v1191 = vmul.f32 %v923, %v923
    %v1192 = vmul.f32 %v1036, %v1036
    %v1193 = vmul.f32 %v926, %v926
    %v1194 = vmul.f32 %v1039, %v1039
    %v1195 = vmul.f32 %v929, %v929
    %v1196 = vmul.f32 %v1042, %v1042
    %v1197 = vmul.f32 %v932, %v932
    %v1198 = vmul.f32 %v1045, %v1045
    %v1199 = vmul.f32 %v935, %v935
    %v1200 = vmul.f32 %v1048, %v1048
    %v1201 = vmul.f32 %v938, %v938
    %v1202 = vmul.f32 %v1051, %v1051
    %v1203 = vmul.f32 %v941, %v941
    %v1204 = vmul.f32 %v1054, %v1054
    %v1205 = vmul.f32 %v944, %v944
    %v1206 = vmul.f32 %v1057, %v1057
    %v1207 = vmul.f32 %v947, %v947
    %v1208 = vmul.f32 %v1060, %v1060
    %v1209 = vadd.f32 %v1145, %v1147
    %v1210 = vadd.f32 %v1209, %v1149
    %v1211 = vadd.f32 %v1210, %v1151
    %v1212 = vadd.f32 %v1211, %v1153
    %v1213 = vadd.f32 %v1212, %v1155
    %v1214 = vadd.f32 %v1213, %v1157
    %v1215 = vadd.f32 %v1214, %v1159
    %v1216 = vadd.f32 %v1215, %v1161
    %v1217 = vadd.f32 %v1216, %v1163
    %v1218 = vadd.f32 %v1217, %v1165
    %v1219 = vadd.f32 %v1218, %v1167
    %v1220 = vadd.f32 %v1219, %v1169
    %v1221 = vadd.f32 %v1220, %v1171
    %v1222 = vadd.f32 %v1221, %v1173
    %v1223 = vadd.f32 %v1222, %v1175
    %v1224 = vadd.f32 %v1223, %v1177
    %v1225 = vadd.f32 %v1224, %v1179
    %v1226 = vadd.f32 %v1225, %v1181
    %v1227 = vadd.f32 %v1226, %v1183
    %v1228 = vadd.f32 %v1227, %v1185
    %v1229 = vadd.f32 %v1228, %v1187
    %v1230 = vadd.f32 %v1229, %v1189
    %v1231 = vadd.f32 %v1230, %v1191
    %v1232 = vadd.f32 %v1231, %v1193
    %v1233 = vadd.f32 %v1232, %v1195
    %v1234 = vadd.f32 %v1233, %v1197
    %v1235 = vadd.f32 %v1234, %v1199
    %v1236 = vadd.f32 %v1235, %v1201
    %v1237 = vadd.f32 %v1236, %v1203
    %v1238 = vadd.f32 %v1237, %v1205
    %v1239 = vadd.f32 %v1238, %v1207
    %v1240 = vrot.slane %v1239, 4
    %v1241 = vadd.f32 %v1239, %v1240
    %v1242 = vrot.slane %v1241, 2
    %v1243 = vadd.f32 %v1241, %v1242
    %v1244 = vrot.slane %v1243, 1
    %v1245 = vadd.f32 %v1243, %v1244
    %v1246 = vadd.f32 %v1146, %v1148
    %v1247 = vadd.f32 %v1246, %v1150
    %v1248 = vadd.f32 %v1247, %v1152
    %v1249 = vadd.f32 %v1248, %v1154
    %v1250 = vadd.f32 %v1249, %v1156
    %v1251 = vadd.f32 %v1250, %v1158
    %v1252 = vadd.f32 %v1251, %v1160
    %v1253 = vadd.f32 %v1252, %v1162
    %v1254 = vadd.f32 %v1253, %v1164
    %v1255 = vadd.f32 %v1254, %v1166
    %v1256 = vadd.f32 %v1255, %v1168
    %v1257 = vadd.f32 %v1256, %v1170
    %v1258 = vadd.f32 %v1257, %v1172
    %v1259 = vadd.f32 %v1258, %v1174
    %v1260 = vadd.f32 %v1259, %v1176
    %v1261 = vadd.f32 %v1260, %v1178
    %v1262 = vadd.f32 %v1261, %v1180
    %v1263 = vadd.f32 %v1262, %v1182
    %v1264 = vadd.f32 %v1263, %v1184
    %v1265 = vadd.f32 %v1264, %v1186
    %v1266 = vadd.f32 %v1265, %v1188
    %v1267 = vadd.f32 %v1266, %v1190
    %v1268 = vadd.f32 %v1267, %v1192
    %v1269 = vadd.f32 %v1268, %v1194
    %v1270 = vadd.f32 %v1269, %v1196
    %v1271 = vadd.f32 %v1270, %v1198
    %v1272 = vadd.f32 %v1271, %v1200
    %v1273 = vadd.f32 %v1272, %v1202
    %v1274 = vadd.f32 %v1273, %v1204
    %v1275 = vadd.f32 %v1274, %v1206
    %v1276 = vadd.f32 %v1275, %v1208
    %v1277 = vrot.slane %v1276, 4
    %v1278 = vadd.f32 %v1276, %v1277
    %v1279 = vrot.slane %v1278, 2
    %v1280 = vadd.f32 %v1278, %v1279
    %v1281 = vrot.slane %v1280, 1
    %v1282 = vadd.f32 %v1280, %v1281
    %v1283 = vmul.f32 %v1245, %v1142
    %v1284 = vmul.f32 %v1282, %v1142
    %v1285 = vmul.f32 %v1143, %v1143
    %v1286 = vmul.f32 %v1144, %v1144
    %v1287 = vsub.f32 %v1283, %v1285
    %v1288 = vsub.f32 %v1284, %v1286
    %v1289 = vld [vmem:[#allocation7] sm:$0x3]
    %v1290 = vadd.f32 %v1287, 0.8
    %v1291 = vadd.f32 %v1288, 0.8
    %v1292 = vrsqrt.pop %v1290
    %v1293 = vmul.f32 %v1292, %v1290
    %v1294 = vmul.f32 %v1293, %v1292
    %v1295 = vmul.f32 0.5, %v1294
    %v1296 = vsub.f32 1.5, %v1295
    %v1297 = vmul.f32 %v1292, %v1296
    %vm1298 = vweird.f32 %v1290
    %vm1299 = vweird.f32 %v1292
    %vm1300 = vmor %vm1298, %vm1299
    %v1301 = vsel %vm1300, %v1292, %v1297
    %v1302 = vrsqrt.pop %v1291
    %v1303 = vmul.f32 %v1302, %v1291
    %v1304 = vmul.f32 %v1303, %v1302
    %v1305 = vmul.f32 0.5, %v1304
    %v1306 = vsub.f32 1.5, %v1305
    %v1307 = vmul.f32 %v1302, %v1306
    %vm1308 = vweird.f32 %v1291
    %vm1309 = vweird.f32 %v1302
    %vm1310 = vmor %vm1308, %vm1309
    %v1311 = vsel %vm1310, %v1302, %v1307
    %v1314 = vrot.slane %v1311, 7
    %vm1315 = vcmask 1040384
    %v1316 = vsel %vm1315, %v1301, %v1314
    %v1318 = vmul.f32 %v1289, %v1316
    %v1319 = vld [vmem:[#allocation9] sm:$0x3]
    %v1321 = vperm.slane %v1318, 0
    %v1322 = vperm.slane %v1318, 1
    %v1325 = vmul.f32 %v1143, %v1321
    %v1326 = vmul.f32 %v1144, %v1322
    %v1329 = vrot.slane %v1326, 7
    %v1330 = vsel %vm1315, %v1325, %v1329
    %v1332 = vsub.f32 %v1319, %v1330
    %v1333 = vmul.f32 %v854, %v1321
    %v1334 = vmul.f32 %v967, %v1322
    %v1335 = vmul.f32 %v857, %v1321
    %v1336 = vmul.f32 %v970, %v1322
    %v1337 = vmul.f32 %v860, %v1321
    %v1338 = vmul.f32 %v973, %v1322
    %v1339 = vmul.f32 %v863, %v1321
    %v1340 = vmul.f32 %v976, %v1322
    %v1341 = vmul.f32 %v866, %v1321
    %v1342 = vmul.f32 %v979, %v1322
    %v1343 = vmul.f32 %v869, %v1321
    %v1344 = vmul.f32 %v982, %v1322
    %v1345 = vmul.f32 %v872, %v1321
    %v1346 = vmul.f32 %v985, %v1322
    %v1347 = vmul.f32 %v875, %v1321
    %v1348 = vmul.f32 %v988, %v1322
    %v1349 = vmul.f32 %v878, %v1321
    %v1350 = vmul.f32 %v991, %v1322
    %v1351 = vmul.f32 %v881, %v1321
    %v1352 = vmul.f32 %v994, %v1322
    %v1353 = vmul.f32 %v884, %v1321
    %v1354 = vmul.f32 %v997, %v1322
    %v1355 = vmul.f32 %v887, %v1321
    %v1356 = vmul.f32 %v1000, %v1322
    %v1357 = vmul.f32 %v890, %v1321
    %v1358 = vmul.f32 %v1003, %v1322
    %v1359 = vmul.f32 %v893, %v1321
    %v1360 = vmul.f32 %v1006, %v1322
    %v1361 = vmul.f32 %v896, %v1321
    %v1362 = vmul.f32 %v1009, %v1322
    %v1363 = vmul.f32 %v899, %v1321
    %v1364 = vmul.f32 %v1012, %v1322
    %v1365 = vmul.f32 %v902, %v1321
    %v1366 = vmul.f32 %v1015, %v1322
    %v1367 = vmul.f32 %v905, %v1321
    %v1368 = vmul.f32 %v1018, %v1322
    %v1369 = vmul.f32 %v908, %v1321
    %v1370 = vmul.f32 %v1021, %v1322
    %v1371 = vmul.f32 %v911, %v1321
    %v1372 = vmul.f32 %v1024, %v1322
    %v1373 = vmul.f32 %v914, %v1321
    %v1374 = vmul.f32 %v1027, %v1322
    %v1375 = vmul.f32 %v917, %v1321
    %v1376 = vmul.f32 %v1030, %v1322
    %v1377 = vmul.f32 %v920, %v1321
    %v1378 = vmul.f32 %v1033, %v1322
    %v1379 = vmul.f32 %v923, %v1321
    %v1380 = vmul.f32 %v1036, %v1322
    %v1381 = vmul.f32 %v926, %v1321
    %v1382 = vmul.f32 %v1039, %v1322
    %v1383 = vmul.f32 %v929, %v1321
    %v1384 = vmul.f32 %v1042, %v1322
    %v1385 = vmul.f32 %v932, %v1321
    %v1386 = vmul.f32 %v1045, %v1322
    %v1387 = vmul.f32 %v935, %v1321
    %v1388 = vmul.f32 %v1048, %v1322
    %v1389 = vmul.f32 %v938, %v1321
    %v1390 = vmul.f32 %v1051, %v1322
    %v1391 = vmul.f32 %v941, %v1321
    %v1392 = vmul.f32 %v1054, %v1322
    %v1393 = vmul.f32 %v944, %v1321
    %v1394 = vmul.f32 %v1057, %v1322
    %v1395 = vmul.f32 %v947, %v1321
    %v1396 = vmul.f32 %v1060, %v1322
    %v1398 = vperm.slane %v1332, 0
    %v1399 = vperm.slane %v1332, 1
    %v1402 = vadd.f32 %v1333, %v1398
    %v1403 = vadd.f32 %v1334, %v1399
    %v1404 = vadd.f32 %v1335, %v1398
    %v1405 = vadd.f32 %v1336, %v1399
    %v1406 = vadd.f32 %v1337, %v1398
    %v1407 = vadd.f32 %v1338, %v1399
    %v1408 = vadd.f32 %v1339, %v1398
    %v1409 = vadd.f32 %v1340, %v1399
    %v1410 = vadd.f32 %v1341, %v1398
    %v1411 = vadd.f32 %v1342, %v1399
    %v1412 = vadd.f32 %v1343, %v1398
    %v1413 = vadd.f32 %v1344, %v1399
    %v1414 = vadd.f32 %v1345, %v1398
    %v1415 = vadd.f32 %v1346, %v1399
    %v1416 = vadd.f32 %v1347, %v1398
    %v1417 = vadd.f32 %v1348, %v1399
    %v1418 = vadd.f32 %v1349, %v1398
    %v1419 = vadd.f32 %v1350, %v1399
    %v1420 = vadd.f32 %v1351, %v1398
    %v1421 = vadd.f32 %v1352, %v1399
    %v1422 = vadd.f32 %v1353, %v1398
    %v1423 = vadd.f32 %v1354, %v1399
    %v1424 = vadd.f32 %v1355, %v1398
    %v1425 = vadd.f32 %v1356, %v1399
    %v1426 = vadd.f32 %v1357, %v1398
    %v1427 = vadd.f32 %v1358, %v1399
    %v1428 = vadd.f32 %v1359, %v1398
    %v1429 = vadd.f32 %v1360, %v1399
    %v1430 = vadd.f32 %v1361, %v1398
    %v1431 = vadd.f32 %v1362, %v1399
    %v1432 = vadd.f32 %v1363, %v1398
    %v1433 = vadd.f32 %v1364, %v1399
    %v1434 = vadd.f32 %v1365, %v1398
    %v1435 = vadd.f32 %v1366, %v1399
    %v1436 = vadd.f32 %v1367, %v1398
    %v1437 = vadd.f32 %v1368, %v1399
    %v1438 = vadd.f32 %v1369, %v1398
    %v1439 = vadd.f32 %v1370, %v1399
    %v1440 = vadd.f32 %v1371, %v1398
    %v1441 = vadd.f32 %v1372, %v1399
    %v1442 = vadd.f32 %v1373, %v1398
    %v1443 = vadd.f32 %v1374, %v1399
    %v1444 = vadd.f32 %v1375, %v1398
    %v1445 = vadd.f32 %v1376, %v1399
    %v1446 = vadd.f32 %v1377, %v1398
    %v1447 = vadd.f32 %v1378, %v1399
    %v1448 = vadd.f32 %v1379, %v1398
    %v1449 = vadd.f32 %v1380, %v1399
    %v1450 = vadd.f32 %v1381, %v1398
    %v1451 = vadd.f32 %v1382, %v1399
    %v1452 = vadd.f32 %v1383, %v1398
    %v1453 = vadd.f32 %v1384, %v1399
    %v1454 = vadd.f32 %v1385, %v1398
    %v1455 = vadd.f32 %v1386, %v1399
    %v1456 = vadd.f32 %v1387, %v1398
    %v1457 = vadd.f32 %v1388, %v1399
    %v1458 = vadd.f32 %v1389, %v1398
    %v1459 = vadd.f32 %v1390, %v1399
    %v1460 = vadd.f32 %v1391, %v1398
    %v1461 = vadd.f32 %v1392, %v1399
    %v1462 = vadd.f32 %v1393, %v1398
    %v1463 = vadd.f32 %v1394, %v1399
    %v1464 = vadd.f32 %v1395, %v1398
    %v1465 = vadd.f32 %v1396, %v1399
    %v1466 = vmul.f32 %v1402, 0.2
    %v1467 = vmul.f32 %v1403, 0.2
    %v1468 = vmul.f32 %v1404, 0.2
    %v1469 = vmul.f32 %v1405, 0.2
    %v1470 = vmul.f32 %v1406, 0.2
    %v1471 = vmul.f32 %v1407, 0.2
    %v1472 = vmul.f32 %v1408, 0.2
    %v1473 = vmul.f32 %v1409, 0.2
    %v1474 = vmul.f32 %v1410, 0.2
    %v1475 = vmul.f32 %v1411, 0.2
    %v1476 = vmul.f32 %v1412, 0.2
    %v1477 = vmul.f32 %v1413, 0.2
    %v1478 = vmul.f32 %v1414, 0.2
    %v1479 = vmul.f32 %v1415, 0.2
    %v1480 = vmul.f32 %v1416, 0.2
    %v1481 = vmul.f32 %v1417, 0.2
    %v1482 = vmul.f32 %v1418, 0.2
    %v1483 = vmul.f32 %v1419, 0.2
    %v1484 = vmul.f32 %v1420, 0.2
    %v1485 = vmul.f32 %v1421, 0.2
    %v1486 = vmul.f32 %v1422, 0.2
    %v1487 = vmul.f32 %v1423, 0.2
    %v1488 = vmul.f32 %v1424, 0.2
    %v1489 = vmul.f32 %v1425, 0.2
    %v1490 = vmul.f32 %v1426, 0.2
    %v1491 = vmul.f32 %v1427, 0.2
    %v1492 = vmul.f32 %v1428, 0.2
    %v1493 = vmul.f32 %v1429, 0.2
    %v1494 = vmul.f32 %v1430, 0.2
    %v1495 = vmul.f32 %v1431, 0.2
    %v1496 = vmul.f32 %v1432, 0.2
    %v1497 = vmul.f32 %v1433, 0.2
    %v1498 = vmul.f32 %v1434, 0.2
    %v1499 = vmul.f32 %v1435, 0.2
    %v1500 = vmul.f32 %v1436, 0.2
    %v1501 = vmul.f32 %v1437, 0.2
    %v1502 = vmul.f32 %v1438, 0.2
    %v1503 = vmul.f32 %v1439, 0.2
    %v1504 = vmul.f32 %v1440, 0.2
    %v1505 = vmul.f32 %v1441, 0.2
    %v1506 = vmul.f32 %v1442, 0.2
    %v1507 = vmul.f32 %v1443, 0.2
    %v1508 = vmul.f32 %v1444, 0.2
    %v1509 = vmul.f32 %v1445, 0.2
    %v1510 = vmul.f32 %v1446, 0.2
    %v1511 = vmul.f32 %v1447, 0.2
    %v1512 = vmul.f32 %v1448, 0.2
    %v1513 = vmul.f32 %v1449, 0.2
    %v1514 = vmul.f32 %v1450, 0.2
    %v1515 = vmul.f32 %v1451, 0.2
    %v1516 = vmul.f32 %v1452, 0.2
    %v1517 = vmul.f32 %v1453, 0.2
    %v1518 = vmul.f32 %v1454, 0.2
    %v1519 = vmul.f32 %v1455, 0.2
    %v1520 = vmul.f32 %v1456, 0.2
    %v1521 = vmul.f32 %v1457, 0.2
    %v1522 = vmul.f32 %v1458, 0.2
    %v1523 = vmul.f32 %v1459, 0.2
    %v1524 = vmul.f32 %v1460, 0.2
    %v1525 = vmul.f32 %v1461, 0.2
    %v1526 = vmul.f32 %v1462, 0.2
    %v1527 = vmul.f32 %v1463, 0.2
    %v1528 = vmul.f32 %v1464, 0.2
    %v1529 = vmul.f32 %v1465, 0.2
    %v1530 = vmax.f32 %v1402, %v1466
    %v1531 = vmax.f32 %v1403, %v1467
    %v1532 = vmax.f32 %v1404, %v1468
    %v1533 = vmax.f32 %v1405, %v1469
    %v1534 = vmax.f32 %v1406, %v1470
    %v1535 = vmax.f32 %v1407, %v1471
    %v1536 = vmax.f32 %v1408, %v1472
    %v1537 = vmax.f32 %v1409, %v1473
    %v1538 = vmax.f32 %v1410, %v1474
    %v1539 = vmax.f32 %v1411, %v1475
    %v1540 = vmax.f32 %v1412, %v1476
    %v1541 = vmax.f32 %v1413, %v1477
    %v1542 = vmax.f32 %v1414, %v1478
    %v1543 = vmax.f32 %v1415, %v1479
    %v1544 = vmax.f32 %v1416, %v1480
    %v1545 = vmax.f32 %v1417, %v1481
    %v1546 = vmax.f32 %v1418, %v1482
    %v1547 = vmax.f32 %v1419, %v1483
    %v1548 = vmax.f32 %v1420, %v1484
    %v1549 = vmax.f32 %v1421, %v1485
    %v1550 = vmax.f32 %v1422, %v1486
    %v1551 = vmax.f32 %v1423, %v1487
    %v1552 = vmax.f32 %v1424, %v1488
    %v1553 = vmax.f32 %v1425, %v1489
    %v1554 = vmax.f32 %v1426, %v1490
    %v1555 = vmax.f32 %v1427, %v1491
    %v1556 = vmax.f32 %v1428, %v1492
    %v1557 = vmax.f32 %v1429, %v1493
    %v1558 = vmax.f32 %v1430, %v1494
    %v1559 = vmax.f32 %v1431, %v1495
    %v1560 = vmax.f32 %v1432, %v1496
    %v1561 = vmax.f32 %v1433, %v1497
    %v1562 = vmax.f32 %v1434, %v1498
    %v1563 = vmax.f32 %v1435, %v1499
    %v1564 = vmax.f32 %v1436, %v1500
    %v1565 = vmax.f32 %v1437, %v1501
    %v1566 = vmax.f32 %v1438, %v1502
    %v1567 = vmax.f32 %v1439, %v1503
    %v1568 = vmax.f32 %v1440, %v1504
    %v1569 = vmax.f32 %v1441, %v1505
    %v1570 = vmax.f32 %v1442, %v1506
    %v1571 = vmax.f32 %v1443, %v1507
    %v1572 = vmax.f32 %v1444, %v1508
    %v1573 = vmax.f32 %v1445, %v1509
    %v1574 = vmax.f32 %v1446, %v1510
    %v1575 = vmax.f32 %v1447, %v1511
    %v1576 = vmax.f32 %v1448, %v1512
    %v1577 = vmax.f32 %v1449, %v1513
    %v1578 = vmax.f32 %v1450, %v1514
    %v1579 = vmax.f32 %v1451, %v1515
    %v1580 = vmax.f32 %v1452, %v1516
    %v1581 = vmax.f32 %v1453, %v1517
    %v1582 = vmax.f32 %v1454, %v1518
    %v1583 = vmax.f32 %v1455, %v1519
    %v1584 = vmax.f32 %v1456, %v1520
    %v1585 = vmax.f32 %v1457, %v1521
    %v1586 = vmax.f32 %v1458, %v1522
    %v1587 = vmax.f32 %v1459, %v1523
    %v1588 = vmax.f32 %v1460, %v1524
    %v1589 = vmax.f32 %v1461, %v1525
    %v1590 = vmax.f32 %v1462, %v1526
    %v1591 = vmax.f32 %v1463, %v1527
    %v1592 = vmax.f32 %v1464, %v1528
    %v1593 = vmax.f32 %v1465, %v1529
    %v1594 = vld [vmem:[%s8] sm:$0xff]
    %v1595 = vld [vmem:[%s8 + $0x8] sm:$0xff]
    %v1596 = vld [vmem:[%s8 + $0x10] sm:$0xff]
    %v1597 = vld [vmem:[%s8 + $0x18] sm:$0xff]
    %v1598 = vld [vmem:[%s8 + $0x20] sm:$0xff]
    %v1599 = vld [vmem:[%s8 + $0x28] sm:$0xff]
    %v1600 = vld [vmem:[%s8 + $0x30] sm:$0xff]
    %v1601 = vld [vmem:[%s8 + $0x38] sm:$0xff]
    %v1602 = vld [vmem:[%s8 + $0x40] sm:$0xff]
    %v1603 = vld [vmem:[%s8 + $0x48] sm:$0xff]
    %v1604 = vld [vmem:[%s8 + $0x50] sm:$0xff]
    %v1605 = vld [vmem:[%s8 + $0x58] sm:$0xff]
    %v1606 = vld [vmem:[%s8 + $0x60] sm:$0xff]
    %v1607 = vld [vmem:[%s8 + $0x68] sm:$0xff]
    %v1608 = vld [vmem:[%s8 + $0x70] sm:$0xff]
    %v1609 = vld [vmem:[%s8 + $0x78] sm:$0xff]
    %v1610 = vld [vmem:[%s8 + $0x80] sm:$0xff]
    %v1611 = vld [vmem:[%s8 + $0x88] sm:$0xff]
    %v1612 = vld [vmem:[%s8 + $0x90] sm:$0xff]
    %v1613 = vld [vmem:[%s8 + $0x98] sm:$0xff]
    %v1614 = vld [vmem:[%s8 + $0xa0] sm:$0xff]
    %v1615 = vld [vmem:[%s8 + $0xa8] sm:$0xff]
    %v1616 = vld [vmem:[%s8 + $0xb0] sm:$0xff]
    %v1617 = vld [vmem:[%s8 + $0xb8] sm:$0xff]
    %v1618 = vld [vmem:[%s8 + $0xc0] sm:$0xff]
    %v1619 = vld [vmem:[%s8 + $0xc8] sm:$0xff]
    %v1620 = vld [vmem:[%s8 + $0xd0] sm:$0xff]
    %v1621 = vld [vmem:[%s8 + $0xd8] sm:$0xff]
    %v1622 = vld [vmem:[%s8 + $0xe0] sm:$0xff]
    %v1623 = vld [vmem:[%s8 + $0xe8] sm:$0xff]
    %v1624 = vld [vmem:[%s8 + $0xf0] sm:$0xff]
    %v1625 = vld [vmem:[%s8 + $0xf8] sm:$0xff]
    %v1626 = vld [vmem:[%s8 + $0x100] sm:$0xff]
    %v1627 = vld [vmem:[%s8 + $0x108] sm:$0xff]
    %v1628 = vld [vmem:[%s8 + $0x110] sm:$0xff]
    %v1629 = vld [vmem:[%s8 + $0x118] sm:$0xff]
    %v1630 = vld [vmem:[%s8 + $0x120] sm:$0xff]
    %v1631 = vld [vmem:[%s8 + $0x128] sm:$0xff]
    %v1632 = vld [vmem:[%s8 + $0x130] sm:$0xff]
    %v1633 = vld [vmem:[%s8 + $0x138] sm:$0xff]
    %v1634 = vld [vmem:[%s8 + $0x140] sm:$0xff]
    %v1635 = vld [vmem:[%s8 + $0x148] sm:$0xff]
    %v1636 = vld [vmem:[%s8 + $0x150] sm:$0xff]
    %v1637 = vld [vmem:[%s8 + $0x158] sm:$0xff]
    %v1638 = vld [vmem:[%s8 + $0x160] sm:$0xff]
    %v1639 = vld [vmem:[%s8 + $0x168] sm:$0xff]
    %v1640 = vld [vmem:[%s8 + $0x170] sm:$0xff]
    %v1641 = vld [vmem:[%s8 + $0x178] sm:$0xff]
    %v1642 = vld [vmem:[%s8 + $0x180] sm:$0xff]
    %v1643 = vld [vmem:[%s8 + $0x188] sm:$0xff]
    %v1644 = vld [vmem:[%s8 + $0x190] sm:$0xff]
    %v1645 = vld [vmem:[%s8 + $0x198] sm:$0xff]
    %v1646 = vld [vmem:[%s8 + $0x1a0] sm:$0xff]
    %v1647 = vld [vmem:[%s8 + $0x1a8] sm:$0xff]
    %v1648 = vld [vmem:[%s8 + $0x1b0] sm:$0xff]
    %v1649 = vld [vmem:[%s8 + $0x1b8] sm:$0xff]
    %v1650 = vld [vmem:[%s8 + $0x1c0] sm:$0xff]
    %v1651 = vld [vmem:[%s8 + $0x1c8] sm:$0xff]
    %v1652 = vld [vmem:[%s8 + $0x1d0] sm:$0xff]
    %v1653 = vld [vmem:[%s8 + $0x1d8] sm:$0xff]
    %v1654 = vld [vmem:[%s8 + $0x1e0] sm:$0xff]
    %v1655 = vld [vmem:[%s8 + $0x1e8] sm:$0xff]
    %v1656 = vld [vmem:[%s8 + $0x1f0] sm:$0xff]
    %v1657 = vld [vmem:[%s8 + $0x1f8] sm:$0xff]
    %v1658 = vunpack.c.l.bf16 %v1594
    %v1659 = vunpack.c.h.bf16 %v1594
    %v1660 = vunpack.c.l.bf16 %v1595
    %v1661 = vunpack.c.h.bf16 %v1595
    %v1662 = vunpack.c.l.bf16 %v1596
    %v1663 = vunpack.c.h.bf16 %v1596
    %v1664 = vunpack.c.l.bf16 %v1597
    %v1665 = vunpack.c.h.bf16 %v1597
    %v1666 = vunpack.c.l.bf16 %v1598
    %v1667 = vunpack.c.h.bf16 %v1598
    %v1668 = vunpack.c.l.bf16 %v1599
    %v1669 = vunpack.c.h.bf16 %v1599
    %v1670 = vunpack.c.l.bf16 %v1600
    %v1671 = vunpack.c.h.bf16 %v1600
    %v1672 = vunpack.c.l.bf16 %v1601
    %v1673 = vunpack.c.h.bf16 %v1601
    %v1674 = vunpack.c.l.bf16 %v1602
    %v1675 = vunpack.c.h.bf16 %v1602
    %v1676 = vunpack.c.l.bf16 %v1603
    %v1677 = vunpack.c.h.bf16 %v1603
    %v1678 = vunpack.c.l.bf16 %v1604
    %v1679 = vunpack.c.h.bf16 %v1604
    %v1680 = vunpack.c.l.bf16 %v1605
    %v1681 = vunpack.c.h.bf16 %v1605
    %v1682 = vunpack.c.l.bf16 %v1606
    %v1683 = vunpack.c.h.bf16 %v1606
    %v1684 = vunpack.c.l.bf16 %v1607
    %v1685 = vunpack.c.h.bf16 %v1607
    %v1686 = vunpack.c.l.bf16 %v1608
    %v1687 = vunpack.c.h.bf16 %v1608
    %v1688 = vunpack.c.l.bf16 %v1609
    %v1689 = vunpack.c.h.bf16 %v1609
    %v1690 = vunpack.c.l.bf16 %v1610
    %v1691 = vunpack.c.h.bf16 %v1610
    %v1692 = vunpack.c.l.bf16 %v1611
    %v1693 = vunpack.c.h.bf16 %v1611
    %v1694 = vunpack.c.l.bf16 %v1612
    %v1695 = vunpack.c.h.bf16 %v1612
    %v1696 = vunpack.c.l.bf16 %v1613
    %v1697 = vunpack.c.h.bf16 %v1613
    %v1698 = vunpack.c.l.bf16 %v1614
    %v1699 = vunpack.c.h.bf16 %v1614
    %v1700 = vunpack.c.l.bf16 %v1615
    %v1701 = vunpack.c.h.bf16 %v1615
    %v1702 = vunpack.c.l.bf16 %v1616
    %v1703 = vunpack.c.h.bf16 %v1616
    %v1704 = vunpack.c.l.bf16 %v1617
    %v1705 = vunpack.c.h.bf16 %v1617
    %v1706 = vunpack.c.l.bf16 %v1618
    %v1707 = vunpack.c.h.bf16 %v1618
    %v1708 = vunpack.c.l.bf16 %v1619
    %v1709 = vunpack.c.h.bf16 %v1619
    %v1710 = vunpack.c.l.bf16 %v1620
    %v1711 = vunpack.c.h.bf16 %v1620
    %v1712 = vunpack.c.l.bf16 %v1621
    %v1713 = vunpack.c.h.bf16 %v1621
    %v1714 = vunpack.c.l.bf16 %v1622
    %v1715 = vunpack.c.h.bf16 %v1622
    %v1716 = vunpack.c.l.bf16 %v1623
    %v1717 = vunpack.c.h.bf16 %v1623
    %v1718 = vunpack.c.l.bf16 %v1624
    %v1719 = vunpack.c.h.bf16 %v1624
    %v1720 = vunpack.c.l.bf16 %v1625
    %v1721 = vunpack.c.h.bf16 %v1625
    %v1722 = vunpack.c.l.bf16 %v1626
    %v1723 = vunpack.c.h.bf16 %v1626
    %v1724 = vunpack.c.l.bf16 %v1627
    %v1725 = vunpack.c.h.bf16 %v1627
    %v1726 = vunpack.c.l.bf16 %v1628
    %v1727 = vunpack.c.h.bf16 %v1628
    %v1728 = vunpack.c.l.bf16 %v1629
    %v1729 = vunpack.c.h.bf16 %v1629
    %v1730 = vunpack.c.l.bf16 %v1630
    %v1731 = vunpack.c.h.bf16 %v1630
    %v1732 = vunpack.c.l.bf16 %v1631
    %v1733 = vunpack.c.h.bf16 %v1631
    %v1734 = vunpack.c.l.bf16 %v1632
    %v1735 = vunpack.c.h.bf16 %v1632
    %v1736 = vunpack.c.l.bf16 %v1633
    %v1737 = vunpack.c.h.bf16 %v1633
    %v1738 = vunpack.c.l.bf16 %v1634
    %v1739 = vunpack.c.h.bf16 %v1634
    %v1740 = vunpack.c.l.bf16 %v1635
    %v1741 = vunpack.c.h.bf16 %v1635
    %v1742 = vunpack.c.l.bf16 %v1636
    %v1743 = vunpack.c.h.bf16 %v1636
    %v1744 = vunpack.c.l.bf16 %v1637
    %v1745 = vunpack.c.h.bf16 %v1637
    %v1746 = vunpack.c.l.bf16 %v1638
    %v1747 = vunpack.c.h.bf16 %v1638
    %v1748 = vunpack.c.l.bf16 %v1639
    %v1749 = vunpack.c.h.bf16 %v1639
    %v1750 = vunpack.c.l.bf16 %v1640
    %v1751 = vunpack.c.h.bf16 %v1640
    %v1752 = vunpack.c.l.bf16 %v1641
    %v1753 = vunpack.c.h.bf16 %v1641
    %v1754 = vunpack.c.l.bf16 %v1642
    %v1755 = vunpack.c.h.bf16 %v1642
    %v1756 = vunpack.c.l.bf16 %v1643
    %v1757 = vunpack.c.h.bf16 %v1643
    %v1758 = vunpack.c.l.bf16 %v1644
    %v1759 = vunpack.c.h.bf16 %v1644
    %v1760 = vunpack.c.l.bf16 %v1645
    %v1761 = vunpack.c.h.bf16 %v1645
    %v1762 = vunpack.c.l.bf16 %v1646
    %v1763 = vunpack.c.h.bf16 %v1646
    %v1764 = vunpack.c.l.bf16 %v1647
    %v1765 = vunpack.c.h.bf16 %v1647
    %v1766 = vunpack.c.l.bf16 %v1648
    %v1767 = vunpack.c.h.bf16 %v1648
    %v1768 = vunpack.c.l.bf16 %v1649
    %v1769 = vunpack.c.h.bf16 %v1649
    %v1770 = vunpack.c.l.bf16 %v1650
    %v1771 = vunpack.c.h.bf16 %v1650
    %v1772 = vunpack.c.l.bf16 %v1651
    %v1773 = vunpack.c.h.bf16 %v1651
    %v1774 = vunpack.c.l.bf16 %v1652
    %v1775 = vunpack.c.h.bf16 %v1652
    %v1776 = vunpack.c.l.bf16 %v1653
    %v1777 = vunpack.c.h.bf16 %v1653
    %v1778 = vunpack.c.l.bf16 %v1654
    %v1779 = vunpack.c.h.bf16 %v1654
    %v1780 = vunpack.c.l.bf16 %v1655
    %v1781 = vunpack.c.h.bf16 %v1655
    %v1782 = vunpack.c.l.bf16 %v1656
    %v1783 = vunpack.c.h.bf16 %v1656
    %v1784 = vunpack.c.l.bf16 %v1657
    %v1785 = vunpack.c.h.bf16 %v1657
    %1786 = vmatpush.msra.mxu0 %v1718
    %1787 = vmatpush.msra.mxu0 %v1714
    %1788 = vmatpush.msra.mxu0 %v1710
    %1789 = vmatpush.msra.mxu0 %v1706
    %1790 = vmatpush.msra.mxu0 %v1702
    %1791 = vmatpush.msra.mxu0 %v1698
    %1792 = vmatpush.msra.mxu0 %v1694
    %1793 = vmatpush.msra.mxu0 %v1690
    %1794 = vmatpush.msra.mxu0 %v1686
    %1795 = vmatpush.msra.mxu0 %v1682
    %1796 = vmatpush.msra.mxu0 %v1678
    %1797 = vmatpush.msra.mxu0 %v1674
    %1798 = vmatpush.msra.mxu0 %v1670
    %1799 = vmatpush.msra.mxu0 %v1666
    %1800 = vmatpush.msra.mxu0 %v1662
    %1801 = vmatpush.msra.mxu0 %v1658
    %1802 = vmatmul.f32.gmra.mxu0 %v1530
    %v1803 = vpop.f32.mrf.mxu0
    %v1804 = vadd.f32 0.0, %v1803
    %1805 = vmatmul.f32.gmra.mxu0 %v1532
    %v1806 = vpop.f32.mrf.mxu0
    %v1807 = vadd.f32 0.0, %v1806
    %1808 = vmatmul.f32.gmra.mxu0 %v1534
    %v1809 = vpop.f32.mrf.mxu0
    %v1810 = vadd.f32 0.0, %v1809
    %1811 = vmatmul.f32.gmra.mxu0 %v1536
    %v1812 = vpop.f32.mrf.mxu0
    %v1813 = vadd.f32 0.0, %v1812
    %1814 = vmatmul.f32.gmra.mxu0 %v1538
    %v1815 = vpop.f32.mrf.mxu0
    %v1816 = vadd.f32 0.0, %v1815
    %1817 = vmatmul.f32.gmra.mxu0 %v1540
    %v1818 = vpop.f32.mrf.mxu0
    %v1819 = vadd.f32 0.0, %v1818
    %1820 = vmatmul.f32.gmra.mxu0 %v1542
    %v1821 = vpop.f32.mrf.mxu0
    %v1822 = vadd.f32 0.0, %v1821
    %1823 = vmatmul.f32.gmra.mxu0 %v1544
    %v1824 = vpop.f32.mrf.mxu0
    %v1825 = vadd.f32 0.0, %v1824
    %1826 = vmatmul.f32.gmra.mxu0 %v1546
    %v1827 = vpop.f32.mrf.mxu0
    %v1828 = vadd.f32 0.0, %v1827
    %1829 = vmatmul.f32.gmra.mxu0 %v1548
    %v1830 = vpop.f32.mrf.mxu0
    %v1831 = vadd.f32 0.0, %v1830
    %1832 = vmatmul.f32.gmra.mxu0 %v1550
    %v1833 = vpop.f32.mrf.mxu0
    %v1834 = vadd.f32 0.0, %v1833
    %1835 = vmatmul.f32.gmra.mxu0 %v1552
    %v1836 = vpop.f32.mrf.mxu0
    %v1837 = vadd.f32 0.0, %v1836
    %1838 = vmatmul.f32.gmra.mxu0 %v1554
    %v1839 = vpop.f32.mrf.mxu0
    %v1840 = vadd.f32 0.0, %v1839
    %1841 = vmatmul.f32.gmra.mxu0 %v1556
    %v1842 = vpop.f32.mrf.mxu0
    %v1843 = vadd.f32 0.0, %v1842
    %1844 = vmatmul.f32.gmra.mxu0 %v1558
    %v1845 = vpop.f32.mrf.mxu0
    %v1846 = vadd.f32 0.0, %v1845
    %1847 = vmatmul.f32.gmra.mxu0 %v1560
    %v1848 = vpop.f32.mrf.mxu0
    %v1849 = vadd.f32 0.0, %v1848
    %1850 = vmatmul.f32.gmra.mxu0 %v1562
    %v1851 = vpop.f32.mrf.mxu0
    %v1852 = vadd.f32 0.0, %v1851
    %1853 = vmatmul.f32.gmra.mxu0 %v1564
    %v1854 = vpop.f32.mrf.mxu0
    %v1855 = vadd.f32 0.0, %v1854
    %1856 = vmatmul.f32.gmra.mxu0 %v1566
    %v1857 = vpop.f32.mrf.mxu0
    %v1858 = vadd.f32 0.0, %v1857
    %1859 = vmatmul.f32.gmra.mxu0 %v1568
    %v1860 = vpop.f32.mrf.mxu0
    %v1861 = vadd.f32 0.0, %v1860
    %1862 = vmatmul.f32.gmra.mxu0 %v1570
    %v1863 = vpop.f32.mrf.mxu0
    %v1864 = vadd.f32 0.0, %v1863
    %1865 = vmatmul.f32.gmra.mxu0 %v1572
    %v1866 = vpop.f32.mrf.mxu0
    %v1867 = vadd.f32 0.0, %v1866
    %1868 = vmatmul.f32.gmra.mxu0 %v1574
    %v1869 = vpop.f32.mrf.mxu0
    %v1870 = vadd.f32 0.0, %v1869
    %1871 = vmatmul.f32.gmra.mxu0 %v1576
    %v1872 = vpop.f32.mrf.mxu0
    %v1873 = vadd.f32 0.0, %v1872
    %1874 = vmatmul.f32.gmra.mxu0 %v1578
    %v1875 = vpop.f32.mrf.mxu0
    %v1876 = vadd.f32 0.0, %v1875
    %1877 = vmatmul.f32.gmra.mxu0 %v1580
    %v1878 = vpop.f32.mrf.mxu0
    %v1879 = vadd.f32 0.0, %v1878
    %1880 = vmatmul.f32.gmra.mxu0 %v1582
    %v1881 = vpop.f32.mrf.mxu0
    %v1882 = vadd.f32 0.0, %v1881
    %1883 = vmatmul.f32.gmra.mxu0 %v1584
    %v1884 = vpop.f32.mrf.mxu0
    %v1885 = vadd.f32 0.0, %v1884
    %1886 = vmatmul.f32.gmra.mxu0 %v1586
    %v1887 = vpop.f32.mrf.mxu0
    %v1888 = vadd.f32 0.0, %v1887
    %1889 = vmatmul.f32.gmra.mxu0 %v1588
    %v1890 = vpop.f32.mrf.mxu0
    %v1891 = vadd.f32 0.0, %v1890
    %1892 = vmatmul.f32.gmra.mxu0 %v1590
    %v1893 = vpop.f32.mrf.mxu0
    %v1894 = vadd.f32 0.0, %v1893
    %1895 = vmatmul.f32.gmra.mxu0 %v1592
    %v1896 = vpop.f32.mrf.mxu0
    %v1897 = vadd.f32 0.0, %v1896
    %1898 = vdwg.mxu0
    %1899 = vmatpush.msra.mxu0 %v1782
    %1900 = vmatpush.msra.mxu0 %v1778
    %1901 = vmatpush.msra.mxu0 %v1774
    %1902 = vmatpush.msra.mxu0 %v1770
    %1903 = vmatpush.msra.mxu0 %v1766
    %1904 = vmatpush.msra.mxu0 %v1762
    %1905 = vmatpush.msra.mxu0 %v1758
    %1906 = vmatpush.msra.mxu0 %v1754
    %1907 = vmatpush.msra.mxu0 %v1750
    %1908 = vmatpush.msra.mxu0 %v1746
    %1909 = vmatpush.msra.mxu0 %v1742
    %1910 = vmatpush.msra.mxu0 %v1738
    %1911 = vmatpush.msra.mxu0 %v1734
    %1912 = vmatpush.msra.mxu0 %v1730
    %1913 = vmatpush.msra.mxu0 %v1726
    %1914 = vmatpush.msra.mxu0 %v1722
    %1915 = vmatmul.f32.gmra.mxu0 %v1531
    %v1916 = vpop.f32.mrf.mxu0
    %v1917 = vadd.f32 %v1804, %v1916
    %1918 = vmatmul.f32.gmra.mxu0 %v1533
    %v1919 = vpop.f32.mrf.mxu0
    %v1920 = vadd.f32 %v1807, %v1919
    %1921 = vmatmul.f32.gmra.mxu0 %v1535
    %v1922 = vpop.f32.mrf.mxu0
    %v1923 = vadd.f32 %v1810, %v1922
    %1924 = vmatmul.f32.gmra.mxu0 %v1537
    %v1925 = vpop.f32.mrf.mxu0
    %v1926 = vadd.f32 %v1813, %v1925
    %1927 = vmatmul.f32.gmra.mxu0 %v1539
    %v1928 = vpop.f32.mrf.mxu0
    %v1929 = vadd.f32 %v1816, %v1928
    %1930 = vmatmul.f32.gmra.mxu0 %v1541
    %v1931 = vpop.f32.mrf.mxu0
    %v1932 = vadd.f32 %v1819, %v1931
    %1933 = vmatmul.f32.gmra.mxu0 %v1543
    %v1934 = vpop.f32.mrf.mxu0
    %v1935 = vadd.f32 %v1822, %v1934
    %1936 = vmatmul.f32.gmra.mxu0 %v1545
    %v1937 = vpop.f32.mrf.mxu0
    %v1938 = vadd.f32 %v1825, %v1937
    %1939 = vmatmul.f32.gmra.mxu0 %v1547
    %v1940 = vpop.f32.mrf.mxu0
    %v1941 = vadd.f32 %v1828, %v1940
    %1942 = vmatmul.f32.gmra.mxu0 %v1549
    %v1943 = vpop.f32.mrf.mxu0
    %v1944 = vadd.f32 %v1831, %v1943
    %1945 = vmatmul.f32.gmra.mxu0 %v1551
    %v1946 = vpop.f32.mrf.mxu0
    %v1947 = vadd.f32 %v1834, %v1946
    %1948 = vmatmul.f32.gmra.mxu0 %v1553
    %v1949 = vpop.f32.mrf.mxu0
    %v1950 = vadd.f32 %v1837, %v1949
    %1951 = vmatmul.f32.gmra.mxu0 %v1555
    %v1952 = vpop.f32.mrf.mxu0
    %v1953 = vadd.f32 %v1840, %v1952
    %1954 = vmatmul.f32.gmra.mxu0 %v1557
    %v1955 = vpop.f32.mrf.mxu0
    %v1956 = vadd.f32 %v1843, %v1955
    %1957 = vmatmul.f32.gmra.mxu0 %v1559
    %v1958 = vpop.f32.mrf.mxu0
    %v1959 = vadd.f32 %v1846, %v1958
    %1960 = vmatmul.f32.gmra.mxu0 %v1561
    %v1961 = vpop.f32.mrf.mxu0
    %v1962 = vadd.f32 %v1849, %v1961
    %1963 = vmatmul.f32.gmra.mxu0 %v1563
    %v1964 = vpop.f32.mrf.mxu0
    %v1965 = vadd.f32 %v1852, %v1964
    %1966 = vmatmul.f32.gmra.mxu0 %v1565
    %v1967 = vpop.f32.mrf.mxu0
    %v1968 = vadd.f32 %v1855, %v1967
    %1969 = vmatmul.f32.gmra.mxu0 %v1567
    %v1970 = vpop.f32.mrf.mxu0
    %v1971 = vadd.f32 %v1858, %v1970
    %1972 = vmatmul.f32.gmra.mxu0 %v1569
    %v1973 = vpop.f32.mrf.mxu0
    %v1974 = vadd.f32 %v1861, %v1973
    %1975 = vmatmul.f32.gmra.mxu0 %v1571
    %v1976 = vpop.f32.mrf.mxu0
    %v1977 = vadd.f32 %v1864, %v1976
    %1978 = vmatmul.f32.gmra.mxu0 %v1573
    %v1979 = vpop.f32.mrf.mxu0
    %v1980 = vadd.f32 %v1867, %v1979
    %1981 = vmatmul.f32.gmra.mxu0 %v1575
    %v1982 = vpop.f32.mrf.mxu0
    %v1983 = vadd.f32 %v1870, %v1982
    %1984 = vmatmul.f32.gmra.mxu0 %v1577
    %v1985 = vpop.f32.mrf.mxu0
    %v1986 = vadd.f32 %v1873, %v1985
    %1987 = vmatmul.f32.gmra.mxu0 %v1579
    %v1988 = vpop.f32.mrf.mxu0
    %v1989 = vadd.f32 %v1876, %v1988
    %1990 = vmatmul.f32.gmra.mxu0 %v1581
    %v1991 = vpop.f32.mrf.mxu0
    %v1992 = vadd.f32 %v1879, %v1991
    %1993 = vmatmul.f32.gmra.mxu0 %v1583
    %v1994 = vpop.f32.mrf.mxu0
    %v1995 = vadd.f32 %v1882, %v1994
    %1996 = vmatmul.f32.gmra.mxu0 %v1585
    %v1997 = vpop.f32.mrf.mxu0
    %v1998 = vadd.f32 %v1885, %v1997
    %1999 = vmatmul.f32.gmra.mxu0 %v1587
    %v2000 = vpop.f32.mrf.mxu0
    %v2001 = vadd.f32 %v1888, %v2000
    %2002 = vmatmul.f32.gmra.mxu0 %v1589
    %v2003 = vpop.f32.mrf.mxu0
    %v2004 = vadd.f32 %v1891, %v2003
    %2005 = vmatmul.f32.gmra.mxu0 %v1591
    %v2006 = vpop.f32.mrf.mxu0
    %v2007 = vadd.f32 %v1894, %v2006
    %2008 = vmatmul.f32.gmra.mxu0 %v1593
    %v2009 = vpop.f32.mrf.mxu0
    %v2010 = vadd.f32 %v1897, %v2009
    %2011 = vdwg.mxu0
    %2012 = vmatpush.msra.mxu0 %v1719
    %2013 = vmatpush.msra.mxu0 %v1715
    %2014 = vmatpush.msra.mxu0 %v1711
    %2015 = vmatpush.msra.mxu0 %v1707
    %2016 = vmatpush.msra.mxu0 %v1703
    %2017 = vmatpush.msra.mxu0 %v1699
    %2018 = vmatpush.msra.mxu0 %v1695
    %2019 = vmatpush.msra.mxu0 %v1691
    %2020 = vmatpush.msra.mxu0 %v1687
    %2021 = vmatpush.msra.mxu0 %v1683
    %2022 = vmatpush.msra.mxu0 %v1679
    %2023 = vmatpush.msra.mxu0 %v1675
    %2024 = vmatpush.msra.mxu0 %v1671
    %2025 = vmatpush.msra.mxu0 %v1667
    %2026 = vmatpush.msra.mxu0 %v1663
    %2027 = vmatpush.msra.mxu0 %v1659
    %2028 = vmatmul.f32.gmra.mxu0 %v1530
    %v2029 = vpop.f32.mrf.mxu0
    %v2030 = vadd.f32 0.0, %v2029
    %2031 = vmatmul.f32.gmra.mxu0 %v1532
    %v2032 = vpop.f32.mrf.mxu0
    %v2033 = vadd.f32 0.0, %v2032
    %2034 = vmatmul.f32.gmra.mxu0 %v1534
    %v2035 = vpop.f32.mrf.mxu0
    %v2036 = vadd.f32 0.0, %v2035
    %2037 = vmatmul.f32.gmra.mxu0 %v1536
    %v2038 = vpop.f32.mrf.mxu0
    %v2039 = vadd.f32 0.0, %v2038
    %2040 = vmatmul.f32.gmra.mxu0 %v1538
    %v2041 = vpop.f32.mrf.mxu0
    %v2042 = vadd.f32 0.0, %v2041
    %2043 = vmatmul.f32.gmra.mxu0 %v1540
    %v2044 = vpop.f32.mrf.mxu0
    %v2045 = vadd.f32 0.0, %v2044
    %2046 = vmatmul.f32.gmra.mxu0 %v1542
    %v2047 = vpop.f32.mrf.mxu0
    %v2048 = vadd.f32 0.0, %v2047
    %2049 = vmatmul.f32.gmra.mxu0 %v1544
    %v2050 = vpop.f32.mrf.mxu0
    %v2051 = vadd.f32 0.0, %v2050
    %2052 = vmatmul.f32.gmra.mxu0 %v1546
    %v2053 = vpop.f32.mrf.mxu0
    %v2054 = vadd.f32 0.0, %v2053
    %2055 = vmatmul.f32.gmra.mxu0 %v1548
    %v2056 = vpop.f32.mrf.mxu0
    %v2057 = vadd.f32 0.0, %v2056
    %2058 = vmatmul.f32.gmra.mxu0 %v1550
    %v2059 = vpop.f32.mrf.mxu0
    %v2060 = vadd.f32 0.0, %v2059
    %2061 = vmatmul.f32.gmra.mxu0 %v1552
    %v2062 = vpop.f32.mrf.mxu0
    %v2063 = vadd.f32 0.0, %v2062
    %2064 = vmatmul.f32.gmra.mxu0 %v1554
    %v2065 = vpop.f32.mrf.mxu0
    %v2066 = vadd.f32 0.0, %v2065
    %2067 = vmatmul.f32.gmra.mxu0 %v1556
    %v2068 = vpop.f32.mrf.mxu0
    %v2069 = vadd.f32 0.0, %v2068
    %2070 = vmatmul.f32.gmra.mxu0 %v1558
    %v2071 = vpop.f32.mrf.mxu0
    %v2072 = vadd.f32 0.0, %v2071
    %2073 = vmatmul.f32.gmra.mxu0 %v1560
    %v2074 = vpop.f32.mrf.mxu0
    %v2075 = vadd.f32 0.0, %v2074
    %2076 = vmatmul.f32.gmra.mxu0 %v1562
    %v2077 = vpop.f32.mrf.mxu0
    %v2078 = vadd.f32 0.0, %v2077
    %2079 = vmatmul.f32.gmra.mxu0 %v1564
    %v2080 = vpop.f32.mrf.mxu0
    %v2081 = vadd.f32 0.0, %v2080
    %2082 = vmatmul.f32.gmra.mxu0 %v1566
    %v2083 = vpop.f32.mrf.mxu0
    %v2084 = vadd.f32 0.0, %v2083
    %2085 = vmatmul.f32.gmra.mxu0 %v1568
    %v2086 = vpop.f32.mrf.mxu0
    %v2087 = vadd.f32 0.0, %v2086
    %2088 = vmatmul.f32.gmra.mxu0 %v1570
    %v2089 = vpop.f32.mrf.mxu0
    %v2090 = vadd.f32 0.0, %v2089
    %2091 = vmatmul.f32.gmra.mxu0 %v1572
    %v2092 = vpop.f32.mrf.mxu0
    %v2093 = vadd.f32 0.0, %v2092
    %2094 = vmatmul.f32.gmra.mxu0 %v1574
    %v2095 = vpop.f32.mrf.mxu0
    %v2096 = vadd.f32 0.0, %v2095
    %2097 = vmatmul.f32.gmra.mxu0 %v1576
    %v2098 = vpop.f32.mrf.mxu0
    %v2099 = vadd.f32 0.0, %v2098
    %2100 = vmatmul.f32.gmra.mxu0 %v1578
    %v2101 = vpop.f32.mrf.mxu0
    %v2102 = vadd.f32 0.0, %v2101
    %2103 = vmatmul.f32.gmra.mxu0 %v1580
    %v2104 = vpop.f32.mrf.mxu0
    %v2105 = vadd.f32 0.0, %v2104
    %2106 = vmatmul.f32.gmra.mxu0 %v1582
    %v2107 = vpop.f32.mrf.mxu0
    %v2108 = vadd.f32 0.0, %v2107
    %2109 = vmatmul.f32.gmra.mxu0 %v1584
    %v2110 = vpop.f32.mrf.mxu0
    %v2111 = vadd.f32 0.0, %v2110
    %2112 = vmatmul.f32.gmra.mxu0 %v1586
    %v2113 = vpop.f32.mrf.mxu0
    %v2114 = vadd.f32 0.0, %v2113
    %2115 = vmatmul.f32.gmra.mxu0 %v1588
    %v2116 = vpop.f32.mrf.mxu0
    %v2117 = vadd.f32 0.0, %v2116
    %2118 = vmatmul.f32.gmra.mxu0 %v1590
    %v2119 = vpop.f32.mrf.mxu0
    %v2120 = vadd.f32 0.0, %v2119
    %2121 = vmatmul.f32.gmra.mxu0 %v1592
    %v2122 = vpop.f32.mrf.mxu0
    %v2123 = vadd.f32 0.0, %v2122
    %2124 = vdwg.mxu0
    %2125 = vmatpush.msra.mxu0 %v1783
    %2126 = vmatpush.msra.mxu0 %v1779
    %2127 = vmatpush.msra.mxu0 %v1775
    %2128 = vmatpush.msra.mxu0 %v1771
    %2129 = vmatpush.msra.mxu0 %v1767
    %2130 = vmatpush.msra.mxu0 %v1763
    %2131 = vmatpush.msra.mxu0 %v1759
    %2132 = vmatpush.msra.mxu0 %v1755
    %2133 = vmatpush.msra.mxu0 %v1751
    %2134 = vmatpush.msra.mxu0 %v1747
    %2135 = vmatpush.msra.mxu0 %v1743
    %2136 = vmatpush.msra.mxu0 %v1739
    %2137 = vmatpush.msra.mxu0 %v1735
    %2138 = vmatpush.msra.mxu0 %v1731
    %2139 = vmatpush.msra.mxu0 %v1727
    %2140 = vmatpush.msra.mxu0 %v1723
    %2141 = vmatmul.f32.gmra.mxu0 %v1531
    %v2142 = vpop.f32.mrf.mxu0
    %v2143 = vadd.f32 %v2030, %v2142
    %2144 = vmatmul.f32.gmra.mxu0 %v1533
    %v2145 = vpop.f32.mrf.mxu0
    %v2146 = vadd.f32 %v2033, %v2145
    %2147 = vmatmul.f32.gmra.mxu0 %v1535
    %v2148 = vpop.f32.mrf.mxu0
    %v2149 = vadd.f32 %v2036, %v2148
    %2150 = vmatmul.f32.gmra.mxu0 %v1537
    %v2151 = vpop.f32.mrf.mxu0
    %v2152 = vadd.f32 %v2039, %v2151
    %2153 = vmatmul.f32.gmra.mxu0 %v1539
    %v2154 = vpop.f32.mrf.mxu0
    %v2155 = vadd.f32 %v2042, %v2154
    %2156 = vmatmul.f32.gmra.mxu0 %v1541
    %v2157 = vpop.f32.mrf.mxu0
    %v2158 = vadd.f32 %v2045, %v2157
    %2159 = vmatmul.f32.gmra.mxu0 %v1543
    %v2160 = vpop.f32.mrf.mxu0
    %v2161 = vadd.f32 %v2048, %v2160
    %2162 = vmatmul.f32.gmra.mxu0 %v1545
    %v2163 = vpop.f32.mrf.mxu0
    %v2164 = vadd.f32 %v2051, %v2163
    %2165 = vmatmul.f32.gmra.mxu0 %v1547
    %v2166 = vpop.f32.mrf.mxu0
    %v2167 = vadd.f32 %v2054, %v2166
    %2168 = vmatmul.f32.gmra.mxu0 %v1549
    %v2169 = vpop.f32.mrf.mxu0
    %v2170 = vadd.f32 %v2057, %v2169
    %2171 = vmatmul.f32.gmra.mxu0 %v1551
    %v2172 = vpop.f32.mrf.mxu0
    %v2173 = vadd.f32 %v2060, %v2172
    %2174 = vmatmul.f32.gmra.mxu0 %v1553
    %v2175 = vpop.f32.mrf.mxu0
    %v2176 = vadd.f32 %v2063, %v2175
    %2177 = vmatmul.f32.gmra.mxu0 %v1555
    %v2178 = vpop.f32.mrf.mxu0
    %v2179 = vadd.f32 %v2066, %v2178
    %2180 = vmatmul.f32.gmra.mxu0 %v1557
    %v2181 = vpop.f32.mrf.mxu0
    %v2182 = vadd.f32 %v2069, %v2181
    %2183 = vmatmul.f32.gmra.mxu0 %v1559
    %v2184 = vpop.f32.mrf.mxu0
    %v2185 = vadd.f32 %v2072, %v2184
    %2186 = vmatmul.f32.gmra.mxu0 %v1561
    %v2187 = vpop.f32.mrf.mxu0
    %v2188 = vadd.f32 %v2075, %v2187
    %2189 = vmatmul.f32.gmra.mxu0 %v1563
    %v2190 = vpop.f32.mrf.mxu0
    %v2191 = vadd.f32 %v2078, %v2190
    %2192 = vmatmul.f32.gmra.mxu0 %v1565
    %v2193 = vpop.f32.mrf.mxu0
    %v2194 = vadd.f32 %v2081, %v2193
    %2195 = vmatmul.f32.gmra.mxu0 %v1567
    %v2196 = vpop.f32.mrf.mxu0
    %v2197 = vadd.f32 %v2084, %v2196
    %2198 = vmatmul.f32.gmra.mxu0 %v1569
    %v2199 = vpop.f32.mrf.mxu0
    %v2200 = vadd.f32 %v2087, %v2199
    %2201 = vmatmul.f32.gmra.mxu0 %v1571
    %v2202 = vpop.f32.mrf.mxu0
    %v2203 = vadd.f32 %v2090, %v2202
    %2204 = vmatmul.f32.gmra.mxu0 %v1573
    %v2205 = vpop.f32.mrf.mxu0
    %v2206 = vadd.f32 %v2093, %v2205
    %2207 = vmatmul.f32.gmra.mxu0 %v1575
    %v2208 = vpop.f32.mrf.mxu0
    %v2209 = vadd.f32 %v2096, %v2208
    %2210 = vmatmul.f32.gmra.mxu0 %v1577
    %v2211 = vpop.f32.mrf.mxu0
    %v2212 = vadd.f32 %v2099, %v2211
    %2213 = vmatmul.f32.gmra.mxu0 %v1579
    %v2214 = vpop.f32.mrf.mxu0
    %v2215 = vadd.f32 %v2102, %v2214
    %2216 = vmatmul.f32.gmra.mxu0 %v1581
    %v2217 = vpop.f32.mrf.mxu0
    %v2218 = vadd.f32 %v2105, %v2217
    %2219 = vmatmul.f32.gmra.mxu0 %v1583
    %v2220 = vpop.f32.mrf.mxu0
    %v2221 = vadd.f32 %v2108, %v2220
    %2222 = vmatmul.f32.gmra.mxu0 %v1585
    %v2223 = vpop.f32.mrf.mxu0
    %v2224 = vadd.f32 %v2111, %v2223
    %2225 = vmatmul.f32.gmra.mxu0 %v1587
    %v2226 = vpop.f32.mrf.mxu0
    %v2227 = vadd.f32 %v2114, %v2226
    %2228 = vmatmul.f32.gmra.mxu0 %v1589
    %v2229 = vpop.f32.mrf.mxu0
    %v2230 = vadd.f32 %v2117, %v2229
    %2231 = vmatmul.f32.gmra.mxu0 %v1591
    %v2232 = vpop.f32.mrf.mxu0
    %v2233 = vadd.f32 %v2120, %v2232
    %2234 = vmatmul.f32.gmra.mxu0 %v1593
    %v2235 = vpop.f32.mrf.mxu0
    %v2236 = vadd.f32 %v2123, %v2235
    %2237 = vdwg.mxu0
    %2238 = vmatpush.msra.mxu0 %v1720
    %2239 = vmatpush.msra.mxu0 %v1716
    %2240 = vmatpush.msra.mxu0 %v1712
    %2241 = vmatpush.msra.mxu0 %v1708
    %2242 = vmatpush.msra.mxu0 %v1704
    %2243 = vmatpush.msra.mxu0 %v1700
    %2244 = vmatpush.msra.mxu0 %v1696
    %2245 = vmatpush.msra.mxu0 %v1692
    %2246 = vmatpush.msra.mxu0 %v1688
    %2247 = vmatpush.msra.mxu0 %v1684
    %2248 = vmatpush.msra.mxu0 %v1680
    %2249 = vmatpush.msra.mxu0 %v1676
    %2250 = vmatpush.msra.mxu0 %v1672
    %2251 = vmatpush.msra.mxu0 %v1668
    %2252 = vmatpush.msra.mxu0 %v1664
    %2253 = vmatpush.msra.mxu0 %v1660
    %2254 = vmatmul.f32.gmra.mxu0 %v1530
    %v2255 = vpop.f32.mrf.mxu0
    %v2256 = vadd.f32 0.0, %v2255
    %2257 = vmatmul.f32.gmra.mxu0 %v1532
    %v2258 = vpop.f32.mrf.mxu0
    %v2259 = vadd.f32 0.0, %v2258
    %2260 = vmatmul.f32.gmra.mxu0 %v1534
    %v2261 = vpop.f32.mrf.mxu0
    %v2262 = vadd.f32 0.0, %v2261
    %2263 = vmatmul.f32.gmra.mxu0 %v1536
    %v2264 = vpop.f32.mrf.mxu0
    %v2265 = vadd.f32 0.0, %v2264
    %2266 = vmatmul.f32.gmra.mxu0 %v1538
    %v2267 = vpop.f32.mrf.mxu0
    %v2268 = vadd.f32 0.0, %v2267
    %2269 = vmatmul.f32.gmra.mxu0 %v1540
    %v2270 = vpop.f32.mrf.mxu0
    %v2271 = vadd.f32 0.0, %v2270
    %2272 = vmatmul.f32.gmra.mxu0 %v1542
    %v2273 = vpop.f32.mrf.mxu0
    %v2274 = vadd.f32 0.0, %v2273
    %2275 = vmatmul.f32.gmra.mxu0 %v1544
    %v2276 = vpop.f32.mrf.mxu0
    %v2277 = vadd.f32 0.0, %v2276
    %2278 = vmatmul.f32.gmra.mxu0 %v1546
    %v2279 = vpop.f32.mrf.mxu0
    %v2280 = vadd.f32 0.0, %v2279
    %2281 = vmatmul.f32.gmra.mxu0 %v1548
    %v2282 = vpop.f32.mrf.mxu0
    %v2283 = vadd.f32 0.0, %v2282
    %2284 = vmatmul.f32.gmra.mxu0 %v1550
    %v2285 = vpop.f32.mrf.mxu0
    %v2286 = vadd.f32 0.0, %v2285
    %2287 = vmatmul.f32.gmra.mxu0 %v1552
    %v2288 = vpop.f32.mrf.mxu0
    %v2289 = vadd.f32 0.0, %v2288
    %2290 = vmatmul.f32.gmra.mxu0 %v1554
    %v2291 = vpop.f32.mrf.mxu0
    %v2292 = vadd.f32 0.0, %v2291
    %2293 = vmatmul.f32.gmra.mxu0 %v1556
    %v2294 = vpop.f32.mrf.mxu0
    %v2295 = vadd.f32 0.0, %v2294
    %2296 = vmatmul.f32.gmra.mxu0 %v1558
    %v2297 = vpop.f32.mrf.mxu0
    %v2298 = vadd.f32 0.0, %v2297
    %2299 = vmatmul.f32.gmra.mxu0 %v1560
    %v2300 = vpop.f32.mrf.mxu0
    %v2301 = vadd.f32 0.0, %v2300
    %2302 = vmatmul.f32.gmra.mxu0 %v1562
    %v2303 = vpop.f32.mrf.mxu0
    %v2304 = vadd.f32 0.0, %v2303
    %2305 = vmatmul.f32.gmra.mxu0 %v1564
    %v2306 = vpop.f32.mrf.mxu0
    %v2307 = vadd.f32 0.0, %v2306
    %2308 = vmatmul.f32.gmra.mxu0 %v1566
    %v2309 = vpop.f32.mrf.mxu0
    %v2310 = vadd.f32 0.0, %v2309
    %2311 = vmatmul.f32.gmra.mxu0 %v1568
    %v2312 = vpop.f32.mrf.mxu0
    %v2313 = vadd.f32 0.0, %v2312
    %2314 = vmatmul.f32.gmra.mxu0 %v1570
    %v2315 = vpop.f32.mrf.mxu0
    %v2316 = vadd.f32 0.0, %v2315
    %2317 = vmatmul.f32.gmra.mxu0 %v1572
    %v2318 = vpop.f32.mrf.mxu0
    %v2319 = vadd.f32 0.0, %v2318
    %2320 = vmatmul.f32.gmra.mxu0 %v1574
    %v2321 = vpop.f32.mrf.mxu0
    %v2322 = vadd.f32 0.0, %v2321
    %2323 = vmatmul.f32.gmra.mxu0 %v1576
    %v2324 = vpop.f32.mrf.mxu0
    %v2325 = vadd.f32 0.0, %v2324
    %2326 = vmatmul.f32.gmra.mxu0 %v1578
    %v2327 = vpop.f32.mrf.mxu0
    %v2328 = vadd.f32 0.0, %v2327
    %2329 = vmatmul.f32.gmra.mxu0 %v1580
    %v2330 = vpop.f32.mrf.mxu0
    %v2331 = vadd.f32 0.0, %v2330
    %2332 = vmatmul.f32.gmra.mxu0 %v1582
    %v2333 = vpop.f32.mrf.mxu0
    %v2334 = vadd.f32 0.0, %v2333
    %2335 = vmatmul.f32.gmra.mxu0 %v1584
    %v2336 = vpop.f32.mrf.mxu0
    %v2337 = vadd.f32 0.0, %v2336
    %2338 = vmatmul.f32.gmra.mxu0 %v1586
    %v2339 = vpop.f32.mrf.mxu0
    %v2340 = vadd.f32 0.0, %v2339
    %2341 = vmatmul.f32.gmra.mxu0 %v1588
    %v2342 = vpop.f32.mrf.mxu0
    %v2343 = vadd.f32 0.0, %v2342
    %2344 = vmatmul.f32.gmra.mxu0 %v1590
    %v2345 = vpop.f32.mrf.mxu0
    %v2346 = vadd.f32 0.0, %v2345
    %2347 = vmatmul.f32.gmra.mxu0 %v1592
    %v2348 = vpop.f32.mrf.mxu0
    %v2349 = vadd.f32 0.0, %v2348
    %2350 = vdwg.mxu0
    %2351 = vmatpush.msra.mxu0 %v1784
    %2352 = vmatpush.msra.mxu0 %v1780
    %2353 = vmatpush.msra.mxu0 %v1776
    %2354 = vmatpush.msra.mxu0 %v1772
    %2355 = vmatpush.msra.mxu0 %v1768
    %2356 = vmatpush.msra.mxu0 %v1764
    %2357 = vmatpush.msra.mxu0 %v1760
    %2358 = vmatpush.msra.mxu0 %v1756
    %2359 = vmatpush.msra.mxu0 %v1752
    %2360 = vmatpush.msra.mxu0 %v1748
    %2361 = vmatpush.msra.mxu0 %v1744
    %2362 = vmatpush.msra.mxu0 %v1740
    %2363 = vmatpush.msra.mxu0 %v1736
    %2364 = vmatpush.msra.mxu0 %v1732
    %2365 = vmatpush.msra.mxu0 %v1728
    %2366 = vmatpush.msra.mxu0 %v1724
    %2367 = vmatmul.f32.gmra.mxu0 %v1531
    %v2368 = vpop.f32.mrf.mxu0
    %v2369 = vadd.f32 %v2256, %v2368
    %2370 = vmatmul.f32.gmra.mxu0 %v1533
    %v2371 = vpop.f32.mrf.mxu0
    %v2372 = vadd.f32 %v2259, %v2371
    %2373 = vmatmul.f32.gmra.mxu0 %v1535
    %v2374 = vpop.f32.mrf.mxu0
    %v2375 = vadd.f32 %v2262, %v2374
    %2376 = vmatmul.f32.gmra.mxu0 %v1537
    %v2377 = vpop.f32.mrf.mxu0
    %v2378 = vadd.f32 %v2265, %v2377
    %2379 = vmatmul.f32.gmra.mxu0 %v1539
    %v2380 = vpop.f32.mrf.mxu0
    %v2381 = vadd.f32 %v2268, %v2380
    %2382 = vmatmul.f32.gmra.mxu0 %v1541
    %v2383 = vpop.f32.mrf.mxu0
    %v2384 = vadd.f32 %v2271, %v2383
    %2385 = vmatmul.f32.gmra.mxu0 %v1543
    %v2386 = vpop.f32.mrf.mxu0
    %v2387 = vadd.f32 %v2274, %v2386
    %2388 = vmatmul.f32.gmra.mxu0 %v1545
    %v2389 = vpop.f32.mrf.mxu0
    %v2390 = vadd.f32 %v2277, %v2389
    %2391 = vmatmul.f32.gmra.mxu0 %v1547
    %v2392 = vpop.f32.mrf.mxu0
    %v2393 = vadd.f32 %v2280, %v2392
    %2394 = vmatmul.f32.gmra.mxu0 %v1549
    %v2395 = vpop.f32.mrf.mxu0
    %v2396 = vadd.f32 %v2283, %v2395
    %2397 = vmatmul.f32.gmra.mxu0 %v1551
    %v2398 = vpop.f32.mrf.mxu0
    %v2399 = vadd.f32 %v2286, %v2398
    %2400 = vmatmul.f32.gmra.mxu0 %v1553
    %v2401 = vpop.f32.mrf.mxu0
    %v2402 = vadd.f32 %v2289, %v2401
    %2403 = vmatmul.f32.gmra.mxu0 %v1555
    %v2404 = vpop.f32.mrf.mxu0
    %v2405 = vadd.f32 %v2292, %v2404
    %2406 = vmatmul.f32.gmra.mxu0 %v1557
    %v2407 = vpop.f32.mrf.mxu0
    %v2408 = vadd.f32 %v2295, %v2407
    %2409 = vmatmul.f32.gmra.mxu0 %v1559
    %v2410 = vpop.f32.mrf.mxu0
    %v2411 = vadd.f32 %v2298, %v2410
    %2412 = vmatmul.f32.gmra.mxu0 %v1561
    %v2413 = vpop.f32.mrf.mxu0
    %v2414 = vadd.f32 %v2301, %v2413
    %2415 = vmatmul.f32.gmra.mxu0 %v1563
    %v2416 = vpop.f32.mrf.mxu0
    %v2417 = vadd.f32 %v2304, %v2416
    %2418 = vmatmul.f32.gmra.mxu0 %v1565
    %v2419 = vpop.f32.mrf.mxu0
    %v2420 = vadd.f32 %v2307, %v2419
    %2421 = vmatmul.f32.gmra.mxu0 %v1567
    %v2422 = vpop.f32.mrf.mxu0
    %v2423 = vadd.f32 %v2310, %v2422
    %2424 = vmatmul.f32.gmra.mxu0 %v1569
    %v2425 = vpop.f32.mrf.mxu0
    %v2426 = vadd.f32 %v2313, %v2425
    %2427 = vmatmul.f32.gmra.mxu0 %v1571
    %v2428 = vpop.f32.mrf.mxu0
    %v2429 = vadd.f32 %v2316, %v2428
    %2430 = vmatmul.f32.gmra.mxu0 %v1573
    %v2431 = vpop.f32.mrf.mxu0
    %v2432 = vadd.f32 %v2319, %v2431
    %2433 = vmatmul.f32.gmra.mxu0 %v1575
    %v2434 = vpop.f32.mrf.mxu0
    %v2435 = vadd.f32 %v2322, %v2434
    %2436 = vmatmul.f32.gmra.mxu0 %v1577
    %v2437 = vpop.f32.mrf.mxu0
    %v2438 = vadd.f32 %v2325, %v2437
    %2439 = vmatmul.f32.gmra.mxu0 %v1579
    %v2440 = vpop.f32.mrf.mxu0
    %v2441 = vadd.f32 %v2328, %v2440
    %2442 = vmatmul.f32.gmra.mxu0 %v1581
    %v2443 = vpop.f32.mrf.mxu0
    %v2444 = vadd.f32 %v2331, %v2443
    %2445 = vmatmul.f32.gmra.mxu0 %v1583
    %v2446 = vpop.f32.mrf.mxu0
    %v2447 = vadd.f32 %v2334, %v2446
    %2448 = vmatmul.f32.gmra.mxu0 %v1585
    %v2449 = vpop.f32.mrf.mxu0
    %v2450 = vadd.f32 %v2337, %v2449
    %2451 = vmatmul.f32.gmra.mxu0 %v1587
    %v2452 = vpop.f32.mrf.mxu0
    %v2453 = vadd.f32 %v2340, %v2452
    %2454 = vmatmul.f32.gmra.mxu0 %v1589
    %v2455 = vpop.f32.mrf.mxu0
    %v2456 = vadd.f32 %v2343, %v2455
    %2457 = vmatmul.f32.gmra.mxu0 %v1591
    %v2458 = vpop.f32.mrf.mxu0
    %v2459 = vadd.f32 %v2346, %v2458
    %2460 = vmatmul.f32.gmra.mxu0 %v1593
    %v2461 = vpop.f32.mrf.mxu0
    %v2462 = vadd.f32 %v2349, %v2461
    %2463 = vdwg.mxu0
    %2464 = vmatpush.msra.mxu0 %v1721
    %2465 = vmatpush.msra.mxu0 %v1717
    %2466 = vmatpush.msra.mxu0 %v1713
    %2467 = vmatpush.msra.mxu0 %v1709
    %2468 = vmatpush.msra.mxu0 %v1705
    %2469 = vmatpush.msra.mxu0 %v1701
    %2470 = vmatpush.msra.mxu0 %v1697
    %2471 = vmatpush.msra.mxu0 %v1693
    %2472 = vmatpush.msra.mxu0 %v1689
    %2473 = vmatpush.msra.mxu0 %v1685
    %2474 = vmatpush.msra.mxu0 %v1681
    %2475 = vmatpush.msra.mxu0 %v1677
    %2476 = vmatpush.msra.mxu0 %v1673
    %2477 = vmatpush.msra.mxu0 %v1669
    %2478 = vmatpush.msra.mxu0 %v1665
    %2479 = vmatpush.msra.mxu0 %v1661
    %2480 = vmatmul.f32.gmra.mxu0 %v1530
    %v2481 = vpop.f32.mrf.mxu0
    %v2482 = vadd.f32 0.0, %v2481
    %2483 = vmatmul.f32.gmra.mxu0 %v1532
    %v2484 = vpop.f32.mrf.mxu0
    %v2485 = vadd.f32 0.0, %v2484
    %2486 = vmatmul.f32.gmra.mxu0 %v1534
    %v2487 = vpop.f32.mrf.mxu0
    %v2488 = vadd.f32 0.0, %v2487
    %2489 = vmatmul.f32.gmra.mxu0 %v1536
    %v2490 = vpop.f32.mrf.mxu0
    %v2491 = vadd.f32 0.0, %v2490
    %2492 = vmatmul.f32.gmra.mxu0 %v1538
    %v2493 = vpop.f32.mrf.mxu0
    %v2494 = vadd.f32 0.0, %v2493
    %2495 = vmatmul.f32.gmra.mxu0 %v1540
    %v2496 = vpop.f32.mrf.mxu0
    %v2497 = vadd.f32 0.0, %v2496
    %2498 = vmatmul.f32.gmra.mxu0 %v1542
    %v2499 = vpop.f32.mrf.mxu0
    %v2500 = vadd.f32 0.0, %v2499
    %2501 = vmatmul.f32.gmra.mxu0 %v1544
    %v2502 = vpop.f32.mrf.mxu0
    %v2503 = vadd.f32 0.0, %v2502
    %2504 = vmatmul.f32.gmra.mxu0 %v1546
    %v2505 = vpop.f32.mrf.mxu0
    %v2506 = vadd.f32 0.0, %v2505
    %2507 = vmatmul.f32.gmra.mxu0 %v1548
    %v2508 = vpop.f32.mrf.mxu0
    %v2509 = vadd.f32 0.0, %v2508
    %2510 = vmatmul.f32.gmra.mxu0 %v1550
    %v2511 = vpop.f32.mrf.mxu0
    %v2512 = vadd.f32 0.0, %v2511
    %2513 = vmatmul.f32.gmra.mxu0 %v1552
    %v2514 = vpop.f32.mrf.mxu0
    %v2515 = vadd.f32 0.0, %v2514
    %2516 = vmatmul.f32.gmra.mxu0 %v1554
    %v2517 = vpop.f32.mrf.mxu0
    %v2518 = vadd.f32 0.0, %v2517
    %2519 = vmatmul.f32.gmra.mxu0 %v1556
    %v2520 = vpop.f32.mrf.mxu0
    %v2521 = vadd.f32 0.0, %v2520
    %2522 = vmatmul.f32.gmra.mxu0 %v1558
    %v2523 = vpop.f32.mrf.mxu0
    %v2524 = vadd.f32 0.0, %v2523
    %2525 = vmatmul.f32.gmra.mxu0 %v1560
    %v2526 = vpop.f32.mrf.mxu0
    %v2527 = vadd.f32 0.0, %v2526
    %2528 = vmatmul.f32.gmra.mxu0 %v1562
    %v2529 = vpop.f32.mrf.mxu0
    %v2530 = vadd.f32 0.0, %v2529
    %2531 = vmatmul.f32.gmra.mxu0 %v1564
    %v2532 = vpop.f32.mrf.mxu0
    %v2533 = vadd.f32 0.0, %v2532
    %2534 = vmatmul.f32.gmra.mxu0 %v1566
    %v2535 = vpop.f32.mrf.mxu0
    %v2536 = vadd.f32 0.0, %v2535
    %2537 = vmatmul.f32.gmra.mxu0 %v1568
    %v2538 = vpop.f32.mrf.mxu0
    %v2539 = vadd.f32 0.0, %v2538
    %2540 = vmatmul.f32.gmra.mxu0 %v1570
    %v2541 = vpop.f32.mrf.mxu0
    %v2542 = vadd.f32 0.0, %v2541
    %2543 = vmatmul.f32.gmra.mxu0 %v1572
    %v2544 = vpop.f32.mrf.mxu0
    %v2545 = vadd.f32 0.0, %v2544
    %2546 = vmatmul.f32.gmra.mxu0 %v1574
    %v2547 = vpop.f32.mrf.mxu0
    %v2548 = vadd.f32 0.0, %v2547
    %2549 = vmatmul.f32.gmra.mxu0 %v1576
    %v2550 = vpop.f32.mrf.mxu0
    %v2551 = vadd.f32 0.0, %v2550
    %2552 = vmatmul.f32.gmra.mxu0 %v1578
    %v2553 = vpop.f32.mrf.mxu0
    %v2554 = vadd.f32 0.0, %v2553
    %2555 = vmatmul.f32.gmra.mxu0 %v1580
    %v2556 = vpop.f32.mrf.mxu0
    %v2557 = vadd.f32 0.0, %v2556
    %2558 = vmatmul.f32.gmra.mxu0 %v1582
    %v2559 = vpop.f32.mrf.mxu0
    %v2560 = vadd.f32 0.0, %v2559
    %2561 = vmatmul.f32.gmra.mxu0 %v1584
    %v2562 = vpop.f32.mrf.mxu0
    %v2563 = vadd.f32 0.0, %v2562
    %2564 = vmatmul.f32.gmra.mxu0 %v1586
    %v2565 = vpop.f32.mrf.mxu0
    %v2566 = vadd.f32 0.0, %v2565
    %2567 = vmatmul.f32.gmra.mxu0 %v1588
    %v2568 = vpop.f32.mrf.mxu0
    %v2569 = vadd.f32 0.0, %v2568
    %2570 = vmatmul.f32.gmra.mxu0 %v1590
    %v2571 = vpop.f32.mrf.mxu0
    %v2572 = vadd.f32 0.0, %v2571
    %2573 = vmatmul.f32.gmra.mxu0 %v1592
    %v2574 = vpop.f32.mrf.mxu0
    %v2575 = vadd.f32 0.0, %v2574
    %2576 = vdwg.mxu0
    %2577 = vmatpush.msra.mxu0 %v1785
    %2578 = vmatpush.msra.mxu0 %v1781
    %2579 = vmatpush.msra.mxu0 %v1777
    %2580 = vmatpush.msra.mxu0 %v1773
    %2581 = vmatpush.msra.mxu0 %v1769
    %2582 = vmatpush.msra.mxu0 %v1765
    %2583 = vmatpush.msra.mxu0 %v1761
    %2584 = vmatpush.msra.mxu0 %v1757
    %2585 = vmatpush.msra.mxu0 %v1753
    %2586 = vmatpush.msra.mxu0 %v1749
    %2587 = vmatpush.msra.mxu0 %v1745
    %2588 = vmatpush.msra.mxu0 %v1741
    %2589 = vmatpush.msra.mxu0 %v1737
    %2590 = vmatpush.msra.mxu0 %v1733
    %2591 = vmatpush.msra.mxu0 %v1729
    %2592 = vmatpush.msra.mxu0 %v1725
    %2593 = vmatmul.f32.gmra.mxu0 %v1531
    %v2594 = vpop.f32.mrf.mxu0
    %v2595 = vadd.f32 %v2482, %v2594
    %2596 = vmatmul.f32.gmra.mxu0 %v1533
    %v2597 = vpop.f32.mrf.mxu0
    %v2598 = vadd.f32 %v2485, %v2597
    %2599 = vmatmul.f32.gmra.mxu0 %v1535
    %v2600 = vpop.f32.mrf.mxu0
    %v2601 = vadd.f32 %v2488, %v2600
    %2602 = vmatmul.f32.gmra.mxu0 %v1537
    %v2603 = vpop.f32.mrf.mxu0
    %v2604 = vadd.f32 %v2491, %v2603
    %2605 = vmatmul.f32.gmra.mxu0 %v1539
    %v2606 = vpop.f32.mrf.mxu0
    %v2607 = vadd.f32 %v2494, %v2606
    %2608 = vmatmul.f32.gmra.mxu0 %v1541
    %v2609 = vpop.f32.mrf.mxu0
    %v2610 = vadd.f32 %v2497, %v2609
    %2611 = vmatmul.f32.gmra.mxu0 %v1543
    %v2612 = vpop.f32.mrf.mxu0
    %v2613 = vadd.f32 %v2500, %v2612
    %2614 = vmatmul.f32.gmra.mxu0 %v1545
    %v2615 = vpop.f32.mrf.mxu0
    %v2616 = vadd.f32 %v2503, %v2615
    %2617 = vmatmul.f32.gmra.mxu0 %v1547
    %v2618 = vpop.f32.mrf.mxu0
    %v2619 = vadd.f32 %v2506, %v2618
    %2620 = vmatmul.f32.gmra.mxu0 %v1549
    %v2621 = vpop.f32.mrf.mxu0
    %v2622 = vadd.f32 %v2509, %v2621
    %2623 = vmatmul.f32.gmra.mxu0 %v1551
    %v2624 = vpop.f32.mrf.mxu0
    %v2625 = vadd.f32 %v2512, %v2624
    %2626 = vmatmul.f32.gmra.mxu0 %v1553
    %v2627 = vpop.f32.mrf.mxu0
    %v2628 = vadd.f32 %v2515, %v2627
    %2629 = vmatmul.f32.gmra.mxu0 %v1555
    %v2630 = vpop.f32.mrf.mxu0
    %v2631 = vadd.f32 %v2518, %v2630
    %2632 = vmatmul.f32.gmra.mxu0 %v1557
    %v2633 = vpop.f32.mrf.mxu0
    %v2634 = vadd.f32 %v2521, %v2633
    %2635 = vmatmul.f32.gmra.mxu0 %v1559
    %v2636 = vpop.f32.mrf.mxu0
    %v2637 = vadd.f32 %v2524, %v2636
    %2638 = vmatmul.f32.gmra.mxu0 %v1561
    %v2639 = vpop.f32.mrf.mxu0
    %v2640 = vadd.f32 %v2527, %v2639
    %2641 = vmatmul.f32.gmra.mxu0 %v1563
    %v2642 = vpop.f32.mrf.mxu0
    %v2643 = vadd.f32 %v2530, %v2642
    %2644 = vmatmul.f32.gmra.mxu0 %v1565
    %v2645 = vpop.f32.mrf.mxu0
    %v2646 = vadd.f32 %v2533, %v2645
    %2647 = vmatmul.f32.gmra.mxu0 %v1567
    %v2648 = vpop.f32.mrf.mxu0
    %v2649 = vadd.f32 %v2536, %v2648
    %2650 = vmatmul.f32.gmra.mxu0 %v1569
    %v2651 = vpop.f32.mrf.mxu0
    %v2652 = vadd.f32 %v2539, %v2651
    %2653 = vmatmul.f32.gmra.mxu0 %v1571
    %v2654 = vpop.f32.mrf.mxu0
    %v2655 = vadd.f32 %v2542, %v2654
    %2656 = vmatmul.f32.gmra.mxu0 %v1573
    %v2657 = vpop.f32.mrf.mxu0
    %v2658 = vadd.f32 %v2545, %v2657
    %2659 = vmatmul.f32.gmra.mxu0 %v1575
    %v2660 = vpop.f32.mrf.mxu0
    %v2661 = vadd.f32 %v2548, %v2660
    %2662 = vmatmul.f32.gmra.mxu0 %v1577
    %v2663 = vpop.f32.mrf.mxu0
    %v2664 = vadd.f32 %v2551, %v2663
    %2665 = vmatmul.f32.gmra.mxu0 %v1579
    %v2666 = vpop.f32.mrf.mxu0
    %v2667 = vadd.f32 %v2554, %v2666
    %2668 = vmatmul.f32.gmra.mxu0 %v1581
    %v2669 = vpop.f32.mrf.mxu0
    %v2670 = vadd.f32 %v2557, %v2669
    %2671 = vmatmul.f32.gmra.mxu0 %v1583
    %v2672 = vpop.f32.mrf.mxu0
    %v2673 = vadd.f32 %v2560, %v2672
    %2674 = vmatmul.f32.gmra.mxu0 %v1585
    %v2675 = vpop.f32.mrf.mxu0
    %v2676 = vadd.f32 %v2563, %v2675
    %2677 = vmatmul.f32.gmra.mxu0 %v1587
    %v2678 = vpop.f32.mrf.mxu0
    %v2679 = vadd.f32 %v2566, %v2678
    %2680 = vmatmul.f32.gmra.mxu0 %v1589
    %v2681 = vpop.f32.mrf.mxu0
    %v2682 = vadd.f32 %v2569, %v2681
    %2683 = vmatmul.f32.gmra.mxu0 %v1591
    %v2684 = vpop.f32.mrf.mxu0
    %v2685 = vadd.f32 %v2572, %v2684
    %2686 = vmatmul.f32.gmra.mxu0 %v1593
    %v2687 = vpop.f32.mrf.mxu0
    %v2688 = vadd.f32 %v2575, %v2687
    %2689 = vdwg.mxu0
    %v2690 = vadd.f32 %v1917, %v1920
    %v2691 = vadd.f32 %v2690, %v1923
    %v2692 = vadd.f32 %v2691, %v1926
    %v2693 = vadd.f32 %v2692, %v1929
    %v2694 = vadd.f32 %v2693, %v1932
    %v2695 = vadd.f32 %v2694, %v1935
    %v2696 = vadd.f32 %v2695, %v1938
    %v2697 = vadd.f32 %v2696, %v1941
    %v2698 = vadd.f32 %v2697, %v1944
    %v2699 = vadd.f32 %v2698, %v1947
    %v2700 = vadd.f32 %v2699, %v1950
    %v2701 = vadd.f32 %v2700, %v1953
    %v2702 = vadd.f32 %v2701, %v1956
    %v2703 = vadd.f32 %v2702, %v1959
    %v2704 = vadd.f32 %v2703, %v1962
    %v2705 = vadd.f32 %v2704, %v1965
    %v2706 = vadd.f32 %v2705, %v1968
    %v2707 = vadd.f32 %v2706, %v1971
    %v2708 = vadd.f32 %v2707, %v1974
    %v2709 = vadd.f32 %v2708, %v1977
    %v2710 = vadd.f32 %v2709, %v1980
    %v2711 = vadd.f32 %v2710, %v1983
    %v2712 = vadd.f32 %v2711, %v1986
    %v2713 = vadd.f32 %v2712, %v1989
    %v2714 = vadd.f32 %v2713, %v1992
    %v2715 = vadd.f32 %v2714, %v1995
    %v2716 = vadd.f32 %v2715, %v1998
    %v2717 = vadd.f32 %v2716, %v2001
    %v2718 = vadd.f32 %v2717, %v2004
    %v2719 = vadd.f32 %v2718, %v2007
    %v2720 = vadd.f32 %v2719, %v2010
    %v2721 = vrot.slane %v2720, 4
    %v2722 = vadd.f32 %v2720, %v2721
    %v2723 = vrot.slane %v2722, 2
    %v2724 = vadd.f32 %v2722, %v2723
    %v2725 = vrot.slane %v2724, 1
    %v2726 = vadd.f32 %v2724, %v2725
    %v2727 = vadd.f32 %v2143, %v2146
    %v2728 = vadd.f32 %v2727, %v2149
    %v2729 = vadd.f32 %v2728, %v2152
    %v2730 = vadd.f32 %v2729, %v2155
    %v2731 = vadd.f32 %v2730, %v2158
    %v2732 = vadd.f32 %v2731, %v2161
    %v2733 = vadd.f32 %v2732, %v2164
    %v2734 = vadd.f32 %v2733, %v2167
    %v2735 = vadd.f32 %v2734, %v2170
    %v2736 = vadd.f32 %v2735, %v2173
    %v2737 = vadd.f32 %v2736, %v2176
    %v2738 = vadd.f32 %v2737, %v2179
    %v2739 = vadd.f32 %v2738, %v2182
    %v2740 = vadd.f32 %v2739, %v2185
    %v2741 = vadd.f32 %v2740, %v2188
    %v2742 = vadd.f32 %v2741, %v2191
    %v2743 = vadd.f32 %v2742, %v2194
    %v2744 = vadd.f32 %v2743, %v2197
    %v2745 = vadd.f32 %v2744, %v2200
    %v2746 = vadd.f32 %v2745, %v2203
    %v2747 = vadd.f32 %v2746, %v2206
    %v2748 = vadd.f32 %v2747, %v2209
    %v2749 = vadd.f32 %v2748, %v2212
    %v2750 = vadd.f32 %v2749, %v2215
    %v2751 = vadd.f32 %v2750, %v2218
    %v2752 = vadd.f32 %v2751, %v2221
    %v2753 = vadd.f32 %v2752, %v2224
    %v2754 = vadd.f32 %v2753, %v2227
    %v2755 = vadd.f32 %v2754, %v2230
    %v2756 = vadd.f32 %v2755, %v2233
    %v2757 = vadd.f32 %v2756, %v2236
    %v2758 = vrot.slane %v2757, 4
    %v2759 = vadd.f32 %v2757, %v2758
    %v2760 = vrot.slane %v2759, 2
    %v2761 = vadd.f32 %v2759, %v2760
    %v2762 = vrot.slane %v2761, 1
    %v2763 = vadd.f32 %v2761, %v2762
    %v2764 = vadd.f32 %v2369, %v2372
    %v2765 = vadd.f32 %v2764, %v2375
    %v2766 = vadd.f32 %v2765, %v2378
    %v2767 = vadd.f32 %v2766, %v2381
    %v2768 = vadd.f32 %v2767, %v2384
    %v2769 = vadd.f32 %v2768, %v2387
    %v2770 = vadd.f32 %v2769, %v2390
    %v2771 = vadd.f32 %v2770, %v2393
    %v2772 = vadd.f32 %v2771, %v2396
    %v2773 = vadd.f32 %v2772, %v2399
    %v2774 = vadd.f32 %v2773, %v2402
    %v2775 = vadd.f32 %v2774, %v2405
    %v2776 = vadd.f32 %v2775, %v2408
    %v2777 = vadd.f32 %v2776, %v2411
    %v2778 = vadd.f32 %v2777, %v2414
    %v2779 = vadd.f32 %v2778, %v2417
    %v2780 = vadd.f32 %v2779, %v2420
    %v2781 = vadd.f32 %v2780, %v2423
    %v2782 = vadd.f32 %v2781, %v2426
    %v2783 = vadd.f32 %v2782, %v2429
    %v2784 = vadd.f32 %v2783, %v2432
    %v2785 = vadd.f32 %v2784, %v2435
    %v2786 = vadd.f32 %v2785, %v2438
    %v2787 = vadd.f32 %v2786, %v2441
    %v2788 = vadd.f32 %v2787, %v2444
    %v2789 = vadd.f32 %v2788, %v2447
    %v2790 = vadd.f32 %v2789, %v2450
    %v2791 = vadd.f32 %v2790, %v2453
    %v2792 = vadd.f32 %v2791, %v2456
    %v2793 = vadd.f32 %v2792, %v2459
    %v2794 = vadd.f32 %v2793, %v2462
    %v2795 = vrot.slane %v2794, 4
    %v2796 = vadd.f32 %v2794, %v2795
    %v2797 = vrot.slane %v2796, 2
    %v2798 = vadd.f32 %v2796, %v2797
    %v2799 = vrot.slane %v2798, 1
    %v2800 = vadd.f32 %v2798, %v2799
    %v2801 = vadd.f32 %v2595, %v2598
    %v2802 = vadd.f32 %v2801, %v2601
    %v2803 = vadd.f32 %v2802, %v2604
    %v2804 = vadd.f32 %v2803, %v2607
    %v2805 = vadd.f32 %v2804, %v2610
    %v2806 = vadd.f32 %v2805, %v2613
    %v2807 = vadd.f32 %v2806, %v2616
    %v2808 = vadd.f32 %v2807, %v2619
    %v2809 = vadd.f32 %v2808, %v2622
    %v2810 = vadd.f32 %v2809, %v2625
    %v2811 = vadd.f32 %v2810, %v2628
    %v2812 = vadd.f32 %v2811, %v2631
    %v2813 = vadd.f32 %v2812, %v2634
    %v2814 = vadd.f32 %v2813, %v2637
    %v2815 = vadd.f32 %v2814, %v2640
    %v2816 = vadd.f32 %v2815, %v2643
    %v2817 = vadd.f32 %v2816, %v2646
    %v2818 = vadd.f32 %v2817, %v2649
    %v2819 = vadd.f32 %v2818, %v2652
    %v2820 = vadd.f32 %v2819, %v2655
    %v2821 = vadd.f32 %v2820, %v2658
    %v2822 = vadd.f32 %v2821, %v2661
    %v2823 = vadd.f32 %v2822, %v2664
    %v2824 = vadd.f32 %v2823, %v2667
    %v2825 = vadd.f32 %v2824, %v2670
    %v2826 = vadd.f32 %v2825, %v2673
    %v2827 = vadd.f32 %v2826, %v2676
    %v2828 = vadd.f32 %v2827, %v2679
    %v2829 = vadd.f32 %v2828, %v2682
    %v2830 = vadd.f32 %v2829, %v2685
    %v2831 = vadd.f32 %v2830, %v2688
    %v2832 = vrot.slane %v2831, 4
    %v2833 = vadd.f32 %v2831, %v2832
    %v2834 = vrot.slane %v2833, 2
    %v2835 = vadd.f32 %v2833, %v2834
    %v2836 = vrot.slane %v2835, 1
    %v2837 = vadd.f32 %v2835, %v2836
    %v2838 = vmul.f32 %v2726, %v1142
    %v2839 = vmul.f32 %v2763, %v1142
    %v2840 = vmul.f32 %v2800, %v1142
    %v2841 = vmul.f32 %v2837, %v1142
    %v2842 = vmul.f32 %v1917, %v1917
    %v2843 = vmul.f32 %v2143, %v2143
    %v2844 = vmul.f32 %v2369, %v2369
    %v2845 = vmul.f32 %v2595, %v2595
    %v2846 = vmul.f32 %v1920, %v1920
    %v2847 = vmul.f32 %v2146, %v2146
    %v2848 = vmul.f32 %v2372, %v2372
    %v2849 = vmul.f32 %v2598, %v2598
    %v2850 = vmul.f32 %v1923, %v1923
    %v2851 = vmul.f32 %v2149, %v2149
    %v2852 = vmul.f32 %v2375, %v2375
    %v2853 = vmul.f32 %v2601, %v2601
    %v2854 = vmul.f32 %v1926, %v1926
    %v2855 = vmul.f32 %v2152, %v2152
    %v2856 = vmul.f32 %v2378, %v2378
    %v2857 = vmul.f32 %v2604, %v2604
    %v2858 = vmul.f32 %v1929, %v1929
    %v2859 = vmul.f32 %v2155, %v2155
    %v2860 = vmul.f32 %v2381, %v2381
    %v2861 = vmul.f32 %v2607, %v2607
    %v2862 = vmul.f32 %v1932, %v1932
    %v2863 = vmul.f32 %v2158, %v2158
    %v2864 = vmul.f32 %v2384, %v2384
    %v2865 = vmul.f32 %v2610, %v2610
    %v2866 = vmul.f32 %v1935, %v1935
    %v2867 = vmul.f32 %v2161, %v2161
    %v2868 = vmul.f32 %v2387, %v2387
    %v2869 = vmul.f32 %v2613, %v2613
    %v2870 = vmul.f32 %v1938, %v1938
    %v2871 = vmul.f32 %v2164, %v2164
    %v2872 = vmul.f32 %v2390, %v2390
    %v2873 = vmul.f32 %v2616, %v2616
    %v2874 = vmul.f32 %v1941, %v1941
    %v2875 = vmul.f32 %v2167, %v2167
    %v2876 = vmul.f32 %v2393, %v2393
    %v2877 = vmul.f32 %v2619, %v2619
    %v2878 = vmul.f32 %v1944, %v1944
    %v2879 = vmul.f32 %v2170, %v2170
    %v2880 = vmul.f32 %v2396, %v2396
    %v2881 = vmul.f32 %v2622, %v2622
    %v2882 = vmul.f32 %v1947, %v1947
    %v2883 = vmul.f32 %v2173, %v2173
    %v2884 = vmul.f32 %v2399, %v2399
    %v2885 = vmul.f32 %v2625, %v2625
    %v2886 = vmul.f32 %v1950, %v1950
    %v2887 = vmul.f32 %v2176, %v2176
    %v2888 = vmul.f32 %v2402, %v2402
    %v2889 = vmul.f32 %v2628, %v2628
    %v2890 = vmul.f32 %v1953, %v1953
    %v2891 = vmul.f32 %v2179, %v2179
    %v2892 = vmul.f32 %v2405, %v2405
    %v2893 = vmul.f32 %v2631, %v2631
    %v2894 = vmul.f32 %v1956, %v1956
    %v2895 = vmul.f32 %v2182, %v2182
    %v2896 = vmul.f32 %v2408, %v2408
    %v2897 = vmul.f32 %v2634, %v2634
    %v2898 = vmul.f32 %v1959, %v1959
    %v2899 = vmul.f32 %v2185, %v2185
    %v2900 = vmul.f32 %v2411, %v2411
    %v2901 = vmul.f32 %v2637, %v2637
    %v2902 = vmul.f32 %v1962, %v1962
    %v2903 = vmul.f32 %v2188, %v2188
    %v2904 = vmul.f32 %v2414, %v2414
    %v2905 = vmul.f32 %v2640, %v2640
    %v2906 = vmul.f32 %v1965, %v1965
    %v2907 = vmul.f32 %v2191, %v2191
    %v2908 = vmul.f32 %v2417, %v2417
    %v2909 = vmul.f32 %v2643, %v2643
    %v2910 = vmul.f32 %v1968, %v1968
    %v2911 = vmul.f32 %v2194, %v2194
    %v2912 = vmul.f32 %v2420, %v2420
    %v2913 = vmul.f32 %v2646, %v2646
    %v2914 = vmul.f32 %v1971, %v1971
    %v2915 = vmul.f32 %v2197, %v2197
    %v2916 = vmul.f32 %v2423, %v2423
    %v2917 = vmul.f32 %v2649, %v2649
    %v2918 = vmul.f32 %v1974, %v1974
    %v2919 = vmul.f32 %v2200, %v2200
    %v2920 = vmul.f32 %v2426, %v2426
    %v2921 = vmul.f32 %v2652, %v2652
    %v2922 = vmul.f32 %v1977, %v1977
    %v2923 = vmul.f32 %v2203, %v2203
    %v2924 = vmul.f32 %v2429, %v2429
    %v2925 = vmul.f32 %v2655, %v2655
    %v2926 = vmul.f32 %v1980, %v1980
    %v2927 = vmul.f32 %v2206, %v2206
    %v2928 = vmul.f32 %v2432, %v2432
    %v2929 = vmul.f32 %v2658, %v2658
    %v2930 = vmul.f32 %v1983, %v1983
    %v2931 = vmul.f32 %v2209, %v2209
    %v2932 = vmul.f32 %v2435, %v2435
    %v2933 = vmul.f32 %v2661, %v2661
    %v2934 = vmul.f32 %v1986, %v1986
    %v2935 = vmul.f32 %v2212, %v2212
    %v2936 = vmul.f32 %v2438, %v2438
    %v2937 = vmul.f32 %v2664, %v2664
    %v2938 = vmul.f32 %v1989, %v1989
    %v2939 = vmul.f32 %v2215, %v2215
    %v2940 = vmul.f32 %v2441, %v2441
    %v2941 = vmul.f32 %v2667, %v2667
    %v2942 = vmul.f32 %v1992, %v1992
    %v2943 = vmul.f32 %v2218, %v2218
    %v2944 = vmul.f32 %v2444, %v2444
    %v2945 = vmul.f32 %v2670, %v2670
    %v2946 = vmul.f32 %v1995, %v1995
    %v2947 = vmul.f32 %v2221, %v2221
    %v2948 = vmul.f32 %v2447, %v2447
    %v2949 = vmul.f32 %v2673, %v2673
    %v2950 = vmul.f32 %v1998, %v1998
    %v2951 = vmul.f32 %v2224, %v2224
    %v2952 = vmul.f32 %v2450, %v2450
    %v2953 = vmul.f32 %v2676, %v2676
    %v2954 = vmul.f32 %v2001, %v2001
    %v2955 = vmul.f32 %v2227, %v2227
    %v2956 = vmul.f32 %v2453, %v2453
    %v2957 = vmul.f32 %v2679, %v2679
    %v2958 = vmul.f32 %v2004, %v2004
    %v2959 = vmul.f32 %v2230, %v2230
    %v2960 = vmul.f32 %v2456, %v2456
    %v2961 = vmul.f32 %v2682, %v2682
    %v2962 = vmul.f32 %v2007, %v2007
    %v2963 = vmul.f32 %v2233, %v2233
    %v2964 = vmul.f32 %v2459, %v2459
    %v2965 = vmul.f32 %v2685, %v2685
    %v2966 = vmul.f32 %v2010, %v2010
    %v2967 = vmul.f32 %v2236, %v2236
    %v2968 = vmul.f32 %v2462, %v2462
    %v2969 = vmul.f32 %v2688, %v2688
    %v2970 = vadd.f32 %v2842, %v2846
    %v2971 = vadd.f32 %v2970, %v2850
    %v2972 = vadd.f32 %v2971, %v2854
    %v2973 = vadd.f32 %v2972, %v2858
    %v2974 = vadd.f32 %v2973, %v2862
    %v2975 = vadd.f32 %v2974, %v2866
    %v2976 = vadd.f32 %v2975, %v2870
    %v2977 = vadd.f32 %v2976, %v2874
    %v2978 = vadd.f32 %v2977, %v2878
    %v2979 = vadd.f32 %v2978, %v2882
    %v2980 = vadd.f32 %v2979, %v2886
    %v2981 = vadd.f32 %v2980, %v2890
    %v2982 = vadd.f32 %v2981, %v2894
    %v2983 = vadd.f32 %v2982, %v2898
    %v2984 = vadd.f32 %v2983, %v2902
    %v2985 = vadd.f32 %v2984, %v2906
    %v2986 = vadd.f32 %v2985, %v2910
    %v2987 = vadd.f32 %v2986, %v2914
    %v2988 = vadd.f32 %v2987, %v2918
    %v2989 = vadd.f32 %v2988, %v2922
    %v2990 = vadd.f32 %v2989, %v2926
    %v2991 = vadd.f32 %v2990, %v2930
    %v2992 = vadd.f32 %v2991, %v2934
    %v2993 = vadd.f32 %v2992, %v2938
    %v2994 = vadd.f32 %v2993, %v2942
    %v2995 = vadd.f32 %v2994, %v2946
    %v2996 = vadd.f32 %v2995, %v2950
    %v2997 = vadd.f32 %v2996, %v2954
    %v2998 = vadd.f32 %v2997, %v2958
    %v2999 = vadd.f32 %v2998, %v2962
    %v3000 = vadd.f32 %v2999, %v2966
    %v3001 = vrot.slane %v3000, 4
    %v3002 = vadd.f32 %v3000, %v3001
    %v3003 = vrot.slane %v3002, 2
    %v3004 = vadd.f32 %v3002, %v3003
    %v3005 = vrot.slane %v3004, 1
    %v3006 = vadd.f32 %v3004, %v3005
    %v3007 = vadd.f32 %v2843, %v2847
    %v3008 = vadd.f32 %v3007, %v2851
    %v3009 = vadd.f32 %v3008, %v2855
    %v3010 = vadd.f32 %v3009, %v2859
    %v3011 = vadd.f32 %v3010, %v2863
    %v3012 = vadd.f32 %v3011, %v2867
    %v3013 = vadd.f32 %v3012, %v2871
    %v3014 = vadd.f32 %v3013, %v2875
    %v3015 = vadd.f32 %v3014, %v2879
    %v3016 = vadd.f32 %v3015, %v2883
    %v3017 = vadd.f32 %v3016, %v2887
    %v3018 = vadd.f32 %v3017, %v2891
    %v3019 = vadd.f32 %v3018, %v2895
    %v3020 = vadd.f32 %v3019, %v2899
    %v3021 = vadd.f32 %v3020, %v2903
    %v3022 = vadd.f32 %v3021, %v2907
    %v3023 = vadd.f32 %v3022, %v2911
    %v3024 = vadd.f32 %v3023, %v2915
    %v3025 = vadd.f32 %v3024, %v2919
    %v3026 = vadd.f32 %v3025, %v2923
    %v3027 = vadd.f32 %v3026, %v2927
    %v3028 = vadd.f32 %v3027, %v2931
    %v3029 = vadd.f32 %v3028, %v2935
    %v3030 = vadd.f32 %v3029, %v2939
    %v3031 = vadd.f32 %v3030, %v2943
    %v3032 = vadd.f32 %v3031, %v2947
    %v3033 = vadd.f32 %v3032, %v2951
    %v3034 = vadd.f32 %v3033, %v2955
    %v3035 = vadd.f32 %v3034, %v2959
    %v3036 = vadd.f32 %v3035, %v2963
    %v3037 = vadd.f32 %v3036, %v2967
    %v3038 = vrot.slane %v3037, 4
    %v3039 = vadd.f32 %v3037, %v3038
    %v3040 = vrot.slane %v3039, 2
    %v3041 = vadd.f32 %v3039, %v3040
    %v3042 = vrot.slane %v3041, 1
    %v3043 = vadd.f32 %v3041, %v3042
    %v3044 = vadd.f32 %v2844, %v2848
    %v3045 = vadd.f32 %v3044, %v2852
    %v3046 = vadd.f32 %v3045, %v2856
    %v3047 = vadd.f32 %v3046, %v2860
    %v3048 = vadd.f32 %v3047, %v2864
    %v3049 = vadd.f32 %v3048, %v2868
    %v3050 = vadd.f32 %v3049, %v2872
    %v3051 = vadd.f32 %v3050, %v2876
    %v3052 = vadd.f32 %v3051, %v2880
    %v3053 = vadd.f32 %v3052, %v2884
    %v3054 = vadd.f32 %v3053, %v2888
    %v3055 = vadd.f32 %v3054, %v2892
    %v3056 = vadd.f32 %v3055, %v2896
    %v3057 = vadd.f32 %v3056, %v2900
    %v3058 = vadd.f32 %v3057, %v2904
    %v3059 = vadd.f32 %v3058, %v2908
    %v3060 = vadd.f32 %v3059, %v2912
    %v3061 = vadd.f32 %v3060, %v2916
    %v3062 = vadd.f32 %v3061, %v2920
    %v3063 = vadd.f32 %v3062, %v2924
    %v3064 = vadd.f32 %v3063, %v2928
    %v3065 = vadd.f32 %v3064, %v2932
    %v3066 = vadd.f32 %v3065, %v2936
    %v3067 = vadd.f32 %v3066, %v2940
    %v3068 = vadd.f32 %v3067, %v2944
    %v3069 = vadd.f32 %v3068, %v2948
    %v3070 = vadd.f32 %v3069, %v2952
    %v3071 = vadd.f32 %v3070, %v2956
    %v3072 = vadd.f32 %v3071, %v2960
    %v3073 = vadd.f32 %v3072, %v2964
    %v3074 = vadd.f32 %v3073, %v2968
    %v3075 = vrot.slane %v3074, 4
    %v3076 = vadd.f32 %v3074, %v3075
    %v3077 = vrot.slane %v3076, 2
    %v3078 = vadd.f32 %v3076, %v3077
    %v3079 = vrot.slane %v3078, 1
    %v3080 = vadd.f32 %v3078, %v3079
    %v3081 = vadd.f32 %v2845, %v2849
    %v3082 = vadd.f32 %v3081, %v2853
    %v3083 = vadd.f32 %v3082, %v2857
    %v3084 = vadd.f32 %v3083, %v2861
    %v3085 = vadd.f32 %v3084, %v2865
    %v3086 = vadd.f32 %v3085, %v2869
    %v3087 = vadd.f32 %v3086, %v2873
    %v3088 = vadd.f32 %v3087, %v2877
    %v3089 = vadd.f32 %v3088, %v2881
    %v3090 = vadd.f32 %v3089, %v2885
    %v3091 = vadd.f32 %v3090, %v2889
    %v3092 = vadd.f32 %v3091, %v2893
    %v3093 = vadd.f32 %v3092, %v2897
    %v3094 = vadd.f32 %v3093, %v2901
    %v3095 = vadd.f32 %v3094, %v2905
    %v3096 = vadd.f32 %v3095, %v2909
    %v3097 = vadd.f32 %v3096, %v2913
    %v3098 = vadd.f32 %v3097, %v2917
    %v3099 = vadd.f32 %v3098, %v2921
    %v3100 = vadd.f32 %v3099, %v2925
    %v3101 = vadd.f32 %v3100, %v2929
    %v3102 = vadd.f32 %v3101, %v2933
    %v3103 = vadd.f32 %v3102, %v2937
    %v3104 = vadd.f32 %v3103, %v2941
    %v3105 = vadd.f32 %v3104, %v2945
    %v3106 = vadd.f32 %v3105, %v2949
    %v3107 = vadd.f32 %v3106, %v2953
    %v3108 = vadd.f32 %v3107, %v2957
    %v3109 = vadd.f32 %v3108, %v2961
    %v3110 = vadd.f32 %v3109, %v2965
    %v3111 = vadd.f32 %v3110, %v2969
    %v3112 = vrot.slane %v3111, 4
    %v3113 = vadd.f32 %v3111, %v3112
    %v3114 = vrot.slane %v3113, 2
    %v3115 = vadd.f32 %v3113, %v3114
    %v3116 = vrot.slane %v3115, 1
    %v3117 = vadd.f32 %v3115, %v3116
    %v3118 = vmul.f32 %v3006, %v1142
    %v3119 = vmul.f32 %v3043, %v1142
    %v3120 = vmul.f32 %v3080, %v1142
    %v3121 = vmul.f32 %v3117, %v1142
    %v3122 = vmul.f32 %v2838, %v2838
    %v3123 = vmul.f32 %v2839, %v2839
    %v3124 = vmul.f32 %v2840, %v2840
    %v3125 = vmul.f32 %v2841, %v2841
    %v3126 = vsub.f32 %v3118, %v3122
    %v3127 = vsub.f32 %v3119, %v3123
    %v3128 = vsub.f32 %v3120, %v3124
    %v3129 = vsub.f32 %v3121, %v3125
    %v3130 = vld [vmem:[%s9] sm:$0xf]
    %v3131 = vadd.f32 %v3126, 0.8
    %v3132 = vadd.f32 %v3127, 0.8
    %v3133 = vadd.f32 %v3128, 0.8
    %v3134 = vadd.f32 %v3129, 0.8
    %v3135 = vrsqrt.pop %v3131
    %v3136 = vmul.f32 %v3135, %v3131
    %v3137 = vmul.f32 %v3136, %v3135
    %v3138 = vmul.f32 0.5, %v3137
    %v3139 = vsub.f32 1.5, %v3138
    %v3140 = vmul.f32 %v3135, %v3139
    %vm3141 = vweird.f32 %v3131
    %vm3142 = vweird.f32 %v3135
    %vm3143 = vmor %vm3141, %vm3142
    %v3144 = vsel %vm3143, %v3135, %v3140
    %v3145 = vrsqrt.pop %v3132
    %v3146 = vmul.f32 %v3145, %v3132
    %v3147 = vmul.f32 %v3146, %v3145
    %v3148 = vmul.f32 0.5, %v3147
    %v3149 = vsub.f32 1.5, %v3148
    %v3150 = vmul.f32 %v3145, %v3149
    %vm3151 = vweird.f32 %v3132
    %vm3152 = vweird.f32 %v3145
    %vm3153 = vmor %vm3151, %vm3152
    %v3154 = vsel %vm3153, %v3145, %v3150
    %v3155 = vrsqrt.pop %v3133
    %v3156 = vmul.f32 %v3155, %v3133
    %v3157 = vmul.f32 %v3156, %v3155
    %v3158 = vmul.f32 0.5, %v3157
    %v3159 = vsub.f32 1.5, %v3158
    %v3160 = vmul.f32 %v3155, %v3159
    %vm3161 = vweird.f32 %v3133
    %vm3162 = vweird.f32 %v3155
    %vm3163 = vmor %vm3161, %vm3162
    %v3164 = vsel %vm3163, %v3155, %v3160
    %v3165 = vrsqrt.pop %v3134
    %v3166 = vmul.f32 %v3165, %v3134
    %v3167 = vmul.f32 %v3166, %v3165
    %v3168 = vmul.f32 0.5, %v3167
    %v3169 = vsub.f32 1.5, %v3168
    %v3170 = vmul.f32 %v3165, %v3169
    %vm3171 = vweird.f32 %v3134
    %vm3172 = vweird.f32 %v3165
    %vm3173 = vmor %vm3171, %vm3172
    %v3174 = vsel %vm3173, %v3165, %v3170
    %v3179 = vrot.slane %v3154, 7
    %v3180 = vrot.slane %v3164, 6
    %v3181 = vrot.slane %v3174, 5
    %v3182 = vsel %vm1315, %v3144, %v3179
    %vm3183 = vcmask 1042434
    %v3184 = vsel %vm3183, %v3180, %v3181
    %vm3185 = vcmask 1041408
    %v3186 = vsel %vm3185, %v3182, %v3184
    %v3188 = vmul.f32 %v3130, %v3186
    %v3189 = vld [vmem:[%s10] sm:$0xf]
    %v3191 = vperm.slane %v3188, 0
    %v3192 = vperm.slane %v3188, 1
    %v3193 = vperm.slane %v3188, 2
    %v3194 = vperm.slane %v3188, 3
    %v3199 = vmul.f32 %v2838, %v3191
    %v3200 = vmul.f32 %v2839, %v3192
    %v3201 = vmul.f32 %v2840, %v3193
    %v3202 = vmul.f32 %v2841, %v3194
    %v3207 = vrot.slane %v3200, 7
    %v3208 = vrot.slane %v3201, 6
    %v3209 = vrot.slane %v3202, 5
    %v3210 = vsel %vm1315, %v3199, %v3207
    %v3211 = vsel %vm3183, %v3208, %v3209
    %v3212 = vsel %vm3185, %v3210, %v3211
    %v3214 = vsub.f32 %v3189, %v3212
    %v3215 = vmul.f32 %v1917, %v3191
    %v3216 = vmul.f32 %v2143, %v3192
    %v3217 = vmul.f32 %v2369, %v3193
    %v3218 = vmul.f32 %v2595, %v3194
    %v3219 = vmul.f32 %v1920, %v3191
    %v3220 = vmul.f32 %v2146, %v3192
    %v3221 = vmul.f32 %v2372, %v3193
    %v3222 = vmul.f32 %v2598, %v3194
    %v3223 = vmul.f32 %v1923, %v3191
    %v3224 = vmul.f32 %v2149, %v3192
    %v3225 = vmul.f32 %v2375, %v3193
    %v3226 = vmul.f32 %v2601, %v3194
    %v3227 = vmul.f32 %v1926, %v3191
    %v3228 = vmul.f32 %v2152, %v3192
    %v3229 = vmul.f32 %v2378, %v3193
    %v3230 = vmul.f32 %v2604, %v3194
    %v3231 = vmul.f32 %v1929, %v3191
    %v3232 = vmul.f32 %v2155, %v3192
    %v3233 = vmul.f32 %v2381, %v3193
    %v3234 = vmul.f32 %v2607, %v3194
    %v3235 = vmul.f32 %v1932, %v3191
    %v3236 = vmul.f32 %v2158, %v3192
    %v3237 = vmul.f32 %v2384, %v3193
    %v3238 = vmul.f32 %v2610, %v3194
    %v3239 = vmul.f32 %v1935, %v3191
    %v3240 = vmul.f32 %v2161, %v3192
    %v3241 = vmul.f32 %v2387, %v3193
    %v3242 = vmul.f32 %v2613, %v3194
    %v3243 = vmul.f32 %v1938, %v3191
    %v3244 = vmul.f32 %v2164, %v3192
    %v3245 = vmul.f32 %v2390, %v3193
    %v3246 = vmul.f32 %v2616, %v3194
    %v3247 = vmul.f32 %v1941, %v3191
    %v3248 = vmul.f32 %v2167, %v3192
    %v3249 = vmul.f32 %v2393, %v3193
    %v3250 = vmul.f32 %v2619, %v3194
    %v3251 = vmul.f32 %v1944, %v3191
    %v3252 = vmul.f32 %v2170, %v3192
    %v3253 = vmul.f32 %v2396, %v3193
    %v3254 = vmul.f32 %v2622, %v3194
    %v3255 = vmul.f32 %v1947, %v3191
    %v3256 = vmul.f32 %v2173, %v3192
    %v3257 = vmul.f32 %v2399, %v3193
    %v3258 = vmul.f32 %v2625, %v3194
    %v3259 = vmul.f32 %v1950, %v3191
    %v3260 = vmul.f32 %v2176, %v3192
    %v3261 = vmul.f32 %v2402, %v3193
    %v3262 = vmul.f32 %v2628, %v3194
    %v3263 = vmul.f32 %v1953, %v3191
    %v3264 = vmul.f32 %v2179, %v3192
    %v3265 = vmul.f32 %v2405, %v3193
    %v3266 = vmul.f32 %v2631, %v3194
    %v3267 = vmul.f32 %v1956, %v3191
    %v3268 = vmul.f32 %v2182, %v3192
    %v3269 = vmul.f32 %v2408, %v3193
    %v3270 = vmul.f32 %v2634, %v3194
    %v3271 = vmul.f32 %v1959, %v3191
    %v3272 = vmul.f32 %v2185, %v3192
    %v3273 = vmul.f32 %v2411, %v3193
    %v3274 = vmul.f32 %v2637, %v3194
    %v3275 = vmul.f32 %v1962, %v3191
    %v3276 = vmul.f32 %v2188, %v3192
    %v3277 = vmul.f32 %v2414, %v3193
    %v3278 = vmul.f32 %v2640, %v3194
    %v3279 = vmul.f32 %v1965, %v3191
    %v3280 = vmul.f32 %v2191, %v3192
    %v3281 = vmul.f32 %v2417, %v3193
    %v3282 = vmul.f32 %v2643, %v3194
    %v3283 = vmul.f32 %v1968, %v3191
    %v3284 = vmul.f32 %v2194, %v3192
    %v3285 = vmul.f32 %v2420, %v3193
    %v3286 = vmul.f32 %v2646, %v3194
    %v3287 = vmul.f32 %v1971, %v3191
    %v3288 = vmul.f32 %v2197, %v3192
    %v3289 = vmul.f32 %v2423, %v3193
    %v3290 = vmul.f32 %v2649, %v3194
    %v3291 = vmul.f32 %v1974, %v3191
    %v3292 = vmul.f32 %v2200, %v3192
    %v3293 = vmul.f32 %v2426, %v3193
    %v3294 = vmul.f32 %v2652, %v3194
    %v3295 = vmul.f32 %v1977, %v3191
    %v3296 = vmul.f32 %v2203, %v3192
    %v3297 = vmul.f32 %v2429, %v3193
    %v3298 = vmul.f32 %v2655, %v3194
    %v3299 = vmul.f32 %v1980, %v3191
    %v3300 = vmul.f32 %v2206, %v3192
    %v3301 = vmul.f32 %v2432, %v3193
    %v3302 = vmul.f32 %v2658, %v3194
    %v3303 = vmul.f32 %v1983, %v3191
    %v3304 = vmul.f32 %v2209, %v3192
    %v3305 = vmul.f32 %v2435, %v3193
    %v3306 = vmul.f32 %v2661, %v3194
    %v3307 = vmul.f32 %v1986, %v3191
    %v3308 = vmul.f32 %v2212, %v3192
    %v3309 = vmul.f32 %v2438, %v3193
    %v3310 = vmul.f32 %v2664, %v3194
    %v3311 = vmul.f32 %v1989, %v3191
    %v3312 = vmul.f32 %v2215, %v3192
    %v3313 = vmul.f32 %v2441, %v3193
    %v3314 = vmul.f32 %v2667, %v3194
    %v3315 = vmul.f32 %v1992, %v3191
    %v3316 = vmul.f32 %v2218, %v3192
    %v3317 = vmul.f32 %v2444, %v3193
    %v3318 = vmul.f32 %v2670, %v3194
    %v3319 = vmul.f32 %v1995, %v3191
    %v3320 = vmul.f32 %v2221, %v3192
    %v3321 = vmul.f32 %v2447, %v3193
    %v3322 = vmul.f32 %v2673, %v3194
    %v3323 = vmul.f32 %v1998, %v3191
    %v3324 = vmul.f32 %v2224, %v3192
    %v3325 = vmul.f32 %v2450, %v3193
    %v3326 = vmul.f32 %v2676, %v3194
    %v3327 = vmul.f32 %v2001, %v3191
    %v3328 = vmul.f32 %v2227, %v3192
    %v3329 = vmul.f32 %v2453, %v3193
    %v3330 = vmul.f32 %v2679, %v3194
    %v3331 = vmul.f32 %v2004, %v3191
    %v3332 = vmul.f32 %v2230, %v3192
    %v3333 = vmul.f32 %v2456, %v3193
    %v3334 = vmul.f32 %v2682, %v3194
    %v3335 = vmul.f32 %v2007, %v3191
    %v3336 = vmul.f32 %v2233, %v3192
    %v3337 = vmul.f32 %v2459, %v3193
    %v3338 = vmul.f32 %v2685, %v3194
    %v3339 = vmul.f32 %v2010, %v3191
    %v3340 = vmul.f32 %v2236, %v3192
    %v3341 = vmul.f32 %v2462, %v3193
    %v3342 = vmul.f32 %v2688, %v3194
    %v3344 = vperm.slane %v3214, 0
    %v3345 = vperm.slane %v3214, 1
    %v3346 = vperm.slane %v3214, 2
    %v3347 = vperm.slane %v3214, 3
    %v3352 = vadd.f32 %v3215, %v3344
    %v3353 = vadd.f32 %v3216, %v3345
    %v3354 = vadd.f32 %v3217, %v3346
    %v3355 = vadd.f32 %v3218, %v3347
    %v3356 = vadd.f32 %v3219, %v3344
    %v3357 = vadd.f32 %v3220, %v3345
    %v3358 = vadd.f32 %v3221, %v3346
    %v3359 = vadd.f32 %v3222, %v3347
    %v3360 = vadd.f32 %v3223, %v3344
    %v3361 = vadd.f32 %v3224, %v3345
    %v3362 = vadd.f32 %v3225, %v3346
    %v3363 = vadd.f32 %v3226, %v3347
    %v3364 = vadd.f32 %v3227, %v3344
    %v3365 = vadd.f32 %v3228, %v3345
    %v3366 = vadd.f32 %v3229, %v3346
    %v3367 = vadd.f32 %v3230, %v3347
    %v3368 = vadd.f32 %v3231, %v3344
    %v3369 = vadd.f32 %v3232, %v3345
    %v3370 = vadd.f32 %v3233, %v3346
    %v3371 = vadd.f32 %v3234, %v3347
    %v3372 = vadd.f32 %v3235, %v3344
    %v3373 = vadd.f32 %v3236, %v3345
    %v3374 = vadd.f32 %v3237, %v3346
    %v3375 = vadd.f32 %v3238, %v3347
    %v3376 = vadd.f32 %v3239, %v3344
    %v3377 = vadd.f32 %v3240, %v3345
    %v3378 = vadd.f32 %v3241, %v3346
    %v3379 = vadd.f32 %v3242, %v3347
    %v3380 = vadd.f32 %v3243, %v3344
    %v3381 = vadd.f32 %v3244, %v3345
    %v3382 = vadd.f32 %v3245, %v3346
    %v3383 = vadd.f32 %v3246, %v3347
    %v3384 = vadd.f32 %v3247, %v3344
    %v3385 = vadd.f32 %v3248, %v3345
    %v3386 = vadd.f32 %v3249, %v3346
    %v3387 = vadd.f32 %v3250, %v3347
    %v3388 = vadd.f32 %v3251, %v3344
    %v3389 = vadd.f32 %v3252, %v3345
    %v3390 = vadd.f32 %v3253, %v3346
    %v3391 = vadd.f32 %v3254, %v3347
    %v3392 = vadd.f32 %v3255, %v3344
    %v3393 = vadd.f32 %v3256, %v3345
    %v3394 = vadd.f32 %v3257, %v3346
    %v3395 = vadd.f32 %v3258, %v3347
    %v3396 = vadd.f32 %v3259, %v3344
    %v3397 = vadd.f32 %v3260, %v3345
    %v3398 = vadd.f32 %v3261, %v3346
    %v3399 = vadd.f32 %v3262, %v3347
    %v3400 = vadd.f32 %v3263, %v3344
    %v3401 = vadd.f32 %v3264, %v3345
    %v3402 = vadd.f32 %v3265, %v3346
    %v3403 = vadd.f32 %v3266, %v3347
    %v3404 = vadd.f32 %v3267, %v3344
    %v3405 = vadd.f32 %v3268, %v3345
    %v3406 = vadd.f32 %v3269, %v3346
    %v3407 = vadd.f32 %v3270, %v3347
    %v3408 = vadd.f32 %v3271, %v3344
    %v3409 = vadd.f32 %v3272, %v3345
    %v3410 = vadd.f32 %v3273, %v3346
    %v3411 = vadd.f32 %v3274, %v3347
    %v3412 = vadd.f32 %v3275, %v3344
    %v3413 = vadd.f32 %v3276, %v3345
    %v3414 = vadd.f32 %v3277, %v3346
    %v3415 = vadd.f32 %v3278, %v3347
    %v3416 = vadd.f32 %v3279, %v3344
    %v3417 = vadd.f32 %v3280, %v3345
    %v3418 = vadd.f32 %v3281, %v3346
    %v3419 = vadd.f32 %v3282, %v3347
    %v3420 = vadd.f32 %v3283, %v3344
    %v3421 = vadd.f32 %v3284, %v3345
    %v3422 = vadd.f32 %v3285, %v3346
    %v3423 = vadd.f32 %v3286, %v3347
    %v3424 = vadd.f32 %v3287, %v3344
    %v3425 = vadd.f32 %v3288, %v3345
    %v3426 = vadd.f32 %v3289, %v3346
    %v3427 = vadd.f32 %v3290, %v3347
    %v3428 = vadd.f32 %v3291, %v3344
    %v3429 = vadd.f32 %v3292, %v3345
    %v3430 = vadd.f32 %v3293, %v3346
    %v3431 = vadd.f32 %v3294, %v3347
    %v3432 = vadd.f32 %v3295, %v3344
    %v3433 = vadd.f32 %v3296, %v3345
    %v3434 = vadd.f32 %v3297, %v3346
    %v3435 = vadd.f32 %v3298, %v3347
    %v3436 = vadd.f32 %v3299, %v3344
    %v3437 = vadd.f32 %v3300, %v3345
    %v3438 = vadd.f32 %v3301, %v3346
    %v3439 = vadd.f32 %v3302, %v3347
    %v3440 = vadd.f32 %v3303, %v3344
    %v3441 = vadd.f32 %v3304, %v3345
    %v3442 = vadd.f32 %v3305, %v3346
    %v3443 = vadd.f32 %v3306, %v3347
    %v3444 = vadd.f32 %v3307, %v3344
    %v3445 = vadd.f32 %v3308, %v3345
    %v3446 = vadd.f32 %v3309, %v3346
    %v3447 = vadd.f32 %v3310, %v3347
    %v3448 = vadd.f32 %v3311, %v3344
    %v3449 = vadd.f32 %v3312, %v3345
    %v3450 = vadd.f32 %v3313, %v3346
    %v3451 = vadd.f32 %v3314, %v3347
    %v3452 = vadd.f32 %v3315, %v3344
    %v3453 = vadd.f32 %v3316, %v3345
    %v3454 = vadd.f32 %v3317, %v3346
    %v3455 = vadd.f32 %v3318, %v3347
    %v3456 = vadd.f32 %v3319, %v3344
    %v3457 = vadd.f32 %v3320, %v3345
    %v3458 = vadd.f32 %v3321, %v3346
    %v3459 = vadd.f32 %v3322, %v3347
    %v3460 = vadd.f32 %v3323, %v3344
    %v3461 = vadd.f32 %v3324, %v3345
    %v3462 = vadd.f32 %v3325, %v3346
    %v3463 = vadd.f32 %v3326, %v3347
    %v3464 = vadd.f32 %v3327, %v3344
    %v3465 = vadd.f32 %v3328, %v3345
    %v3466 = vadd.f32 %v3329, %v3346
    %v3467 = vadd.f32 %v3330, %v3347
    %v3468 = vadd.f32 %v3331, %v3344
    %v3469 = vadd.f32 %v3332, %v3345
    %v3470 = vadd.f32 %v3333, %v3346
    %v3471 = vadd.f32 %v3334, %v3347
    %v3472 = vadd.f32 %v3335, %v3344
    %v3473 = vadd.f32 %v3336, %v3345
    %v3474 = vadd.f32 %v3337, %v3346
    %v3475 = vadd.f32 %v3338, %v3347
    %v3476 = vadd.f32 %v3339, %v3344
    %v3477 = vadd.f32 %v3340, %v3345
    %v3478 = vadd.f32 %v3341, %v3346
    %v3479 = vadd.f32 %v3342, %v3347
    %v3480 = vmul.f32 %v3352, 0.2
    %v3481 = vmul.f32 %v3353, 0.2
    %v3482 = vmul.f32 %v3354, 0.2
    %v3483 = vmul.f32 %v3355, 0.2
    %v3484 = vmul.f32 %v3356, 0.2
    %v3485 = vmul.f32 %v3357, 0.2
    %v3486 = vmul.f32 %v3358, 0.2
    %v3487 = vmul.f32 %v3359, 0.2
    %v3488 = vmul.f32 %v3360, 0.2
    %v3489 = vmul.f32 %v3361, 0.2
    %v3490 = vmul.f32 %v3362, 0.2
    %v3491 = vmul.f32 %v3363, 0.2
    %v3492 = vmul.f32 %v3364, 0.2
    %v3493 = vmul.f32 %v3365, 0.2
    %v3494 = vmul.f32 %v3366, 0.2
    %v3495 = vmul.f32 %v3367, 0.2
    %v3496 = vmul.f32 %v3368, 0.2
    %v3497 = vmul.f32 %v3369, 0.2
    %v3498 = vmul.f32 %v3370, 0.2
    %v3499 = vmul.f32 %v3371, 0.2
    %v3500 = vmul.f32 %v3372, 0.2
    %v3501 = vmul.f32 %v3373, 0.2
    %v3502 = vmul.f32 %v3374, 0.2
    %v3503 = vmul.f32 %v3375, 0.2
    %v3504 = vmul.f32 %v3376, 0.2
    %v3505 = vmul.f32 %v3377, 0.2
    %v3506 = vmul.f32 %v3378, 0.2
    %v3507 = vmul.f32 %v3379, 0.2
    %v3508 = vmul.f32 %v3380, 0.2
    %v3509 = vmul.f32 %v3381, 0.2
    %v3510 = vmul.f32 %v3382, 0.2
    %v3511 = vmul.f32 %v3383, 0.2
    %v3512 = vmul.f32 %v3384, 0.2
    %v3513 = vmul.f32 %v3385, 0.2
    %v3514 = vmul.f32 %v3386, 0.2
    %v3515 = vmul.f32 %v3387, 0.2
    %v3516 = vmul.f32 %v3388, 0.2
    %v3517 = vmul.f32 %v3389, 0.2
    %v3518 = vmul.f32 %v3390, 0.2
    %v3519 = vmul.f32 %v3391, 0.2
    %v3520 = vmul.f32 %v3392, 0.2
    %v3521 = vmul.f32 %v3393, 0.2
    %v3522 = vmul.f32 %v3394, 0.2
    %v3523 = vmul.f32 %v3395, 0.2
    %v3524 = vmul.f32 %v3396, 0.2
    %v3525 = vmul.f32 %v3397, 0.2
    %v3526 = vmul.f32 %v3398, 0.2
    %v3527 = vmul.f32 %v3399, 0.2
    %v3528 = vmul.f32 %v3400, 0.2
    %v3529 = vmul.f32 %v3401, 0.2
    %v3530 = vmul.f32 %v3402, 0.2
    %v3531 = vmul.f32 %v3403, 0.2
    %v3532 = vmul.f32 %v3404, 0.2
    %v3533 = vmul.f32 %v3405, 0.2
    %v3534 = vmul.f32 %v3406, 0.2
    %v3535 = vmul.f32 %v3407, 0.2
    %v3536 = vmul.f32 %v3408, 0.2
    %v3537 = vmul.f32 %v3409, 0.2
    %v3538 = vmul.f32 %v3410, 0.2
    %v3539 = vmul.f32 %v3411, 0.2
    %v3540 = vmul.f32 %v3412, 0.2
    %v3541 = vmul.f32 %v3413, 0.2
    %v3542 = vmul.f32 %v3414, 0.2
    %v3543 = vmul.f32 %v3415, 0.2
    %v3544 = vmul.f32 %v3416, 0.2
    %v3545 = vmul.f32 %v3417, 0.2
    %v3546 = vmul.f32 %v3418, 0.2
    %v3547 = vmul.f32 %v3419, 0.2
    %v3548 = vmul.f32 %v3420, 0.2
    %v3549 = vmul.f32 %v3421, 0.2
    %v3550 = vmul.f32 %v3422, 0.2
    %v3551 = vmul.f32 %v3423, 0.2
    %v3552 = vmul.f32 %v3424, 0.2
    %v3553 = vmul.f32 %v3425, 0.2
    %v3554 = vmul.f32 %v3426, 0.2
    %v3555 = vmul.f32 %v3427, 0.2
    %v3556 = vmul.f32 %v3428, 0.2
    %v3557 = vmul.f32 %v3429, 0.2
    %v3558 = vmul.f32 %v3430, 0.2
    %v3559 = vmul.f32 %v3431, 0.2
    %v3560 = vmul.f32 %v3432, 0.2
    %v3561 = vmul.f32 %v3433, 0.2
    %v3562 = vmul.f32 %v3434, 0.2
    %v3563 = vmul.f32 %v3435, 0.2
    %v3564 = vmul.f32 %v3436, 0.2
    %v3565 = vmul.f32 %v3437, 0.2
    %v3566 = vmul.f32 %v3438, 0.2
    %v3567 = vmul.f32 %v3439, 0.2
    %v3568 = vmul.f32 %v3440, 0.2
    %v3569 = vmul.f32 %v3441, 0.2
    %v3570 = vmul.f32 %v3442, 0.2
    %v3571 = vmul.f32 %v3443, 0.2
    %v3572 = vmul.f32 %v3444, 0.2
    %v3573 = vmul.f32 %v3445, 0.2
    %v3574 = vmul.f32 %v3446, 0.2
    %v3575 = vmul.f32 %v3447, 0.2
    %v3576 = vmul.f32 %v3448, 0.2
    %v3577 = vmul.f32 %v3449, 0.2
    %v3578 = vmul.f32 %v3450, 0.2
    %v3579 = vmul.f32 %v3451, 0.2
    %v3580 = vmul.f32 %v3452, 0.2
    %v3581 = vmul.f32 %v3453, 0.2
    %v3582 = vmul.f32 %v3454, 0.2
    %v3583 = vmul.f32 %v3455, 0.2
    %v3584 = vmul.f32 %v3456, 0.2
    %v3585 = vmul.f32 %v3457, 0.2
    %v3586 = vmul.f32 %v3458, 0.2
    %v3587 = vmul.f32 %v3459, 0.2
    %v3588 = vmul.f32 %v3460, 0.2
    %v3589 = vmul.f32 %v3461, 0.2
    %v3590 = vmul.f32 %v3462, 0.2
    %v3591 = vmul.f32 %v3463, 0.2
    %v3592 = vmul.f32 %v3464, 0.2
    %v3593 = vmul.f32 %v3465, 0.2
    %v3594 = vmul.f32 %v3466, 0.2
    %v3595 = vmul.f32 %v3467, 0.2
    %v3596 = vmul.f32 %v3468, 0.2
    %v3597 = vmul.f32 %v3469, 0.2
    %v3598 = vmul.f32 %v3470, 0.2
    %v3599 = vmul.f32 %v3471, 0.2
    %v3600 = vmul.f32 %v3472, 0.2
    %v3601 = vmul.f32 %v3473, 0.2
    %v3602 = vmul.f32 %v3474, 0.2
    %v3603 = vmul.f32 %v3475, 0.2
    %v3604 = vmul.f32 %v3476, 0.2
    %v3605 = vmul.f32 %v3477, 0.2
    %v3606 = vmul.f32 %v3478, 0.2
    %v3607 = vmul.f32 %v3479, 0.2
    %v3608 = vmax.f32 %v3352, %v3480
    %v3609 = vmax.f32 %v3353, %v3481
    %v3610 = vmax.f32 %v3354, %v3482
    %v3611 = vmax.f32 %v3355, %v3483
    %v3612 = vmax.f32 %v3356, %v3484
    %v3613 = vmax.f32 %v3357, %v3485
    %v3614 = vmax.f32 %v3358, %v3486
    %v3615 = vmax.f32 %v3359, %v3487
    %v3616 = vmax.f32 %v3360, %v3488
    %v3617 = vmax.f32 %v3361, %v3489
    %v3618 = vmax.f32 %v3362, %v3490
    %v3619 = vmax.f32 %v3363, %v3491
    %v3620 = vmax.f32 %v3364, %v3492
    %v3621 = vmax.f32 %v3365, %v3493
    %v3622 = vmax.f32 %v3366, %v3494
    %v3623 = vmax.f32 %v3367, %v3495
    %v3624 = vmax.f32 %v3368, %v3496
    %v3625 = vmax.f32 %v3369, %v3497
    %v3626 = vmax.f32 %v3370, %v3498
    %v3627 = vmax.f32 %v3371, %v3499
    %v3628 = vmax.f32 %v3372, %v3500
    %v3629 = vmax.f32 %v3373, %v3501
    %v3630 = vmax.f32 %v3374, %v3502
    %v3631 = vmax.f32 %v3375, %v3503
    %v3632 = vmax.f32 %v3376, %v3504
    %v3633 = vmax.f32 %v3377, %v3505
    %v3634 = vmax.f32 %v3378, %v3506
    %v3635 = vmax.f32 %v3379, %v3507
    %v3636 = vmax.f32 %v3380, %v3508
    %v3637 = vmax.f32 %v3381, %v3509
    %v3638 = vmax.f32 %v3382, %v3510
    %v3639 = vmax.f32 %v3383, %v3511
    %v3640 = vmax.f32 %v3384, %v3512
    %v3641 = vmax.f32 %v3385, %v3513
    %v3642 = vmax.f32 %v3386, %v3514
    %v3643 = vmax.f32 %v3387, %v3515
    %v3644 = vmax.f32 %v3388, %v3516
    %v3645 = vmax.f32 %v3389, %v3517
    %v3646 = vmax.f32 %v3390, %v3518
    %v3647 = vmax.f32 %v3391, %v3519
    %v3648 = vmax.f32 %v3392, %v3520
    %v3649 = vmax.f32 %v3393, %v3521
    %v3650 = vmax.f32 %v3394, %v3522
    %v3651 = vmax.f32 %v3395, %v3523
    %v3652 = vmax.f32 %v3396, %v3524
    %v3653 = vmax.f32 %v3397, %v3525
    %v3654 = vmax.f32 %v3398, %v3526
    %v3655 = vmax.f32 %v3399, %v3527
    %v3656 = vmax.f32 %v3400, %v3528
    %v3657 = vmax.f32 %v3401, %v3529
    %v3658 = vmax.f32 %v3402, %v3530
    %v3659 = vmax.f32 %v3403, %v3531
    %v3660 = vmax.f32 %v3404, %v3532
    %v3661 = vmax.f32 %v3405, %v3533
    %v3662 = vmax.f32 %v3406, %v3534
    %v3663 = vmax.f32 %v3407, %v3535
    %v3664 = vmax.f32 %v3408, %v3536
    %v3665 = vmax.f32 %v3409, %v3537
    %v3666 = vmax.f32 %v3410, %v3538
    %v3667 = vmax.f32 %v3411, %v3539
    %v3668 = vmax.f32 %v3412, %v3540
    %v3669 = vmax.f32 %v3413, %v3541
    %v3670 = vmax.f32 %v3414, %v3542
    %v3671 = vmax.f32 %v3415, %v3543
    %v3672 = vmax.f32 %v3416, %v3544
    %v3673 = vmax.f32 %v3417, %v3545
    %v3674 = vmax.f32 %v3418, %v3546
    %v3675 = vmax.f32 %v3419, %v3547
    %v3676 = vmax.f32 %v3420, %v3548
    %v3677 = vmax.f32 %v3421, %v3549
    %v3678 = vmax.f32 %v3422, %v3550
    %v3679 = vmax.f32 %v3423, %v3551
    %v3680 = vmax.f32 %v3424, %v3552
    %v3681 = vmax.f32 %v3425, %v3553
    %v3682 = vmax.f32 %v3426, %v3554
    %v3683 = vmax.f32 %v3427, %v3555
    %v3684 = vmax.f32 %v3428, %v3556
    %v3685 = vmax.f32 %v3429, %v3557
    %v3686 = vmax.f32 %v3430, %v3558
    %v3687 = vmax.f32 %v3431, %v3559
    %v3688 = vmax.f32 %v3432, %v3560
    %v3689 = vmax.f32 %v3433, %v3561
    %v3690 = vmax.f32 %v3434, %v3562
    %v3691 = vmax.f32 %v3435, %v3563
    %v3692 = vmax.f32 %v3436, %v3564
    %v3693 = vmax.f32 %v3437, %v3565
    %v3694 = vmax.f32 %v3438, %v3566
    %v3695 = vmax.f32 %v3439, %v3567
    %v3696 = vmax.f32 %v3440, %v3568
    %v3697 = vmax.f32 %v3441, %v3569
    %v3698 = vmax.f32 %v3442, %v3570
    %v3699 = vmax.f32 %v3443, %v3571
    %v3700 = vmax.f32 %v3444, %v3572
    %v3701 = vmax.f32 %v3445, %v3573
    %v3702 = vmax.f32 %v3446, %v3574
    %v3703 = vmax.f32 %v3447, %v3575
    %v3704 = vmax.f32 %v3448, %v3576
    %v3705 = vmax.f32 %v3449, %v3577
    %v3706 = vmax.f32 %v3450, %v3578
    %v3707 = vmax.f32 %v3451, %v3579
    %v3708 = vmax.f32 %v3452, %v3580
    %v3709 = vmax.f32 %v3453, %v3581
    %v3710 = vmax.f32 %v3454, %v3582
    %v3711 = vmax.f32 %v3455, %v3583
    %v3712 = vmax.f32 %v3456, %v3584
    %v3713 = vmax.f32 %v3457, %v3585
    %v3714 = vmax.f32 %v3458, %v3586
    %v3715 = vmax.f32 %v3459, %v3587
    %v3716 = vmax.f32 %v3460, %v3588
    %v3717 = vmax.f32 %v3461, %v3589
    %v3718 = vmax.f32 %v3462, %v3590
    %v3719 = vmax.f32 %v3463, %v3591
    %v3720 = vmax.f32 %v3464, %v3592
    %v3721 = vmax.f32 %v3465, %v3593
    %v3722 = vmax.f32 %v3466, %v3594
    %v3723 = vmax.f32 %v3467, %v3595
    %v3724 = vmax.f32 %v3468, %v3596
    %v3725 = vmax.f32 %v3469, %v3597
    %v3726 = vmax.f32 %v3470, %v3598
    %v3727 = vmax.f32 %v3471, %v3599
    %v3728 = vmax.f32 %v3472, %v3600
    %v3729 = vmax.f32 %v3473, %v3601
    %v3730 = vmax.f32 %v3474, %v3602
    %v3731 = vmax.f32 %v3475, %v3603
    %v3732 = vmax.f32 %v3476, %v3604
    %v3733 = vmax.f32 %v3477, %v3605
    %v3734 = vmax.f32 %v3478, %v3606
    %v3735 = vmax.f32 %v3479, %v3607
    %v3736 = vld [vmem:[#allocation10] sm:$0xff]
    %v3737 = vld [vmem:[#allocation10 + $0x8] sm:$0xff]
    %v3738 = vld [vmem:[#allocation10 + $0x10] sm:$0xff]
    %v3739 = vld [vmem:[#allocation10 + $0x18] sm:$0xff]
    %v3740 = vld [vmem:[#allocation10 + $0x20] sm:$0xff]
    %v3741 = vld [vmem:[#allocation10 + $0x28] sm:$0xff]
    %v3742 = vld [vmem:[#allocation10 + $0x30] sm:$0xff]
    %v3743 = vld [vmem:[#allocation10 + $0x38] sm:$0xff]
    %v3744 = vld [vmem:[#allocation10 + $0x40] sm:$0xff]
    %v3745 = vld [vmem:[#allocation10 + $0x48] sm:$0xff]
    %v3746 = vld [vmem:[#allocation10 + $0x50] sm:$0xff]
    %v3747 = vld [vmem:[#allocation10 + $0x58] sm:$0xff]
    %v3748 = vld [vmem:[#allocation10 + $0x60] sm:$0xff]
    %v3749 = vld [vmem:[#allocation10 + $0x68] sm:$0xff]
    %v3750 = vld [vmem:[#allocation10 + $0x70] sm:$0xff]
    %v3751 = vld [vmem:[#allocation10 + $0x78] sm:$0xff]
    %v3752 = vld [vmem:[#allocation10 + $0x80] sm:$0xff]
    %v3753 = vld [vmem:[#allocation10 + $0x88] sm:$0xff]
    %v3754 = vld [vmem:[#allocation10 + $0x90] sm:$0xff]
    %v3755 = vld [vmem:[#allocation10 + $0x98] sm:$0xff]
    %v3756 = vld [vmem:[#allocation10 + $0xa0] sm:$0xff]
    %v3757 = vld [vmem:[#allocation10 + $0xa8] sm:$0xff]
    %v3758 = vld [vmem:[#allocation10 + $0xb0] sm:$0xff]
    %v3759 = vld [vmem:[#allocation10 + $0xb8] sm:$0xff]
    %v3760 = vld [vmem:[#allocation10 + $0xc0] sm:$0xff]
    %v3761 = vld [vmem:[#allocation10 + $0xc8] sm:$0xff]
    %v3762 = vld [vmem:[#allocation10 + $0xd0] sm:$0xff]
    %v3763 = vld [vmem:[#allocation10 + $0xd8] sm:$0xff]
    %v3764 = vld [vmem:[#allocation10 + $0xe0] sm:$0xff]
    %v3765 = vld [vmem:[#allocation10 + $0xe8] sm:$0xff]
    %v3766 = vld [vmem:[#allocation10 + $0xf0] sm:$0xff]
    %v3767 = vld [vmem:[#allocation10 + $0xf8] sm:$0xff]
    %v3768 = vld [vmem:[#allocation10 + $0x100] sm:$0xff]
    %v3769 = vld [vmem:[#allocation10 + $0x108] sm:$0xff]
    %v3770 = vld [vmem:[#allocation10 + $0x110] sm:$0xff]
    %v3771 = vld [vmem:[#allocation10 + $0x118] sm:$0xff]
    %v3772 = vld [vmem:[#allocation10 + $0x120] sm:$0xff]
    %v3773 = vld [vmem:[#allocation10 + $0x128] sm:$0xff]
    %v3774 = vld [vmem:[#allocation10 + $0x130] sm:$0xff]
    %v3775 = vld [vmem:[#allocation10 + $0x138] sm:$0xff]
    %v3776 = vld [vmem:[#allocation10 + $0x140] sm:$0xff]
    %v3777 = vld [vmem:[#allocation10 + $0x148] sm:$0xff]
    %v3778 = vld [vmem:[#allocation10 + $0x150] sm:$0xff]
    %v3779 = vld [vmem:[#allocation10 + $0x158] sm:$0xff]
    %v3780 = vld [vmem:[#allocation10 + $0x160] sm:$0xff]
    %v3781 = vld [vmem:[#allocation10 + $0x168] sm:$0xff]
    %v3782 = vld [vmem:[#allocation10 + $0x170] sm:$0xff]
    %v3783 = vld [vmem:[#allocation10 + $0x178] sm:$0xff]
    %v3784 = vld [vmem:[#allocation10 + $0x180] sm:$0xff]
    %v3785 = vld [vmem:[#allocation10 + $0x188] sm:$0xff]
    %v3786 = vld [vmem:[#allocation10 + $0x190] sm:$0xff]
    %v3787 = vld [vmem:[#allocation10 + $0x198] sm:$0xff]
    %v3788 = vld [vmem:[#allocation10 + $0x1a0] sm:$0xff]
    %v3789 = vld [vmem:[#allocation10 + $0x1a8] sm:$0xff]
    %v3790 = vld [vmem:[#allocation10 + $0x1b0] sm:$0xff]
    %v3791 = vld [vmem:[#allocation10 + $0x1b8] sm:$0xff]
    %v3792 = vld [vmem:[#allocation10 + $0x1c0] sm:$0xff]
    %v3793 = vld [vmem:[#allocation10 + $0x1c8] sm:$0xff]
    %v3794 = vld [vmem:[#allocation10 + $0x1d0] sm:$0xff]
    %v3795 = vld [vmem:[#allocation10 + $0x1d8] sm:$0xff]
    %v3796 = vld [vmem:[#allocation10 + $0x1e0] sm:$0xff]
    %v3797 = vld [vmem:[#allocation10 + $0x1e8] sm:$0xff]
    %v3798 = vld [vmem:[#allocation10 + $0x1f0] sm:$0xff]
    %v3799 = vld [vmem:[#allocation10 + $0x1f8] sm:$0xff]
    %v3800 = vld [vmem:[#allocation10 + $0x200] sm:$0xff]
    %v3801 = vld [vmem:[#allocation10 + $0x208] sm:$0xff]
    %v3802 = vld [vmem:[#allocation10 + $0x210] sm:$0xff]
    %v3803 = vld [vmem:[#allocation10 + $0x218] sm:$0xff]
    %v3804 = vld [vmem:[#allocation10 + $0x220] sm:$0xff]
    %v3805 = vld [vmem:[#allocation10 + $0x228] sm:$0xff]
    %v3806 = vld [vmem:[#allocation10 + $0x230] sm:$0xff]
    %v3807 = vld [vmem:[#allocation10 + $0x238] sm:$0xff]
    %v3808 = vld [vmem:[#allocation10 + $0x240] sm:$0xff]
    %v3809 = vld [vmem:[#allocation10 + $0x248] sm:$0xff]
    %v3810 = vld [vmem:[#allocation10 + $0x250] sm:$0xff]
    %v3811 = vld [vmem:[#allocation10 + $0x258] sm:$0xff]
    %v3812 = vld [vmem:[#allocation10 + $0x260] sm:$0xff]
    %v3813 = vld [vmem:[#allocation10 + $0x268] sm:$0xff]
    %v3814 = vld [vmem:[#allocation10 + $0x270] sm:$0xff]
    %v3815 = vld [vmem:[#allocation10 + $0x278] sm:$0xff]
    %v3816 = vld [vmem:[#allocation10 + $0x280] sm:$0xff]
    %v3817 = vld [vmem:[#allocation10 + $0x288] sm:$0xff]
    %v3818 = vld [vmem:[#allocation10 + $0x290] sm:$0xff]
    %v3819 = vld [vmem:[#allocation10 + $0x298] sm:$0xff]
    %v3820 = vld [vmem:[#allocation10 + $0x2a0] sm:$0xff]
    %v3821 = vld [vmem:[#allocation10 + $0x2a8] sm:$0xff]
    %v3822 = vld [vmem:[#allocation10 + $0x2b0] sm:$0xff]
    %v3823 = vld [vmem:[#allocation10 + $0x2b8] sm:$0xff]
    %v3824 = vld [vmem:[#allocation10 + $0x2c0] sm:$0xff]
    %v3825 = vld [vmem:[#allocation10 + $0x2c8] sm:$0xff]
    %v3826 = vld [vmem:[#allocation10 + $0x2d0] sm:$0xff]
    %v3827 = vld [vmem:[#allocation10 + $0x2d8] sm:$0xff]
    %v3828 = vld [vmem:[#allocation10 + $0x2e0] sm:$0xff]
    %v3829 = vld [vmem:[#allocation10 + $0x2e8] sm:$0xff]
    %v3830 = vld [vmem:[#allocation10 + $0x2f0] sm:$0xff]
    %v3831 = vld [vmem:[#allocation10 + $0x2f8] sm:$0xff]
    %v3832 = vld [vmem:[#allocation10 + $0x300] sm:$0xff]
    %v3833 = vld [vmem:[#allocation10 + $0x308] sm:$0xff]
    %v3834 = vld [vmem:[#allocation10 + $0x310] sm:$0xff]
    %v3835 = vld [vmem:[#allocation10 + $0x318] sm:$0xff]
    %v3836 = vld [vmem:[#allocation10 + $0x320] sm:$0xff]
    %v3837 = vld [vmem:[#allocation10 + $0x328] sm:$0xff]
    %v3838 = vld [vmem:[#allocation10 + $0x330] sm:$0xff]
    %v3839 = vld [vmem:[#allocation10 + $0x338] sm:$0xff]
    %v3840 = vld [vmem:[#allocation10 + $0x340] sm:$0xff]
    %v3841 = vld [vmem:[#allocation10 + $0x348] sm:$0xff]
    %v3842 = vld [vmem:[#allocation10 + $0x350] sm:$0xff]
    %v3843 = vld [vmem:[#allocation10 + $0x358] sm:$0xff]
    %v3844 = vld [vmem:[#allocation10 + $0x360] sm:$0xff]
    %v3845 = vld [vmem:[#allocation10 + $0x368] sm:$0xff]
    %v3846 = vld [vmem:[#allocation10 + $0x370] sm:$0xff]
    %v3847 = vld [vmem:[#allocation10 + $0x378] sm:$0xff]
    %v3848 = vld [vmem:[#allocation10 + $0x380] sm:$0xff]
    %v3849 = vld [vmem:[#allocation10 + $0x388] sm:$0xff]
    %v3850 = vld [vmem:[#allocation10 + $0x390] sm:$0xff]
    %v3851 = vld [vmem:[#allocation10 + $0x398] sm:$0xff]
    %v3852 = vld [vmem:[#allocation10 + $0x3a0] sm:$0xff]
    %v3853 = vld [vmem:[#allocation10 + $0x3a8] sm:$0xff]
    %v3854 = vld [vmem:[#allocation10 + $0x3b0] sm:$0xff]
    %v3855 = vld [vmem:[#allocation10 + $0x3b8] sm:$0xff]
    %v3856 = vld [vmem:[#allocation10 + $0x3c0] sm:$0xff]
    %v3857 = vld [vmem:[#allocation10 + $0x3c8] sm:$0xff]
    %v3858 = vld [vmem:[#allocation10 + $0x3d0] sm:$0xff]
    %v3859 = vld [vmem:[#allocation10 + $0x3d8] sm:$0xff]
    %v3860 = vld [vmem:[#allocation10 + $0x3e0] sm:$0xff]
    %v3861 = vld [vmem:[#allocation10 + $0x3e8] sm:$0xff]
    %v3862 = vld [vmem:[#allocation10 + $0x3f0] sm:$0xff]
    %v3863 = vld [vmem:[#allocation10 + $0x3f8] sm:$0xff]
    %v3864 = vld [vmem:[#allocation10 + $0x400] sm:$0xff]
    %v3865 = vld [vmem:[#allocation10 + $0x408] sm:$0xff]
    %v3866 = vld [vmem:[#allocation10 + $0x410] sm:$0xff]
    %v3867 = vld [vmem:[#allocation10 + $0x418] sm:$0xff]
    %v3868 = vld [vmem:[#allocation10 + $0x420] sm:$0xff]
    %v3869 = vld [vmem:[#allocation10 + $0x428] sm:$0xff]
    %v3870 = vld [vmem:[#allocation10 + $0x430] sm:$0xff]
    %v3871 = vld [vmem:[#allocation10 + $0x438] sm:$0xff]
    %v3872 = vld [vmem:[#allocation10 + $0x440] sm:$0xff]
    %v3873 = vld [vmem:[#allocation10 + $0x448] sm:$0xff]
    %v3874 = vld [vmem:[#allocation10 + $0x450] sm:$0xff]
    %v3875 = vld [vmem:[#allocation10 + $0x458] sm:$0xff]
    %v3876 = vld [vmem:[#allocation10 + $0x460] sm:$0xff]
    %v3877 = vld [vmem:[#allocation10 + $0x468] sm:$0xff]
    %v3878 = vld [vmem:[#allocation10 + $0x470] sm:$0xff]
    %v3879 = vld [vmem:[#allocation10 + $0x478] sm:$0xff]
    %v3880 = vld [vmem:[#allocation10 + $0x480] sm:$0xff]
    %v3881 = vld [vmem:[#allocation10 + $0x488] sm:$0xff]
    %v3882 = vld [vmem:[#allocation10 + $0x490] sm:$0xff]
    %v3883 = vld [vmem:[#allocation10 + $0x498] sm:$0xff]
    %v3884 = vld [vmem:[#allocation10 + $0x4a0] sm:$0xff]
    %v3885 = vld [vmem:[#allocation10 + $0x4a8] sm:$0xff]
    %v3886 = vld [vmem:[#allocation10 + $0x4b0] sm:$0xff]
    %v3887 = vld [vmem:[#allocation10 + $0x4b8] sm:$0xff]
    %v3888 = vld [vmem:[#allocation10 + $0x4c0] sm:$0xff]
    %v3889 = vld [vmem:[#allocation10 + $0x4c8] sm:$0xff]
    %v3890 = vld [vmem:[#allocation10 + $0x4d0] sm:$0xff]
    %v3891 = vld [vmem:[#allocation10 + $0x4d8] sm:$0xff]
    %v3892 = vld [vmem:[#allocation10 + $0x4e0] sm:$0xff]
    %v3893 = vld [vmem:[#allocation10 + $0x4e8] sm:$0xff]
    %v3894 = vld [vmem:[#allocation10 + $0x4f0] sm:$0xff]
    %v3895 = vld [vmem:[#allocation10 + $0x4f8] sm:$0xff]
    %v3896 = vld [vmem:[#allocation10 + $0x500] sm:$0xff]
    %v3897 = vld [vmem:[#allocation10 + $0x508] sm:$0xff]
    %v3898 = vld [vmem:[#allocation10 + $0x510] sm:$0xff]
    %v3899 = vld [vmem:[#allocation10 + $0x518] sm:$0xff]
    %v3900 = vld [vmem:[#allocation10 + $0x520] sm:$0xff]
    %v3901 = vld [vmem:[#allocation10 + $0x528] sm:$0xff]
    %v3902 = vld [vmem:[#allocation10 + $0x530] sm:$0xff]
    %v3903 = vld [vmem:[#allocation10 + $0x538] sm:$0xff]
    %v3904 = vld [vmem:[#allocation10 + $0x540] sm:$0xff]
    %v3905 = vld [vmem:[#allocation10 + $0x548] sm:$0xff]
    %v3906 = vld [vmem:[#allocation10 + $0x550] sm:$0xff]
    %v3907 = vld [vmem:[#allocation10 + $0x558] sm:$0xff]
    %v3908 = vld [vmem:[#allocation10 + $0x560] sm:$0xff]
    %v3909 = vld [vmem:[#allocation10 + $0x568] sm:$0xff]
    %v3910 = vld [vmem:[#allocation10 + $0x570] sm:$0xff]
    %v3911 = vld [vmem:[#allocation10 + $0x578] sm:$0xff]
    %v3912 = vld [vmem:[#allocation10 + $0x580] sm:$0xff]
    %v3913 = vld [vmem:[#allocation10 + $0x588] sm:$0xff]
    %v3914 = vld [vmem:[#allocation10 + $0x590] sm:$0xff]
    %v3915 = vld [vmem:[#allocation10 + $0x598] sm:$0xff]
    %v3916 = vld [vmem:[#allocation10 + $0x5a0] sm:$0xff]
    %v3917 = vld [vmem:[#allocation10 + $0x5a8] sm:$0xff]
    %v3918 = vld [vmem:[#allocation10 + $0x5b0] sm:$0xff]
    %v3919 = vld [vmem:[#allocation10 + $0x5b8] sm:$0xff]
    %v3920 = vld [vmem:[#allocation10 + $0x5c0] sm:$0xff]
    %v3921 = vld [vmem:[#allocation10 + $0x5c8] sm:$0xff]
    %v3922 = vld [vmem:[#allocation10 + $0x5d0] sm:$0xff]
    %v3923 = vld [vmem:[#allocation10 + $0x5d8] sm:$0xff]
    %v3924 = vld [vmem:[#allocation10 + $0x5e0] sm:$0xff]
    %v3925 = vld [vmem:[#allocation10 + $0x5e8] sm:$0xff]
    %v3926 = vld [vmem:[#allocation10 + $0x5f0] sm:$0xff]
    %v3927 = vld [vmem:[#allocation10 + $0x5f8] sm:$0xff]
    %v3928 = vld [vmem:[#allocation10 + $0x600] sm:$0xff]
    %v3929 = vld [vmem:[#allocation10 + $0x608] sm:$0xff]
    %v3930 = vld [vmem:[#allocation10 + $0x610] sm:$0xff]
    %v3931 = vld [vmem:[#allocation10 + $0x618] sm:$0xff]
    %v3932 = vld [vmem:[#allocation10 + $0x620] sm:$0xff]
    %v3933 = vld [vmem:[#allocation10 + $0x628] sm:$0xff]
    %v3934 = vld [vmem:[#allocation10 + $0x630] sm:$0xff]
    %v3935 = vld [vmem:[#allocation10 + $0x638] sm:$0xff]
    %v3936 = vld [vmem:[#allocation10 + $0x640] sm:$0xff]
    %v3937 = vld [vmem:[#allocation10 + $0x648] sm:$0xff]
    %v3938 = vld [vmem:[#allocation10 + $0x650] sm:$0xff]
    %v3939 = vld [vmem:[#allocation10 + $0x658] sm:$0xff]
    %v3940 = vld [vmem:[#allocation10 + $0x660] sm:$0xff]
    %v3941 = vld [vmem:[#allocation10 + $0x668] sm:$0xff]
    %v3942 = vld [vmem:[#allocation10 + $0x670] sm:$0xff]
    %v3943 = vld [vmem:[#allocation10 + $0x678] sm:$0xff]
    %v3944 = vld [vmem:[#allocation10 + $0x680] sm:$0xff]
    %v3945 = vld [vmem:[#allocation10 + $0x688] sm:$0xff]
    %v3946 = vld [vmem:[#allocation10 + $0x690] sm:$0xff]
    %v3947 = vld [vmem:[#allocation10 + $0x698] sm:$0xff]
    %v3948 = vld [vmem:[#allocation10 + $0x6a0] sm:$0xff]
    %v3949 = vld [vmem:[#allocation10 + $0x6a8] sm:$0xff]
    %v3950 = vld [vmem:[#allocation10 + $0x6b0] sm:$0xff]
    %v3951 = vld [vmem:[#allocation10 + $0x6b8] sm:$0xff]
    %v3952 = vld [vmem:[#allocation10 + $0x6c0] sm:$0xff]
    %v3953 = vld [vmem:[#allocation10 + $0x6c8] sm:$0xff]
    %v3954 = vld [vmem:[#allocation10 + $0x6d0] sm:$0xff]
    %v3955 = vld [vmem:[#allocation10 + $0x6d8] sm:$0xff]
    %v3956 = vld [vmem:[#allocation10 + $0x6e0] sm:$0xff]
    %v3957 = vld [vmem:[#allocation10 + $0x6e8] sm:$0xff]
    %v3958 = vld [vmem:[#allocation10 + $0x6f0] sm:$0xff]
    %v3959 = vld [vmem:[#allocation10 + $0x6f8] sm:$0xff]
    %v3960 = vld [vmem:[#allocation10 + $0x700] sm:$0xff]
    %v3961 = vld [vmem:[#allocation10 + $0x708] sm:$0xff]
    %v3962 = vld [vmem:[#allocation10 + $0x710] sm:$0xff]
    %v3963 = vld [vmem:[#allocation10 + $0x718] sm:$0xff]
    %v3964 = vld [vmem:[#allocation10 + $0x720] sm:$0xff]
    %v3965 = vld [vmem:[#allocation10 + $0x728] sm:$0xff]
    %v3966 = vld [vmem:[#allocation10 + $0x730] sm:$0xff]
    %v3967 = vld [vmem:[#allocation10 + $0x738] sm:$0xff]
    %v3968 = vld [vmem:[#allocation10 + $0x740] sm:$0xff]
    %v3969 = vld [vmem:[#allocation10 + $0x748] sm:$0xff]
    %v3970 = vld [vmem:[#allocation10 + $0x750] sm:$0xff]
    %v3971 = vld [vmem:[#allocation10 + $0x758] sm:$0xff]
    %v3972 = vld [vmem:[#allocation10 + $0x760] sm:$0xff]
    %v3973 = vld [vmem:[#allocation10 + $0x768] sm:$0xff]
    %v3974 = vld [vmem:[#allocation10 + $0x770] sm:$0xff]
    %v3975 = vld [vmem:[#allocation10 + $0x778] sm:$0xff]
    %v3976 = vld [vmem:[#allocation10 + $0x780] sm:$0xff]
    %v3977 = vld [vmem:[#allocation10 + $0x788] sm:$0xff]
    %v3978 = vld [vmem:[#allocation10 + $0x790] sm:$0xff]
    %v3979 = vld [vmem:[#allocation10 + $0x798] sm:$0xff]
    %v3980 = vld [vmem:[#allocation10 + $0x7a0] sm:$0xff]
    %v3981 = vld [vmem:[#allocation10 + $0x7a8] sm:$0xff]
    %v3982 = vld [vmem:[#allocation10 + $0x7b0] sm:$0xff]
    %v3983 = vld [vmem:[#allocation10 + $0x7b8] sm:$0xff]
    %v3984 = vld [vmem:[#allocation10 + $0x7c0] sm:$0xff]
    %v3985 = vld [vmem:[#allocation10 + $0x7c8] sm:$0xff]
    %v3986 = vld [vmem:[#allocation10 + $0x7d0] sm:$0xff]
    %v3987 = vld [vmem:[#allocation10 + $0x7d8] sm:$0xff]
    %v3988 = vld [vmem:[#allocation10 + $0x7e0] sm:$0xff]
    %v3989 = vld [vmem:[#allocation10 + $0x7e8] sm:$0xff]
    %v3990 = vld [vmem:[#allocation10 + $0x7f0] sm:$0xff]
    %v3991 = vld [vmem:[#allocation10 + $0x7f8] sm:$0xff]
    %v3992 = vunpack.c.l.bf16 %v3736
    %v3993 = vunpack.c.h.bf16 %v3736
    %v3994 = vunpack.c.l.bf16 %v3737
    %v3995 = vunpack.c.h.bf16 %v3737
    %v3996 = vunpack.c.l.bf16 %v3738
    %v3997 = vunpack.c.h.bf16 %v3738
    %v3998 = vunpack.c.l.bf16 %v3739
    %v3999 = vunpack.c.h.bf16 %v3739
    %v4000 = vunpack.c.l.bf16 %v3740
    %v4001 = vunpack.c.h.bf16 %v3740
    %v4002 = vunpack.c.l.bf16 %v3741
    %v4003 = vunpack.c.h.bf16 %v3741
    %v4004 = vunpack.c.l.bf16 %v3742
    %v4005 = vunpack.c.h.bf16 %v3742
    %v4006 = vunpack.c.l.bf16 %v3743
    %v4007 = vunpack.c.h.bf16 %v3743
    %v4008 = vunpack.c.l.bf16 %v3744
    %v4009 = vunpack.c.h.bf16 %v3744
    %v4010 = vunpack.c.l.bf16 %v3745
    %v4011 = vunpack.c.h.bf16 %v3745
    %v4012 = vunpack.c.l.bf16 %v3746
    %v4013 = vunpack.c.h.bf16 %v3746
    %v4014 = vunpack.c.l.bf16 %v3747
    %v4015 = vunpack.c.h.bf16 %v3747
    %v4016 = vunpack.c.l.bf16 %v3748
    %v4017 = vunpack.c.h.bf16 %v3748
    %v4018 = vunpack.c.l.bf16 %v3749
    %v4019 = vunpack.c.h.bf16 %v3749
    %v4020 = vunpack.c.l.bf16 %v3750
    %v4021 = vunpack.c.h.bf16 %v3750
    %v4022 = vunpack.c.l.bf16 %v3751
    %v4023 = vunpack.c.h.bf16 %v3751
    %v4024 = vunpack.c.l.bf16 %v3752
    %v4025 = vunpack.c.h.bf16 %v3752
    %v4026 = vunpack.c.l.bf16 %v3753
    %v4027 = vunpack.c.h.bf16 %v3753
    %v4028 = vunpack.c.l.bf16 %v3754
    %v4029 = vunpack.c.h.bf16 %v3754
    %v4030 = vunpack.c.l.bf16 %v3755
    %v4031 = vunpack.c.h.bf16 %v3755
    %v4032 = vunpack.c.l.bf16 %v3756
    %v4033 = vunpack.c.h.bf16 %v3756
    %v4034 = vunpack.c.l.bf16 %v3757
    %v4035 = vunpack.c.h.bf16 %v3757
    %v4036 = vunpack.c.l.bf16 %v3758
    %v4037 = vunpack.c.h.bf16 %v3758
    %v4038 = vunpack.c.l.bf16 %v3759
    %v4039 = vunpack.c.h.bf16 %v3759
    %v4040 = vunpack.c.l.bf16 %v3760
    %v4041 = vunpack.c.h.bf16 %v3760
    %v4042 = vunpack.c.l.bf16 %v3761
    %v4043 = vunpack.c.h.bf16 %v3761
    %v4044 = vunpack.c.l.bf16 %v3762
    %v4045 = vunpack.c.h.bf16 %v3762
    %v4046 = vunpack.c.l.bf16 %v3763
    %v4047 = vunpack.c.h.bf16 %v3763
    %v4048 = vunpack.c.l.bf16 %v3764
    %v4049 = vunpack.c.h.bf16 %v3764
    %v4050 = vunpack.c.l.bf16 %v3765
    %v4051 = vunpack.c.h.bf16 %v3765
    %v4052 = vunpack.c.l.bf16 %v3766
    %v4053 = vunpack.c.h.bf16 %v3766
    %v4054 = vunpack.c.l.bf16 %v3767
    %v4055 = vunpack.c.h.bf16 %v3767
    %v4056 = vunpack.c.l.bf16 %v3768
    %v4057 = vunpack.c.h.bf16 %v3768
    %v4058 = vunpack.c.l.bf16 %v3769
    %v4059 = vunpack.c.h.bf16 %v3769
    %v4060 = vunpack.c.l.bf16 %v3770
    %v4061 = vunpack.c.h.bf16 %v3770
    %v4062 = vunpack.c.l.bf16 %v3771
    %v4063 = vunpack.c.h.bf16 %v3771
    %v4064 = vunpack.c.l.bf16 %v3772
    %v4065 = vunpack.c.h.bf16 %v3772
    %v4066 = vunpack.c.l.bf16 %v3773
    %v4067 = vunpack.c.h.bf16 %v3773
    %v4068 = vunpack.c.l.bf16 %v3774
    %v4069 = vunpack.c.h.bf16 %v3774
    %v4070 = vunpack.c.l.bf16 %v3775
    %v4071 = vunpack.c.h.bf16 %v3775
    %v4072 = vunpack.c.l.bf16 %v3776
    %v4073 = vunpack.c.h.bf16 %v3776
    %v4074 = vunpack.c.l.bf16 %v3777
    %v4075 = vunpack.c.h.bf16 %v3777
    %v4076 = vunpack.c.l.bf16 %v3778
    %v4077 = vunpack.c.h.bf16 %v3778
    %v4078 = vunpack.c.l.bf16 %v3779
    %v4079 = vunpack.c.h.bf16 %v3779
    %v4080 = vunpack.c.l.bf16 %v3780
    %v4081 = vunpack.c.h.bf16 %v3780
    %v4082 = vunpack.c.l.bf16 %v3781
    %v4083 = vunpack.c.h.bf16 %v3781
    %v4084 = vunpack.c.l.bf16 %v3782
    %v4085 = vunpack.c.h.bf16 %v3782
    %v4086 = vunpack.c.l.bf16 %v3783
    %v4087 = vunpack.c.h.bf16 %v3783
    %v4088 = vunpack.c.l.bf16 %v3784
    %v4089 = vunpack.c.h.bf16 %v3784
    %v4090 = vunpack.c.l.bf16 %v3785
    %v4091 = vunpack.c.h.bf16 %v3785
    %v4092 = vunpack.c.l.bf16 %v3786
    %v4093 = vunpack.c.h.bf16 %v3786
    %v4094 = vunpack.c.l.bf16 %v3787
    %v4095 = vunpack.c.h.bf16 %v3787
    %v4096 = vunpack.c.l.bf16 %v3788
    %v4097 = vunpack.c.h.bf16 %v3788
    %v4098 = vunpack.c.l.bf16 %v3789
    %v4099 = vunpack.c.h.bf16 %v3789
    %v4100 = vunpack.c.l.bf16 %v3790
    %v4101 = vunpack.c.h.bf16 %v3790
    %v4102 = vunpack.c.l.bf16 %v3791
    %v4103 = vunpack.c.h.bf16 %v3791
    %v4104 = vunpack.c.l.bf16 %v3792
    %v4105 = vunpack.c.h.bf16 %v3792
    %v4106 = vunpack.c.l.bf16 %v3793
    %v4107 = vunpack.c.h.bf16 %v3793
    %v4108 = vunpack.c.l.bf16 %v3794
    %v4109 = vunpack.c.h.bf16 %v3794
    %v4110 = vunpack.c.l.bf16 %v3795
    %v4111 = vunpack.c.h.bf16 %v3795
    %v4112 = vunpack.c.l.bf16 %v3796
    %v4113 = vunpack.c.h.bf16 %v3796
    %v4114 = vunpack.c.l.bf16 %v3797
    %v4115 = vunpack.c.h.bf16 %v3797
    %v4116 = vunpack.c.l.bf16 %v3798
    %v4117 = vunpack.c.h.bf16 %v3798
    %v4118 = vunpack.c.l.bf16 %v3799
    %v4119 = vunpack.c.h.bf16 %v3799
    %v4120 = vunpack.c.l.bf16 %v3800
    %v4121 = vunpack.c.h.bf16 %v3800
    %v4122 = vunpack.c.l.bf16 %v3801
    %v4123 = vunpack.c.h.bf16 %v3801
    %v4124 = vunpack.c.l.bf16 %v3802
    %v4125 = vunpack.c.h.bf16 %v3802
    %v4126 = vunpack.c.l.bf16 %v3803
    %v4127 = vunpack.c.h.bf16 %v3803
    %v4128 = vunpack.c.l.bf16 %v3804
    %v4129 = vunpack.c.h.bf16 %v3804
    %v4130 = vunpack.c.l.bf16 %v3805
    %v4131 = vunpack.c.h.bf16 %v3805
    %v4132 = vunpack.c.l.bf16 %v3806
    %v4133 = vunpack.c.h.bf16 %v3806
    %v4134 = vunpack.c.l.bf16 %v3807
    %v4135 = vunpack.c.h.bf16 %v3807
    %v4136 = vunpack.c.l.bf16 %v3808
    %v4137 = vunpack.c.h.bf16 %v3808
    %v4138 = vunpack.c.l.bf16 %v3809
    %v4139 = vunpack.c.h.bf16 %v3809
    %v4140 = vunpack.c.l.bf16 %v3810
    %v4141 = vunpack.c.h.bf16 %v3810
    %v4142 = vunpack.c.l.bf16 %v3811
    %v4143 = vunpack.c.h.bf16 %v3811
    %v4144 = vunpack.c.l.bf16 %v3812
    %v4145 = vunpack.c.h.bf16 %v3812
    %v4146 = vunpack.c.l.bf16 %v3813
    %v4147 = vunpack.c.h.bf16 %v3813
    %v4148 = vunpack.c.l.bf16 %v3814
    %v4149 = vunpack.c.h.bf16 %v3814
    %v4150 = vunpack.c.l.bf16 %v3815
    %v4151 = vunpack.c.h.bf16 %v3815
    %v4152 = vunpack.c.l.bf16 %v3816
    %v4153 = vunpack.c.h.bf16 %v3816
    %v4154 = vunpack.c.l.bf16 %v3817
    %v4155 = vunpack.c.h.bf16 %v3817
    %v4156 = vunpack.c.l.bf16 %v3818
    %v4157 = vunpack.c.h.bf16 %v3818
    %v4158 = vunpack.c.l.bf16 %v3819
    %v4159 = vunpack.c.h.bf16 %v3819
    %v4160 = vunpack.c.l.bf16 %v3820
    %v4161 = vunpack.c.h.bf16 %v3820
    %v4162 = vunpack.c.l.bf16 %v3821
    %v4163 = vunpack.c.h.bf16 %v3821
    %v4164 = vunpack.c.l.bf16 %v3822
    %v4165 = vunpack.c.h.bf16 %v3822
    %v4166 = vunpack.c.l.bf16 %v3823
    %v4167 = vunpack.c.h.bf16 %v3823
    %v4168 = vunpack.c.l.bf16 %v3824
    %v4169 = vunpack.c.h.bf16 %v3824
    %v4170 = vunpack.c.l.bf16 %v3825
    %v4171 = vunpack.c.h.bf16 %v3825
    %v4172 = vunpack.c.l.bf16 %v3826
    %v4173 = vunpack.c.h.bf16 %v3826
    %v4174 = vunpack.c.l.bf16 %v3827
    %v4175 = vunpack.c.h.bf16 %v3827
    %v4176 = vunpack.c.l.bf16 %v3828
    %v4177 = vunpack.c.h.bf16 %v3828
    %v4178 = vunpack.c.l.bf16 %v3829
    %v4179 = vunpack.c.h.bf16 %v3829
    %v4180 = vunpack.c.l.bf16 %v3830
    %v4181 = vunpack.c.h.bf16 %v3830
    %v4182 = vunpack.c.l.bf16 %v3831
    %v4183 = vunpack.c.h.bf16 %v3831
    %v4184 = vunpack.c.l.bf16 %v3832
    %v4185 = vunpack.c.h.bf16 %v3832
    %v4186 = vunpack.c.l.bf16 %v3833
    %v4187 = vunpack.c.h.bf16 %v3833
    %v4188 = vunpack.c.l.bf16 %v3834
    %v4189 = vunpack.c.h.bf16 %v3834
    %v4190 = vunpack.c.l.bf16 %v3835
    %v4191 = vunpack.c.h.bf16 %v3835
    %v4192 = vunpack.c.l.bf16 %v3836
    %v4193 = vunpack.c.h.bf16 %v3836
    %v4194 = vunpack.c.l.bf16 %v3837
    %v4195 = vunpack.c.h.bf16 %v3837
    %v4196 = vunpack.c.l.bf16 %v3838
    %v4197 = vunpack.c.h.bf16 %v3838
    %v4198 = vunpack.c.l.bf16 %v3839
    %v4199 = vunpack.c.h.bf16 %v3839
    %v4200 = vunpack.c.l.bf16 %v3840
    %v4201 = vunpack.c.h.bf16 %v3840
    %v4202 = vunpack.c.l.bf16 %v3841
    %v4203 = vunpack.c.h.bf16 %v3841
    %v4204 = vunpack.c.l.bf16 %v3842
    %v4205 = vunpack.c.h.bf16 %v3842
    %v4206 = vunpack.c.l.bf16 %v3843
    %v4207 = vunpack.c.h.bf16 %v3843
    %v4208 = vunpack.c.l.bf16 %v3844
    %v4209 = vunpack.c.h.bf16 %v3844
    %v4210 = vunpack.c.l.bf16 %v3845
    %v4211 = vunpack.c.h.bf16 %v3845
    %v4212 = vunpack.c.l.bf16 %v3846
    %v4213 = vunpack.c.h.bf16 %v3846
    %v4214 = vunpack.c.l.bf16 %v3847
    %v4215 = vunpack.c.h.bf16 %v3847
    %v4216 = vunpack.c.l.bf16 %v3848
    %v4217 = vunpack.c.h.bf16 %v3848
    %v4218 = vunpack.c.l.bf16 %v3849
    %v4219 = vunpack.c.h.bf16 %v3849
    %v4220 = vunpack.c.l.bf16 %v3850
    %v4221 = vunpack.c.h.bf16 %v3850
    %v4222 = vunpack.c.l.bf16 %v3851
    %v4223 = vunpack.c.h.bf16 %v3851
    %v4224 = vunpack.c.l.bf16 %v3852
    %v4225 = vunpack.c.h.bf16 %v3852
    %v4226 = vunpack.c.l.bf16 %v3853
    %v4227 = vunpack.c.h.bf16 %v3853
    %v4228 = vunpack.c.l.bf16 %v3854
    %v4229 = vunpack.c.h.bf16 %v3854
    %v4230 = vunpack.c.l.bf16 %v3855
    %v4231 = vunpack.c.h.bf16 %v3855
    %v4232 = vunpack.c.l.bf16 %v3856
    %v4233 = vunpack.c.h.bf16 %v3856
    %v4234 = vunpack.c.l.bf16 %v3857
    %v4235 = vunpack.c.h.bf16 %v3857
    %v4236 = vunpack.c.l.bf16 %v3858
    %v4237 = vunpack.c.h.bf16 %v3858
    %v4238 = vunpack.c.l.bf16 %v3859
    %v4239 = vunpack.c.h.bf16 %v3859
    %v4240 = vunpack.c.l.bf16 %v3860
    %v4241 = vunpack.c.h.bf16 %v3860
    %v4242 = vunpack.c.l.bf16 %v3861
    %v4243 = vunpack.c.h.bf16 %v3861
    %v4244 = vunpack.c.l.bf16 %v3862
    %v4245 = vunpack.c.h.bf16 %v3862
    %v4246 = vunpack.c.l.bf16 %v3863
    %v4247 = vunpack.c.h.bf16 %v3863
    %v4248 = vunpack.c.l.bf16 %v3864
    %v4249 = vunpack.c.h.bf16 %v3864
    %v4250 = vunpack.c.l.bf16 %v3865
    %v4251 = vunpack.c.h.bf16 %v3865
    %v4252 = vunpack.c.l.bf16 %v3866
    %v4253 = vunpack.c.h.bf16 %v3866
    %v4254 = vunpack.c.l.bf16 %v3867
    %v4255 = vunpack.c.h.bf16 %v3867
    %v4256 = vunpack.c.l.bf16 %v3868
    %v4257 = vunpack.c.h.bf16 %v3868
    %v4258 = vunpack.c.l.bf16 %v3869
    %v4259 = vunpack.c.h.bf16 %v3869
    %v4260 = vunpack.c.l.bf16 %v3870
    %v4261 = vunpack.c.h.bf16 %v3870
    %v4262 = vunpack.c.l.bf16 %v3871
    %v4263 = vunpack.c.h.bf16 %v3871
    %v4264 = vunpack.c.l.bf16 %v3872
    %v4265 = vunpack.c.h.bf16 %v3872
    %v4266 = vunpack.c.l.bf16 %v3873
    %v4267 = vunpack.c.h.bf16 %v3873
    %v4268 = vunpack.c.l.bf16 %v3874
    %v4269 = vunpack.c.h.bf16 %v3874
    %v4270 = vunpack.c.l.bf16 %v3875
    %v4271 = vunpack.c.h.bf16 %v3875
    %v4272 = vunpack.c.l.bf16 %v3876
    %v4273 = vunpack.c.h.bf16 %v3876
    %v4274 = vunpack.c.l.bf16 %v3877
    %v4275 = vunpack.c.h.bf16 %v3877
    %v4276 = vunpack.c.l.bf16 %v3878
    %v4277 = vunpack.c.h.bf16 %v3878
    %v4278 = vunpack.c.l.bf16 %v3879
    %v4279 = vunpack.c.h.bf16 %v3879
    %v4280 = vunpack.c.l.bf16 %v3880
    %v4281 = vunpack.c.h.bf16 %v3880
    %v4282 = vunpack.c.l.bf16 %v3881
    %v4283 = vunpack.c.h.bf16 %v3881
    %v4284 = vunpack.c.l.bf16 %v3882
    %v4285 = vunpack.c.h.bf16 %v3882
    %v4286 = vunpack.c.l.bf16 %v3883
    %v4287 = vunpack.c.h.bf16 %v3883
    %v4288 = vunpack.c.l.bf16 %v3884
    %v4289 = vunpack.c.h.bf16 %v3884
    %v4290 = vunpack.c.l.bf16 %v3885
    %v4291 = vunpack.c.h.bf16 %v3885
    %v4292 = vunpack.c.l.bf16 %v3886
    %v4293 = vunpack.c.h.bf16 %v3886
    %v4294 = vunpack.c.l.bf16 %v3887
    %v4295 = vunpack.c.h.bf16 %v3887
    %v4296 = vunpack.c.l.bf16 %v3888
    %v4297 = vunpack.c.h.bf16 %v3888
    %v4298 = vunpack.c.l.bf16 %v3889
    %v4299 = vunpack.c.h.bf16 %v3889
    %v4300 = vunpack.c.l.bf16 %v3890
    %v4301 = vunpack.c.h.bf16 %v3890
    %v4302 = vunpack.c.l.bf16 %v3891
    %v4303 = vunpack.c.h.bf16 %v3891
    %v4304 = vunpack.c.l.bf16 %v3892
    %v4305 = vunpack.c.h.bf16 %v3892
    %v4306 = vunpack.c.l.bf16 %v3893
    %v4307 = vunpack.c.h.bf16 %v3893
    %v4308 = vunpack.c.l.bf16 %v3894
    %v4309 = vunpack.c.h.bf16 %v3894
    %v4310 = vunpack.c.l.bf16 %v3895
    %v4311 = vunpack.c.h.bf16 %v3895
    %v4312 = vunpack.c.l.bf16 %v3896
    %v4313 = vunpack.c.h.bf16 %v3896
    %v4314 = vunpack.c.l.bf16 %v3897
    %v4315 = vunpack.c.h.bf16 %v3897
    %v4316 = vunpack.c.l.bf16 %v3898
    %v4317 = vunpack.c.h.bf16 %v3898
    %v4318 = vunpack.c.l.bf16 %v3899
    %v4319 = vunpack.c.h.bf16 %v3899
    %v4320 = vunpack.c.l.bf16 %v3900
    %v4321 = vunpack.c.h.bf16 %v3900
    %v4322 = vunpack.c.l.bf16 %v3901
    %v4323 = vunpack.c.h.bf16 %v3901
    %v4324 = vunpack.c.l.bf16 %v3902
    %v4325 = vunpack.c.h.bf16 %v3902
    %v4326 = vunpack.c.l.bf16 %v3903
    %v4327 = vunpack.c.h.bf16 %v3903
    %v4328 = vunpack.c.l.bf16 %v3904
    %v4329 = vunpack.c.h.bf16 %v3904
    %v4330 = vunpack.c.l.bf16 %v3905
    %v4331 = vunpack.c.h.bf16 %v3905
    %v4332 = vunpack.c.l.bf16 %v3906
    %v4333 = vunpack.c.h.bf16 %v3906
    %v4334 = vunpack.c.l.bf16 %v3907
    %v4335 = vunpack.c.h.bf16 %v3907
    %v4336 = vunpack.c.l.bf16 %v3908
    %v4337 = vunpack.c.h.bf16 %v3908
    %v4338 = vunpack.c.l.bf16 %v3909
    %v4339 = vunpack.c.h.bf16 %v3909
    %v4340 = vunpack.c.l.bf16 %v3910
    %v4341 = vunpack.c.h.bf16 %v3910
    %v4342 = vunpack.c.l.bf16 %v3911
    %v4343 = vunpack.c.h.bf16 %v3911
    %v4344 = vunpack.c.l.bf16 %v3912
    %v4345 = vunpack.c.h.bf16 %v3912
    %v4346 = vunpack.c.l.bf16 %v3913
    %v4347 = vunpack.c.h.bf16 %v3913
    %v4348 = vunpack.c.l.bf16 %v3914
    %v4349 = vunpack.c.h.bf16 %v3914
    %v4350 = vunpack.c.l.bf16 %v3915
    %v4351 = vunpack.c.h.bf16 %v3915
    %v4352 = vunpack.c.l.bf16 %v3916
    %v4353 = vunpack.c.h.bf16 %v3916
    %v4354 = vunpack.c.l.bf16 %v3917
    %v4355 = vunpack.c.h.bf16 %v3917
    %v4356 = vunpack.c.l.bf16 %v3918
    %v4357 = vunpack.c.h.bf16 %v3918
    %v4358 = vunpack.c.l.bf16 %v3919
    %v4359 = vunpack.c.h.bf16 %v3919
    %v4360 = vunpack.c.l.bf16 %v3920
    %v4361 = vunpack.c.h.bf16 %v3920
    %v4362 = vunpack.c.l.bf16 %v3921
    %v4363 = vunpack.c.h.bf16 %v3921
    %v4364 = vunpack.c.l.bf16 %v3922
    %v4365 = vunpack.c.h.bf16 %v3922
    %v4366 = vunpack.c.l.bf16 %v3923
    %v4367 = vunpack.c.h.bf16 %v3923
    %v4368 = vunpack.c.l.bf16 %v3924
    %v4369 = vunpack.c.h.bf16 %v3924
    %v4370 = vunpack.c.l.bf16 %v3925
    %v4371 = vunpack.c.h.bf16 %v3925
    %v4372 = vunpack.c.l.bf16 %v3926
    %v4373 = vunpack.c.h.bf16 %v3926
    %v4374 = vunpack.c.l.bf16 %v3927
    %v4375 = vunpack.c.h.bf16 %v3927
    %v4376 = vunpack.c.l.bf16 %v3928
    %v4377 = vunpack.c.h.bf16 %v3928
    %v4378 = vunpack.c.l.bf16 %v3929
    %v4379 = vunpack.c.h.bf16 %v3929
    %v4380 = vunpack.c.l.bf16 %v3930
    %v4381 = vunpack.c.h.bf16 %v3930
    %v4382 = vunpack.c.l.bf16 %v3931
    %v4383 = vunpack.c.h.bf16 %v3931
    %v4384 = vunpack.c.l.bf16 %v3932
    %v4385 = vunpack.c.h.bf16 %v3932
    %v4386 = vunpack.c.l.bf16 %v3933
    %v4387 = vunpack.c.h.bf16 %v3933
    %v4388 = vunpack.c.l.bf16 %v3934
    %v4389 = vunpack.c.h.bf16 %v3934
    %v4390 = vunpack.c.l.bf16 %v3935
    %v4391 = vunpack.c.h.bf16 %v3935
    %v4392 = vunpack.c.l.bf16 %v3936
    %v4393 = vunpack.c.h.bf16 %v3936
    %v4394 = vunpack.c.l.bf16 %v3937
    %v4395 = vunpack.c.h.bf16 %v3937
    %v4396 = vunpack.c.l.bf16 %v3938
    %v4397 = vunpack.c.h.bf16 %v3938
    %v4398 = vunpack.c.l.bf16 %v3939
    %v4399 = vunpack.c.h.bf16 %v3939
    %v4400 = vunpack.c.l.bf16 %v3940
    %v4401 = vunpack.c.h.bf16 %v3940
    %v4402 = vunpack.c.l.bf16 %v3941
    %v4403 = vunpack.c.h.bf16 %v3941
    %v4404 = vunpack.c.l.bf16 %v3942
    %v4405 = vunpack.c.h.bf16 %v3942
    %v4406 = vunpack.c.l.bf16 %v3943
    %v4407 = vunpack.c.h.bf16 %v3943
    %v4408 = vunpack.c.l.bf16 %v3944
    %v4409 = vunpack.c.h.bf16 %v3944
    %v4410 = vunpack.c.l.bf16 %v3945
    %v4411 = vunpack.c.h.bf16 %v3945
    %v4412 = vunpack.c.l.bf16 %v3946
    %v4413 = vunpack.c.h.bf16 %v3946
    %v4414 = vunpack.c.l.bf16 %v3947
    %v4415 = vunpack.c.h.bf16 %v3947
    %v4416 = vunpack.c.l.bf16 %v3948
    %v4417 = vunpack.c.h.bf16 %v3948
    %v4418 = vunpack.c.l.bf16 %v3949
    %v4419 = vunpack.c.h.bf16 %v3949
    %v4420 = vunpack.c.l.bf16 %v3950
    %v4421 = vunpack.c.h.bf16 %v3950
    %v4422 = vunpack.c.l.bf16 %v3951
    %v4423 = vunpack.c.h.bf16 %v3951
    %v4424 = vunpack.c.l.bf16 %v3952
    %v4425 = vunpack.c.h.bf16 %v3952
    %v4426 = vunpack.c.l.bf16 %v3953
    %v4427 = vunpack.c.h.bf16 %v3953
    %v4428 = vunpack.c.l.bf16 %v3954
    %v4429 = vunpack.c.h.bf16 %v3954
    %v4430 = vunpack.c.l.bf16 %v3955
    %v4431 = vunpack.c.h.bf16 %v3955
    %v4432 = vunpack.c.l.bf16 %v3956
    %v4433 = vunpack.c.h.bf16 %v3956
    %v4434 = vunpack.c.l.bf16 %v3957
    %v4435 = vunpack.c.h.bf16 %v3957
    %v4436 = vunpack.c.l.bf16 %v3958
    %v4437 = vunpack.c.h.bf16 %v3958
    %v4438 = vunpack.c.l.bf16 %v3959
    %v4439 = vunpack.c.h.bf16 %v3959
    %v4440 = vunpack.c.l.bf16 %v3960
    %v4441 = vunpack.c.h.bf16 %v3960
    %v4442 = vunpack.c.l.bf16 %v3961
    %v4443 = vunpack.c.h.bf16 %v3961
    %v4444 = vunpack.c.l.bf16 %v3962
    %v4445 = vunpack.c.h.bf16 %v3962
    %v4446 = vunpack.c.l.bf16 %v3963
    %v4447 = vunpack.c.h.bf16 %v3963
    %v4448 = vunpack.c.l.bf16 %v3964
    %v4449 = vunpack.c.h.bf16 %v3964
    %v4450 = vunpack.c.l.bf16 %v3965
    %v4451 = vunpack.c.h.bf16 %v3965
    %v4452 = vunpack.c.l.bf16 %v3966
    %v4453 = vunpack.c.h.bf16 %v3966
    %v4454 = vunpack.c.l.bf16 %v3967
    %v4455 = vunpack.c.h.bf16 %v3967
    %v4456 = vunpack.c.l.bf16 %v3968
    %v4457 = vunpack.c.h.bf16 %v3968
    %v4458 = vunpack.c.l.bf16 %v3969
    %v4459 = vunpack.c.h.bf16 %v3969
    %v4460 = vunpack.c.l.bf16 %v3970
    %v4461 = vunpack.c.h.bf16 %v3970
    %v4462 = vunpack.c.l.bf16 %v3971
    %v4463 = vunpack.c.h.bf16 %v3971
    %v4464 = vunpack.c.l.bf16 %v3972
    %v4465 = vunpack.c.h.bf16 %v3972
    %v4466 = vunpack.c.l.bf16 %v3973
    %v4467 = vunpack.c.h.bf16 %v3973
    %v4468 = vunpack.c.l.bf16 %v3974
    %v4469 = vunpack.c.h.bf16 %v3974
    %v4470 = vunpack.c.l.bf16 %v3975
    %v4471 = vunpack.c.h.bf16 %v3975
    %v4472 = vunpack.c.l.bf16 %v3976
    %v4473 = vunpack.c.h.bf16 %v3976
    %v4474 = vunpack.c.l.bf16 %v3977
    %v4475 = vunpack.c.h.bf16 %v3977
    %v4476 = vunpack.c.l.bf16 %v3978
    %v4477 = vunpack.c.h.bf16 %v3978
    %v4478 = vunpack.c.l.bf16 %v3979
    %v4479 = vunpack.c.h.bf16 %v3979
    %v4480 = vunpack.c.l.bf16 %v3980
    %v4481 = vunpack.c.h.bf16 %v3980
    %v4482 = vunpack.c.l.bf16 %v3981
    %v4483 = vunpack.c.h.bf16 %v3981
    %v4484 = vunpack.c.l.bf16 %v3982
    %v4485 = vunpack.c.h.bf16 %v3982
    %v4486 = vunpack.c.l.bf16 %v3983
    %v4487 = vunpack.c.h.bf16 %v3983
    %v4488 = vunpack.c.l.bf16 %v3984
    %v4489 = vunpack.c.h.bf16 %v3984
    %v4490 = vunpack.c.l.bf16 %v3985
    %v4491 = vunpack.c.h.bf16 %v3985
    %v4492 = vunpack.c.l.bf16 %v3986
    %v4493 = vunpack.c.h.bf16 %v3986
    %v4494 = vunpack.c.l.bf16 %v3987
    %v4495 = vunpack.c.h.bf16 %v3987
    %v4496 = vunpack.c.l.bf16 %v3988
    %v4497 = vunpack.c.h.bf16 %v3988
    %v4498 = vunpack.c.l.bf16 %v3989
    %v4499 = vunpack.c.h.bf16 %v3989
    %v4500 = vunpack.c.l.bf16 %v3990
    %v4501 = vunpack.c.h.bf16 %v3990
    %v4502 = vunpack.c.l.bf16 %v3991
    %v4503 = vunpack.c.h.bf16 %v3991
    %4504 = vmatpush.msra.mxu0 %v4112
    %4505 = vmatpush.msra.mxu0 %v4104
    %4506 = vmatpush.msra.mxu0 %v4096
    %4507 = vmatpush.msra.mxu0 %v4088
    %4508 = vmatpush.msra.mxu0 %v4080
    %4509 = vmatpush.msra.mxu0 %v4072
    %4510 = vmatpush.msra.mxu0 %v4064
    %4511 = vmatpush.msra.mxu0 %v4056
    %4512 = vmatpush.msra.mxu0 %v4048
    %4513 = vmatpush.msra.mxu0 %v4040
    %4514 = vmatpush.msra.mxu0 %v4032
    %4515 = vmatpush.msra.mxu0 %v4024
    %4516 = vmatpush.msra.mxu0 %v4016
    %4517 = vmatpush.msra.mxu0 %v4008
    %4518 = vmatpush.msra.mxu0 %v4000
    %4519 = vmatpush.msra.mxu0 %v3992
    %4520 = vmatmul.f32.gmra.mxu0 %v3608
    %v4521 = vpop.f32.mrf.mxu0
    %v4522 = vadd.f32 0.0, %v4521
    %4523 = vmatmul.f32.gmra.mxu0 %v3612
    %v4524 = vpop.f32.mrf.mxu0
    %v4525 = vadd.f32 0.0, %v4524
    %4526 = vmatmul.f32.gmra.mxu0 %v3616
    %v4527 = vpop.f32.mrf.mxu0
    %v4528 = vadd.f32 0.0, %v4527
    %4529 = vmatmul.f32.gmra.mxu0 %v3620
    %v4530 = vpop.f32.mrf.mxu0
    %v4531 = vadd.f32 0.0, %v4530
    %4532 = vmatmul.f32.gmra.mxu0 %v3624
    %v4533 = vpop.f32.mrf.mxu0
    %v4534 = vadd.f32 0.0, %v4533
    %4535 = vmatmul.f32.gmra.mxu0 %v3628
    %v4536 = vpop.f32.mrf.mxu0
    %v4537 = vadd.f32 0.0, %v4536
    %4538 = vmatmul.f32.gmra.mxu0 %v3632
    %v4539 = vpop.f32.mrf.mxu0
    %v4540 = vadd.f32 0.0, %v4539
    %4541 = vmatmul.f32.gmra.mxu0 %v3636
    %v4542 = vpop.f32.mrf.mxu0
    %v4543 = vadd.f32 0.0, %v4542
    %4544 = vmatmul.f32.gmra.mxu0 %v3640
    %v4545 = vpop.f32.mrf.mxu0
    %v4546 = vadd.f32 0.0, %v4545
    %4547 = vmatmul.f32.gmra.mxu0 %v3644
    %v4548 = vpop.f32.mrf.mxu0
    %v4549 = vadd.f32 0.0, %v4548
    %4550 = vmatmul.f32.gmra.mxu0 %v3648
    %v4551 = vpop.f32.mrf.mxu0
    %v4552 = vadd.f32 0.0, %v4551
    %4553 = vmatmul.f32.gmra.mxu0 %v3652
    %v4554 = vpop.f32.mrf.mxu0
    %v4555 = vadd.f32 0.0, %v4554
    %4556 = vmatmul.f32.gmra.mxu0 %v3656
    %v4557 = vpop.f32.mrf.mxu0
    %v4558 = vadd.f32 0.0, %v4557
    %4559 = vmatmul.f32.gmra.mxu0 %v3660
    %v4560 = vpop.f32.mrf.mxu0
    %v4561 = vadd.f32 0.0, %v4560
    %4562 = vmatmul.f32.gmra.mxu0 %v3664
    %v4563 = vpop.f32.mrf.mxu0
    %v4564 = vadd.f32 0.0, %v4563
    %4565 = vmatmul.f32.gmra.mxu0 %v3668
    %v4566 = vpop.f32.mrf.mxu0
    %v4567 = vadd.f32 0.0, %v4566
    %4568 = vmatmul.f32.gmra.mxu0 %v3672
    %v4569 = vpop.f32.mrf.mxu0
    %v4570 = vadd.f32 0.0, %v4569
    %4571 = vmatmul.f32.gmra.mxu0 %v3676
    %v4572 = vpop.f32.mrf.mxu0
    %v4573 = vadd.f32 0.0, %v4572
    %4574 = vmatmul.f32.gmra.mxu0 %v3680
    %v4575 = vpop.f32.mrf.mxu0
    %v4576 = vadd.f32 0.0, %v4575
    %4577 = vmatmul.f32.gmra.mxu0 %v3684
    %v4578 = vpop.f32.mrf.mxu0
    %v4579 = vadd.f32 0.0, %v4578
    %4580 = vmatmul.f32.gmra.mxu0 %v3688
    %v4581 = vpop.f32.mrf.mxu0
    %v4582 = vadd.f32 0.0, %v4581
    %4583 = vmatmul.f32.gmra.mxu0 %v3692
    %v4584 = vpop.f32.mrf.mxu0
    %v4585 = vadd.f32 0.0, %v4584
    %4586 = vmatmul.f32.gmra.mxu0 %v3696
    %v4587 = vpop.f32.mrf.mxu0
    %v4588 = vadd.f32 0.0, %v4587
    %4589 = vmatmul.f32.gmra.mxu0 %v3700
    %v4590 = vpop.f32.mrf.mxu0
    %v4591 = vadd.f32 0.0, %v4590
    %4592 = vmatmul.f32.gmra.mxu0 %v3704
    %v4593 = vpop.f32.mrf.mxu0
    %v4594 = vadd.f32 0.0, %v4593
    %4595 = vmatmul.f32.gmra.mxu0 %v3708
    %v4596 = vpop.f32.mrf.mxu0
    %v4597 = vadd.f32 0.0, %v4596
    %4598 = vmatmul.f32.gmra.mxu0 %v3712
    %v4599 = vpop.f32.mrf.mxu0
    %v4600 = vadd.f32 0.0, %v4599
    %4601 = vmatmul.f32.gmra.mxu0 %v3716
    %v4602 = vpop.f32.mrf.mxu0
    %v4603 = vadd.f32 0.0, %v4602
    %4604 = vmatmul.f32.gmra.mxu0 %v3720
    %v4605 = vpop.f32.mrf.mxu0
    %v4606 = vadd.f32 0.0, %v4605
    %4607 = vmatmul.f32.gmra.mxu0 %v3724
    %v4608 = vpop.f32.mrf.mxu0
    %v4609 = vadd.f32 0.0, %v4608
    %4610 = vmatmul.f32.gmra.mxu0 %v3728
    %v4611 = vpop.f32.mrf.mxu0
    %v4612 = vadd.f32 0.0, %v4611
    %4613 = vmatmul.f32.gmra.mxu0 %v3732
    %v4614 = vpop.f32.mrf.mxu0
    %v4615 = vadd.f32 0.0, %v4614
    %4616 = vdwg.mxu0
    %4617 = vmatpush.msra.mxu0 %v4240
    %4618 = vmatpush.msra.mxu0 %v4232
    %4619 = vmatpush.msra.mxu0 %v4224
    %4620 = vmatpush.msra.mxu0 %v4216
    %4621 = vmatpush.msra.mxu0 %v4208
    %4622 = vmatpush.msra.mxu0 %v4200
    %4623 = vmatpush.msra.mxu0 %v4192
    %4624 = vmatpush.msra.mxu0 %v4184
    %4625 = vmatpush.msra.mxu0 %v4176
    %4626 = vmatpush.msra.mxu0 %v4168
    %4627 = vmatpush.msra.mxu0 %v4160
    %4628 = vmatpush.msra.mxu0 %v4152
    %4629 = vmatpush.msra.mxu0 %v4144
    %4630 = vmatpush.msra.mxu0 %v4136
    %4631 = vmatpush.msra.mxu0 %v4128
    %4632 = vmatpush.msra.mxu0 %v4120
    %4633 = vmatmul.f32.gmra.mxu0 %v3609
    %v4634 = vpop.f32.mrf.mxu0
    %v4635 = vadd.f32 %v4522, %v4634
    %4636 = vmatmul.f32.gmra.mxu0 %v3613
    %v4637 = vpop.f32.mrf.mxu0
    %v4638 = vadd.f32 %v4525, %v4637
    %4639 = vmatmul.f32.gmra.mxu0 %v3617
    %v4640 = vpop.f32.mrf.mxu0
    %v4641 = vadd.f32 %v4528, %v4640
    %4642 = vmatmul.f32.gmra.mxu0 %v3621
    %v4643 = vpop.f32.mrf.mxu0
    %v4644 = vadd.f32 %v4531, %v4643
    %4645 = vmatmul.f32.gmra.mxu0 %v3625
    %v4646 = vpop.f32.mrf.mxu0
    %v4647 = vadd.f32 %v4534, %v4646
    %4648 = vmatmul.f32.gmra.mxu0 %v3629
    %v4649 = vpop.f32.mrf.mxu0
    %v4650 = vadd.f32 %v4537, %v4649
    %4651 = vmatmul.f32.gmra.mxu0 %v3633
    %v4652 = vpop.f32.mrf.mxu0
    %v4653 = vadd.f32 %v4540, %v4652
    %4654 = vmatmul.f32.gmra.mxu0 %v3637
    %v4655 = vpop.f32.mrf.mxu0
    %v4656 = vadd.f32 %v4543, %v4655
    %4657 = vmatmul.f32.gmra.mxu0 %v3641
    %v4658 = vpop.f32.mrf.mxu0
    %v4659 = vadd.f32 %v4546, %v4658
    %4660 = vmatmul.f32.gmra.mxu0 %v3645
    %v4661 = vpop.f32.mrf.mxu0
    %v4662 = vadd.f32 %v4549, %v4661
    %4663 = vmatmul.f32.gmra.mxu0 %v3649
    %v4664 = vpop.f32.mrf.mxu0
    %v4665 = vadd.f32 %v4552, %v4664
    %4666 = vmatmul.f32.gmra.mxu0 %v3653
    %v4667 = vpop.f32.mrf.mxu0
    %v4668 = vadd.f32 %v4555, %v4667
    %4669 = vmatmul.f32.gmra.mxu0 %v3657
    %v4670 = vpop.f32.mrf.mxu0
    %v4671 = vadd.f32 %v4558, %v4670
    %4672 = vmatmul.f32.gmra.mxu0 %v3661
    %v4673 = vpop.f32.mrf.mxu0
    %v4674 = vadd.f32 %v4561, %v4673
    %4675 = vmatmul.f32.gmra.mxu0 %v3665
    %v4676 = vpop.f32.mrf.mxu0
    %v4677 = vadd.f32 %v4564, %v4676
    %4678 = vmatmul.f32.gmra.mxu0 %v3669
    %v4679 = vpop.f32.mrf.mxu0
    %v4680 = vadd.f32 %v4567, %v4679
    %4681 = vmatmul.f32.gmra.mxu0 %v3673
    %v4682 = vpop.f32.mrf.mxu0
    %v4683 = vadd.f32 %v4570, %v4682
    %4684 = vmatmul.f32.gmra.mxu0 %v3677
    %v4685 = vpop.f32.mrf.mxu0
    %v4686 = vadd.f32 %v4573, %v4685
    %4687 = vmatmul.f32.gmra.mxu0 %v3681
    %v4688 = vpop.f32.mrf.mxu0
    %v4689 = vadd.f32 %v4576, %v4688
    %4690 = vmatmul.f32.gmra.mxu0 %v3685
    %v4691 = vpop.f32.mrf.mxu0
    %v4692 = vadd.f32 %v4579, %v4691
    %4693 = vmatmul.f32.gmra.mxu0 %v3689
    %v4694 = vpop.f32.mrf.mxu0
    %v4695 = vadd.f32 %v4582, %v4694
    %4696 = vmatmul.f32.gmra.mxu0 %v3693
    %v4697 = vpop.f32.mrf.mxu0
    %v4698 = vadd.f32 %v4585, %v4697
    %4699 = vmatmul.f32.gmra.mxu0 %v3697
    %v4700 = vpop.f32.mrf.mxu0
    %v4701 = vadd.f32 %v4588, %v4700
    %4702 = vmatmul.f32.gmra.mxu0 %v3701
    %v4703 = vpop.f32.mrf.mxu0
    %v4704 = vadd.f32 %v4591, %v4703
    %4705 = vmatmul.f32.gmra.mxu0 %v3705
    %v4706 = vpop.f32.mrf.mxu0
    %v4707 = vadd.f32 %v4594, %v4706
    %4708 = vmatmul.f32.gmra.mxu0 %v3709
    %v4709 = vpop.f32.mrf.mxu0
    %v4710 = vadd.f32 %v4597, %v4709
    %4711 = vmatmul.f32.gmra.mxu0 %v3713
    %v4712 = vpop.f32.mrf.mxu0
    %v4713 = vadd.f32 %v4600, %v4712
    %4714 = vmatmul.f32.gmra.mxu0 %v3717
    %v4715 = vpop.f32.mrf.mxu0
    %v4716 = vadd.f32 %v4603, %v4715
    %4717 = vmatmul.f32.gmra.mxu0 %v3721
    %v4718 = vpop.f32.mrf.mxu0
    %v4719 = vadd.f32 %v4606, %v4718
    %4720 = vmatmul.f32.gmra.mxu0 %v3725
    %v4721 = vpop.f32.mrf.mxu0
    %v4722 = vadd.f32 %v4609, %v4721
    %4723 = vmatmul.f32.gmra.mxu0 %v3729
    %v4724 = vpop.f32.mrf.mxu0
    %v4725 = vadd.f32 %v4612, %v4724
    %4726 = vmatmul.f32.gmra.mxu0 %v3733
    %v4727 = vpop.f32.mrf.mxu0
    %v4728 = vadd.f32 %v4615, %v4727
    %4729 = vdwg.mxu0
    %4730 = vmatpush.msra.mxu0 %v4368
    %4731 = vmatpush.msra.mxu0 %v4360
    %4732 = vmatpush.msra.mxu0 %v4352
    %4733 = vmatpush.msra.mxu0 %v4344
    %4734 = vmatpush.msra.mxu0 %v4336
    %4735 = vmatpush.msra.mxu0 %v4328
    %4736 = vmatpush.msra.mxu0 %v4320
    %4737 = vmatpush.msra.mxu0 %v4312
    %4738 = vmatpush.msra.mxu0 %v4304
    %4739 = vmatpush.msra.mxu0 %v4296
    %4740 = vmatpush.msra.mxu0 %v4288
    %4741 = vmatpush.msra.mxu0 %v4280
    %4742 = vmatpush.msra.mxu0 %v4272
    %4743 = vmatpush.msra.mxu0 %v4264
    %4744 = vmatpush.msra.mxu0 %v4256
    %4745 = vmatpush.msra.mxu0 %v4248
    %4746 = vmatmul.f32.gmra.mxu0 %v3610
    %v4747 = vpop.f32.mrf.mxu0
    %v4748 = vadd.f32 %v4635, %v4747
    %4749 = vmatmul.f32.gmra.mxu0 %v3614
    %v4750 = vpop.f32.mrf.mxu0
    %v4751 = vadd.f32 %v4638, %v4750
    %4752 = vmatmul.f32.gmra.mxu0 %v3618
    %v4753 = vpop.f32.mrf.mxu0
    %v4754 = vadd.f32 %v4641, %v4753
    %4755 = vmatmul.f32.gmra.mxu0 %v3622
    %v4756 = vpop.f32.mrf.mxu0
    %v4757 = vadd.f32 %v4644, %v4756
    %4758 = vmatmul.f32.gmra.mxu0 %v3626
    %v4759 = vpop.f32.mrf.mxu0
    %v4760 = vadd.f32 %v4647, %v4759
    %4761 = vmatmul.f32.gmra.mxu0 %v3630
    %v4762 = vpop.f32.mrf.mxu0
    %v4763 = vadd.f32 %v4650, %v4762
    %4764 = vmatmul.f32.gmra.mxu0 %v3634
    %v4765 = vpop.f32.mrf.mxu0
    %v4766 = vadd.f32 %v4653, %v4765
    %4767 = vmatmul.f32.gmra.mxu0 %v3638
    %v4768 = vpop.f32.mrf.mxu0
    %v4769 = vadd.f32 %v4656, %v4768
    %4770 = vmatmul.f32.gmra.mxu0 %v3642
    %v4771 = vpop.f32.mrf.mxu0
    %v4772 = vadd.f32 %v4659, %v4771
    %4773 = vmatmul.f32.gmra.mxu0 %v3646
    %v4774 = vpop.f32.mrf.mxu0
    %v4775 = vadd.f32 %v4662, %v4774
    %4776 = vmatmul.f32.gmra.mxu0 %v3650
    %v4777 = vpop.f32.mrf.mxu0
    %v4778 = vadd.f32 %v4665, %v4777
    %4779 = vmatmul.f32.gmra.mxu0 %v3654
    %v4780 = vpop.f32.mrf.mxu0
    %v4781 = vadd.f32 %v4668, %v4780
    %4782 = vmatmul.f32.gmra.mxu0 %v3658
    %v4783 = vpop.f32.mrf.mxu0
    %v4784 = vadd.f32 %v4671, %v4783
    %4785 = vmatmul.f32.gmra.mxu0 %v3662
    %v4786 = vpop.f32.mrf.mxu0
    %v4787 = vadd.f32 %v4674, %v4786
    %4788 = vmatmul.f32.gmra.mxu0 %v3666
    %v4789 = vpop.f32.mrf.mxu0
    %v4790 = vadd.f32 %v4677, %v4789
    %4791 = vmatmul.f32.gmra.mxu0 %v3670
    %v4792 = vpop.f32.mrf.mxu0
    %v4793 = vadd.f32 %v4680, %v4792
    %4794 = vmatmul.f32.gmra.mxu0 %v3674
    %v4795 = vpop.f32.mrf.mxu0
    %v4796 = vadd.f32 %v4683, %v4795
    %4797 = vmatmul.f32.gmra.mxu0 %v3678
    %v4798 = vpop.f32.mrf.mxu0
    %v4799 = vadd.f32 %v4686, %v4798
    %4800 = vmatmul.f32.gmra.mxu0 %v3682
    %v4801 = vpop.f32.mrf.mxu0
    %v4802 = vadd.f32 %v4689, %v4801
    %4803 = vmatmul.f32.gmra.mxu0 %v3686
    %v4804 = vpop.f32.mrf.mxu0
    %v4805 = vadd.f32 %v4692, %v4804
    %4806 = vmatmul.f32.gmra.mxu0 %v3690
    %v4807 = vpop.f32.mrf.mxu0
    %v4808 = vadd.f32 %v4695, %v4807
    %4809 = vmatmul.f32.gmra.mxu0 %v3694
    %v4810 = vpop.f32.mrf.mxu0
    %v4811 = vadd.f32 %v4698, %v4810
    %4812 = vmatmul.f32.gmra.mxu0 %v3698
    %v4813 = vpop.f32.mrf.mxu0
    %v4814 = vadd.f32 %v4701, %v4813
    %4815 = vmatmul.f32.gmra.mxu0 %v3702
    %v4816 = vpop.f32.mrf.mxu0
    %v4817 = vadd.f32 %v4704, %v4816
    %4818 = vmatmul.f32.gmra.mxu0 %v3706
    %v4819 = vpop.f32.mrf.mxu0
    %v4820 = vadd.f32 %v4707, %v4819
    %4821 = vmatmul.f32.gmra.mxu0 %v3710
    %v4822 = vpop.f32.mrf.mxu0
    %v4823 = vadd.f32 %v4710, %v4822
    %4824 = vmatmul.f32.gmra.mxu0 %v3714
    %v4825 = vpop.f32.mrf.mxu0
    %v4826 = vadd.f32 %v4713, %v4825
    %4827 = vmatmul.f32.gmra.mxu0 %v3718
    %v4828 = vpop.f32.mrf.mxu0
    %v4829 = vadd.f32 %v4716, %v4828
    %4830 = vmatmul.f32.gmra.mxu0 %v3722
    %v4831 = vpop.f32.mrf.mxu0
    %v4832 = vadd.f32 %v4719, %v4831
    %4833 = vmatmul.f32.gmra.mxu0 %v3726
    %v4834 = vpop.f32.mrf.mxu0
    %v4835 = vadd.f32 %v4722, %v4834
    %4836 = vmatmul.f32.gmra.mxu0 %v3730
    %v4837 = vpop.f32.mrf.mxu0
    %v4838 = vadd.f32 %v4725, %v4837
    %4839 = vmatmul.f32.gmra.mxu0 %v3734
    %v4840 = vpop.f32.mrf.mxu0
    %v4841 = vadd.f32 %v4728, %v4840
    %4842 = vdwg.mxu0
    %4843 = vmatpush.msra.mxu0 %v4496
    %4844 = vmatpush.msra.mxu0 %v4488
    %4845 = vmatpush.msra.mxu0 %v4480
    %4846 = vmatpush.msra.mxu0 %v4472
    %4847 = vmatpush.msra.mxu0 %v4464
    %4848 = vmatpush.msra.mxu0 %v4456
    %4849 = vmatpush.msra.mxu0 %v4448
    %4850 = vmatpush.msra.mxu0 %v4440
    %4851 = vmatpush.msra.mxu0 %v4432
    %4852 = vmatpush.msra.mxu0 %v4424
    %4853 = vmatpush.msra.mxu0 %v4416
    %4854 = vmatpush.msra.mxu0 %v4408
    %4855 = vmatpush.msra.mxu0 %v4400
    %4856 = vmatpush.msra.mxu0 %v4392
    %4857 = vmatpush.msra.mxu0 %v4384
    %4858 = vmatpush.msra.mxu0 %v4376
    %4859 = vmatmul.f32.gmra.mxu0 %v3611
    %v4860 = vpop.f32.mrf.mxu0
    %v4861 = vadd.f32 %v4748, %v4860
    %4862 = vmatmul.f32.gmra.mxu0 %v3615
    %v4863 = vpop.f32.mrf.mxu0
    %v4864 = vadd.f32 %v4751, %v4863
    %4865 = vmatmul.f32.gmra.mxu0 %v3619
    %v4866 = vpop.f32.mrf.mxu0
    %v4867 = vadd.f32 %v4754, %v4866
    %4868 = vmatmul.f32.gmra.mxu0 %v3623
    %v4869 = vpop.f32.mrf.mxu0
    %v4870 = vadd.f32 %v4757, %v4869
    %4871 = vmatmul.f32.gmra.mxu0 %v3627
    %v4872 = vpop.f32.mrf.mxu0
    %v4873 = vadd.f32 %v4760, %v4872
    %4874 = vmatmul.f32.gmra.mxu0 %v3631
    %v4875 = vpop.f32.mrf.mxu0
    %v4876 = vadd.f32 %v4763, %v4875
    %4877 = vmatmul.f32.gmra.mxu0 %v3635
    %v4878 = vpop.f32.mrf.mxu0
    %v4879 = vadd.f32 %v4766, %v4878
    %4880 = vmatmul.f32.gmra.mxu0 %v3639
    %v4881 = vpop.f32.mrf.mxu0
    %v4882 = vadd.f32 %v4769, %v4881
    %4883 = vmatmul.f32.gmra.mxu0 %v3643
    %v4884 = vpop.f32.mrf.mxu0
    %v4885 = vadd.f32 %v4772, %v4884
    %4886 = vmatmul.f32.gmra.mxu0 %v3647
    %v4887 = vpop.f32.mrf.mxu0
    %v4888 = vadd.f32 %v4775, %v4887
    %4889 = vmatmul.f32.gmra.mxu0 %v3651
    %v4890 = vpop.f32.mrf.mxu0
    %v4891 = vadd.f32 %v4778, %v4890
    %4892 = vmatmul.f32.gmra.mxu0 %v3655
    %v4893 = vpop.f32.mrf.mxu0
    %v4894 = vadd.f32 %v4781, %v4893
    %4895 = vmatmul.f32.gmra.mxu0 %v3659
    %v4896 = vpop.f32.mrf.mxu0
    %v4897 = vadd.f32 %v4784, %v4896
    %4898 = vmatmul.f32.gmra.mxu0 %v3663
    %v4899 = vpop.f32.mrf.mxu0
    %v4900 = vadd.f32 %v4787, %v4899
    %4901 = vmatmul.f32.gmra.mxu0 %v3667
    %v4902 = vpop.f32.mrf.mxu0
    %v4903 = vadd.f32 %v4790, %v4902
    %4904 = vmatmul.f32.gmra.mxu0 %v3671
    %v4905 = vpop.f32.mrf.mxu0
    %v4906 = vadd.f32 %v4793, %v4905
    %4907 = vmatmul.f32.gmra.mxu0 %v3675
    %v4908 = vpop.f32.mrf.mxu0
    %v4909 = vadd.f32 %v4796, %v4908
    %4910 = vmatmul.f32.gmra.mxu0 %v3679
    %v4911 = vpop.f32.mrf.mxu0
    %v4912 = vadd.f32 %v4799, %v4911
    %4913 = vmatmul.f32.gmra.mxu0 %v3683
    %v4914 = vpop.f32.mrf.mxu0
    %v4915 = vadd.f32 %v4802, %v4914
    %4916 = vmatmul.f32.gmra.mxu0 %v3687
    %v4917 = vpop.f32.mrf.mxu0
    %v4918 = vadd.f32 %v4805, %v4917
    %4919 = vmatmul.f32.gmra.mxu0 %v3691
    %v4920 = vpop.f32.mrf.mxu0
    %v4921 = vadd.f32 %v4808, %v4920
    %4922 = vmatmul.f32.gmra.mxu0 %v3695
    %v4923 = vpop.f32.mrf.mxu0
    %v4924 = vadd.f32 %v4811, %v4923
    %4925 = vmatmul.f32.gmra.mxu0 %v3699
    %v4926 = vpop.f32.mrf.mxu0
    %v4927 = vadd.f32 %v4814, %v4926
    %4928 = vmatmul.f32.gmra.mxu0 %v3703
    %v4929 = vpop.f32.mrf.mxu0
    %v4930 = vadd.f32 %v4817, %v4929
    %4931 = vmatmul.f32.gmra.mxu0 %v3707
    %v4932 = vpop.f32.mrf.mxu0
    %v4933 = vadd.f32 %v4820, %v4932
    %4934 = vmatmul.f32.gmra.mxu0 %v3711
    %v4935 = vpop.f32.mrf.mxu0
    %v4936 = vadd.f32 %v4823, %v4935
    %4937 = vmatmul.f32.gmra.mxu0 %v3715
    %v4938 = vpop.f32.mrf.mxu0
    %v4939 = vadd.f32 %v4826, %v4938
    %4940 = vmatmul.f32.gmra.mxu0 %v3719
    %v4941 = vpop.f32.mrf.mxu0
    %v4942 = vadd.f32 %v4829, %v4941
    %4943 = vmatmul.f32.gmra.mxu0 %v3723
    %v4944 = vpop.f32.mrf.mxu0
    %v4945 = vadd.f32 %v4832, %v4944
    %4946 = vmatmul.f32.gmra.mxu0 %v3727
    %v4947 = vpop.f32.mrf.mxu0
    %v4948 = vadd.f32 %v4835, %v4947
    %4949 = vmatmul.f32.gmra.mxu0 %v3731
    %v4950 = vpop.f32.mrf.mxu0
    %v4951 = vadd.f32 %v4838, %v4950
    %4952 = vmatmul.f32.gmra.mxu0 %v3735
    %v4953 = vpop.f32.mrf.mxu0
    %v4954 = vadd.f32 %v4841, %v4953
    %4955 = vdwg.mxu0
    %4956 = vmatpush.msra.mxu0 %v4113
    %4957 = vmatpush.msra.mxu0 %v4105
    %4958 = vmatpush.msra.mxu0 %v4097
    %4959 = vmatpush.msra.mxu0 %v4089
    %4960 = vmatpush.msra.mxu0 %v4081
    %4961 = vmatpush.msra.mxu0 %v4073
    %4962 = vmatpush.msra.mxu0 %v4065
    %4963 = vmatpush.msra.mxu0 %v4057
    %4964 = vmatpush.msra.mxu0 %v4049
    %4965 = vmatpush.msra.mxu0 %v4041
    %4966 = vmatpush.msra.mxu0 %v4033
    %4967 = vmatpush.msra.mxu0 %v4025
    %4968 = vmatpush.msra.mxu0 %v4017
    %4969 = vmatpush.msra.mxu0 %v4009
    %4970 = vmatpush.msra.mxu0 %v4001
    %4971 = vmatpush.msra.mxu0 %v3993
    %4972 = vmatmul.f32.gmra.mxu0 %v3608
    %v4973 = vpop.f32.mrf.mxu0
    %v4974 = vadd.f32 0.0, %v4973
    %4975 = vmatmul.f32.gmra.mxu0 %v3612
    %v4976 = vpop.f32.mrf.mxu0
    %v4977 = vadd.f32 0.0, %v4976
    %4978 = vmatmul.f32.gmra.mxu0 %v3616
    %v4979 = vpop.f32.mrf.mxu0
    %v4980 = vadd.f32 0.0, %v4979
    %4981 = vmatmul.f32.gmra.mxu0 %v3620
    %v4982 = vpop.f32.mrf.mxu0
    %v4983 = vadd.f32 0.0, %v4982
    %4984 = vmatmul.f32.gmra.mxu0 %v3624
    %v4985 = vpop.f32.mrf.mxu0
    %v4986 = vadd.f32 0.0, %v4985
    %4987 = vmatmul.f32.gmra.mxu0 %v3628
    %v4988 = vpop.f32.mrf.mxu0
    %v4989 = vadd.f32 0.0, %v4988
    %4990 = vmatmul.f32.gmra.mxu0 %v3632
    %v4991 = vpop.f32.mrf.mxu0
    %v4992 = vadd.f32 0.0, %v4991
    %4993 = vmatmul.f32.gmra.mxu0 %v3636
    %v4994 = vpop.f32.mrf.mxu0
    %v4995 = vadd.f32 0.0, %v4994
    %4996 = vmatmul.f32.gmra.mxu0 %v3640
    %v4997 = vpop.f32.mrf.mxu0
    %v4998 = vadd.f32 0.0, %v4997
    %4999 = vmatmul.f32.gmra.mxu0 %v3644
    %v5000 = vpop.f32.mrf.mxu0
    %v5001 = vadd.f32 0.0, %v5000
    %5002 = vmatmul.f32.gmra.mxu0 %v3648
    %v5003 = vpop.f32.mrf.mxu0
    %v5004 = vadd.f32 0.0, %v5003
    %5005 = vmatmul.f32.gmra.mxu0 %v3652
    %v5006 = vpop.f32.mrf.mxu0
    %v5007 = vadd.f32 0.0, %v5006
    %5008 = vmatmul.f32.gmra.mxu0 %v3656
    %v5009 = vpop.f32.mrf.mxu0
    %v5010 = vadd.f32 0.0, %v5009
    %5011 = vmatmul.f32.gmra.mxu0 %v3660
    %v5012 = vpop.f32.mrf.mxu0
    %v5013 = vadd.f32 0.0, %v5012
    %5014 = vmatmul.f32.gmra.mxu0 %v3664
    %v5015 = vpop.f32.mrf.mxu0
    %v5016 = vadd.f32 0.0, %v5015
    %5017 = vmatmul.f32.gmra.mxu0 %v3668
    %v5018 = vpop.f32.mrf.mxu0
    %v5019 = vadd.f32 0.0, %v5018
    %5020 = vmatmul.f32.gmra.mxu0 %v3672
    %v5021 = vpop.f32.mrf.mxu0
    %v5022 = vadd.f32 0.0, %v5021
    %5023 = vmatmul.f32.gmra.mxu0 %v3676
    %v5024 = vpop.f32.mrf.mxu0
    %v5025 = vadd.f32 0.0, %v5024
    %5026 = vmatmul.f32.gmra.mxu0 %v3680
    %v5027 = vpop.f32.mrf.mxu0
    %v5028 = vadd.f32 0.0, %v5027
    %5029 = vmatmul.f32.gmra.mxu0 %v3684
    %v5030 = vpop.f32.mrf.mxu0
    %v5031 = vadd.f32 0.0, %v5030
    %5032 = vmatmul.f32.gmra.mxu0 %v3688
    %v5033 = vpop.f32.mrf.mxu0
    %v5034 = vadd.f32 0.0, %v5033
    %5035 = vmatmul.f32.gmra.mxu0 %v3692
    %v5036 = vpop.f32.mrf.mxu0
    %v5037 = vadd.f32 0.0, %v5036
    %5038 = vmatmul.f32.gmra.mxu0 %v3696
    %v5039 = vpop.f32.mrf.mxu0
    %v5040 = vadd.f32 0.0, %v5039
    %5041 = vmatmul.f32.gmra.mxu0 %v3700
    %v5042 = vpop.f32.mrf.mxu0
    %v5043 = vadd.f32 0.0, %v5042
    %5044 = vmatmul.f32.gmra.mxu0 %v3704
    %v5045 = vpop.f32.mrf.mxu0
    %v5046 = vadd.f32 0.0, %v5045
    %5047 = vmatmul.f32.gmra.mxu0 %v3708
    %v5048 = vpop.f32.mrf.mxu0
    %v5049 = vadd.f32 0.0, %v5048
    %5050 = vmatmul.f32.gmra.mxu0 %v3712
    %v5051 = vpop.f32.mrf.mxu0
    %v5052 = vadd.f32 0.0, %v5051
    %5053 = vmatmul.f32.gmra.mxu0 %v3716
    %v5054 = vpop.f32.mrf.mxu0
    %v5055 = vadd.f32 0.0, %v5054
    %5056 = vmatmul.f32.gmra.mxu0 %v3720
    %v5057 = vpop.f32.mrf.mxu0
    %v5058 = vadd.f32 0.0, %v5057
    %5059 = vmatmul.f32.gmra.mxu0 %v3724
    %v5060 = vpop.f32.mrf.mxu0
    %v5061 = vadd.f32 0.0, %v5060
    %5062 = vmatmul.f32.gmra.mxu0 %v3728
    %v5063 = vpop.f32.mrf.mxu0
    %v5064 = vadd.f32 0.0, %v5063
    %5065 = vmatmul.f32.gmra.mxu0 %v3732
    %v5066 = vpop.f32.mrf.mxu0
    %v5067 = vadd.f32 0.0, %v5066
    %5068 = vdwg.mxu0
    %5069 = vmatpush.msra.mxu0 %v4241
    %5070 = vmatpush.msra.mxu0 %v4233
    %5071 = vmatpush.msra.mxu0 %v4225
    %5072 = vmatpush.msra.mxu0 %v4217
    %5073 = vmatpush.msra.mxu0 %v4209
    %5074 = vmatpush.msra.mxu0 %v4201
    %5075 = vmatpush.msra.mxu0 %v4193
    %5076 = vmatpush.msra.mxu0 %v4185
    %5077 = vmatpush.msra.mxu0 %v4177
    %5078 = vmatpush.msra.mxu0 %v4169
    %5079 = vmatpush.msra.mxu0 %v4161
    %5080 = vmatpush.msra.mxu0 %v4153
    %5081 = vmatpush.msra.mxu0 %v4145
    %5082 = vmatpush.msra.mxu0 %v4137
    %5083 = vmatpush.msra.mxu0 %v4129
    %5084 = vmatpush.msra.mxu0 %v4121
    %5085 = vmatmul.f32.gmra.mxu0 %v3609
    %v5086 = vpop.f32.mrf.mxu0
    %v5087 = vadd.f32 %v4974, %v5086
    %5088 = vmatmul.f32.gmra.mxu0 %v3613
    %v5089 = vpop.f32.mrf.mxu0
    %v5090 = vadd.f32 %v4977, %v5089
    %5091 = vmatmul.f32.gmra.mxu0 %v3617
    %v5092 = vpop.f32.mrf.mxu0
    %v5093 = vadd.f32 %v4980, %v5092
    %5094 = vmatmul.f32.gmra.mxu0 %v3621
    %v5095 = vpop.f32.mrf.mxu0
    %v5096 = vadd.f32 %v4983, %v5095
    %5097 = vmatmul.f32.gmra.mxu0 %v3625
    %v5098 = vpop.f32.mrf.mxu0
    %v5099 = vadd.f32 %v4986, %v5098
    %5100 = vmatmul.f32.gmra.mxu0 %v3629
    %v5101 = vpop.f32.mrf.mxu0
    %v5102 = vadd.f32 %v4989, %v5101
    %5103 = vmatmul.f32.gmra.mxu0 %v3633
    %v5104 = vpop.f32.mrf.mxu0
    %v5105 = vadd.f32 %v4992, %v5104
    %5106 = vmatmul.f32.gmra.mxu0 %v3637
    %v5107 = vpop.f32.mrf.mxu0
    %v5108 = vadd.f32 %v4995, %v5107
    %5109 = vmatmul.f32.gmra.mxu0 %v3641
    %v5110 = vpop.f32.mrf.mxu0
    %v5111 = vadd.f32 %v4998, %v5110
    %5112 = vmatmul.f32.gmra.mxu0 %v3645
    %v5113 = vpop.f32.mrf.mxu0
    %v5114 = vadd.f32 %v5001, %v5113
    %5115 = vmatmul.f32.gmra.mxu0 %v3649
    %v5116 = vpop.f32.mrf.mxu0
    %v5117 = vadd.f32 %v5004, %v5116
    %5118 = vmatmul.f32.gmra.mxu0 %v3653
    %v5119 = vpop.f32.mrf.mxu0
    %v5120 = vadd.f32 %v5007, %v5119
    %5121 = vmatmul.f32.gmra.mxu0 %v3657
    %v5122 = vpop.f32.mrf.mxu0
    %v5123 = vadd.f32 %v5010, %v5122
    %5124 = vmatmul.f32.gmra.mxu0 %v3661
    %v5125 = vpop.f32.mrf.mxu0
    %v5126 = vadd.f32 %v5013, %v5125
    %5127 = vmatmul.f32.gmra.mxu0 %v3665
    %v5128 = vpop.f32.mrf.mxu0
    %v5129 = vadd.f32 %v5016, %v5128
    %5130 = vmatmul.f32.gmra.mxu0 %v3669
    %v5131 = vpop.f32.mrf.mxu0
    %v5132 = vadd.f32 %v5019, %v5131
    %5133 = vmatmul.f32.gmra.mxu0 %v3673
    %v5134 = vpop.f32.mrf.mxu0
    %v5135 = vadd.f32 %v5022, %v5134
    %5136 = vmatmul.f32.gmra.mxu0 %v3677
    %v5137 = vpop.f32.mrf.mxu0
    %v5138 = vadd.f32 %v5025, %v5137
    %5139 = vmatmul.f32.gmra.mxu0 %v3681
    %v5140 = vpop.f32.mrf.mxu0
    %v5141 = vadd.f32 %v5028, %v5140
    %5142 = vmatmul.f32.gmra.mxu0 %v3685
    %v5143 = vpop.f32.mrf.mxu0
    %v5144 = vadd.f32 %v5031, %v5143
    %5145 = vmatmul.f32.gmra.mxu0 %v3689
    %v5146 = vpop.f32.mrf.mxu0
    %v5147 = vadd.f32 %v5034, %v5146
    %5148 = vmatmul.f32.gmra.mxu0 %v3693
    %v5149 = vpop.f32.mrf.mxu0
    %v5150 = vadd.f32 %v5037, %v5149
    %5151 = vmatmul.f32.gmra.mxu0 %v3697
    %v5152 = vpop.f32.mrf.mxu0
    %v5153 = vadd.f32 %v5040, %v5152
    %5154 = vmatmul.f32.gmra.mxu0 %v3701
    %v5155 = vpop.f32.mrf.mxu0
    %v5156 = vadd.f32 %v5043, %v5155
    %5157 = vmatmul.f32.gmra.mxu0 %v3705
    %v5158 = vpop.f32.mrf.mxu0
    %v5159 = vadd.f32 %v5046, %v5158
    %5160 = vmatmul.f32.gmra.mxu0 %v3709
    %v5161 = vpop.f32.mrf.mxu0
    %v5162 = vadd.f32 %v5049, %v5161
    %5163 = vmatmul.f32.gmra.mxu0 %v3713
    %v5164 = vpop.f32.mrf.mxu0
    %v5165 = vadd.f32 %v5052, %v5164
    %5166 = vmatmul.f32.gmra.mxu0 %v3717
    %v5167 = vpop.f32.mrf.mxu0
    %v5168 = vadd.f32 %v5055, %v5167
    %5169 = vmatmul.f32.gmra.mxu0 %v3721
    %v5170 = vpop.f32.mrf.mxu0
    %v5171 = vadd.f32 %v5058, %v5170
    %5172 = vmatmul.f32.gmra.mxu0 %v3725
    %v5173 = vpop.f32.mrf.mxu0
    %v5174 = vadd.f32 %v5061, %v5173
    %5175 = vmatmul.f32.gmra.mxu0 %v3729
    %v5176 = vpop.f32.mrf.mxu0
    %v5177 = vadd.f32 %v5064, %v5176
    %5178 = vmatmul.f32.gmra.mxu0 %v3733
    %v5179 = vpop.f32.mrf.mxu0
    %v5180 = vadd.f32 %v5067, %v5179
    %5181 = vdwg.mxu0
    %5182 = vmatpush.msra.mxu0 %v4369
    %5183 = vmatpush.msra.mxu0 %v4361
    %5184 = vmatpush.msra.mxu0 %v4353
    %5185 = vmatpush.msra.mxu0 %v4345
    %5186 = vmatpush.msra.mxu0 %v4337
    %5187 = vmatpush.msra.mxu0 %v4329
    %5188 = vmatpush.msra.mxu0 %v4321
    %5189 = vmatpush.msra.mxu0 %v4313
    %5190 = vmatpush.msra.mxu0 %v4305
    %5191 = vmatpush.msra.mxu0 %v4297
    %5192 = vmatpush.msra.mxu0 %v4289
    %5193 = vmatpush.msra.mxu0 %v4281
    %5194 = vmatpush.msra.mxu0 %v4273
    %5195 = vmatpush.msra.mxu0 %v4265
    %5196 = vmatpush.msra.mxu0 %v4257
    %5197 = vmatpush.msra.mxu0 %v4249
    %5198 = vmatmul.f32.gmra.mxu0 %v3610
    %v5199 = vpop.f32.mrf.mxu0
    %v5200 = vadd.f32 %v5087, %v5199
    %5201 = vmatmul.f32.gmra.mxu0 %v3614
    %v5202 = vpop.f32.mrf.mxu0
    %v5203 = vadd.f32 %v5090, %v5202
    %5204 = vmatmul.f32.gmra.mxu0 %v3618
    %v5205 = vpop.f32.mrf.mxu0
    %v5206 = vadd.f32 %v5093, %v5205
    %5207 = vmatmul.f32.gmra.mxu0 %v3622
    %v5208 = vpop.f32.mrf.mxu0
    %v5209 = vadd.f32 %v5096, %v5208
    %5210 = vmatmul.f32.gmra.mxu0 %v3626
    %v5211 = vpop.f32.mrf.mxu0
    %v5212 = vadd.f32 %v5099, %v5211
    %5213 = vmatmul.f32.gmra.mxu0 %v3630
    %v5214 = vpop.f32.mrf.mxu0
    %v5215 = vadd.f32 %v5102, %v5214
    %5216 = vmatmul.f32.gmra.mxu0 %v3634
    %v5217 = vpop.f32.mrf.mxu0
    %v5218 = vadd.f32 %v5105, %v5217
    %5219 = vmatmul.f32.gmra.mxu0 %v3638
    %v5220 = vpop.f32.mrf.mxu0
    %v5221 = vadd.f32 %v5108, %v5220
    %5222 = vmatmul.f32.gmra.mxu0 %v3642
    %v5223 = vpop.f32.mrf.mxu0
    %v5224 = vadd.f32 %v5111, %v5223
    %5225 = vmatmul.f32.gmra.mxu0 %v3646
    %v5226 = vpop.f32.mrf.mxu0
    %v5227 = vadd.f32 %v5114, %v5226
    %5228 = vmatmul.f32.gmra.mxu0 %v3650
    %v5229 = vpop.f32.mrf.mxu0
    %v5230 = vadd.f32 %v5117, %v5229
    %5231 = vmatmul.f32.gmra.mxu0 %v3654
    %v5232 = vpop.f32.mrf.mxu0
    %v5233 = vadd.f32 %v5120, %v5232
    %5234 = vmatmul.f32.gmra.mxu0 %v3658
    %v5235 = vpop.f32.mrf.mxu0
    %v5236 = vadd.f32 %v5123, %v5235
    %5237 = vmatmul.f32.gmra.mxu0 %v3662
    %v5238 = vpop.f32.mrf.mxu0
    %v5239 = vadd.f32 %v5126, %v5238
    %5240 = vmatmul.f32.gmra.mxu0 %v3666
    %v5241 = vpop.f32.mrf.mxu0
    %v5242 = vadd.f32 %v5129, %v5241
    %5243 = vmatmul.f32.gmra.mxu0 %v3670
    %v5244 = vpop.f32.mrf.mxu0
    %v5245 = vadd.f32 %v5132, %v5244
    %5246 = vmatmul.f32.gmra.mxu0 %v3674
    %v5247 = vpop.f32.mrf.mxu0
    %v5248 = vadd.f32 %v5135, %v5247
    %5249 = vmatmul.f32.gmra.mxu0 %v3678
    %v5250 = vpop.f32.mrf.mxu0
    %v5251 = vadd.f32 %v5138, %v5250
    %5252 = vmatmul.f32.gmra.mxu0 %v3682
    %v5253 = vpop.f32.mrf.mxu0
    %v5254 = vadd.f32 %v5141, %v5253
    %5255 = vmatmul.f32.gmra.mxu0 %v3686
    %v5256 = vpop.f32.mrf.mxu0
    %v5257 = vadd.f32 %v5144, %v5256
    %5258 = vmatmul.f32.gmra.mxu0 %v3690
    %v5259 = vpop.f32.mrf.mxu0
    %v5260 = vadd.f32 %v5147, %v5259
    %5261 = vmatmul.f32.gmra.mxu0 %v3694
    %v5262 = vpop.f32.mrf.mxu0
    %v5263 = vadd.f32 %v5150, %v5262
    %5264 = vmatmul.f32.gmra.mxu0 %v3698
    %v5265 = vpop.f32.mrf.mxu0
    %v5266 = vadd.f32 %v5153, %v5265
    %5267 = vmatmul.f32.gmra.mxu0 %v3702
    %v5268 = vpop.f32.mrf.mxu0
    %v5269 = vadd.f32 %v5156, %v5268
    %5270 = vmatmul.f32.gmra.mxu0 %v3706
    %v5271 = vpop.f32.mrf.mxu0
    %v5272 = vadd.f32 %v5159, %v5271
    %5273 = vmatmul.f32.gmra.mxu0 %v3710
    %v5274 = vpop.f32.mrf.mxu0
    %v5275 = vadd.f32 %v5162, %v5274
    %5276 = vmatmul.f32.gmra.mxu0 %v3714
    %v5277 = vpop.f32.mrf.mxu0
    %v5278 = vadd.f32 %v5165, %v5277
    %5279 = vmatmul.f32.gmra.mxu0 %v3718
    %v5280 = vpop.f32.mrf.mxu0
    %v5281 = vadd.f32 %v5168, %v5280
    %5282 = vmatmul.f32.gmra.mxu0 %v3722
    %v5283 = vpop.f32.mrf.mxu0
    %v5284 = vadd.f32 %v5171, %v5283
    %5285 = vmatmul.f32.gmra.mxu0 %v3726
    %v5286 = vpop.f32.mrf.mxu0
    %v5287 = vadd.f32 %v5174, %v5286
    %5288 = vmatmul.f32.gmra.mxu0 %v3730
    %v5289 = vpop.f32.mrf.mxu0
    %v5290 = vadd.f32 %v5177, %v5289
    %5291 = vmatmul.f32.gmra.mxu0 %v3734
    %v5292 = vpop.f32.mrf.mxu0
    %v5293 = vadd.f32 %v5180, %v5292
    %5294 = vdwg.mxu0
    %5295 = vmatpush.msra.mxu0 %v4497
    %5296 = vmatpush.msra.mxu0 %v4489
    %5297 = vmatpush.msra.mxu0 %v4481
    %5298 = vmatpush.msra.mxu0 %v4473
    %5299 = vmatpush.msra.mxu0 %v4465
    %5300 = vmatpush.msra.mxu0 %v4457
    %5301 = vmatpush.msra.mxu0 %v4449
    %5302 = vmatpush.msra.mxu0 %v4441
    %5303 = vmatpush.msra.mxu0 %v4433
    %5304 = vmatpush.msra.mxu0 %v4425
    %5305 = vmatpush.msra.mxu0 %v4417
    %5306 = vmatpush.msra.mxu0 %v4409
    %5307 = vmatpush.msra.mxu0 %v4401
    %5308 = vmatpush.msra.mxu0 %v4393
    %5309 = vmatpush.msra.mxu0 %v4385
    %5310 = vmatpush.msra.mxu0 %v4377
    %5311 = vmatmul.f32.gmra.mxu0 %v3611
    %v5312 = vpop.f32.mrf.mxu0
    %v5313 = vadd.f32 %v5200, %v5312
    %5314 = vmatmul.f32.gmra.mxu0 %v3615
    %v5315 = vpop.f32.mrf.mxu0
    %v5316 = vadd.f32 %v5203, %v5315
    %5317 = vmatmul.f32.gmra.mxu0 %v3619
    %v5318 = vpop.f32.mrf.mxu0
    %v5319 = vadd.f32 %v5206, %v5318
    %5320 = vmatmul.f32.gmra.mxu0 %v3623
    %v5321 = vpop.f32.mrf.mxu0
    %v5322 = vadd.f32 %v5209, %v5321
    %5323 = vmatmul.f32.gmra.mxu0 %v3627
    %v5324 = vpop.f32.mrf.mxu0
    %v5325 = vadd.f32 %v5212, %v5324
    %5326 = vmatmul.f32.gmra.mxu0 %v3631
    %v5327 = vpop.f32.mrf.mxu0
    %v5328 = vadd.f32 %v5215, %v5327
    %5329 = vmatmul.f32.gmra.mxu0 %v3635
    %v5330 = vpop.f32.mrf.mxu0
    %v5331 = vadd.f32 %v5218, %v5330
    %5332 = vmatmul.f32.gmra.mxu0 %v3639
    %v5333 = vpop.f32.mrf.mxu0
    %v5334 = vadd.f32 %v5221, %v5333
    %5335 = vmatmul.f32.gmra.mxu0 %v3643
    %v5336 = vpop.f32.mrf.mxu0
    %v5337 = vadd.f32 %v5224, %v5336
    %5338 = vmatmul.f32.gmra.mxu0 %v3647
    %v5339 = vpop.f32.mrf.mxu0
    %v5340 = vadd.f32 %v5227, %v5339
    %5341 = vmatmul.f32.gmra.mxu0 %v3651
    %v5342 = vpop.f32.mrf.mxu0
    %v5343 = vadd.f32 %v5230, %v5342
    %5344 = vmatmul.f32.gmra.mxu0 %v3655
    %v5345 = vpop.f32.mrf.mxu0
    %v5346 = vadd.f32 %v5233, %v5345
    %5347 = vmatmul.f32.gmra.mxu0 %v3659
    %v5348 = vpop.f32.mrf.mxu0
    %v5349 = vadd.f32 %v5236, %v5348
    %5350 = vmatmul.f32.gmra.mxu0 %v3663
    %v5351 = vpop.f32.mrf.mxu0
    %v5352 = vadd.f32 %v5239, %v5351
    %5353 = vmatmul.f32.gmra.mxu0 %v3667
    %v5354 = vpop.f32.mrf.mxu0
    %v5355 = vadd.f32 %v5242, %v5354
    %5356 = vmatmul.f32.gmra.mxu0 %v3671
    %v5357 = vpop.f32.mrf.mxu0
    %v5358 = vadd.f32 %v5245, %v5357
    %5359 = vmatmul.f32.gmra.mxu0 %v3675
    %v5360 = vpop.f32.mrf.mxu0
    %v5361 = vadd.f32 %v5248, %v5360
    %5362 = vmatmul.f32.gmra.mxu0 %v3679
    %v5363 = vpop.f32.mrf.mxu0
    %v5364 = vadd.f32 %v5251, %v5363
    %5365 = vmatmul.f32.gmra.mxu0 %v3683
    %v5366 = vpop.f32.mrf.mxu0
    %v5367 = vadd.f32 %v5254, %v5366
    %5368 = vmatmul.f32.gmra.mxu0 %v3687
    %v5369 = vpop.f32.mrf.mxu0
    %v5370 = vadd.f32 %v5257, %v5369
    %5371 = vmatmul.f32.gmra.mxu0 %v3691
    %v5372 = vpop.f32.mrf.mxu0
    %v5373 = vadd.f32 %v5260, %v5372
    %5374 = vmatmul.f32.gmra.mxu0 %v3695
    %v5375 = vpop.f32.mrf.mxu0
    %v5376 = vadd.f32 %v5263, %v5375
    %5377 = vmatmul.f32.gmra.mxu0 %v3699
    %v5378 = vpop.f32.mrf.mxu0
    %v5379 = vadd.f32 %v5266, %v5378
    %5380 = vmatmul.f32.gmra.mxu0 %v3703
    %v5381 = vpop.f32.mrf.mxu0
    %v5382 = vadd.f32 %v5269, %v5381
    %5383 = vmatmul.f32.gmra.mxu0 %v3707
    %v5384 = vpop.f32.mrf.mxu0
    %v5385 = vadd.f32 %v5272, %v5384
    %5386 = vmatmul.f32.gmra.mxu0 %v3711
    %v5387 = vpop.f32.mrf.mxu0
    %v5388 = vadd.f32 %v5275, %v5387
    %5389 = vmatmul.f32.gmra.mxu0 %v3715
    %v5390 = vpop.f32.mrf.mxu0
    %v5391 = vadd.f32 %v5278, %v5390
    %5392 = vmatmul.f32.gmra.mxu0 %v3719
    %v5393 = vpop.f32.mrf.mxu0
    %v5394 = vadd.f32 %v5281, %v5393
    %5395 = vmatmul.f32.gmra.mxu0 %v3723
    %v5396 = vpop.f32.mrf.mxu0
    %v5397 = vadd.f32 %v5284, %v5396
    %5398 = vmatmul.f32.gmra.mxu0 %v3727
    %v5399 = vpop.f32.mrf.mxu0
    %v5400 = vadd.f32 %v5287, %v5399
    %5401 = vmatmul.f32.gmra.mxu0 %v3731
    %v5402 = vpop.f32.mrf.mxu0
    %v5403 = vadd.f32 %v5290, %v5402
    %5404 = vmatmul.f32.gmra.mxu0 %v3735
    %v5405 = vpop.f32.mrf.mxu0
    %v5406 = vadd.f32 %v5293, %v5405
    %5407 = vdwg.mxu0
    %5408 = vmatpush.msra.mxu0 %v4114
    %5409 = vmatpush.msra.mxu0 %v4106
    %5410 = vmatpush.msra.mxu0 %v4098
    %5411 = vmatpush.msra.mxu0 %v4090
    %5412 = vmatpush.msra.mxu0 %v4082
    %5413 = vmatpush.msra.mxu0 %v4074
    %5414 = vmatpush.msra.mxu0 %v4066
    %5415 = vmatpush.msra.mxu0 %v4058
    %5416 = vmatpush.msra.mxu0 %v4050
    %5417 = vmatpush.msra.mxu0 %v4042
    %5418 = vmatpush.msra.mxu0 %v4034
    %5419 = vmatpush.msra.mxu0 %v4026
    %5420 = vmatpush.msra.mxu0 %v4018
    %5421 = vmatpush.msra.mxu0 %v4010
    %5422 = vmatpush.msra.mxu0 %v4002
    %5423 = vmatpush.msra.mxu0 %v3994
    %5424 = vmatmul.f32.gmra.mxu0 %v3608
    %v5425 = vpop.f32.mrf.mxu0
    %v5426 = vadd.f32 0.0, %v5425
    %5427 = vmatmul.f32.gmra.mxu0 %v3612
    %v5428 = vpop.f32.mrf.mxu0
    %v5429 = vadd.f32 0.0, %v5428
    %5430 = vmatmul.f32.gmra.mxu0 %v3616
    %v5431 = vpop.f32.mrf.mxu0
    %v5432 = vadd.f32 0.0, %v5431
    %5433 = vmatmul.f32.gmra.mxu0 %v3620
    %v5434 = vpop.f32.mrf.mxu0
    %v5435 = vadd.f32 0.0, %v5434
    %5436 = vmatmul.f32.gmra.mxu0 %v3624
    %v5437 = vpop.f32.mrf.mxu0
    %v5438 = vadd.f32 0.0, %v5437
    %5439 = vmatmul.f32.gmra.mxu0 %v3628
    %v5440 = vpop.f32.mrf.mxu0
    %v5441 = vadd.f32 0.0, %v5440
    %5442 = vmatmul.f32.gmra.mxu0 %v3632
    %v5443 = vpop.f32.mrf.mxu0
    %v5444 = vadd.f32 0.0, %v5443
    %5445 = vmatmul.f32.gmra.mxu0 %v3636
    %v5446 = vpop.f32.mrf.mxu0
    %v5447 = vadd.f32 0.0, %v5446
    %5448 = vmatmul.f32.gmra.mxu0 %v3640
    %v5449 = vpop.f32.mrf.mxu0
    %v5450 = vadd.f32 0.0, %v5449
    %5451 = vmatmul.f32.gmra.mxu0 %v3644
    %v5452 = vpop.f32.mrf.mxu0
    %v5453 = vadd.f32 0.0, %v5452
    %5454 = vmatmul.f32.gmra.mxu0 %v3648
    %v5455 = vpop.f32.mrf.mxu0
    %v5456 = vadd.f32 0.0, %v5455
    %5457 = vmatmul.f32.gmra.mxu0 %v3652
    %v5458 = vpop.f32.mrf.mxu0
    %v5459 = vadd.f32 0.0, %v5458
    %5460 = vmatmul.f32.gmra.mxu0 %v3656
    %v5461 = vpop.f32.mrf.mxu0
    %v5462 = vadd.f32 0.0, %v5461
    %5463 = vmatmul.f32.gmra.mxu0 %v3660
    %v5464 = vpop.f32.mrf.mxu0
    %v5465 = vadd.f32 0.0, %v5464
    %5466 = vmatmul.f32.gmra.mxu0 %v3664
    %v5467 = vpop.f32.mrf.mxu0
    %v5468 = vadd.f32 0.0, %v5467
    %5469 = vmatmul.f32.gmra.mxu0 %v3668
    %v5470 = vpop.f32.mrf.mxu0
    %v5471 = vadd.f32 0.0, %v5470
    %5472 = vmatmul.f32.gmra.mxu0 %v3672
    %v5473 = vpop.f32.mrf.mxu0
    %v5474 = vadd.f32 0.0, %v5473
    %5475 = vmatmul.f32.gmra.mxu0 %v3676
    %v5476 = vpop.f32.mrf.mxu0
    %v5477 = vadd.f32 0.0, %v5476
    %5478 = vmatmul.f32.gmra.mxu0 %v3680
    %v5479 = vpop.f32.mrf.mxu0
    %v5480 = vadd.f32 0.0, %v5479
    %5481 = vmatmul.f32.gmra.mxu0 %v3684
    %v5482 = vpop.f32.mrf.mxu0
    %v5483 = vadd.f32 0.0, %v5482
    %5484 = vmatmul.f32.gmra.mxu0 %v3688
    %v5485 = vpop.f32.mrf.mxu0
    %v5486 = vadd.f32 0.0, %v5485
    %5487 = vmatmul.f32.gmra.mxu0 %v3692
    %v5488 = vpop.f32.mrf.mxu0
    %v5489 = vadd.f32 0.0, %v5488
    %5490 = vmatmul.f32.gmra.mxu0 %v3696
    %v5491 = vpop.f32.mrf.mxu0
    %v5492 = vadd.f32 0.0, %v5491
    %5493 = vmatmul.f32.gmra.mxu0 %v3700
    %v5494 = vpop.f32.mrf.mxu0
    %v5495 = vadd.f32 0.0, %v5494
    %5496 = vmatmul.f32.gmra.mxu0 %v3704
    %v5497 = vpop.f32.mrf.mxu0
    %v5498 = vadd.f32 0.0, %v5497
    %5499 = vmatmul.f32.gmra.mxu0 %v3708
    %v5500 = vpop.f32.mrf.mxu0
    %v5501 = vadd.f32 0.0, %v5500
    %5502 = vmatmul.f32.gmra.mxu0 %v3712
    %v5503 = vpop.f32.mrf.mxu0
    %v5504 = vadd.f32 0.0, %v5503
    %5505 = vmatmul.f32.gmra.mxu0 %v3716
    %v5506 = vpop.f32.mrf.mxu0
    %v5507 = vadd.f32 0.0, %v5506
    %5508 = vmatmul.f32.gmra.mxu0 %v3720
    %v5509 = vpop.f32.mrf.mxu0
    %v5510 = vadd.f32 0.0, %v5509
    %5511 = vmatmul.f32.gmra.mxu0 %v3724
    %v5512 = vpop.f32.mrf.mxu0
    %v5513 = vadd.f32 0.0, %v5512
    %5514 = vmatmul.f32.gmra.mxu0 %v3728
    %v5515 = vpop.f32.mrf.mxu0
    %v5516 = vadd.f32 0.0, %v5515
    %5517 = vmatmul.f32.gmra.mxu0 %v3732
    %v5518 = vpop.f32.mrf.mxu0
    %v5519 = vadd.f32 0.0, %v5518
    %5520 = vdwg.mxu0
    %5521 = vmatpush.msra.mxu0 %v4242
    %5522 = vmatpush.msra.mxu0 %v4234
    %5523 = vmatpush.msra.mxu0 %v4226
    %5524 = vmatpush.msra.mxu0 %v4218
    %5525 = vmatpush.msra.mxu0 %v4210
    %5526 = vmatpush.msra.mxu0 %v4202
    %5527 = vmatpush.msra.mxu0 %v4194
    %5528 = vmatpush.msra.mxu0 %v4186
    %5529 = vmatpush.msra.mxu0 %v4178
    %5530 = vmatpush.msra.mxu0 %v4170
    %5531 = vmatpush.msra.mxu0 %v4162
    %5532 = vmatpush.msra.mxu0 %v4154
    %5533 = vmatpush.msra.mxu0 %v4146
    %5534 = vmatpush.msra.mxu0 %v4138
    %5535 = vmatpush.msra.mxu0 %v4130
    %5536 = vmatpush.msra.mxu0 %v4122
    %5537 = vmatmul.f32.gmra.mxu0 %v3609
    %v5538 = vpop.f32.mrf.mxu0
    %v5539 = vadd.f32 %v5426, %v5538
    %5540 = vmatmul.f32.gmra.mxu0 %v3613
    %v5541 = vpop.f32.mrf.mxu0
    %v5542 = vadd.f32 %v5429, %v5541
    %5543 = vmatmul.f32.gmra.mxu0 %v3617
    %v5544 = vpop.f32.mrf.mxu0
    %v5545 = vadd.f32 %v5432, %v5544
    %5546 = vmatmul.f32.gmra.mxu0 %v3621
    %v5547 = vpop.f32.mrf.mxu0
    %v5548 = vadd.f32 %v5435, %v5547
    %5549 = vmatmul.f32.gmra.mxu0 %v3625
    %v5550 = vpop.f32.mrf.mxu0
    %v5551 = vadd.f32 %v5438, %v5550
    %5552 = vmatmul.f32.gmra.mxu0 %v3629
    %v5553 = vpop.f32.mrf.mxu0
    %v5554 = vadd.f32 %v5441, %v5553
    %5555 = vmatmul.f32.gmra.mxu0 %v3633
    %v5556 = vpop.f32.mrf.mxu0
    %v5557 = vadd.f32 %v5444, %v5556
    %5558 = vmatmul.f32.gmra.mxu0 %v3637
    %v5559 = vpop.f32.mrf.mxu0
    %v5560 = vadd.f32 %v5447, %v5559
    %5561 = vmatmul.f32.gmra.mxu0 %v3641
    %v5562 = vpop.f32.mrf.mxu0
    %v5563 = vadd.f32 %v5450, %v5562
    %5564 = vmatmul.f32.gmra.mxu0 %v3645
    %v5565 = vpop.f32.mrf.mxu0
    %v5566 = vadd.f32 %v5453, %v5565
    %5567 = vmatmul.f32.gmra.mxu0 %v3649
    %v5568 = vpop.f32.mrf.mxu0
    %v5569 = vadd.f32 %v5456, %v5568
    %5570 = vmatmul.f32.gmra.mxu0 %v3653
    %v5571 = vpop.f32.mrf.mxu0
    %v5572 = vadd.f32 %v5459, %v5571
    %5573 = vmatmul.f32.gmra.mxu0 %v3657
    %v5574 = vpop.f32.mrf.mxu0
    %v5575 = vadd.f32 %v5462, %v5574
    %5576 = vmatmul.f32.gmra.mxu0 %v3661
    %v5577 = vpop.f32.mrf.mxu0
    %v5578 = vadd.f32 %v5465, %v5577
    %5579 = vmatmul.f32.gmra.mxu0 %v3665
    %v5580 = vpop.f32.mrf.mxu0
    %v5581 = vadd.f32 %v5468, %v5580
    %5582 = vmatmul.f32.gmra.mxu0 %v3669
    %v5583 = vpop.f32.mrf.mxu0
    %v5584 = vadd.f32 %v5471, %v5583
    %5585 = vmatmul.f32.gmra.mxu0 %v3673
    %v5586 = vpop.f32.mrf.mxu0
    %v5587 = vadd.f32 %v5474, %v5586
    %5588 = vmatmul.f32.gmra.mxu0 %v3677
    %v5589 = vpop.f32.mrf.mxu0
    %v5590 = vadd.f32 %v5477, %v5589
    %5591 = vmatmul.f32.gmra.mxu0 %v3681
    %v5592 = vpop.f32.mrf.mxu0
    %v5593 = vadd.f32 %v5480, %v5592
    %5594 = vmatmul.f32.gmra.mxu0 %v3685
    %v5595 = vpop.f32.mrf.mxu0
    %v5596 = vadd.f32 %v5483, %v5595
    %5597 = vmatmul.f32.gmra.mxu0 %v3689
    %v5598 = vpop.f32.mrf.mxu0
    %v5599 = vadd.f32 %v5486, %v5598
    %5600 = vmatmul.f32.gmra.mxu0 %v3693
    %v5601 = vpop.f32.mrf.mxu0
    %v5602 = vadd.f32 %v5489, %v5601
    %5603 = vmatmul.f32.gmra.mxu0 %v3697
    %v5604 = vpop.f32.mrf.mxu0
    %v5605 = vadd.f32 %v5492, %v5604
    %5606 = vmatmul.f32.gmra.mxu0 %v3701
    %v5607 = vpop.f32.mrf.mxu0
    %v5608 = vadd.f32 %v5495, %v5607
    %5609 = vmatmul.f32.gmra.mxu0 %v3705
    %v5610 = vpop.f32.mrf.mxu0
    %v5611 = vadd.f32 %v5498, %v5610
    %5612 = vmatmul.f32.gmra.mxu0 %v3709
    %v5613 = vpop.f32.mrf.mxu0
    %v5614 = vadd.f32 %v5501, %v5613
    %5615 = vmatmul.f32.gmra.mxu0 %v3713
    %v5616 = vpop.f32.mrf.mxu0
    %v5617 = vadd.f32 %v5504, %v5616
    %5618 = vmatmul.f32.gmra.mxu0 %v3717
    %v5619 = vpop.f32.mrf.mxu0
    %v5620 = vadd.f32 %v5507, %v5619
    %5621 = vmatmul.f32.gmra.mxu0 %v3721
    %v5622 = vpop.f32.mrf.mxu0
    %v5623 = vadd.f32 %v5510, %v5622
    %5624 = vmatmul.f32.gmra.mxu0 %v3725
    %v5625 = vpop.f32.mrf.mxu0
    %v5626 = vadd.f32 %v5513, %v5625
    %5627 = vmatmul.f32.gmra.mxu0 %v3729
    %v5628 = vpop.f32.mrf.mxu0
    %v5629 = vadd.f32 %v5516, %v5628
    %5630 = vmatmul.f32.gmra.mxu0 %v3733
    %v5631 = vpop.f32.mrf.mxu0
    %v5632 = vadd.f32 %v5519, %v5631
    %5633 = vdwg.mxu0
    %5634 = vmatpush.msra.mxu0 %v4370
    %5635 = vmatpush.msra.mxu0 %v4362
    %5636 = vmatpush.msra.mxu0 %v4354
    %5637 = vmatpush.msra.mxu0 %v4346
    %5638 = vmatpush.msra.mxu0 %v4338
    %5639 = vmatpush.msra.mxu0 %v4330
    %5640 = vmatpush.msra.mxu0 %v4322
    %5641 = vmatpush.msra.mxu0 %v4314
    %5642 = vmatpush.msra.mxu0 %v4306
    %5643 = vmatpush.msra.mxu0 %v4298
    %5644 = vmatpush.msra.mxu0 %v4290
    %5645 = vmatpush.msra.mxu0 %v4282
    %5646 = vmatpush.msra.mxu0 %v4274
    %5647 = vmatpush.msra.mxu0 %v4266
    %5648 = vmatpush.msra.mxu0 %v4258
    %5649 = vmatpush.msra.mxu0 %v4250
    %5650 = vmatmul.f32.gmra.mxu0 %v3610
    %v5651 = vpop.f32.mrf.mxu0
    %v5652 = vadd.f32 %v5539, %v5651
    %5653 = vmatmul.f32.gmra.mxu0 %v3614
    %v5654 = vpop.f32.mrf.mxu0
    %v5655 = vadd.f32 %v5542, %v5654
    %5656 = vmatmul.f32.gmra.mxu0 %v3618
    %v5657 = vpop.f32.mrf.mxu0
    %v5658 = vadd.f32 %v5545, %v5657
    %5659 = vmatmul.f32.gmra.mxu0 %v3622
    %v5660 = vpop.f32.mrf.mxu0
    %v5661 = vadd.f32 %v5548, %v5660
    %5662 = vmatmul.f32.gmra.mxu0 %v3626
    %v5663 = vpop.f32.mrf.mxu0
    %v5664 = vadd.f32 %v5551, %v5663
    %5665 = vmatmul.f32.gmra.mxu0 %v3630
    %v5666 = vpop.f32.mrf.mxu0
    %v5667 = vadd.f32 %v5554, %v5666
    %5668 = vmatmul.f32.gmra.mxu0 %v3634
    %v5669 = vpop.f32.mrf.mxu0
    %v5670 = vadd.f32 %v5557, %v5669
    %5671 = vmatmul.f32.gmra.mxu0 %v3638
    %v5672 = vpop.f32.mrf.mxu0
    %v5673 = vadd.f32 %v5560, %v5672
    %5674 = vmatmul.f32.gmra.mxu0 %v3642
    %v5675 = vpop.f32.mrf.mxu0
    %v5676 = vadd.f32 %v5563, %v5675
    %5677 = vmatmul.f32.gmra.mxu0 %v3646
    %v5678 = vpop.f32.mrf.mxu0
    %v5679 = vadd.f32 %v5566, %v5678
    %5680 = vmatmul.f32.gmra.mxu0 %v3650
    %v5681 = vpop.f32.mrf.mxu0
    %v5682 = vadd.f32 %v5569, %v5681
    %5683 = vmatmul.f32.gmra.mxu0 %v3654
    %v5684 = vpop.f32.mrf.mxu0
    %v5685 = vadd.f32 %v5572, %v5684
    %5686 = vmatmul.f32.gmra.mxu0 %v3658
    %v5687 = vpop.f32.mrf.mxu0
    %v5688 = vadd.f32 %v5575, %v5687
    %5689 = vmatmul.f32.gmra.mxu0 %v3662
    %v5690 = vpop.f32.mrf.mxu0
    %v5691 = vadd.f32 %v5578, %v5690
    %5692 = vmatmul.f32.gmra.mxu0 %v3666
    %v5693 = vpop.f32.mrf.mxu0
    %v5694 = vadd.f32 %v5581, %v5693
    %5695 = vmatmul.f32.gmra.mxu0 %v3670
    %v5696 = vpop.f32.mrf.mxu0
    %v5697 = vadd.f32 %v5584, %v5696
    %5698 = vmatmul.f32.gmra.mxu0 %v3674
    %v5699 = vpop.f32.mrf.mxu0
    %v5700 = vadd.f32 %v5587, %v5699
    %5701 = vmatmul.f32.gmra.mxu0 %v3678
    %v5702 = vpop.f32.mrf.mxu0
    %v5703 = vadd.f32 %v5590, %v5702
    %5704 = vmatmul.f32.gmra.mxu0 %v3682
    %v5705 = vpop.f32.mrf.mxu0
    %v5706 = vadd.f32 %v5593, %v5705
    %5707 = vmatmul.f32.gmra.mxu0 %v3686
    %v5708 = vpop.f32.mrf.mxu0
    %v5709 = vadd.f32 %v5596, %v5708
    %5710 = vmatmul.f32.gmra.mxu0 %v3690
    %v5711 = vpop.f32.mrf.mxu0
    %v5712 = vadd.f32 %v5599, %v5711
    %5713 = vmatmul.f32.gmra.mxu0 %v3694
    %v5714 = vpop.f32.mrf.mxu0
    %v5715 = vadd.f32 %v5602, %v5714
    %5716 = vmatmul.f32.gmra.mxu0 %v3698
    %v5717 = vpop.f32.mrf.mxu0
    %v5718 = vadd.f32 %v5605, %v5717
    %5719 = vmatmul.f32.gmra.mxu0 %v3702
    %v5720 = vpop.f32.mrf.mxu0
    %v5721 = vadd.f32 %v5608, %v5720
    %5722 = vmatmul.f32.gmra.mxu0 %v3706
    %v5723 = vpop.f32.mrf.mxu0
    %v5724 = vadd.f32 %v5611, %v5723
    %5725 = vmatmul.f32.gmra.mxu0 %v3710
    %v5726 = vpop.f32.mrf.mxu0
    %v5727 = vadd.f32 %v5614, %v5726
    %5728 = vmatmul.f32.gmra.mxu0 %v3714
    %v5729 = vpop.f32.mrf.mxu0
    %v5730 = vadd.f32 %v5617, %v5729
    %5731 = vmatmul.f32.gmra.mxu0 %v3718
    %v5732 = vpop.f32.mrf.mxu0
    %v5733 = vadd.f32 %v5620, %v5732
    %5734 = vmatmul.f32.gmra.mxu0 %v3722
    %v5735 = vpop.f32.mrf.mxu0
    %v5736 = vadd.f32 %v5623, %v5735
    %5737 = vmatmul.f32.gmra.mxu0 %v3726
    %v5738 = vpop.f32.mrf.mxu0
    %v5739 = vadd.f32 %v5626, %v5738
    %5740 = vmatmul.f32.gmra.mxu0 %v3730
    %v5741 = vpop.f32.mrf.mxu0
    %v5742 = vadd.f32 %v5629, %v5741
    %5743 = vmatmul.f32.gmra.mxu0 %v3734
    %v5744 = vpop.f32.mrf.mxu0
    %v5745 = vadd.f32 %v5632, %v5744
    %5746 = vdwg.mxu0
    %5747 = vmatpush.msra.mxu0 %v4498
    %5748 = vmatpush.msra.mxu0 %v4490
    %5749 = vmatpush.msra.mxu0 %v4482
    %5750 = vmatpush.msra.mxu0 %v4474
    %5751 = vmatpush.msra.mxu0 %v4466
    %5752 = vmatpush.msra.mxu0 %v4458
    %5753 = vmatpush.msra.mxu0 %v4450
    %5754 = vmatpush.msra.mxu0 %v4442
    %5755 = vmatpush.msra.mxu0 %v4434
    %5756 = vmatpush.msra.mxu0 %v4426
    %5757 = vmatpush.msra.mxu0 %v4418
    %5758 = vmatpush.msra.mxu0 %v4410
    %5759 = vmatpush.msra.mxu0 %v4402
    %5760 = vmatpush.msra.mxu0 %v4394
    %5761 = vmatpush.msra.mxu0 %v4386
    %5762 = vmatpush.msra.mxu0 %v4378
    %5763 = vmatmul.f32.gmra.mxu0 %v3611
    %v5764 = vpop.f32.mrf.mxu0
    %v5765 = vadd.f32 %v5652, %v5764
    %5766 = vmatmul.f32.gmra.mxu0 %v3615
    %v5767 = vpop.f32.mrf.mxu0
    %v5768 = vadd.f32 %v5655, %v5767
    %5769 = vmatmul.f32.gmra.mxu0 %v3619
    %v5770 = vpop.f32.mrf.mxu0
    %v5771 = vadd.f32 %v5658, %v5770
    %5772 = vmatmul.f32.gmra.mxu0 %v3623
    %v5773 = vpop.f32.mrf.mxu0
    %v5774 = vadd.f32 %v5661, %v5773
    %5775 = vmatmul.f32.gmra.mxu0 %v3627
    %v5776 = vpop.f32.mrf.mxu0
    %v5777 = vadd.f32 %v5664, %v5776
    %5778 = vmatmul.f32.gmra.mxu0 %v3631
    %v5779 = vpop.f32.mrf.mxu0
    %v5780 = vadd.f32 %v5667, %v5779
    %5781 = vmatmul.f32.gmra.mxu0 %v3635
    %v5782 = vpop.f32.mrf.mxu0
    %v5783 = vadd.f32 %v5670, %v5782
    %5784 = vmatmul.f32.gmra.mxu0 %v3639
    %v5785 = vpop.f32.mrf.mxu0
    %v5786 = vadd.f32 %v5673, %v5785
    %5787 = vmatmul.f32.gmra.mxu0 %v3643
    %v5788 = vpop.f32.mrf.mxu0
    %v5789 = vadd.f32 %v5676, %v5788
    %5790 = vmatmul.f32.gmra.mxu0 %v3647
    %v5791 = vpop.f32.mrf.mxu0
    %v5792 = vadd.f32 %v5679, %v5791
    %5793 = vmatmul.f32.gmra.mxu0 %v3651
    %v5794 = vpop.f32.mrf.mxu0
    %v5795 = vadd.f32 %v5682, %v5794
    %5796 = vmatmul.f32.gmra.mxu0 %v3655
    %v5797 = vpop.f32.mrf.mxu0
    %v5798 = vadd.f32 %v5685, %v5797
    %5799 = vmatmul.f32.gmra.mxu0 %v3659
    %v5800 = vpop.f32.mrf.mxu0
    %v5801 = vadd.f32 %v5688, %v5800
    %5802 = vmatmul.f32.gmra.mxu0 %v3663
    %v5803 = vpop.f32.mrf.mxu0
    %v5804 = vadd.f32 %v5691, %v5803
    %5805 = vmatmul.f32.gmra.mxu0 %v3667
    %v5806 = vpop.f32.mrf.mxu0
    %v5807 = vadd.f32 %v5694, %v5806
    %5808 = vmatmul.f32.gmra.mxu0 %v3671
    %v5809 = vpop.f32.mrf.mxu0
    %v5810 = vadd.f32 %v5697, %v5809
    %5811 = vmatmul.f32.gmra.mxu0 %v3675
    %v5812 = vpop.f32.mrf.mxu0
    %v5813 = vadd.f32 %v5700, %v5812
    %5814 = vmatmul.f32.gmra.mxu0 %v3679
    %v5815 = vpop.f32.mrf.mxu0
    %v5816 = vadd.f32 %v5703, %v5815
    %5817 = vmatmul.f32.gmra.mxu0 %v3683
    %v5818 = vpop.f32.mrf.mxu0
    %v5819 = vadd.f32 %v5706, %v5818
    %5820 = vmatmul.f32.gmra.mxu0 %v3687
    %v5821 = vpop.f32.mrf.mxu0
    %v5822 = vadd.f32 %v5709, %v5821
    %5823 = vmatmul.f32.gmra.mxu0 %v3691
    %v5824 = vpop.f32.mrf.mxu0
    %v5825 = vadd.f32 %v5712, %v5824
    %5826 = vmatmul.f32.gmra.mxu0 %v3695
    %v5827 = vpop.f32.mrf.mxu0
    %v5828 = vadd.f32 %v5715, %v5827
    %5829 = vmatmul.f32.gmra.mxu0 %v3699
    %v5830 = vpop.f32.mrf.mxu0
    %v5831 = vadd.f32 %v5718, %v5830
    %5832 = vmatmul.f32.gmra.mxu0 %v3703
    %v5833 = vpop.f32.mrf.mxu0
    %v5834 = vadd.f32 %v5721, %v5833
    %5835 = vmatmul.f32.gmra.mxu0 %v3707
    %v5836 = vpop.f32.mrf.mxu0
    %v5837 = vadd.f32 %v5724, %v5836
    %5838 = vmatmul.f32.gmra.mxu0 %v3711
    %v5839 = vpop.f32.mrf.mxu0
    %v5840 = vadd.f32 %v5727, %v5839
    %5841 = vmatmul.f32.gmra.mxu0 %v3715
    %v5842 = vpop.f32.mrf.mxu0
    %v5843 = vadd.f32 %v5730, %v5842
    %5844 = vmatmul.f32.gmra.mxu0 %v3719
    %v5845 = vpop.f32.mrf.mxu0
    %v5846 = vadd.f32 %v5733, %v5845
    %5847 = vmatmul.f32.gmra.mxu0 %v3723
    %v5848 = vpop.f32.mrf.mxu0
    %v5849 = vadd.f32 %v5736, %v5848
    %5850 = vmatmul.f32.gmra.mxu0 %v3727
    %v5851 = vpop.f32.mrf.mxu0
    %v5852 = vadd.f32 %v5739, %v5851
    %5853 = vmatmul.f32.gmra.mxu0 %v3731
    %v5854 = vpop.f32.mrf.mxu0
    %v5855 = vadd.f32 %v5742, %v5854
    %5856 = vmatmul.f32.gmra.mxu0 %v3735
    %v5857 = vpop.f32.mrf.mxu0
    %v5858 = vadd.f32 %v5745, %v5857
    %5859 = vdwg.mxu0
    %5860 = vmatpush.msra.mxu0 %v4115
    %5861 = vmatpush.msra.mxu0 %v4107
    %5862 = vmatpush.msra.mxu0 %v4099
    %5863 = vmatpush.msra.mxu0 %v4091
    %5864 = vmatpush.msra.mxu0 %v4083
    %5865 = vmatpush.msra.mxu0 %v4075
    %5866 = vmatpush.msra.mxu0 %v4067
    %5867 = vmatpush.msra.mxu0 %v4059
    %5868 = vmatpush.msra.mxu0 %v4051
    %5869 = vmatpush.msra.mxu0 %v4043
    %5870 = vmatpush.msra.mxu0 %v4035
    %5871 = vmatpush.msra.mxu0 %v4027
    %5872 = vmatpush.msra.mxu0 %v4019
    %5873 = vmatpush.msra.mxu0 %v4011
    %5874 = vmatpush.msra.mxu0 %v4003
    %5875 = vmatpush.msra.mxu0 %v3995
    %5876 = vmatmul.f32.gmra.mxu0 %v3608
    %v5877 = vpop.f32.mrf.mxu0
    %v5878 = vadd.f32 0.0, %v5877
    %5879 = vmatmul.f32.gmra.mxu0 %v3612
    %v5880 = vpop.f32.mrf.mxu0
    %v5881 = vadd.f32 0.0, %v5880
    %5882 = vmatmul.f32.gmra.mxu0 %v3616
    %v5883 = vpop.f32.mrf.mxu0
    %v5884 = vadd.f32 0.0, %v5883
    %5885 = vmatmul.f32.gmra.mxu0 %v3620
    %v5886 = vpop.f32.mrf.mxu0
    %v5887 = vadd.f32 0.0, %v5886
    %5888 = vmatmul.f32.gmra.mxu0 %v3624
    %v5889 = vpop.f32.mrf.mxu0
    %v5890 = vadd.f32 0.0, %v5889
    %5891 = vmatmul.f32.gmra.mxu0 %v3628
    %v5892 = vpop.f32.mrf.mxu0
    %v5893 = vadd.f32 0.0, %v5892
    %5894 = vmatmul.f32.gmra.mxu0 %v3632
    %v5895 = vpop.f32.mrf.mxu0
    %v5896 = vadd.f32 0.0, %v5895
    %5897 = vmatmul.f32.gmra.mxu0 %v3636
    %v5898 = vpop.f32.mrf.mxu0
    %v5899 = vadd.f32 0.0, %v5898
    %5900 = vmatmul.f32.gmra.mxu0 %v3640
    %v5901 = vpop.f32.mrf.mxu0
    %v5902 = vadd.f32 0.0, %v5901
    %5903 = vmatmul.f32.gmra.mxu0 %v3644
    %v5904 = vpop.f32.mrf.mxu0
    %v5905 = vadd.f32 0.0, %v5904
    %5906 = vmatmul.f32.gmra.mxu0 %v3648
    %v5907 = vpop.f32.mrf.mxu0
    %v5908 = vadd.f32 0.0, %v5907
    %5909 = vmatmul.f32.gmra.mxu0 %v3652
    %v5910 = vpop.f32.mrf.mxu0
    %v5911 = vadd.f32 0.0, %v5910
    %5912 = vmatmul.f32.gmra.mxu0 %v3656
    %v5913 = vpop.f32.mrf.mxu0
    %v5914 = vadd.f32 0.0, %v5913
    %5915 = vmatmul.f32.gmra.mxu0 %v3660
    %v5916 = vpop.f32.mrf.mxu0
    %v5917 = vadd.f32 0.0, %v5916
    %5918 = vmatmul.f32.gmra.mxu0 %v3664
    %v5919 = vpop.f32.mrf.mxu0
    %v5920 = vadd.f32 0.0, %v5919
    %5921 = vmatmul.f32.gmra.mxu0 %v3668
    %v5922 = vpop.f32.mrf.mxu0
    %v5923 = vadd.f32 0.0, %v5922
    %5924 = vmatmul.f32.gmra.mxu0 %v3672
    %v5925 = vpop.f32.mrf.mxu0
    %v5926 = vadd.f32 0.0, %v5925
    %5927 = vmatmul.f32.gmra.mxu0 %v3676
    %v5928 = vpop.f32.mrf.mxu0
    %v5929 = vadd.f32 0.0, %v5928
    %5930 = vmatmul.f32.gmra.mxu0 %v3680
    %v5931 = vpop.f32.mrf.mxu0
    %v5932 = vadd.f32 0.0, %v5931
    %5933 = vmatmul.f32.gmra.mxu0 %v3684
    %v5934 = vpop.f32.mrf.mxu0
    %v5935 = vadd.f32 0.0, %v5934
    %5936 = vmatmul.f32.gmra.mxu0 %v3688
    %v5937 = vpop.f32.mrf.mxu0
    %v5938 = vadd.f32 0.0, %v5937
    %5939 = vmatmul.f32.gmra.mxu0 %v3692
    %v5940 = vpop.f32.mrf.mxu0
    %v5941 = vadd.f32 0.0, %v5940
    %5942 = vmatmul.f32.gmra.mxu0 %v3696
    %v5943 = vpop.f32.mrf.mxu0
    %v5944 = vadd.f32 0.0, %v5943
    %5945 = vmatmul.f32.gmra.mxu0 %v3700
    %v5946 = vpop.f32.mrf.mxu0
    %v5947 = vadd.f32 0.0, %v5946
    %5948 = vmatmul.f32.gmra.mxu0 %v3704
    %v5949 = vpop.f32.mrf.mxu0
    %v5950 = vadd.f32 0.0, %v5949
    %5951 = vmatmul.f32.gmra.mxu0 %v3708
    %v5952 = vpop.f32.mrf.mxu0
    %v5953 = vadd.f32 0.0, %v5952
    %5954 = vmatmul.f32.gmra.mxu0 %v3712
    %v5955 = vpop.f32.mrf.mxu0
    %v5956 = vadd.f32 0.0, %v5955
    %5957 = vmatmul.f32.gmra.mxu0 %v3716
    %v5958 = vpop.f32.mrf.mxu0
    %v5959 = vadd.f32 0.0, %v5958
    %5960 = vmatmul.f32.gmra.mxu0 %v3720
    %v5961 = vpop.f32.mrf.mxu0
    %v5962 = vadd.f32 0.0, %v5961
    %5963 = vmatmul.f32.gmra.mxu0 %v3724
    %v5964 = vpop.f32.mrf.mxu0
    %v5965 = vadd.f32 0.0, %v5964
    %5966 = vmatmul.f32.gmra.mxu0 %v3728
    %v5967 = vpop.f32.mrf.mxu0
    %v5968 = vadd.f32 0.0, %v5967
    %5969 = vmatmul.f32.gmra.mxu0 %v3732
    %v5970 = vpop.f32.mrf.mxu0
    %v5971 = vadd.f32 0.0, %v5970
    %5972 = vdwg.mxu0
    %5973 = vmatpush.msra.mxu0 %v4243
    %5974 = vmatpush.msra.mxu0 %v4235
    %5975 = vmatpush.msra.mxu0 %v4227
    %5976 = vmatpush.msra.mxu0 %v4219
    %5977 = vmatpush.msra.mxu0 %v4211
    %5978 = vmatpush.msra.mxu0 %v4203
    %5979 = vmatpush.msra.mxu0 %v4195
    %5980 = vmatpush.msra.mxu0 %v4187
    %5981 = vmatpush.msra.mxu0 %v4179
    %5982 = vmatpush.msra.mxu0 %v4171
    %5983 = vmatpush.msra.mxu0 %v4163
    %5984 = vmatpush.msra.mxu0 %v4155
    %5985 = vmatpush.msra.mxu0 %v4147
    %5986 = vmatpush.msra.mxu0 %v4139
    %5987 = vmatpush.msra.mxu0 %v4131
    %5988 = vmatpush.msra.mxu0 %v4123
    %5989 = vmatmul.f32.gmra.mxu0 %v3609
    %v5990 = vpop.f32.mrf.mxu0
    %v5991 = vadd.f32 %v5878, %v5990
    %5992 = vmatmul.f32.gmra.mxu0 %v3613
    %v5993 = vpop.f32.mrf.mxu0
    %v5994 = vadd.f32 %v5881, %v5993
    %5995 = vmatmul.f32.gmra.mxu0 %v3617
    %v5996 = vpop.f32.mrf.mxu0
    %v5997 = vadd.f32 %v5884, %v5996
    %5998 = vmatmul.f32.gmra.mxu0 %v3621
    %v5999 = vpop.f32.mrf.mxu0
    %v6000 = vadd.f32 %v5887, %v5999
    %6001 = vmatmul.f32.gmra.mxu0 %v3625
    %v6002 = vpop.f32.mrf.mxu0
    %v6003 = vadd.f32 %v5890, %v6002
    %6004 = vmatmul.f32.gmra.mxu0 %v3629
    %v6005 = vpop.f32.mrf.mxu0
    %v6006 = vadd.f32 %v5893, %v6005
    %6007 = vmatmul.f32.gmra.mxu0 %v3633
    %v6008 = vpop.f32.mrf.mxu0
    %v6009 = vadd.f32 %v5896, %v6008
    %6010 = vmatmul.f32.gmra.mxu0 %v3637
    %v6011 = vpop.f32.mrf.mxu0
    %v6012 = vadd.f32 %v5899, %v6011
    %6013 = vmatmul.f32.gmra.mxu0 %v3641
    %v6014 = vpop.f32.mrf.mxu0
    %v6015 = vadd.f32 %v5902, %v6014
    %6016 = vmatmul.f32.gmra.mxu0 %v3645
    %v6017 = vpop.f32.mrf.mxu0
    %v6018 = vadd.f32 %v5905, %v6017
    %6019 = vmatmul.f32.gmra.mxu0 %v3649
    %v6020 = vpop.f32.mrf.mxu0
    %v6021 = vadd.f32 %v5908, %v6020
    %6022 = vmatmul.f32.gmra.mxu0 %v3653
    %v6023 = vpop.f32.mrf.mxu0
    %v6024 = vadd.f32 %v5911, %v6023
    %6025 = vmatmul.f32.gmra.mxu0 %v3657
    %v6026 = vpop.f32.mrf.mxu0
    %v6027 = vadd.f32 %v5914, %v6026
    %6028 = vmatmul.f32.gmra.mxu0 %v3661
    %v6029 = vpop.f32.mrf.mxu0
    %v6030 = vadd.f32 %v5917, %v6029
    %6031 = vmatmul.f32.gmra.mxu0 %v3665
    %v6032 = vpop.f32.mrf.mxu0
    %v6033 = vadd.f32 %v5920, %v6032
    %6034 = vmatmul.f32.gmra.mxu0 %v3669
    %v6035 = vpop.f32.mrf.mxu0
    %v6036 = vadd.f32 %v5923, %v6035
    %6037 = vmatmul.f32.gmra.mxu0 %v3673
    %v6038 = vpop.f32.mrf.mxu0
    %v6039 = vadd.f32 %v5926, %v6038
    %6040 = vmatmul.f32.gmra.mxu0 %v3677
    %v6041 = vpop.f32.mrf.mxu0
    %v6042 = vadd.f32 %v5929, %v6041
    %6043 = vmatmul.f32.gmra.mxu0 %v3681
    %v6044 = vpop.f32.mrf.mxu0
    %v6045 = vadd.f32 %v5932, %v6044
    %6046 = vmatmul.f32.gmra.mxu0 %v3685
    %v6047 = vpop.f32.mrf.mxu0
    %v6048 = vadd.f32 %v5935, %v6047
    %6049 = vmatmul.f32.gmra.mxu0 %v3689
    %v6050 = vpop.f32.mrf.mxu0
    %v6051 = vadd.f32 %v5938, %v6050
    %6052 = vmatmul.f32.gmra.mxu0 %v3693
    %v6053 = vpop.f32.mrf.mxu0
    %v6054 = vadd.f32 %v5941, %v6053
    %6055 = vmatmul.f32.gmra.mxu0 %v3697
    %v6056 = vpop.f32.mrf.mxu0
    %v6057 = vadd.f32 %v5944, %v6056
    %6058 = vmatmul.f32.gmra.mxu0 %v3701
    %v6059 = vpop.f32.mrf.mxu0
    %v6060 = vadd.f32 %v5947, %v6059
    %6061 = vmatmul.f32.gmra.mxu0 %v3705
    %v6062 = vpop.f32.mrf.mxu0
    %v6063 = vadd.f32 %v5950, %v6062
    %6064 = vmatmul.f32.gmra.mxu0 %v3709
    %v6065 = vpop.f32.mrf.mxu0
    %v6066 = vadd.f32 %v5953, %v6065
    %6067 = vmatmul.f32.gmra.mxu0 %v3713
    %v6068 = vpop.f32.mrf.mxu0
    %v6069 = vadd.f32 %v5956, %v6068
    %6070 = vmatmul.f32.gmra.mxu0 %v3717
    %v6071 = vpop.f32.mrf.mxu0
    %v6072 = vadd.f32 %v5959, %v6071
    %6073 = vmatmul.f32.gmra.mxu0 %v3721
    %v6074 = vpop.f32.mrf.mxu0
    %v6075 = vadd.f32 %v5962, %v6074
    %6076 = vmatmul.f32.gmra.mxu0 %v3725
    %v6077 = vpop.f32.mrf.mxu0
    %v6078 = vadd.f32 %v5965, %v6077
    %6079 = vmatmul.f32.gmra.mxu0 %v3729
    %v6080 = vpop.f32.mrf.mxu0
    %v6081 = vadd.f32 %v5968, %v6080
    %6082 = vmatmul.f32.gmra.mxu0 %v3733
    %v6083 = vpop.f32.mrf.mxu0
    %v6084 = vadd.f32 %v5971, %v6083
    %6085 = vdwg.mxu0
    %6086 = vmatpush.msra.mxu0 %v4371
    %6087 = vmatpush.msra.mxu0 %v4363
    %6088 = vmatpush.msra.mxu0 %v4355
    %6089 = vmatpush.msra.mxu0 %v4347
    %6090 = vmatpush.msra.mxu0 %v4339
    %6091 = vmatpush.msra.mxu0 %v4331
    %6092 = vmatpush.msra.mxu0 %v4323
    %6093 = vmatpush.msra.mxu0 %v4315
    %6094 = vmatpush.msra.mxu0 %v4307
    %6095 = vmatpush.msra.mxu0 %v4299
    %6096 = vmatpush.msra.mxu0 %v4291
    %6097 = vmatpush.msra.mxu0 %v4283
    %6098 = vmatpush.msra.mxu0 %v4275
    %6099 = vmatpush.msra.mxu0 %v4267
    %6100 = vmatpush.msra.mxu0 %v4259
    %6101 = vmatpush.msra.mxu0 %v4251
    %6102 = vmatmul.f32.gmra.mxu0 %v3610
    %v6103 = vpop.f32.mrf.mxu0
    %v6104 = vadd.f32 %v5991, %v6103
    %6105 = vmatmul.f32.gmra.mxu0 %v3614
    %v6106 = vpop.f32.mrf.mxu0
    %v6107 = vadd.f32 %v5994, %v6106
    %6108 = vmatmul.f32.gmra.mxu0 %v3618
    %v6109 = vpop.f32.mrf.mxu0
    %v6110 = vadd.f32 %v5997, %v6109
    %6111 = vmatmul.f32.gmra.mxu0 %v3622
    %v6112 = vpop.f32.mrf.mxu0
    %v6113 = vadd.f32 %v6000, %v6112
    %6114 = vmatmul.f32.gmra.mxu0 %v3626
    %v6115 = vpop.f32.mrf.mxu0
    %v6116 = vadd.f32 %v6003, %v6115
    %6117 = vmatmul.f32.gmra.mxu0 %v3630
    %v6118 = vpop.f32.mrf.mxu0
    %v6119 = vadd.f32 %v6006, %v6118
    %6120 = vmatmul.f32.gmra.mxu0 %v3634
    %v6121 = vpop.f32.mrf.mxu0
    %v6122 = vadd.f32 %v6009, %v6121
    %6123 = vmatmul.f32.gmra.mxu0 %v3638
    %v6124 = vpop.f32.mrf.mxu0
    %v6125 = vadd.f32 %v6012, %v6124
    %6126 = vmatmul.f32.gmra.mxu0 %v3642
    %v6127 = vpop.f32.mrf.mxu0
    %v6128 = vadd.f32 %v6015, %v6127
    %6129 = vmatmul.f32.gmra.mxu0 %v3646
    %v6130 = vpop.f32.mrf.mxu0
    %v6131 = vadd.f32 %v6018, %v6130
    %6132 = vmatmul.f32.gmra.mxu0 %v3650
    %v6133 = vpop.f32.mrf.mxu0
    %v6134 = vadd.f32 %v6021, %v6133
    %6135 = vmatmul.f32.gmra.mxu0 %v3654
    %v6136 = vpop.f32.mrf.mxu0
    %v6137 = vadd.f32 %v6024, %v6136
    %6138 = vmatmul.f32.gmra.mxu0 %v3658
    %v6139 = vpop.f32.mrf.mxu0
    %v6140 = vadd.f32 %v6027, %v6139
    %6141 = vmatmul.f32.gmra.mxu0 %v3662
    %v6142 = vpop.f32.mrf.mxu0
    %v6143 = vadd.f32 %v6030, %v6142
    %6144 = vmatmul.f32.gmra.mxu0 %v3666
    %v6145 = vpop.f32.mrf.mxu0
    %v6146 = vadd.f32 %v6033, %v6145
    %6147 = vmatmul.f32.gmra.mxu0 %v3670
    %v6148 = vpop.f32.mrf.mxu0
    %v6149 = vadd.f32 %v6036, %v6148
    %6150 = vmatmul.f32.gmra.mxu0 %v3674
    %v6151 = vpop.f32.mrf.mxu0
    %v6152 = vadd.f32 %v6039, %v6151
    %6153 = vmatmul.f32.gmra.mxu0 %v3678
    %v6154 = vpop.f32.mrf.mxu0
    %v6155 = vadd.f32 %v6042, %v6154
    %6156 = vmatmul.f32.gmra.mxu0 %v3682
    %v6157 = vpop.f32.mrf.mxu0
    %v6158 = vadd.f32 %v6045, %v6157
    %6159 = vmatmul.f32.gmra.mxu0 %v3686
    %v6160 = vpop.f32.mrf.mxu0
    %v6161 = vadd.f32 %v6048, %v6160
    %6162 = vmatmul.f32.gmra.mxu0 %v3690
    %v6163 = vpop.f32.mrf.mxu0
    %v6164 = vadd.f32 %v6051, %v6163
    %6165 = vmatmul.f32.gmra.mxu0 %v3694
    %v6166 = vpop.f32.mrf.mxu0
    %v6167 = vadd.f32 %v6054, %v6166
    %6168 = vmatmul.f32.gmra.mxu0 %v3698
    %v6169 = vpop.f32.mrf.mxu0
    %v6170 = vadd.f32 %v6057, %v6169
    %6171 = vmatmul.f32.gmra.mxu0 %v3702
    %v6172 = vpop.f32.mrf.mxu0
    %v6173 = vadd.f32 %v6060, %v6172
    %6174 = vmatmul.f32.gmra.mxu0 %v3706
    %v6175 = vpop.f32.mrf.mxu0
    %v6176 = vadd.f32 %v6063, %v6175
    %6177 = vmatmul.f32.gmra.mxu0 %v3710
    %v6178 = vpop.f32.mrf.mxu0
    %v6179 = vadd.f32 %v6066, %v6178
    %6180 = vmatmul.f32.gmra.mxu0 %v3714
    %v6181 = vpop.f32.mrf.mxu0
    %v6182 = vadd.f32 %v6069, %v6181
    %6183 = vmatmul.f32.gmra.mxu0 %v3718
    %v6184 = vpop.f32.mrf.mxu0
    %v6185 = vadd.f32 %v6072, %v6184
    %6186 = vmatmul.f32.gmra.mxu0 %v3722
    %v6187 = vpop.f32.mrf.mxu0
    %v6188 = vadd.f32 %v6075, %v6187
    %6189 = vmatmul.f32.gmra.mxu0 %v3726
    %v6190 = vpop.f32.mrf.mxu0
    %v6191 = vadd.f32 %v6078, %v6190
    %6192 = vmatmul.f32.gmra.mxu0 %v3730
    %v6193 = vpop.f32.mrf.mxu0
    %v6194 = vadd.f32 %v6081, %v6193
    %6195 = vmatmul.f32.gmra.mxu0 %v3734
    %v6196 = vpop.f32.mrf.mxu0
    %v6197 = vadd.f32 %v6084, %v6196
    %6198 = vdwg.mxu0
    %6199 = vmatpush.msra.mxu0 %v4499
    %6200 = vmatpush.msra.mxu0 %v4491
    %6201 = vmatpush.msra.mxu0 %v4483
    %6202 = vmatpush.msra.mxu0 %v4475
    %6203 = vmatpush.msra.mxu0 %v4467
    %6204 = vmatpush.msra.mxu0 %v4459
    %6205 = vmatpush.msra.mxu0 %v4451
    %6206 = vmatpush.msra.mxu0 %v4443
    %6207 = vmatpush.msra.mxu0 %v4435
    %6208 = vmatpush.msra.mxu0 %v4427
    %6209 = vmatpush.msra.mxu0 %v4419
    %6210 = vmatpush.msra.mxu0 %v4411
    %6211 = vmatpush.msra.mxu0 %v4403
    %6212 = vmatpush.msra.mxu0 %v4395
    %6213 = vmatpush.msra.mxu0 %v4387
    %6214 = vmatpush.msra.mxu0 %v4379
    %6215 = vmatmul.f32.gmra.mxu0 %v3611
    %v6216 = vpop.f32.mrf.mxu0
    %v6217 = vadd.f32 %v6104, %v6216
    %6218 = vmatmul.f32.gmra.mxu0 %v3615
    %v6219 = vpop.f32.mrf.mxu0
    %v6220 = vadd.f32 %v6107, %v6219
    %6221 = vmatmul.f32.gmra.mxu0 %v3619
    %v6222 = vpop.f32.mrf.mxu0
    %v6223 = vadd.f32 %v6110, %v6222
    %6224 = vmatmul.f32.gmra.mxu0 %v3623
    %v6225 = vpop.f32.mrf.mxu0
    %v6226 = vadd.f32 %v6113, %v6225
    %6227 = vmatmul.f32.gmra.mxu0 %v3627
    %v6228 = vpop.f32.mrf.mxu0
    %v6229 = vadd.f32 %v6116, %v6228
    %6230 = vmatmul.f32.gmra.mxu0 %v3631
    %v6231 = vpop.f32.mrf.mxu0
    %v6232 = vadd.f32 %v6119, %v6231
    %6233 = vmatmul.f32.gmra.mxu0 %v3635
    %v6234 = vpop.f32.mrf.mxu0
    %v6235 = vadd.f32 %v6122, %v6234
    %6236 = vmatmul.f32.gmra.mxu0 %v3639
    %v6237 = vpop.f32.mrf.mxu0
    %v6238 = vadd.f32 %v6125, %v6237
    %6239 = vmatmul.f32.gmra.mxu0 %v3643
    %v6240 = vpop.f32.mrf.mxu0
    %v6241 = vadd.f32 %v6128, %v6240
    %6242 = vmatmul.f32.gmra.mxu0 %v3647
    %v6243 = vpop.f32.mrf.mxu0
    %v6244 = vadd.f32 %v6131, %v6243
    %6245 = vmatmul.f32.gmra.mxu0 %v3651
    %v6246 = vpop.f32.mrf.mxu0
    %v6247 = vadd.f32 %v6134, %v6246
    %6248 = vmatmul.f32.gmra.mxu0 %v3655
    %v6249 = vpop.f32.mrf.mxu0
    %v6250 = vadd.f32 %v6137, %v6249
    %6251 = vmatmul.f32.gmra.mxu0 %v3659
    %v6252 = vpop.f32.mrf.mxu0
    %v6253 = vadd.f32 %v6140, %v6252
    %6254 = vmatmul.f32.gmra.mxu0 %v3663
    %v6255 = vpop.f32.mrf.mxu0
    %v6256 = vadd.f32 %v6143, %v6255
    %6257 = vmatmul.f32.gmra.mxu0 %v3667
    %v6258 = vpop.f32.mrf.mxu0
    %v6259 = vadd.f32 %v6146, %v6258
    %6260 = vmatmul.f32.gmra.mxu0 %v3671
    %v6261 = vpop.f32.mrf.mxu0
    %v6262 = vadd.f32 %v6149, %v6261
    %6263 = vmatmul.f32.gmra.mxu0 %v3675
    %v6264 = vpop.f32.mrf.mxu0
    %v6265 = vadd.f32 %v6152, %v6264
    %6266 = vmatmul.f32.gmra.mxu0 %v3679
    %v6267 = vpop.f32.mrf.mxu0
    %v6268 = vadd.f32 %v6155, %v6267
    %6269 = vmatmul.f32.gmra.mxu0 %v3683
    %v6270 = vpop.f32.mrf.mxu0
    %v6271 = vadd.f32 %v6158, %v6270
    %6272 = vmatmul.f32.gmra.mxu0 %v3687
    %v6273 = vpop.f32.mrf.mxu0
    %v6274 = vadd.f32 %v6161, %v6273
    %6275 = vmatmul.f32.gmra.mxu0 %v3691
    %v6276 = vpop.f32.mrf.mxu0
    %v6277 = vadd.f32 %v6164, %v6276
    %6278 = vmatmul.f32.gmra.mxu0 %v3695
    %v6279 = vpop.f32.mrf.mxu0
    %v6280 = vadd.f32 %v6167, %v6279
    %6281 = vmatmul.f32.gmra.mxu0 %v3699
    %v6282 = vpop.f32.mrf.mxu0
    %v6283 = vadd.f32 %v6170, %v6282
    %6284 = vmatmul.f32.gmra.mxu0 %v3703
    %v6285 = vpop.f32.mrf.mxu0
    %v6286 = vadd.f32 %v6173, %v6285
    %6287 = vmatmul.f32.gmra.mxu0 %v3707
    %v6288 = vpop.f32.mrf.mxu0
    %v6289 = vadd.f32 %v6176, %v6288
    %6290 = vmatmul.f32.gmra.mxu0 %v3711
    %v6291 = vpop.f32.mrf.mxu0
    %v6292 = vadd.f32 %v6179, %v6291
    %6293 = vmatmul.f32.gmra.mxu0 %v3715
    %v6294 = vpop.f32.mrf.mxu0
    %v6295 = vadd.f32 %v6182, %v6294
    %6296 = vmatmul.f32.gmra.mxu0 %v3719
    %v6297 = vpop.f32.mrf.mxu0
    %v6298 = vadd.f32 %v6185, %v6297
    %6299 = vmatmul.f32.gmra.mxu0 %v3723
    %v6300 = vpop.f32.mrf.mxu0
    %v6301 = vadd.f32 %v6188, %v6300
    %6302 = vmatmul.f32.gmra.mxu0 %v3727
    %v6303 = vpop.f32.mrf.mxu0
    %v6304 = vadd.f32 %v6191, %v6303
    %6305 = vmatmul.f32.gmra.mxu0 %v3731
    %v6306 = vpop.f32.mrf.mxu0
    %v6307 = vadd.f32 %v6194, %v6306
    %6308 = vmatmul.f32.gmra.mxu0 %v3735
    %v6309 = vpop.f32.mrf.mxu0
    %v6310 = vadd.f32 %v6197, %v6309
    %6311 = vdwg.mxu0
    %6312 = vmatpush.msra.mxu0 %v4116
    %6313 = vmatpush.msra.mxu0 %v4108
    %6314 = vmatpush.msra.mxu0 %v4100
    %6315 = vmatpush.msra.mxu0 %v4092
    %6316 = vmatpush.msra.mxu0 %v4084
    %6317 = vmatpush.msra.mxu0 %v4076
    %6318 = vmatpush.msra.mxu0 %v4068
    %6319 = vmatpush.msra.mxu0 %v4060
    %6320 = vmatpush.msra.mxu0 %v4052
    %6321 = vmatpush.msra.mxu0 %v4044
    %6322 = vmatpush.msra.mxu0 %v4036
    %6323 = vmatpush.msra.mxu0 %v4028
    %6324 = vmatpush.msra.mxu0 %v4020
    %6325 = vmatpush.msra.mxu0 %v4012
    %6326 = vmatpush.msra.mxu0 %v4004
    %6327 = vmatpush.msra.mxu0 %v3996
    %6328 = vmatmul.f32.gmra.mxu0 %v3608
    %v6329 = vpop.f32.mrf.mxu0
    %v6330 = vadd.f32 0.0, %v6329
    %6331 = vmatmul.f32.gmra.mxu0 %v3612
    %v6332 = vpop.f32.mrf.mxu0
    %v6333 = vadd.f32 0.0, %v6332
    %6334 = vmatmul.f32.gmra.mxu0 %v3616
    %v6335 = vpop.f32.mrf.mxu0
    %v6336 = vadd.f32 0.0, %v6335
    %6337 = vmatmul.f32.gmra.mxu0 %v3620
    %v6338 = vpop.f32.mrf.mxu0
    %v6339 = vadd.f32 0.0, %v6338
    %6340 = vmatmul.f32.gmra.mxu0 %v3624
    %v6341 = vpop.f32.mrf.mxu0
    %v6342 = vadd.f32 0.0, %v6341
    %6343 = vmatmul.f32.gmra.mxu0 %v3628
    %v6344 = vpop.f32.mrf.mxu0
    %v6345 = vadd.f32 0.0, %v6344
    %6346 = vmatmul.f32.gmra.mxu0 %v3632
    %v6347 = vpop.f32.mrf.mxu0
    %v6348 = vadd.f32 0.0, %v6347
    %6349 = vmatmul.f32.gmra.mxu0 %v3636
    %v6350 = vpop.f32.mrf.mxu0
    %v6351 = vadd.f32 0.0, %v6350
    %6352 = vmatmul.f32.gmra.mxu0 %v3640
    %v6353 = vpop.f32.mrf.mxu0
    %v6354 = vadd.f32 0.0, %v6353
    %6355 = vmatmul.f32.gmra.mxu0 %v3644
    %v6356 = vpop.f32.mrf.mxu0
    %v6357 = vadd.f32 0.0, %v6356
    %6358 = vmatmul.f32.gmra.mxu0 %v3648
    %v6359 = vpop.f32.mrf.mxu0
    %v6360 = vadd.f32 0.0, %v6359
    %6361 = vmatmul.f32.gmra.mxu0 %v3652
    %v6362 = vpop.f32.mrf.mxu0
    %v6363 = vadd.f32 0.0, %v6362
    %6364 = vmatmul.f32.gmra.mxu0 %v3656
    %v6365 = vpop.f32.mrf.mxu0
    %v6366 = vadd.f32 0.0, %v6365
    %6367 = vmatmul.f32.gmra.mxu0 %v3660
    %v6368 = vpop.f32.mrf.mxu0
    %v6369 = vadd.f32 0.0, %v6368
    %6370 = vmatmul.f32.gmra.mxu0 %v3664
    %v6371 = vpop.f32.mrf.mxu0
    %v6372 = vadd.f32 0.0, %v6371
    %6373 = vmatmul.f32.gmra.mxu0 %v3668
    %v6374 = vpop.f32.mrf.mxu0
    %v6375 = vadd.f32 0.0, %v6374
    %6376 = vmatmul.f32.gmra.mxu0 %v3672
    %v6377 = vpop.f32.mrf.mxu0
    %v6378 = vadd.f32 0.0, %v6377
    %6379 = vmatmul.f32.gmra.mxu0 %v3676
    %v6380 = vpop.f32.mrf.mxu0
    %v6381 = vadd.f32 0.0, %v6380
    %6382 = vmatmul.f32.gmra.mxu0 %v3680
    %v6383 = vpop.f32.mrf.mxu0
    %v6384 = vadd.f32 0.0, %v6383
    %6385 = vmatmul.f32.gmra.mxu0 %v3684
    %v6386 = vpop.f32.mrf.mxu0
    %v6387 = vadd.f32 0.0, %v6386
    %6388 = vmatmul.f32.gmra.mxu0 %v3688
    %v6389 = vpop.f32.mrf.mxu0
    %v6390 = vadd.f32 0.0, %v6389
    %6391 = vmatmul.f32.gmra.mxu0 %v3692
    %v6392 = vpop.f32.mrf.mxu0
    %v6393 = vadd.f32 0.0, %v6392
    %6394 = vmatmul.f32.gmra.mxu0 %v3696
    %v6395 = vpop.f32.mrf.mxu0
    %v6396 = vadd.f32 0.0, %v6395
    %6397 = vmatmul.f32.gmra.mxu0 %v3700
    %v6398 = vpop.f32.mrf.mxu0
    %v6399 = vadd.f32 0.0, %v6398
    %6400 = vmatmul.f32.gmra.mxu0 %v3704
    %v6401 = vpop.f32.mrf.mxu0
    %v6402 = vadd.f32 0.0, %v6401
    %6403 = vmatmul.f32.gmra.mxu0 %v3708
    %v6404 = vpop.f32.mrf.mxu0
    %v6405 = vadd.f32 0.0, %v6404
    %6406 = vmatmul.f32.gmra.mxu0 %v3712
    %v6407 = vpop.f32.mrf.mxu0
    %v6408 = vadd.f32 0.0, %v6407
    %6409 = vmatmul.f32.gmra.mxu0 %v3716
    %v6410 = vpop.f32.mrf.mxu0
    %v6411 = vadd.f32 0.0, %v6410
    %6412 = vmatmul.f32.gmra.mxu0 %v3720
    %v6413 = vpop.f32.mrf.mxu0
    %v6414 = vadd.f32 0.0, %v6413
    %6415 = vmatmul.f32.gmra.mxu0 %v3724
    %v6416 = vpop.f32.mrf.mxu0
    %v6417 = vadd.f32 0.0, %v6416
    %6418 = vmatmul.f32.gmra.mxu0 %v3728
    %v6419 = vpop.f32.mrf.mxu0
    %v6420 = vadd.f32 0.0, %v6419
    %6421 = vmatmul.f32.gmra.mxu0 %v3732
    %v6422 = vpop.f32.mrf.mxu0
    %v6423 = vadd.f32 0.0, %v6422
    %6424 = vdwg.mxu0
    %6425 = vmatpush.msra.mxu0 %v4244
    %6426 = vmatpush.msra.mxu0 %v4236
    %6427 = vmatpush.msra.mxu0 %v4228
    %6428 = vmatpush.msra.mxu0 %v4220
    %6429 = vmatpush.msra.mxu0 %v4212
    %6430 = vmatpush.msra.mxu0 %v4204
    %6431 = vmatpush.msra.mxu0 %v4196
    %6432 = vmatpush.msra.mxu0 %v4188
    %6433 = vmatpush.msra.mxu0 %v4180
    %6434 = vmatpush.msra.mxu0 %v4172
    %6435 = vmatpush.msra.mxu0 %v4164
    %6436 = vmatpush.msra.mxu0 %v4156
    %6437 = vmatpush.msra.mxu0 %v4148
    %6438 = vmatpush.msra.mxu0 %v4140
    %6439 = vmatpush.msra.mxu0 %v4132
    %6440 = vmatpush.msra.mxu0 %v4124
    %6441 = vmatmul.f32.gmra.mxu0 %v3609
    %v6442 = vpop.f32.mrf.mxu0
    %v6443 = vadd.f32 %v6330, %v6442
    %6444 = vmatmul.f32.gmra.mxu0 %v3613
    %v6445 = vpop.f32.mrf.mxu0
    %v6446 = vadd.f32 %v6333, %v6445
    %6447 = vmatmul.f32.gmra.mxu0 %v3617
    %v6448 = vpop.f32.mrf.mxu0
    %v6449 = vadd.f32 %v6336, %v6448
    %6450 = vmatmul.f32.gmra.mxu0 %v3621
    %v6451 = vpop.f32.mrf.mxu0
    %v6452 = vadd.f32 %v6339, %v6451
    %6453 = vmatmul.f32.gmra.mxu0 %v3625
    %v6454 = vpop.f32.mrf.mxu0
    %v6455 = vadd.f32 %v6342, %v6454
    %6456 = vmatmul.f32.gmra.mxu0 %v3629
    %v6457 = vpop.f32.mrf.mxu0
    %v6458 = vadd.f32 %v6345, %v6457
    %6459 = vmatmul.f32.gmra.mxu0 %v3633
    %v6460 = vpop.f32.mrf.mxu0
    %v6461 = vadd.f32 %v6348, %v6460
    %6462 = vmatmul.f32.gmra.mxu0 %v3637
    %v6463 = vpop.f32.mrf.mxu0
    %v6464 = vadd.f32 %v6351, %v6463
    %6465 = vmatmul.f32.gmra.mxu0 %v3641
    %v6466 = vpop.f32.mrf.mxu0
    %v6467 = vadd.f32 %v6354, %v6466
    %6468 = vmatmul.f32.gmra.mxu0 %v3645
    %v6469 = vpop.f32.mrf.mxu0
    %v6470 = vadd.f32 %v6357, %v6469
    %6471 = vmatmul.f32.gmra.mxu0 %v3649
    %v6472 = vpop.f32.mrf.mxu0
    %v6473 = vadd.f32 %v6360, %v6472
    %6474 = vmatmul.f32.gmra.mxu0 %v3653
    %v6475 = vpop.f32.mrf.mxu0
    %v6476 = vadd.f32 %v6363, %v6475
    %6477 = vmatmul.f32.gmra.mxu0 %v3657
    %v6478 = vpop.f32.mrf.mxu0
    %v6479 = vadd.f32 %v6366, %v6478
    %6480 = vmatmul.f32.gmra.mxu0 %v3661
    %v6481 = vpop.f32.mrf.mxu0
    %v6482 = vadd.f32 %v6369, %v6481
    %6483 = vmatmul.f32.gmra.mxu0 %v3665
    %v6484 = vpop.f32.mrf.mxu0
    %v6485 = vadd.f32 %v6372, %v6484
    %6486 = vmatmul.f32.gmra.mxu0 %v3669
    %v6487 = vpop.f32.mrf.mxu0
    %v6488 = vadd.f32 %v6375, %v6487
    %6489 = vmatmul.f32.gmra.mxu0 %v3673
    %v6490 = vpop.f32.mrf.mxu0
    %v6491 = vadd.f32 %v6378, %v6490
    %6492 = vmatmul.f32.gmra.mxu0 %v3677
    %v6493 = vpop.f32.mrf.mxu0
    %v6494 = vadd.f32 %v6381, %v6493
    %6495 = vmatmul.f32.gmra.mxu0 %v3681
    %v6496 = vpop.f32.mrf.mxu0
    %v6497 = vadd.f32 %v6384, %v6496
    %6498 = vmatmul.f32.gmra.mxu0 %v3685
    %v6499 = vpop.f32.mrf.mxu0
    %v6500 = vadd.f32 %v6387, %v6499
    %6501 = vmatmul.f32.gmra.mxu0 %v3689
    %v6502 = vpop.f32.mrf.mxu0
    %v6503 = vadd.f32 %v6390, %v6502
    %6504 = vmatmul.f32.gmra.mxu0 %v3693
    %v6505 = vpop.f32.mrf.mxu0
    %v6506 = vadd.f32 %v6393, %v6505
    %6507 = vmatmul.f32.gmra.mxu0 %v3697
    %v6508 = vpop.f32.mrf.mxu0
    %v6509 = vadd.f32 %v6396, %v6508
    %6510 = vmatmul.f32.gmra.mxu0 %v3701
    %v6511 = vpop.f32.mrf.mxu0
    %v6512 = vadd.f32 %v6399, %v6511
    %6513 = vmatmul.f32.gmra.mxu0 %v3705
    %v6514 = vpop.f32.mrf.mxu0
    %v6515 = vadd.f32 %v6402, %v6514
    %6516 = vmatmul.f32.gmra.mxu0 %v3709
    %v6517 = vpop.f32.mrf.mxu0
    %v6518 = vadd.f32 %v6405, %v6517
    %6519 = vmatmul.f32.gmra.mxu0 %v3713
    %v6520 = vpop.f32.mrf.mxu0
    %v6521 = vadd.f32 %v6408, %v6520
    %6522 = vmatmul.f32.gmra.mxu0 %v3717
    %v6523 = vpop.f32.mrf.mxu0
    %v6524 = vadd.f32 %v6411, %v6523
    %6525 = vmatmul.f32.gmra.mxu0 %v3721
    %v6526 = vpop.f32.mrf.mxu0
    %v6527 = vadd.f32 %v6414, %v6526
    %6528 = vmatmul.f32.gmra.mxu0 %v3725
    %v6529 = vpop.f32.mrf.mxu0
    %v6530 = vadd.f32 %v6417, %v6529
    %6531 = vmatmul.f32.gmra.mxu0 %v3729
    %v6532 = vpop.f32.mrf.mxu0
    %v6533 = vadd.f32 %v6420, %v6532
    %6534 = vmatmul.f32.gmra.mxu0 %v3733
    %v6535 = vpop.f32.mrf.mxu0
    %v6536 = vadd.f32 %v6423, %v6535
    %6537 = vdwg.mxu0
    %6538 = vmatpush.msra.mxu0 %v4372
    %6539 = vmatpush.msra.mxu0 %v4364
    %6540 = vmatpush.msra.mxu0 %v4356
    %6541 = vmatpush.msra.mxu0 %v4348
    %6542 = vmatpush.msra.mxu0 %v4340
    %6543 = vmatpush.msra.mxu0 %v4332
    %6544 = vmatpush.msra.mxu0 %v4324
    %6545 = vmatpush.msra.mxu0 %v4316
    %6546 = vmatpush.msra.mxu0 %v4308
    %6547 = vmatpush.msra.mxu0 %v4300
    %6548 = vmatpush.msra.mxu0 %v4292
    %6549 = vmatpush.msra.mxu0 %v4284
    %6550 = vmatpush.msra.mxu0 %v4276
    %6551 = vmatpush.msra.mxu0 %v4268
    %6552 = vmatpush.msra.mxu0 %v4260
    %6553 = vmatpush.msra.mxu0 %v4252
    %6554 = vmatmul.f32.gmra.mxu0 %v3610
    %v6555 = vpop.f32.mrf.mxu0
    %v6556 = vadd.f32 %v6443, %v6555
    %6557 = vmatmul.f32.gmra.mxu0 %v3614
    %v6558 = vpop.f32.mrf.mxu0
    %v6559 = vadd.f32 %v6446, %v6558
    %6560 = vmatmul.f32.gmra.mxu0 %v3618
    %v6561 = vpop.f32.mrf.mxu0
    %v6562 = vadd.f32 %v6449, %v6561
    %6563 = vmatmul.f32.gmra.mxu0 %v3622
    %v6564 = vpop.f32.mrf.mxu0
    %v6565 = vadd.f32 %v6452, %v6564
    %6566 = vmatmul.f32.gmra.mxu0 %v3626
    %v6567 = vpop.f32.mrf.mxu0
    %v6568 = vadd.f32 %v6455, %v6567
    %6569 = vmatmul.f32.gmra.mxu0 %v3630
    %v6570 = vpop.f32.mrf.mxu0
    %v6571 = vadd.f32 %v6458, %v6570
    %6572 = vmatmul.f32.gmra.mxu0 %v3634
    %v6573 = vpop.f32.mrf.mxu0
    %v6574 = vadd.f32 %v6461, %v6573
    %6575 = vmatmul.f32.gmra.mxu0 %v3638
    %v6576 = vpop.f32.mrf.mxu0
    %v6577 = vadd.f32 %v6464, %v6576
    %6578 = vmatmul.f32.gmra.mxu0 %v3642
    %v6579 = vpop.f32.mrf.mxu0
    %v6580 = vadd.f32 %v6467, %v6579
    %6581 = vmatmul.f32.gmra.mxu0 %v3646
    %v6582 = vpop.f32.mrf.mxu0
    %v6583 = vadd.f32 %v6470, %v6582
    %6584 = vmatmul.f32.gmra.mxu0 %v3650
    %v6585 = vpop.f32.mrf.mxu0
    %v6586 = vadd.f32 %v6473, %v6585
    %6587 = vmatmul.f32.gmra.mxu0 %v3654
    %v6588 = vpop.f32.mrf.mxu0
    %v6589 = vadd.f32 %v6476, %v6588
    %6590 = vmatmul.f32.gmra.mxu0 %v3658
    %v6591 = vpop.f32.mrf.mxu0
    %v6592 = vadd.f32 %v6479, %v6591
    %6593 = vmatmul.f32.gmra.mxu0 %v3662
    %v6594 = vpop.f32.mrf.mxu0
    %v6595 = vadd.f32 %v6482, %v6594
    %6596 = vmatmul.f32.gmra.mxu0 %v3666
    %v6597 = vpop.f32.mrf.mxu0
    %v6598 = vadd.f32 %v6485, %v6597
    %6599 = vmatmul.f32.gmra.mxu0 %v3670
    %v6600 = vpop.f32.mrf.mxu0
    %v6601 = vadd.f32 %v6488, %v6600
    %6602 = vmatmul.f32.gmra.mxu0 %v3674
    %v6603 = vpop.f32.mrf.mxu0
    %v6604 = vadd.f32 %v6491, %v6603
    %6605 = vmatmul.f32.gmra.mxu0 %v3678
    %v6606 = vpop.f32.mrf.mxu0
    %v6607 = vadd.f32 %v6494, %v6606
    %6608 = vmatmul.f32.gmra.mxu0 %v3682
    %v6609 = vpop.f32.mrf.mxu0
    %v6610 = vadd.f32 %v6497, %v6609
    %6611 = vmatmul.f32.gmra.mxu0 %v3686
    %v6612 = vpop.f32.mrf.mxu0
    %v6613 = vadd.f32 %v6500, %v6612
    %6614 = vmatmul.f32.gmra.mxu0 %v3690
    %v6615 = vpop.f32.mrf.mxu0
    %v6616 = vadd.f32 %v6503, %v6615
    %6617 = vmatmul.f32.gmra.mxu0 %v3694
    %v6618 = vpop.f32.mrf.mxu0
    %v6619 = vadd.f32 %v6506, %v6618
    %6620 = vmatmul.f32.gmra.mxu0 %v3698
    %v6621 = vpop.f32.mrf.mxu0
    %v6622 = vadd.f32 %v6509, %v6621
    %6623 = vmatmul.f32.gmra.mxu0 %v3702
    %v6624 = vpop.f32.mrf.mxu0
    %v6625 = vadd.f32 %v6512, %v6624
    %6626 = vmatmul.f32.gmra.mxu0 %v3706
    %v6627 = vpop.f32.mrf.mxu0
    %v6628 = vadd.f32 %v6515, %v6627
    %6629 = vmatmul.f32.gmra.mxu0 %v3710
    %v6630 = vpop.f32.mrf.mxu0
    %v6631 = vadd.f32 %v6518, %v6630
    %6632 = vmatmul.f32.gmra.mxu0 %v3714
    %v6633 = vpop.f32.mrf.mxu0
    %v6634 = vadd.f32 %v6521, %v6633
    %6635 = vmatmul.f32.gmra.mxu0 %v3718
    %v6636 = vpop.f32.mrf.mxu0
    %v6637 = vadd.f32 %v6524, %v6636
    %6638 = vmatmul.f32.gmra.mxu0 %v3722
    %v6639 = vpop.f32.mrf.mxu0
    %v6640 = vadd.f32 %v6527, %v6639
    %6641 = vmatmul.f32.gmra.mxu0 %v3726
    %v6642 = vpop.f32.mrf.mxu0
    %v6643 = vadd.f32 %v6530, %v6642
    %6644 = vmatmul.f32.gmra.mxu0 %v3730
    %v6645 = vpop.f32.mrf.mxu0
    %v6646 = vadd.f32 %v6533, %v6645
    %6647 = vmatmul.f32.gmra.mxu0 %v3734
    %v6648 = vpop.f32.mrf.mxu0
    %v6649 = vadd.f32 %v6536, %v6648
    %6650 = vdwg.mxu0
    %6651 = vmatpush.msra.mxu0 %v4500
    %6652 = vmatpush.msra.mxu0 %v4492
    %6653 = vmatpush.msra.mxu0 %v4484
    %6654 = vmatpush.msra.mxu0 %v4476
    %6655 = vmatpush.msra.mxu0 %v4468
    %6656 = vmatpush.msra.mxu0 %v4460
    %6657 = vmatpush.msra.mxu0 %v4452
    %6658 = vmatpush.msra.mxu0 %v4444
    %6659 = vmatpush.msra.mxu0 %v4436
    %6660 = vmatpush.msra.mxu0 %v4428
    %6661 = vmatpush.msra.mxu0 %v4420
    %6662 = vmatpush.msra.mxu0 %v4412
    %6663 = vmatpush.msra.mxu0 %v4404
    %6664 = vmatpush.msra.mxu0 %v4396
    %6665 = vmatpush.msra.mxu0 %v4388
    %6666 = vmatpush.msra.mxu0 %v4380
    %6667 = vmatmul.f32.gmra.mxu0 %v3611
    %v6668 = vpop.f32.mrf.mxu0
    %v6669 = vadd.f32 %v6556, %v6668
    %6670 = vmatmul.f32.gmra.mxu0 %v3615
    %v6671 = vpop.f32.mrf.mxu0
    %v6672 = vadd.f32 %v6559, %v6671
    %6673 = vmatmul.f32.gmra.mxu0 %v3619
    %v6674 = vpop.f32.mrf.mxu0
    %v6675 = vadd.f32 %v6562, %v6674
    %6676 = vmatmul.f32.gmra.mxu0 %v3623
    %v6677 = vpop.f32.mrf.mxu0
    %v6678 = vadd.f32 %v6565, %v6677
    %6679 = vmatmul.f32.gmra.mxu0 %v3627
    %v6680 = vpop.f32.mrf.mxu0
    %v6681 = vadd.f32 %v6568, %v6680
    %6682 = vmatmul.f32.gmra.mxu0 %v3631
    %v6683 = vpop.f32.mrf.mxu0
    %v6684 = vadd.f32 %v6571, %v6683
    %6685 = vmatmul.f32.gmra.mxu0 %v3635
    %v6686 = vpop.f32.mrf.mxu0
    %v6687 = vadd.f32 %v6574, %v6686
    %6688 = vmatmul.f32.gmra.mxu0 %v3639
    %v6689 = vpop.f32.mrf.mxu0
    %v6690 = vadd.f32 %v6577, %v6689
    %6691 = vmatmul.f32.gmra.mxu0 %v3643
    %v6692 = vpop.f32.mrf.mxu0
    %v6693 = vadd.f32 %v6580, %v6692
    %6694 = vmatmul.f32.gmra.mxu0 %v3647
    %v6695 = vpop.f32.mrf.mxu0
    %v6696 = vadd.f32 %v6583, %v6695
    %6697 = vmatmul.f32.gmra.mxu0 %v3651
    %v6698 = vpop.f32.mrf.mxu0
    %v6699 = vadd.f32 %v6586, %v6698
    %6700 = vmatmul.f32.gmra.mxu0 %v3655
    %v6701 = vpop.f32.mrf.mxu0
    %v6702 = vadd.f32 %v6589, %v6701
    %6703 = vmatmul.f32.gmra.mxu0 %v3659
    %v6704 = vpop.f32.mrf.mxu0
    %v6705 = vadd.f32 %v6592, %v6704
    %6706 = vmatmul.f32.gmra.mxu0 %v3663
    %v6707 = vpop.f32.mrf.mxu0
    %v6708 = vadd.f32 %v6595, %v6707
    %6709 = vmatmul.f32.gmra.mxu0 %v3667
    %v6710 = vpop.f32.mrf.mxu0
    %v6711 = vadd.f32 %v6598, %v6710
    %6712 = vmatmul.f32.gmra.mxu0 %v3671
    %v6713 = vpop.f32.mrf.mxu0
    %v6714 = vadd.f32 %v6601, %v6713
    %6715 = vmatmul.f32.gmra.mxu0 %v3675
    %v6716 = vpop.f32.mrf.mxu0
    %v6717 = vadd.f32 %v6604, %v6716
    %6718 = vmatmul.f32.gmra.mxu0 %v3679
    %v6719 = vpop.f32.mrf.mxu0
    %v6720 = vadd.f32 %v6607, %v6719
    %6721 = vmatmul.f32.gmra.mxu0 %v3683
    %v6722 = vpop.f32.mrf.mxu0
    %v6723 = vadd.f32 %v6610, %v6722
    %6724 = vmatmul.f32.gmra.mxu0 %v3687
    %v6725 = vpop.f32.mrf.mxu0
    %v6726 = vadd.f32 %v6613, %v6725
    %6727 = vmatmul.f32.gmra.mxu0 %v3691
    %v6728 = vpop.f32.mrf.mxu0
    %v6729 = vadd.f32 %v6616, %v6728
    %6730 = vmatmul.f32.gmra.mxu0 %v3695
    %v6731 = vpop.f32.mrf.mxu0
    %v6732 = vadd.f32 %v6619, %v6731
    %6733 = vmatmul.f32.gmra.mxu0 %v3699
    %v6734 = vpop.f32.mrf.mxu0
    %v6735 = vadd.f32 %v6622, %v6734
    %6736 = vmatmul.f32.gmra.mxu0 %v3703
    %v6737 = vpop.f32.mrf.mxu0
    %v6738 = vadd.f32 %v6625, %v6737
    %6739 = vmatmul.f32.gmra.mxu0 %v3707
    %v6740 = vpop.f32.mrf.mxu0
    %v6741 = vadd.f32 %v6628, %v6740
    %6742 = vmatmul.f32.gmra.mxu0 %v3711
    %v6743 = vpop.f32.mrf.mxu0
    %v6744 = vadd.f32 %v6631, %v6743
    %6745 = vmatmul.f32.gmra.mxu0 %v3715
    %v6746 = vpop.f32.mrf.mxu0
    %v6747 = vadd.f32 %v6634, %v6746
    %6748 = vmatmul.f32.gmra.mxu0 %v3719
    %v6749 = vpop.f32.mrf.mxu0
    %v6750 = vadd.f32 %v6637, %v6749
    %6751 = vmatmul.f32.gmra.mxu0 %v3723
    %v6752 = vpop.f32.mrf.mxu0
    %v6753 = vadd.f32 %v6640, %v6752
    %6754 = vmatmul.f32.gmra.mxu0 %v3727
    %v6755 = vpop.f32.mrf.mxu0
    %v6756 = vadd.f32 %v6643, %v6755
    %6757 = vmatmul.f32.gmra.mxu0 %v3731
    %v6758 = vpop.f32.mrf.mxu0
    %v6759 = vadd.f32 %v6646, %v6758
    %6760 = vmatmul.f32.gmra.mxu0 %v3735
    %v6761 = vpop.f32.mrf.mxu0
    %v6762 = vadd.f32 %v6649, %v6761
    %6763 = vdwg.mxu0
    %6764 = vmatpush.msra.mxu0 %v4117
    %6765 = vmatpush.msra.mxu0 %v4109
    %6766 = vmatpush.msra.mxu0 %v4101
    %6767 = vmatpush.msra.mxu0 %v4093
    %6768 = vmatpush.msra.mxu0 %v4085
    %6769 = vmatpush.msra.mxu0 %v4077
    %6770 = vmatpush.msra.mxu0 %v4069
    %6771 = vmatpush.msra.mxu0 %v4061
    %6772 = vmatpush.msra.mxu0 %v4053
    %6773 = vmatpush.msra.mxu0 %v4045
    %6774 = vmatpush.msra.mxu0 %v4037
    %6775 = vmatpush.msra.mxu0 %v4029
    %6776 = vmatpush.msra.mxu0 %v4021
    %6777 = vmatpush.msra.mxu0 %v4013
    %6778 = vmatpush.msra.mxu0 %v4005
    %6779 = vmatpush.msra.mxu0 %v3997
    %6780 = vmatmul.f32.gmra.mxu0 %v3608
    %v6781 = vpop.f32.mrf.mxu0
    %v6782 = vadd.f32 0.0, %v6781
    %6783 = vmatmul.f32.gmra.mxu0 %v3612
    %v6784 = vpop.f32.mrf.mxu0
    %v6785 = vadd.f32 0.0, %v6784
    %6786 = vmatmul.f32.gmra.mxu0 %v3616
    %v6787 = vpop.f32.mrf.mxu0
    %v6788 = vadd.f32 0.0, %v6787
    %6789 = vmatmul.f32.gmra.mxu0 %v3620
    %v6790 = vpop.f32.mrf.mxu0
    %v6791 = vadd.f32 0.0, %v6790
    %6792 = vmatmul.f32.gmra.mxu0 %v3624
    %v6793 = vpop.f32.mrf.mxu0
    %v6794 = vadd.f32 0.0, %v6793
    %6795 = vmatmul.f32.gmra.mxu0 %v3628
    %v6796 = vpop.f32.mrf.mxu0
    %v6797 = vadd.f32 0.0, %v6796
    %6798 = vmatmul.f32.gmra.mxu0 %v3632
    %v6799 = vpop.f32.mrf.mxu0
    %v6800 = vadd.f32 0.0, %v6799
    %6801 = vmatmul.f32.gmra.mxu0 %v3636
    %v6802 = vpop.f32.mrf.mxu0
    %v6803 = vadd.f32 0.0, %v6802
    %6804 = vmatmul.f32.gmra.mxu0 %v3640
    %v6805 = vpop.f32.mrf.mxu0
    %v6806 = vadd.f32 0.0, %v6805
    %6807 = vmatmul.f32.gmra.mxu0 %v3644
    %v6808 = vpop.f32.mrf.mxu0
    %v6809 = vadd.f32 0.0, %v6808
    %6810 = vmatmul.f32.gmra.mxu0 %v3648
    %v6811 = vpop.f32.mrf.mxu0
    %v6812 = vadd.f32 0.0, %v6811
    %6813 = vmatmul.f32.gmra.mxu0 %v3652
    %v6814 = vpop.f32.mrf.mxu0
    %v6815 = vadd.f32 0.0, %v6814
    %6816 = vmatmul.f32.gmra.mxu0 %v3656
    %v6817 = vpop.f32.mrf.mxu0
    %v6818 = vadd.f32 0.0, %v6817
    %6819 = vmatmul.f32.gmra.mxu0 %v3660
    %v6820 = vpop.f32.mrf.mxu0
    %v6821 = vadd.f32 0.0, %v6820
    %6822 = vmatmul.f32.gmra.mxu0 %v3664
    %v6823 = vpop.f32.mrf.mxu0
    %v6824 = vadd.f32 0.0, %v6823
    %6825 = vmatmul.f32.gmra.mxu0 %v3668
    %v6826 = vpop.f32.mrf.mxu0
    %v6827 = vadd.f32 0.0, %v6826
    %6828 = vmatmul.f32.gmra.mxu0 %v3672
    %v6829 = vpop.f32.mrf.mxu0
    %v6830 = vadd.f32 0.0, %v6829
    %6831 = vmatmul.f32.gmra.mxu0 %v3676
    %v6832 = vpop.f32.mrf.mxu0
    %v6833 = vadd.f32 0.0, %v6832
    %6834 = vmatmul.f32.gmra.mxu0 %v3680
    %v6835 = vpop.f32.mrf.mxu0
    %v6836 = vadd.f32 0.0, %v6835
    %6837 = vmatmul.f32.gmra.mxu0 %v3684
    %v6838 = vpop.f32.mrf.mxu0
    %v6839 = vadd.f32 0.0, %v6838
    %6840 = vmatmul.f32.gmra.mxu0 %v3688
    %v6841 = vpop.f32.mrf.mxu0
    %v6842 = vadd.f32 0.0, %v6841
    %6843 = vmatmul.f32.gmra.mxu0 %v3692
    %v6844 = vpop.f32.mrf.mxu0
    %v6845 = vadd.f32 0.0, %v6844
    %6846 = vmatmul.f32.gmra.mxu0 %v3696
    %v6847 = vpop.f32.mrf.mxu0
    %v6848 = vadd.f32 0.0, %v6847
    %6849 = vmatmul.f32.gmra.mxu0 %v3700
    %v6850 = vpop.f32.mrf.mxu0
    %v6851 = vadd.f32 0.0, %v6850
    %6852 = vmatmul.f32.gmra.mxu0 %v3704
    %v6853 = vpop.f32.mrf.mxu0
    %v6854 = vadd.f32 0.0, %v6853
    %6855 = vmatmul.f32.gmra.mxu0 %v3708
    %v6856 = vpop.f32.mrf.mxu0
    %v6857 = vadd.f32 0.0, %v6856
    %6858 = vmatmul.f32.gmra.mxu0 %v3712
    %v6859 = vpop.f32.mrf.mxu0
    %v6860 = vadd.f32 0.0, %v6859
    %6861 = vmatmul.f32.gmra.mxu0 %v3716
    %v6862 = vpop.f32.mrf.mxu0
    %v6863 = vadd.f32 0.0, %v6862
    %6864 = vmatmul.f32.gmra.mxu0 %v3720
    %v6865 = vpop.f32.mrf.mxu0
    %v6866 = vadd.f32 0.0, %v6865
    %6867 = vmatmul.f32.gmra.mxu0 %v3724
    %v6868 = vpop.f32.mrf.mxu0
    %v6869 = vadd.f32 0.0, %v6868
    %6870 = vmatmul.f32.gmra.mxu0 %v3728
    %v6871 = vpop.f32.mrf.mxu0
    %v6872 = vadd.f32 0.0, %v6871
    %6873 = vmatmul.f32.gmra.mxu0 %v3732
    %v6874 = vpop.f32.mrf.mxu0
    %v6875 = vadd.f32 0.0, %v6874
    %6876 = vdwg.mxu0
    %6877 = vmatpush.msra.mxu0 %v4245
    %6878 = vmatpush.msra.mxu0 %v4237
    %6879 = vmatpush.msra.mxu0 %v4229
    %6880 = vmatpush.msra.mxu0 %v4221
    %6881 = vmatpush.msra.mxu0 %v4213
    %6882 = vmatpush.msra.mxu0 %v4205
    %6883 = vmatpush.msra.mxu0 %v4197
    %6884 = vmatpush.msra.mxu0 %v4189
    %6885 = vmatpush.msra.mxu0 %v4181
    %6886 = vmatpush.msra.mxu0 %v4173
    %6887 = vmatpush.msra.mxu0 %v4165
    %6888 = vmatpush.msra.mxu0 %v4157
    %6889 = vmatpush.msra.mxu0 %v4149
    %6890 = vmatpush.msra.mxu0 %v4141
    %6891 = vmatpush.msra.mxu0 %v4133
    %6892 = vmatpush.msra.mxu0 %v4125
    %6893 = vmatmul.f32.gmra.mxu0 %v3609
    %v6894 = vpop.f32.mrf.mxu0
    %v6895 = vadd.f32 %v6782, %v6894
    %6896 = vmatmul.f32.gmra.mxu0 %v3613
    %v6897 = vpop.f32.mrf.mxu0
    %v6898 = vadd.f32 %v6785, %v6897
    %6899 = vmatmul.f32.gmra.mxu0 %v3617
    %v6900 = vpop.f32.mrf.mxu0
    %v6901 = vadd.f32 %v6788, %v6900
    %6902 = vmatmul.f32.gmra.mxu0 %v3621
    %v6903 = vpop.f32.mrf.mxu0
    %v6904 = vadd.f32 %v6791, %v6903
    %6905 = vmatmul.f32.gmra.mxu0 %v3625
    %v6906 = vpop.f32.mrf.mxu0
    %v6907 = vadd.f32 %v6794, %v6906
    %6908 = vmatmul.f32.gmra.mxu0 %v3629
    %v6909 = vpop.f32.mrf.mxu0
    %v6910 = vadd.f32 %v6797, %v6909
    %6911 = vmatmul.f32.gmra.mxu0 %v3633
    %v6912 = vpop.f32.mrf.mxu0
    %v6913 = vadd.f32 %v6800, %v6912
    %6914 = vmatmul.f32.gmra.mxu0 %v3637
    %v6915 = vpop.f32.mrf.mxu0
    %v6916 = vadd.f32 %v6803, %v6915
    %6917 = vmatmul.f32.gmra.mxu0 %v3641
    %v6918 = vpop.f32.mrf.mxu0
    %v6919 = vadd.f32 %v6806, %v6918
    %6920 = vmatmul.f32.gmra.mxu0 %v3645
    %v6921 = vpop.f32.mrf.mxu0
    %v6922 = vadd.f32 %v6809, %v6921
    %6923 = vmatmul.f32.gmra.mxu0 %v3649
    %v6924 = vpop.f32.mrf.mxu0
    %v6925 = vadd.f32 %v6812, %v6924
    %6926 = vmatmul.f32.gmra.mxu0 %v3653
    %v6927 = vpop.f32.mrf.mxu0
    %v6928 = vadd.f32 %v6815, %v6927
    %6929 = vmatmul.f32.gmra.mxu0 %v3657
    %v6930 = vpop.f32.mrf.mxu0
    %v6931 = vadd.f32 %v6818, %v6930
    %6932 = vmatmul.f32.gmra.mxu0 %v3661
    %v6933 = vpop.f32.mrf.mxu0
    %v6934 = vadd.f32 %v6821, %v6933
    %6935 = vmatmul.f32.gmra.mxu0 %v3665
    %v6936 = vpop.f32.mrf.mxu0
    %v6937 = vadd.f32 %v6824, %v6936
    %6938 = vmatmul.f32.gmra.mxu0 %v3669
    %v6939 = vpop.f32.mrf.mxu0
    %v6940 = vadd.f32 %v6827, %v6939
    %6941 = vmatmul.f32.gmra.mxu0 %v3673
    %v6942 = vpop.f32.mrf.mxu0
    %v6943 = vadd.f32 %v6830, %v6942
    %6944 = vmatmul.f32.gmra.mxu0 %v3677
    %v6945 = vpop.f32.mrf.mxu0
    %v6946 = vadd.f32 %v6833, %v6945
    %6947 = vmatmul.f32.gmra.mxu0 %v3681
    %v6948 = vpop.f32.mrf.mxu0
    %v6949 = vadd.f32 %v6836, %v6948
    %6950 = vmatmul.f32.gmra.mxu0 %v3685
    %v6951 = vpop.f32.mrf.mxu0
    %v6952 = vadd.f32 %v6839, %v6951
    %6953 = vmatmul.f32.gmra.mxu0 %v3689
    %v6954 = vpop.f32.mrf.mxu0
    %v6955 = vadd.f32 %v6842, %v6954
    %6956 = vmatmul.f32.gmra.mxu0 %v3693
    %v6957 = vpop.f32.mrf.mxu0
    %v6958 = vadd.f32 %v6845, %v6957
    %6959 = vmatmul.f32.gmra.mxu0 %v3697
    %v6960 = vpop.f32.mrf.mxu0
    %v6961 = vadd.f32 %v6848, %v6960
    %6962 = vmatmul.f32.gmra.mxu0 %v3701
    %v6963 = vpop.f32.mrf.mxu0
    %v6964 = vadd.f32 %v6851, %v6963
    %6965 = vmatmul.f32.gmra.mxu0 %v3705
    %v6966 = vpop.f32.mrf.mxu0
    %v6967 = vadd.f32 %v6854, %v6966
    %6968 = vmatmul.f32.gmra.mxu0 %v3709
    %v6969 = vpop.f32.mrf.mxu0
    %v6970 = vadd.f32 %v6857, %v6969
    %6971 = vmatmul.f32.gmra.mxu0 %v3713
    %v6972 = vpop.f32.mrf.mxu0
    %v6973 = vadd.f32 %v6860, %v6972
    %6974 = vmatmul.f32.gmra.mxu0 %v3717
    %v6975 = vpop.f32.mrf.mxu0
    %v6976 = vadd.f32 %v6863, %v6975
    %6977 = vmatmul.f32.gmra.mxu0 %v3721
    %v6978 = vpop.f32.mrf.mxu0
    %v6979 = vadd.f32 %v6866, %v6978
    %6980 = vmatmul.f32.gmra.mxu0 %v3725
    %v6981 = vpop.f32.mrf.mxu0
    %v6982 = vadd.f32 %v6869, %v6981
    %6983 = vmatmul.f32.gmra.mxu0 %v3729
    %v6984 = vpop.f32.mrf.mxu0
    %v6985 = vadd.f32 %v6872, %v6984
    %6986 = vmatmul.f32.gmra.mxu0 %v3733
    %v6987 = vpop.f32.mrf.mxu0
    %v6988 = vadd.f32 %v6875, %v6987
    %6989 = vdwg.mxu0
    %6990 = vmatpush.msra.mxu0 %v4373
    %6991 = vmatpush.msra.mxu0 %v4365
    %6992 = vmatpush.msra.mxu0 %v4357
    %6993 = vmatpush.msra.mxu0 %v4349
    %6994 = vmatpush.msra.mxu0 %v4341
    %6995 = vmatpush.msra.mxu0 %v4333
    %6996 = vmatpush.msra.mxu0 %v4325
    %6997 = vmatpush.msra.mxu0 %v4317
    %6998 = vmatpush.msra.mxu0 %v4309
    %6999 = vmatpush.msra.mxu0 %v4301
    %7000 = vmatpush.msra.mxu0 %v4293
    %7001 = vmatpush.msra.mxu0 %v4285
    %7002 = vmatpush.msra.mxu0 %v4277
    %7003 = vmatpush.msra.mxu0 %v4269
    %7004 = vmatpush.msra.mxu0 %v4261
    %7005 = vmatpush.msra.mxu0 %v4253
    %7006 = vmatmul.f32.gmra.mxu0 %v3610
    %v7007 = vpop.f32.mrf.mxu0
    %v7008 = vadd.f32 %v6895, %v7007
    %7009 = vmatmul.f32.gmra.mxu0 %v3614
    %v7010 = vpop.f32.mrf.mxu0
    %v7011 = vadd.f32 %v6898, %v7010
    %7012 = vmatmul.f32.gmra.mxu0 %v3618
    %v7013 = vpop.f32.mrf.mxu0
    %v7014 = vadd.f32 %v6901, %v7013
    %7015 = vmatmul.f32.gmra.mxu0 %v3622
    %v7016 = vpop.f32.mrf.mxu0
    %v7017 = vadd.f32 %v6904, %v7016
    %7018 = vmatmul.f32.gmra.mxu0 %v3626
    %v7019 = vpop.f32.mrf.mxu0
    %v7020 = vadd.f32 %v6907, %v7019
    %7021 = vmatmul.f32.gmra.mxu0 %v3630
    %v7022 = vpop.f32.mrf.mxu0
    %v7023 = vadd.f32 %v6910, %v7022
    %7024 = vmatmul.f32.gmra.mxu0 %v3634
    %v7025 = vpop.f32.mrf.mxu0
    %v7026 = vadd.f32 %v6913, %v7025
    %7027 = vmatmul.f32.gmra.mxu0 %v3638
    %v7028 = vpop.f32.mrf.mxu0
    %v7029 = vadd.f32 %v6916, %v7028
    %7030 = vmatmul.f32.gmra.mxu0 %v3642
    %v7031 = vpop.f32.mrf.mxu0
    %v7032 = vadd.f32 %v6919, %v7031
    %7033 = vmatmul.f32.gmra.mxu0 %v3646
    %v7034 = vpop.f32.mrf.mxu0
    %v7035 = vadd.f32 %v6922, %v7034
    %7036 = vmatmul.f32.gmra.mxu0 %v3650
    %v7037 = vpop.f32.mrf.mxu0
    %v7038 = vadd.f32 %v6925, %v7037
    %7039 = vmatmul.f32.gmra.mxu0 %v3654
    %v7040 = vpop.f32.mrf.mxu0
    %v7041 = vadd.f32 %v6928, %v7040
    %7042 = vmatmul.f32.gmra.mxu0 %v3658
    %v7043 = vpop.f32.mrf.mxu0
    %v7044 = vadd.f32 %v6931, %v7043
    %7045 = vmatmul.f32.gmra.mxu0 %v3662
    %v7046 = vpop.f32.mrf.mxu0
    %v7047 = vadd.f32 %v6934, %v7046
    %7048 = vmatmul.f32.gmra.mxu0 %v3666
    %v7049 = vpop.f32.mrf.mxu0
    %v7050 = vadd.f32 %v6937, %v7049
    %7051 = vmatmul.f32.gmra.mxu0 %v3670
    %v7052 = vpop.f32.mrf.mxu0
    %v7053 = vadd.f32 %v6940, %v7052
    %7054 = vmatmul.f32.gmra.mxu0 %v3674
    %v7055 = vpop.f32.mrf.mxu0
    %v7056 = vadd.f32 %v6943, %v7055
    %7057 = vmatmul.f32.gmra.mxu0 %v3678
    %v7058 = vpop.f32.mrf.mxu0
    %v7059 = vadd.f32 %v6946, %v7058
    %7060 = vmatmul.f32.gmra.mxu0 %v3682
    %v7061 = vpop.f32.mrf.mxu0
    %v7062 = vadd.f32 %v6949, %v7061
    %7063 = vmatmul.f32.gmra.mxu0 %v3686
    %v7064 = vpop.f32.mrf.mxu0
    %v7065 = vadd.f32 %v6952, %v7064
    %7066 = vmatmul.f32.gmra.mxu0 %v3690
    %v7067 = vpop.f32.mrf.mxu0
    %v7068 = vadd.f32 %v6955, %v7067
    %7069 = vmatmul.f32.gmra.mxu0 %v3694
    %v7070 = vpop.f32.mrf.mxu0
    %v7071 = vadd.f32 %v6958, %v7070
    %7072 = vmatmul.f32.gmra.mxu0 %v3698
    %v7073 = vpop.f32.mrf.mxu0
    %v7074 = vadd.f32 %v6961, %v7073
    %7075 = vmatmul.f32.gmra.mxu0 %v3702
    %v7076 = vpop.f32.mrf.mxu0
    %v7077 = vadd.f32 %v6964, %v7076
    %7078 = vmatmul.f32.gmra.mxu0 %v3706
    %v7079 = vpop.f32.mrf.mxu0
    %v7080 = vadd.f32 %v6967, %v7079
    %7081 = vmatmul.f32.gmra.mxu0 %v3710
    %v7082 = vpop.f32.mrf.mxu0
    %v7083 = vadd.f32 %v6970, %v7082
    %7084 = vmatmul.f32.gmra.mxu0 %v3714
    %v7085 = vpop.f32.mrf.mxu0
    %v7086 = vadd.f32 %v6973, %v7085
    %7087 = vmatmul.f32.gmra.mxu0 %v3718
    %v7088 = vpop.f32.mrf.mxu0
    %v7089 = vadd.f32 %v6976, %v7088
    %7090 = vmatmul.f32.gmra.mxu0 %v3722
    %v7091 = vpop.f32.mrf.mxu0
    %v7092 = vadd.f32 %v6979, %v7091
    %7093 = vmatmul.f32.gmra.mxu0 %v3726
    %v7094 = vpop.f32.mrf.mxu0
    %v7095 = vadd.f32 %v6982, %v7094
    %7096 = vmatmul.f32.gmra.mxu0 %v3730
    %v7097 = vpop.f32.mrf.mxu0
    %v7098 = vadd.f32 %v6985, %v7097
    %7099 = vmatmul.f32.gmra.mxu0 %v3734
    %v7100 = vpop.f32.mrf.mxu0
    %v7101 = vadd.f32 %v6988, %v7100
    %7102 = vdwg.mxu0
    %7103 = vmatpush.msra.mxu0 %v4501
    %7104 = vmatpush.msra.mxu0 %v4493
    %7105 = vmatpush.msra.mxu0 %v4485
    %7106 = vmatpush.msra.mxu0 %v4477
    %7107 = vmatpush.msra.mxu0 %v4469
    %7108 = vmatpush.msra.mxu0 %v4461
    %7109 = vmatpush.msra.mxu0 %v4453
    %7110 = vmatpush.msra.mxu0 %v4445
    %7111 = vmatpush.msra.mxu0 %v4437
    %7112 = vmatpush.msra.mxu0 %v4429
    %7113 = vmatpush.msra.mxu0 %v4421
    %7114 = vmatpush.msra.mxu0 %v4413
    %7115 = vmatpush.msra.mxu0 %v4405
    %7116 = vmatpush.msra.mxu0 %v4397
    %7117 = vmatpush.msra.mxu0 %v4389
    %7118 = vmatpush.msra.mxu0 %v4381
    %7119 = vmatmul.f32.gmra.mxu0 %v3611
    %v7120 = vpop.f32.mrf.mxu0
    %v7121 = vadd.f32 %v7008, %v7120
    %7122 = vmatmul.f32.gmra.mxu0 %v3615
    %v7123 = vpop.f32.mrf.mxu0
    %v7124 = vadd.f32 %v7011, %v7123
    %7125 = vmatmul.f32.gmra.mxu0 %v3619
    %v7126 = vpop.f32.mrf.mxu0
    %v7127 = vadd.f32 %v7014, %v7126
    %7128 = vmatmul.f32.gmra.mxu0 %v3623
    %v7129 = vpop.f32.mrf.mxu0
    %v7130 = vadd.f32 %v7017, %v7129
    %7131 = vmatmul.f32.gmra.mxu0 %v3627
    %v7132 = vpop.f32.mrf.mxu0
    %v7133 = vadd.f32 %v7020, %v7132
    %7134 = vmatmul.f32.gmra.mxu0 %v3631
    %v7135 = vpop.f32.mrf.mxu0
    %v7136 = vadd.f32 %v7023, %v7135
    %7137 = vmatmul.f32.gmra.mxu0 %v3635
    %v7138 = vpop.f32.mrf.mxu0
    %v7139 = vadd.f32 %v7026, %v7138
    %7140 = vmatmul.f32.gmra.mxu0 %v3639
    %v7141 = vpop.f32.mrf.mxu0
    %v7142 = vadd.f32 %v7029, %v7141
    %7143 = vmatmul.f32.gmra.mxu0 %v3643
    %v7144 = vpop.f32.mrf.mxu0
    %v7145 = vadd.f32 %v7032, %v7144
    %7146 = vmatmul.f32.gmra.mxu0 %v3647
    %v7147 = vpop.f32.mrf.mxu0
    %v7148 = vadd.f32 %v7035, %v7147
    %7149 = vmatmul.f32.gmra.mxu0 %v3651
    %v7150 = vpop.f32.mrf.mxu0
    %v7151 = vadd.f32 %v7038, %v7150
    %7152 = vmatmul.f32.gmra.mxu0 %v3655
    %v7153 = vpop.f32.mrf.mxu0
    %v7154 = vadd.f32 %v7041, %v7153
    %7155 = vmatmul.f32.gmra.mxu0 %v3659
    %v7156 = vpop.f32.mrf.mxu0
    %v7157 = vadd.f32 %v7044, %v7156
    %7158 = vmatmul.f32.gmra.mxu0 %v3663
    %v7159 = vpop.f32.mrf.mxu0
    %v7160 = vadd.f32 %v7047, %v7159
    %7161 = vmatmul.f32.gmra.mxu0 %v3667
    %v7162 = vpop.f32.mrf.mxu0
    %v7163 = vadd.f32 %v7050, %v7162
    %7164 = vmatmul.f32.gmra.mxu0 %v3671
    %v7165 = vpop.f32.mrf.mxu0
    %v7166 = vadd.f32 %v7053, %v7165
    %7167 = vmatmul.f32.gmra.mxu0 %v3675
    %v7168 = vpop.f32.mrf.mxu0
    %v7169 = vadd.f32 %v7056, %v7168
    %7170 = vmatmul.f32.gmra.mxu0 %v3679
    %v7171 = vpop.f32.mrf.mxu0
    %v7172 = vadd.f32 %v7059, %v7171
    %7173 = vmatmul.f32.gmra.mxu0 %v3683
    %v7174 = vpop.f32.mrf.mxu0
    %v7175 = vadd.f32 %v7062, %v7174
    %7176 = vmatmul.f32.gmra.mxu0 %v3687
    %v7177 = vpop.f32.mrf.mxu0
    %v7178 = vadd.f32 %v7065, %v7177
    %7179 = vmatmul.f32.gmra.mxu0 %v3691
    %v7180 = vpop.f32.mrf.mxu0
    %v7181 = vadd.f32 %v7068, %v7180
    %7182 = vmatmul.f32.gmra.mxu0 %v3695
    %v7183 = vpop.f32.mrf.mxu0
    %v7184 = vadd.f32 %v7071, %v7183
    %7185 = vmatmul.f32.gmra.mxu0 %v3699
    %v7186 = vpop.f32.mrf.mxu0
    %v7187 = vadd.f32 %v7074, %v7186
    %7188 = vmatmul.f32.gmra.mxu0 %v3703
    %v7189 = vpop.f32.mrf.mxu0
    %v7190 = vadd.f32 %v7077, %v7189
    %7191 = vmatmul.f32.gmra.mxu0 %v3707
    %v7192 = vpop.f32.mrf.mxu0
    %v7193 = vadd.f32 %v7080, %v7192
    %7194 = vmatmul.f32.gmra.mxu0 %v3711
    %v7195 = vpop.f32.mrf.mxu0
    %v7196 = vadd.f32 %v7083, %v7195
    %7197 = vmatmul.f32.gmra.mxu0 %v3715
    %v7198 = vpop.f32.mrf.mxu0
    %v7199 = vadd.f32 %v7086, %v7198
    %7200 = vmatmul.f32.gmra.mxu0 %v3719
    %v7201 = vpop.f32.mrf.mxu0
    %v7202 = vadd.f32 %v7089, %v7201
    %7203 = vmatmul.f32.gmra.mxu0 %v3723
    %v7204 = vpop.f32.mrf.mxu0
    %v7205 = vadd.f32 %v7092, %v7204
    %7206 = vmatmul.f32.gmra.mxu0 %v3727
    %v7207 = vpop.f32.mrf.mxu0
    %v7208 = vadd.f32 %v7095, %v7207
    %7209 = vmatmul.f32.gmra.mxu0 %v3731
    %v7210 = vpop.f32.mrf.mxu0
    %v7211 = vadd.f32 %v7098, %v7210
    %7212 = vmatmul.f32.gmra.mxu0 %v3735
    %v7213 = vpop.f32.mrf.mxu0
    %v7214 = vadd.f32 %v7101, %v7213
    %7215 = vdwg.mxu0
    %7216 = vmatpush.msra.mxu0 %v4118
    %7217 = vmatpush.msra.mxu0 %v4110
    %7218 = vmatpush.msra.mxu0 %v4102
    %7219 = vmatpush.msra.mxu0 %v4094
    %7220 = vmatpush.msra.mxu0 %v4086
    %7221 = vmatpush.msra.mxu0 %v4078
    %7222 = vmatpush.msra.mxu0 %v4070
    %7223 = vmatpush.msra.mxu0 %v4062
    %7224 = vmatpush.msra.mxu0 %v4054
    %7225 = vmatpush.msra.mxu0 %v4046
    %7226 = vmatpush.msra.mxu0 %v4038
    %7227 = vmatpush.msra.mxu0 %v4030
    %7228 = vmatpush.msra.mxu0 %v4022
    %7229 = vmatpush.msra.mxu0 %v4014
    %7230 = vmatpush.msra.mxu0 %v4006
    %7231 = vmatpush.msra.mxu0 %v3998
    %7232 = vmatmul.f32.gmra.mxu0 %v3608
    %v7233 = vpop.f32.mrf.mxu0
    %v7234 = vadd.f32 0.0, %v7233
    %7235 = vmatmul.f32.gmra.mxu0 %v3612
    %v7236 = vpop.f32.mrf.mxu0
    %v7237 = vadd.f32 0.0, %v7236
    %7238 = vmatmul.f32.gmra.mxu0 %v3616
    %v7239 = vpop.f32.mrf.mxu0
    %v7240 = vadd.f32 0.0, %v7239
    %7241 = vmatmul.f32.gmra.mxu0 %v3620
    %v7242 = vpop.f32.mrf.mxu0
    %v7243 = vadd.f32 0.0, %v7242
    %7244 = vmatmul.f32.gmra.mxu0 %v3624
    %v7245 = vpop.f32.mrf.mxu0
    %v7246 = vadd.f32 0.0, %v7245
    %7247 = vmatmul.f32.gmra.mxu0 %v3628
    %v7248 = vpop.f32.mrf.mxu0
    %v7249 = vadd.f32 0.0, %v7248
    %7250 = vmatmul.f32.gmra.mxu0 %v3632
    %v7251 = vpop.f32.mrf.mxu0
    %v7252 = vadd.f32 0.0, %v7251
    %7253 = vmatmul.f32.gmra.mxu0 %v3636
    %v7254 = vpop.f32.mrf.mxu0
    %v7255 = vadd.f32 0.0, %v7254
    %7256 = vmatmul.f32.gmra.mxu0 %v3640
    %v7257 = vpop.f32.mrf.mxu0
    %v7258 = vadd.f32 0.0, %v7257
    %7259 = vmatmul.f32.gmra.mxu0 %v3644
    %v7260 = vpop.f32.mrf.mxu0
    %v7261 = vadd.f32 0.0, %v7260
    %7262 = vmatmul.f32.gmra.mxu0 %v3648
    %v7263 = vpop.f32.mrf.mxu0
    %v7264 = vadd.f32 0.0, %v7263
    %7265 = vmatmul.f32.gmra.mxu0 %v3652
    %v7266 = vpop.f32.mrf.mxu0
    %v7267 = vadd.f32 0.0, %v7266
    %7268 = vmatmul.f32.gmra.mxu0 %v3656
    %v7269 = vpop.f32.mrf.mxu0
    %v7270 = vadd.f32 0.0, %v7269
    %7271 = vmatmul.f32.gmra.mxu0 %v3660
    %v7272 = vpop.f32.mrf.mxu0
    %v7273 = vadd.f32 0.0, %v7272
    %7274 = vmatmul.f32.gmra.mxu0 %v3664
    %v7275 = vpop.f32.mrf.mxu0
    %v7276 = vadd.f32 0.0, %v7275
    %7277 = vmatmul.f32.gmra.mxu0 %v3668
    %v7278 = vpop.f32.mrf.mxu0
    %v7279 = vadd.f32 0.0, %v7278
    %7280 = vmatmul.f32.gmra.mxu0 %v3672
    %v7281 = vpop.f32.mrf.mxu0
    %v7282 = vadd.f32 0.0, %v7281
    %7283 = vmatmul.f32.gmra.mxu0 %v3676
    %v7284 = vpop.f32.mrf.mxu0
    %v7285 = vadd.f32 0.0, %v7284
    %7286 = vmatmul.f32.gmra.mxu0 %v3680
    %v7287 = vpop.f32.mrf.mxu0
    %v7288 = vadd.f32 0.0, %v7287
    %7289 = vmatmul.f32.gmra.mxu0 %v3684
    %v7290 = vpop.f32.mrf.mxu0
    %v7291 = vadd.f32 0.0, %v7290
    %7292 = vmatmul.f32.gmra.mxu0 %v3688
    %v7293 = vpop.f32.mrf.mxu0
    %v7294 = vadd.f32 0.0, %v7293
    %7295 = vmatmul.f32.gmra.mxu0 %v3692
    %v7296 = vpop.f32.mrf.mxu0
    %v7297 = vadd.f32 0.0, %v7296
    %7298 = vmatmul.f32.gmra.mxu0 %v3696
    %v7299 = vpop.f32.mrf.mxu0
    %v7300 = vadd.f32 0.0, %v7299
    %7301 = vmatmul.f32.gmra.mxu0 %v3700
    %v7302 = vpop.f32.mrf.mxu0
    %v7303 = vadd.f32 0.0, %v7302
    %7304 = vmatmul.f32.gmra.mxu0 %v3704
    %v7305 = vpop.f32.mrf.mxu0
    %v7306 = vadd.f32 0.0, %v7305
    %7307 = vmatmul.f32.gmra.mxu0 %v3708
    %v7308 = vpop.f32.mrf.mxu0
    %v7309 = vadd.f32 0.0, %v7308
    %7310 = vmatmul.f32.gmra.mxu0 %v3712
    %v7311 = vpop.f32.mrf.mxu0
    %v7312 = vadd.f32 0.0, %v7311
    %7313 = vmatmul.f32.gmra.mxu0 %v3716
    %v7314 = vpop.f32.mrf.mxu0
    %v7315 = vadd.f32 0.0, %v7314
    %7316 = vmatmul.f32.gmra.mxu0 %v3720
    %v7317 = vpop.f32.mrf.mxu0
    %v7318 = vadd.f32 0.0, %v7317
    %7319 = vmatmul.f32.gmra.mxu0 %v3724
    %v7320 = vpop.f32.mrf.mxu0
    %v7321 = vadd.f32 0.0, %v7320
    %7322 = vmatmul.f32.gmra.mxu0 %v3728
    %v7323 = vpop.f32.mrf.mxu0
    %v7324 = vadd.f32 0.0, %v7323
    %7325 = vmatmul.f32.gmra.mxu0 %v3732
    %v7326 = vpop.f32.mrf.mxu0
    %v7327 = vadd.f32 0.0, %v7326
    %7328 = vdwg.mxu0
    %7329 = vmatpush.msra.mxu0 %v4246
    %7330 = vmatpush.msra.mxu0 %v4238
    %7331 = vmatpush.msra.mxu0 %v4230
    %7332 = vmatpush.msra.mxu0 %v4222
    %7333 = vmatpush.msra.mxu0 %v4214
    %7334 = vmatpush.msra.mxu0 %v4206
    %7335 = vmatpush.msra.mxu0 %v4198
    %7336 = vmatpush.msra.mxu0 %v4190
    %7337 = vmatpush.msra.mxu0 %v4182
    %7338 = vmatpush.msra.mxu0 %v4174
    %7339 = vmatpush.msra.mxu0 %v4166
    %7340 = vmatpush.msra.mxu0 %v4158
    %7341 = vmatpush.msra.mxu0 %v4150
    %7342 = vmatpush.msra.mxu0 %v4142
    %7343 = vmatpush.msra.mxu0 %v4134
    %7344 = vmatpush.msra.mxu0 %v4126
    %7345 = vmatmul.f32.gmra.mxu0 %v3609
    %v7346 = vpop.f32.mrf.mxu0
    %v7347 = vadd.f32 %v7234, %v7346
    %7348 = vmatmul.f32.gmra.mxu0 %v3613
    %v7349 = vpop.f32.mrf.mxu0
    %v7350 = vadd.f32 %v7237, %v7349
    %7351 = vmatmul.f32.gmra.mxu0 %v3617
    %v7352 = vpop.f32.mrf.mxu0
    %v7353 = vadd.f32 %v7240, %v7352
    %7354 = vmatmul.f32.gmra.mxu0 %v3621
    %v7355 = vpop.f32.mrf.mxu0
    %v7356 = vadd.f32 %v7243, %v7355
    %7357 = vmatmul.f32.gmra.mxu0 %v3625
    %v7358 = vpop.f32.mrf.mxu0
    %v7359 = vadd.f32 %v7246, %v7358
    %7360 = vmatmul.f32.gmra.mxu0 %v3629
    %v7361 = vpop.f32.mrf.mxu0
    %v7362 = vadd.f32 %v7249, %v7361
    %7363 = vmatmul.f32.gmra.mxu0 %v3633
    %v7364 = vpop.f32.mrf.mxu0
    %v7365 = vadd.f32 %v7252, %v7364
    %7366 = vmatmul.f32.gmra.mxu0 %v3637
    %v7367 = vpop.f32.mrf.mxu0
    %v7368 = vadd.f32 %v7255, %v7367
    %7369 = vmatmul.f32.gmra.mxu0 %v3641
    %v7370 = vpop.f32.mrf.mxu0
    %v7371 = vadd.f32 %v7258, %v7370
    %7372 = vmatmul.f32.gmra.mxu0 %v3645
    %v7373 = vpop.f32.mrf.mxu0
    %v7374 = vadd.f32 %v7261, %v7373
    %7375 = vmatmul.f32.gmra.mxu0 %v3649
    %v7376 = vpop.f32.mrf.mxu0
    %v7377 = vadd.f32 %v7264, %v7376
    %7378 = vmatmul.f32.gmra.mxu0 %v3653
    %v7379 = vpop.f32.mrf.mxu0
    %v7380 = vadd.f32 %v7267, %v7379
    %7381 = vmatmul.f32.gmra.mxu0 %v3657
    %v7382 = vpop.f32.mrf.mxu0
    %v7383 = vadd.f32 %v7270, %v7382
    %7384 = vmatmul.f32.gmra.mxu0 %v3661
    %v7385 = vpop.f32.mrf.mxu0
    %v7386 = vadd.f32 %v7273, %v7385
    %7387 = vmatmul.f32.gmra.mxu0 %v3665
    %v7388 = vpop.f32.mrf.mxu0
    %v7389 = vadd.f32 %v7276, %v7388
    %7390 = vmatmul.f32.gmra.mxu0 %v3669
    %v7391 = vpop.f32.mrf.mxu0
    %v7392 = vadd.f32 %v7279, %v7391
    %7393 = vmatmul.f32.gmra.mxu0 %v3673
    %v7394 = vpop.f32.mrf.mxu0
    %v7395 = vadd.f32 %v7282, %v7394
    %7396 = vmatmul.f32.gmra.mxu0 %v3677
    %v7397 = vpop.f32.mrf.mxu0
    %v7398 = vadd.f32 %v7285, %v7397
    %7399 = vmatmul.f32.gmra.mxu0 %v3681
    %v7400 = vpop.f32.mrf.mxu0
    %v7401 = vadd.f32 %v7288, %v7400
    %7402 = vmatmul.f32.gmra.mxu0 %v3685
    %v7403 = vpop.f32.mrf.mxu0
    %v7404 = vadd.f32 %v7291, %v7403
    %7405 = vmatmul.f32.gmra.mxu0 %v3689
    %v7406 = vpop.f32.mrf.mxu0
    %v7407 = vadd.f32 %v7294, %v7406
    %7408 = vmatmul.f32.gmra.mxu0 %v3693
    %v7409 = vpop.f32.mrf.mxu0
    %v7410 = vadd.f32 %v7297, %v7409
    %7411 = vmatmul.f32.gmra.mxu0 %v3697
    %v7412 = vpop.f32.mrf.mxu0
    %v7413 = vadd.f32 %v7300, %v7412
    %7414 = vmatmul.f32.gmra.mxu0 %v3701
    %v7415 = vpop.f32.mrf.mxu0
    %v7416 = vadd.f32 %v7303, %v7415
    %7417 = vmatmul.f32.gmra.mxu0 %v3705
    %v7418 = vpop.f32.mrf.mxu0
    %v7419 = vadd.f32 %v7306, %v7418
    %7420 = vmatmul.f32.gmra.mxu0 %v3709
    %v7421 = vpop.f32.mrf.mxu0
    %v7422 = vadd.f32 %v7309, %v7421
    %7423 = vmatmul.f32.gmra.mxu0 %v3713
    %v7424 = vpop.f32.mrf.mxu0
    %v7425 = vadd.f32 %v7312, %v7424
    %7426 = vmatmul.f32.gmra.mxu0 %v3717
    %v7427 = vpop.f32.mrf.mxu0
    %v7428 = vadd.f32 %v7315, %v7427
    %7429 = vmatmul.f32.gmra.mxu0 %v3721
    %v7430 = vpop.f32.mrf.mxu0
    %v7431 = vadd.f32 %v7318, %v7430
    %7432 = vmatmul.f32.gmra.mxu0 %v3725
    %v7433 = vpop.f32.mrf.mxu0
    %v7434 = vadd.f32 %v7321, %v7433
    %7435 = vmatmul.f32.gmra.mxu0 %v3729
    %v7436 = vpop.f32.mrf.mxu0
    %v7437 = vadd.f32 %v7324, %v7436
    %7438 = vmatmul.f32.gmra.mxu0 %v3733
    %v7439 = vpop.f32.mrf.mxu0
    %v7440 = vadd.f32 %v7327, %v7439
    %7441 = vdwg.mxu0
    %7442 = vmatpush.msra.mxu0 %v4374
    %7443 = vmatpush.msra.mxu0 %v4366
    %7444 = vmatpush.msra.mxu0 %v4358
    %7445 = vmatpush.msra.mxu0 %v4350
    %7446 = vmatpush.msra.mxu0 %v4342
    %7447 = vmatpush.msra.mxu0 %v4334
    %7448 = vmatpush.msra.mxu0 %v4326
    %7449 = vmatpush.msra.mxu0 %v4318
    %7450 = vmatpush.msra.mxu0 %v4310
    %7451 = vmatpush.msra.mxu0 %v4302
    %7452 = vmatpush.msra.mxu0 %v4294
    %7453 = vmatpush.msra.mxu0 %v4286
    %7454 = vmatpush.msra.mxu0 %v4278
    %7455 = vmatpush.msra.mxu0 %v4270
    %7456 = vmatpush.msra.mxu0 %v4262
    %7457 = vmatpush.msra.mxu0 %v4254
    %7458 = vmatmul.f32.gmra.mxu0 %v3610
    %v7459 = vpop.f32.mrf.mxu0
    %v7460 = vadd.f32 %v7347, %v7459
    %7461 = vmatmul.f32.gmra.mxu0 %v3614
    %v7462 = vpop.f32.mrf.mxu0
    %v7463 = vadd.f32 %v7350, %v7462
    %7464 = vmatmul.f32.gmra.mxu0 %v3618
    %v7465 = vpop.f32.mrf.mxu0
    %v7466 = vadd.f32 %v7353, %v7465
    %7467 = vmatmul.f32.gmra.mxu0 %v3622
    %v7468 = vpop.f32.mrf.mxu0
    %v7469 = vadd.f32 %v7356, %v7468
    %7470 = vmatmul.f32.gmra.mxu0 %v3626
    %v7471 = vpop.f32.mrf.mxu0
    %v7472 = vadd.f32 %v7359, %v7471
    %7473 = vmatmul.f32.gmra.mxu0 %v3630
    %v7474 = vpop.f32.mrf.mxu0
    %v7475 = vadd.f32 %v7362, %v7474
    %7476 = vmatmul.f32.gmra.mxu0 %v3634
    %v7477 = vpop.f32.mrf.mxu0
    %v7478 = vadd.f32 %v7365, %v7477
    %7479 = vmatmul.f32.gmra.mxu0 %v3638
    %v7480 = vpop.f32.mrf.mxu0
    %v7481 = vadd.f32 %v7368, %v7480
    %7482 = vmatmul.f32.gmra.mxu0 %v3642
    %v7483 = vpop.f32.mrf.mxu0
    %v7484 = vadd.f32 %v7371, %v7483
    %7485 = vmatmul.f32.gmra.mxu0 %v3646
    %v7486 = vpop.f32.mrf.mxu0
    %v7487 = vadd.f32 %v7374, %v7486
    %7488 = vmatmul.f32.gmra.mxu0 %v3650
    %v7489 = vpop.f32.mrf.mxu0
    %v7490 = vadd.f32 %v7377, %v7489
    %7491 = vmatmul.f32.gmra.mxu0 %v3654
    %v7492 = vpop.f32.mrf.mxu0
    %v7493 = vadd.f32 %v7380, %v7492
    %7494 = vmatmul.f32.gmra.mxu0 %v3658
    %v7495 = vpop.f32.mrf.mxu0
    %v7496 = vadd.f32 %v7383, %v7495
    %7497 = vmatmul.f32.gmra.mxu0 %v3662
    %v7498 = vpop.f32.mrf.mxu0
    %v7499 = vadd.f32 %v7386, %v7498
    %7500 = vmatmul.f32.gmra.mxu0 %v3666
    %v7501 = vpop.f32.mrf.mxu0
    %v7502 = vadd.f32 %v7389, %v7501
    %7503 = vmatmul.f32.gmra.mxu0 %v3670
    %v7504 = vpop.f32.mrf.mxu0
    %v7505 = vadd.f32 %v7392, %v7504
    %7506 = vmatmul.f32.gmra.mxu0 %v3674
    %v7507 = vpop.f32.mrf.mxu0
    %v7508 = vadd.f32 %v7395, %v7507
    %7509 = vmatmul.f32.gmra.mxu0 %v3678
    %v7510 = vpop.f32.mrf.mxu0
    %v7511 = vadd.f32 %v7398, %v7510
    %7512 = vmatmul.f32.gmra.mxu0 %v3682
    %v7513 = vpop.f32.mrf.mxu0
    %v7514 = vadd.f32 %v7401, %v7513
    %7515 = vmatmul.f32.gmra.mxu0 %v3686
    %v7516 = vpop.f32.mrf.mxu0
    %v7517 = vadd.f32 %v7404, %v7516
    %7518 = vmatmul.f32.gmra.mxu0 %v3690
    %v7519 = vpop.f32.mrf.mxu0
    %v7520 = vadd.f32 %v7407, %v7519
    %7521 = vmatmul.f32.gmra.mxu0 %v3694
    %v7522 = vpop.f32.mrf.mxu0
    %v7523 = vadd.f32 %v7410, %v7522
    %7524 = vmatmul.f32.gmra.mxu0 %v3698
    %v7525 = vpop.f32.mrf.mxu0
    %v7526 = vadd.f32 %v7413, %v7525
    %7527 = vmatmul.f32.gmra.mxu0 %v3702
    %v7528 = vpop.f32.mrf.mxu0
    %v7529 = vadd.f32 %v7416, %v7528
    %7530 = vmatmul.f32.gmra.mxu0 %v3706
    %v7531 = vpop.f32.mrf.mxu0
    %v7532 = vadd.f32 %v7419, %v7531
    %7533 = vmatmul.f32.gmra.mxu0 %v3710
    %v7534 = vpop.f32.mrf.mxu0
    %v7535 = vadd.f32 %v7422, %v7534
    %7536 = vmatmul.f32.gmra.mxu0 %v3714
    %v7537 = vpop.f32.mrf.mxu0
    %v7538 = vadd.f32 %v7425, %v7537
    %7539 = vmatmul.f32.gmra.mxu0 %v3718
    %v7540 = vpop.f32.mrf.mxu0
    %v7541 = vadd.f32 %v7428, %v7540
    %7542 = vmatmul.f32.gmra.mxu0 %v3722
    %v7543 = vpop.f32.mrf.mxu0
    %v7544 = vadd.f32 %v7431, %v7543
    %7545 = vmatmul.f32.gmra.mxu0 %v3726
    %v7546 = vpop.f32.mrf.mxu0
    %v7547 = vadd.f32 %v7434, %v7546
    %7548 = vmatmul.f32.gmra.mxu0 %v3730
    %v7549 = vpop.f32.mrf.mxu0
    %v7550 = vadd.f32 %v7437, %v7549
    %7551 = vmatmul.f32.gmra.mxu0 %v3734
    %v7552 = vpop.f32.mrf.mxu0
    %v7553 = vadd.f32 %v7440, %v7552
    %7554 = vdwg.mxu0
    %7555 = vmatpush.msra.mxu0 %v4502
    %7556 = vmatpush.msra.mxu0 %v4494
    %7557 = vmatpush.msra.mxu0 %v4486
    %7558 = vmatpush.msra.mxu0 %v4478
    %7559 = vmatpush.msra.mxu0 %v4470
    %7560 = vmatpush.msra.mxu0 %v4462
    %7561 = vmatpush.msra.mxu0 %v4454
    %7562 = vmatpush.msra.mxu0 %v4446
    %7563 = vmatpush.msra.mxu0 %v4438
    %7564 = vmatpush.msra.mxu0 %v4430
    %7565 = vmatpush.msra.mxu0 %v4422
    %7566 = vmatpush.msra.mxu0 %v4414
    %7567 = vmatpush.msra.mxu0 %v4406
    %7568 = vmatpush.msra.mxu0 %v4398
    %7569 = vmatpush.msra.mxu0 %v4390
    %7570 = vmatpush.msra.mxu0 %v4382
    %7571 = vmatmul.f32.gmra.mxu0 %v3611
    %v7572 = vpop.f32.mrf.mxu0
    %v7573 = vadd.f32 %v7460, %v7572
    %7574 = vmatmul.f32.gmra.mxu0 %v3615
    %v7575 = vpop.f32.mrf.mxu0
    %v7576 = vadd.f32 %v7463, %v7575
    %7577 = vmatmul.f32.gmra.mxu0 %v3619
    %v7578 = vpop.f32.mrf.mxu0
    %v7579 = vadd.f32 %v7466, %v7578
    %7580 = vmatmul.f32.gmra.mxu0 %v3623
    %v7581 = vpop.f32.mrf.mxu0
    %v7582 = vadd.f32 %v7469, %v7581
    %7583 = vmatmul.f32.gmra.mxu0 %v3627
    %v7584 = vpop.f32.mrf.mxu0
    %v7585 = vadd.f32 %v7472, %v7584
    %7586 = vmatmul.f32.gmra.mxu0 %v3631
    %v7587 = vpop.f32.mrf.mxu0
    %v7588 = vadd.f32 %v7475, %v7587
    %7589 = vmatmul.f32.gmra.mxu0 %v3635
    %v7590 = vpop.f32.mrf.mxu0
    %v7591 = vadd.f32 %v7478, %v7590
    %7592 = vmatmul.f32.gmra.mxu0 %v3639
    %v7593 = vpop.f32.mrf.mxu0
    %v7594 = vadd.f32 %v7481, %v7593
    %7595 = vmatmul.f32.gmra.mxu0 %v3643
    %v7596 = vpop.f32.mrf.mxu0
    %v7597 = vadd.f32 %v7484, %v7596
    %7598 = vmatmul.f32.gmra.mxu0 %v3647
    %v7599 = vpop.f32.mrf.mxu0
    %v7600 = vadd.f32 %v7487, %v7599
    %7601 = vmatmul.f32.gmra.mxu0 %v3651
    %v7602 = vpop.f32.mrf.mxu0
    %v7603 = vadd.f32 %v7490, %v7602
    %7604 = vmatmul.f32.gmra.mxu0 %v3655
    %v7605 = vpop.f32.mrf.mxu0
    %v7606 = vadd.f32 %v7493, %v7605
    %7607 = vmatmul.f32.gmra.mxu0 %v3659
    %v7608 = vpop.f32.mrf.mxu0
    %v7609 = vadd.f32 %v7496, %v7608
    %7610 = vmatmul.f32.gmra.mxu0 %v3663
    %v7611 = vpop.f32.mrf.mxu0
    %v7612 = vadd.f32 %v7499, %v7611
    %7613 = vmatmul.f32.gmra.mxu0 %v3667
    %v7614 = vpop.f32.mrf.mxu0
    %v7615 = vadd.f32 %v7502, %v7614
    %7616 = vmatmul.f32.gmra.mxu0 %v3671
    %v7617 = vpop.f32.mrf.mxu0
    %v7618 = vadd.f32 %v7505, %v7617
    %7619 = vmatmul.f32.gmra.mxu0 %v3675
    %v7620 = vpop.f32.mrf.mxu0
    %v7621 = vadd.f32 %v7508, %v7620
    %7622 = vmatmul.f32.gmra.mxu0 %v3679
    %v7623 = vpop.f32.mrf.mxu0
    %v7624 = vadd.f32 %v7511, %v7623
    %7625 = vmatmul.f32.gmra.mxu0 %v3683
    %v7626 = vpop.f32.mrf.mxu0
    %v7627 = vadd.f32 %v7514, %v7626
    %7628 = vmatmul.f32.gmra.mxu0 %v3687
    %v7629 = vpop.f32.mrf.mxu0
    %v7630 = vadd.f32 %v7517, %v7629
    %7631 = vmatmul.f32.gmra.mxu0 %v3691
    %v7632 = vpop.f32.mrf.mxu0
    %v7633 = vadd.f32 %v7520, %v7632
    %7634 = vmatmul.f32.gmra.mxu0 %v3695
    %v7635 = vpop.f32.mrf.mxu0
    %v7636 = vadd.f32 %v7523, %v7635
    %7637 = vmatmul.f32.gmra.mxu0 %v3699
    %v7638 = vpop.f32.mrf.mxu0
    %v7639 = vadd.f32 %v7526, %v7638
    %7640 = vmatmul.f32.gmra.mxu0 %v3703
    %v7641 = vpop.f32.mrf.mxu0
    %v7642 = vadd.f32 %v7529, %v7641
    %7643 = vmatmul.f32.gmra.mxu0 %v3707
    %v7644 = vpop.f32.mrf.mxu0
    %v7645 = vadd.f32 %v7532, %v7644
    %7646 = vmatmul.f32.gmra.mxu0 %v3711
    %v7647 = vpop.f32.mrf.mxu0
    %v7648 = vadd.f32 %v7535, %v7647
    %7649 = vmatmul.f32.gmra.mxu0 %v3715
    %v7650 = vpop.f32.mrf.mxu0
    %v7651 = vadd.f32 %v7538, %v7650
    %7652 = vmatmul.f32.gmra.mxu0 %v3719
    %v7653 = vpop.f32.mrf.mxu0
    %v7654 = vadd.f32 %v7541, %v7653
    %7655 = vmatmul.f32.gmra.mxu0 %v3723
    %v7656 = vpop.f32.mrf.mxu0
    %v7657 = vadd.f32 %v7544, %v7656
    %7658 = vmatmul.f32.gmra.mxu0 %v3727
    %v7659 = vpop.f32.mrf.mxu0
    %v7660 = vadd.f32 %v7547, %v7659
    %7661 = vmatmul.f32.gmra.mxu0 %v3731
    %v7662 = vpop.f32.mrf.mxu0
    %v7663 = vadd.f32 %v7550, %v7662
    %7664 = vmatmul.f32.gmra.mxu0 %v3735
    %v7665 = vpop.f32.mrf.mxu0
    %v7666 = vadd.f32 %v7553, %v7665
    %7667 = vdwg.mxu0
    %7668 = vmatpush.msra.mxu0 %v4119
    %7669 = vmatpush.msra.mxu0 %v4111
    %7670 = vmatpush.msra.mxu0 %v4103
    %7671 = vmatpush.msra.mxu0 %v4095
    %7672 = vmatpush.msra.mxu0 %v4087
    %7673 = vmatpush.msra.mxu0 %v4079
    %7674 = vmatpush.msra.mxu0 %v4071
    %7675 = vmatpush.msra.mxu0 %v4063
    %7676 = vmatpush.msra.mxu0 %v4055
    %7677 = vmatpush.msra.mxu0 %v4047
    %7678 = vmatpush.msra.mxu0 %v4039
    %7679 = vmatpush.msra.mxu0 %v4031
    %7680 = vmatpush.msra.mxu0 %v4023
    %7681 = vmatpush.msra.mxu0 %v4015
    %7682 = vmatpush.msra.mxu0 %v4007
    %7683 = vmatpush.msra.mxu0 %v3999
    %7684 = vmatmul.f32.gmra.mxu0 %v3608
    %v7685 = vpop.f32.mrf.mxu0
    %v7686 = vadd.f32 0.0, %v7685
    %7687 = vmatmul.f32.gmra.mxu0 %v3612
    %v7688 = vpop.f32.mrf.mxu0
    %v7689 = vadd.f32 0.0, %v7688
    %7690 = vmatmul.f32.gmra.mxu0 %v3616
    %v7691 = vpop.f32.mrf.mxu0
    %v7692 = vadd.f32 0.0, %v7691
    %7693 = vmatmul.f32.gmra.mxu0 %v3620
    %v7694 = vpop.f32.mrf.mxu0
    %v7695 = vadd.f32 0.0, %v7694
    %7696 = vmatmul.f32.gmra.mxu0 %v3624
    %v7697 = vpop.f32.mrf.mxu0
    %v7698 = vadd.f32 0.0, %v7697
    %7699 = vmatmul.f32.gmra.mxu0 %v3628
    %v7700 = vpop.f32.mrf.mxu0
    %v7701 = vadd.f32 0.0, %v7700
    %7702 = vmatmul.f32.gmra.mxu0 %v3632
    %v7703 = vpop.f32.mrf.mxu0
    %v7704 = vadd.f32 0.0, %v7703
    %7705 = vmatmul.f32.gmra.mxu0 %v3636
    %v7706 = vpop.f32.mrf.mxu0
    %v7707 = vadd.f32 0.0, %v7706
    %7708 = vmatmul.f32.gmra.mxu0 %v3640
    %v7709 = vpop.f32.mrf.mxu0
    %v7710 = vadd.f32 0.0, %v7709
    %7711 = vmatmul.f32.gmra.mxu0 %v3644
    %v7712 = vpop.f32.mrf.mxu0
    %v7713 = vadd.f32 0.0, %v7712
    %7714 = vmatmul.f32.gmra.mxu0 %v3648
    %v7715 = vpop.f32.mrf.mxu0
    %v7716 = vadd.f32 0.0, %v7715
    %7717 = vmatmul.f32.gmra.mxu0 %v3652
    %v7718 = vpop.f32.mrf.mxu0
    %v7719 = vadd.f32 0.0, %v7718
    %7720 = vmatmul.f32.gmra.mxu0 %v3656
    %v7721 = vpop.f32.mrf.mxu0
    %v7722 = vadd.f32 0.0, %v7721
    %7723 = vmatmul.f32.gmra.mxu0 %v3660
    %v7724 = vpop.f32.mrf.mxu0
    %v7725 = vadd.f32 0.0, %v7724
    %7726 = vmatmul.f32.gmra.mxu0 %v3664
    %v7727 = vpop.f32.mrf.mxu0
    %v7728 = vadd.f32 0.0, %v7727
    %7729 = vmatmul.f32.gmra.mxu0 %v3668
    %v7730 = vpop.f32.mrf.mxu0
    %v7731 = vadd.f32 0.0, %v7730
    %7732 = vmatmul.f32.gmra.mxu0 %v3672
    %v7733 = vpop.f32.mrf.mxu0
    %v7734 = vadd.f32 0.0, %v7733
    %7735 = vmatmul.f32.gmra.mxu0 %v3676
    %v7736 = vpop.f32.mrf.mxu0
    %v7737 = vadd.f32 0.0, %v7736
    %7738 = vmatmul.f32.gmra.mxu0 %v3680
    %v7739 = vpop.f32.mrf.mxu0
    %v7740 = vadd.f32 0.0, %v7739
    %7741 = vmatmul.f32.gmra.mxu0 %v3684
    %v7742 = vpop.f32.mrf.mxu0
    %v7743 = vadd.f32 0.0, %v7742
    %7744 = vmatmul.f32.gmra.mxu0 %v3688
    %v7745 = vpop.f32.mrf.mxu0
    %v7746 = vadd.f32 0.0, %v7745
    %7747 = vmatmul.f32.gmra.mxu0 %v3692
    %v7748 = vpop.f32.mrf.mxu0
    %v7749 = vadd.f32 0.0, %v7748
    %7750 = vmatmul.f32.gmra.mxu0 %v3696
    %v7751 = vpop.f32.mrf.mxu0
    %v7752 = vadd.f32 0.0, %v7751
    %7753 = vmatmul.f32.gmra.mxu0 %v3700
    %v7754 = vpop.f32.mrf.mxu0
    %v7755 = vadd.f32 0.0, %v7754
    %7756 = vmatmul.f32.gmra.mxu0 %v3704
    %v7757 = vpop.f32.mrf.mxu0
    %v7758 = vadd.f32 0.0, %v7757
    %7759 = vmatmul.f32.gmra.mxu0 %v3708
    %v7760 = vpop.f32.mrf.mxu0
    %v7761 = vadd.f32 0.0, %v7760
    %7762 = vmatmul.f32.gmra.mxu0 %v3712
    %v7763 = vpop.f32.mrf.mxu0
    %v7764 = vadd.f32 0.0, %v7763
    %7765 = vmatmul.f32.gmra.mxu0 %v3716
    %v7766 = vpop.f32.mrf.mxu0
    %v7767 = vadd.f32 0.0, %v7766
    %7768 = vmatmul.f32.gmra.mxu0 %v3720
    %v7769 = vpop.f32.mrf.mxu0
    %v7770 = vadd.f32 0.0, %v7769
    %7771 = vmatmul.f32.gmra.mxu0 %v3724
    %v7772 = vpop.f32.mrf.mxu0
    %v7773 = vadd.f32 0.0, %v7772
    %7774 = vmatmul.f32.gmra.mxu0 %v3728
    %v7775 = vpop.f32.mrf.mxu0
    %v7776 = vadd.f32 0.0, %v7775
    %7777 = vmatmul.f32.gmra.mxu0 %v3732
    %v7778 = vpop.f32.mrf.mxu0
    %v7779 = vadd.f32 0.0, %v7778
    %7780 = vdwg.mxu0
    %7781 = vmatpush.msra.mxu0 %v4247
    %7782 = vmatpush.msra.mxu0 %v4239
    %7783 = vmatpush.msra.mxu0 %v4231
    %7784 = vmatpush.msra.mxu0 %v4223
    %7785 = vmatpush.msra.mxu0 %v4215
    %7786 = vmatpush.msra.mxu0 %v4207
    %7787 = vmatpush.msra.mxu0 %v4199
    %7788 = vmatpush.msra.mxu0 %v4191
    %7789 = vmatpush.msra.mxu0 %v4183
    %7790 = vmatpush.msra.mxu0 %v4175
    %7791 = vmatpush.msra.mxu0 %v4167
    %7792 = vmatpush.msra.mxu0 %v4159
    %7793 = vmatpush.msra.mxu0 %v4151
    %7794 = vmatpush.msra.mxu0 %v4143
    %7795 = vmatpush.msra.mxu0 %v4135
    %7796 = vmatpush.msra.mxu0 %v4127
    %7797 = vmatmul.f32.gmra.mxu0 %v3609
    %v7798 = vpop.f32.mrf.mxu0
    %v7799 = vadd.f32 %v7686, %v7798
    %7800 = vmatmul.f32.gmra.mxu0 %v3613
    %v7801 = vpop.f32.mrf.mxu0
    %v7802 = vadd.f32 %v7689, %v7801
    %7803 = vmatmul.f32.gmra.mxu0 %v3617
    %v7804 = vpop.f32.mrf.mxu0
    %v7805 = vadd.f32 %v7692, %v7804
    %7806 = vmatmul.f32.gmra.mxu0 %v3621
    %v7807 = vpop.f32.mrf.mxu0
    %v7808 = vadd.f32 %v7695, %v7807
    %7809 = vmatmul.f32.gmra.mxu0 %v3625
    %v7810 = vpop.f32.mrf.mxu0
    %v7811 = vadd.f32 %v7698, %v7810
    %7812 = vmatmul.f32.gmra.mxu0 %v3629
    %v7813 = vpop.f32.mrf.mxu0
    %v7814 = vadd.f32 %v7701, %v7813
    %7815 = vmatmul.f32.gmra.mxu0 %v3633
    %v7816 = vpop.f32.mrf.mxu0
    %v7817 = vadd.f32 %v7704, %v7816
    %7818 = vmatmul.f32.gmra.mxu0 %v3637
    %v7819 = vpop.f32.mrf.mxu0
    %v7820 = vadd.f32 %v7707, %v7819
    %7821 = vmatmul.f32.gmra.mxu0 %v3641
    %v7822 = vpop.f32.mrf.mxu0
    %v7823 = vadd.f32 %v7710, %v7822
    %7824 = vmatmul.f32.gmra.mxu0 %v3645
    %v7825 = vpop.f32.mrf.mxu0
    %v7826 = vadd.f32 %v7713, %v7825
    %7827 = vmatmul.f32.gmra.mxu0 %v3649
    %v7828 = vpop.f32.mrf.mxu0
    %v7829 = vadd.f32 %v7716, %v7828
    %7830 = vmatmul.f32.gmra.mxu0 %v3653
    %v7831 = vpop.f32.mrf.mxu0
    %v7832 = vadd.f32 %v7719, %v7831
    %7833 = vmatmul.f32.gmra.mxu0 %v3657
    %v7834 = vpop.f32.mrf.mxu0
    %v7835 = vadd.f32 %v7722, %v7834
    %7836 = vmatmul.f32.gmra.mxu0 %v3661
    %v7837 = vpop.f32.mrf.mxu0
    %v7838 = vadd.f32 %v7725, %v7837
    %7839 = vmatmul.f32.gmra.mxu0 %v3665
    %v7840 = vpop.f32.mrf.mxu0
    %v7841 = vadd.f32 %v7728, %v7840
    %7842 = vmatmul.f32.gmra.mxu0 %v3669
    %v7843 = vpop.f32.mrf.mxu0
    %v7844 = vadd.f32 %v7731, %v7843
    %7845 = vmatmul.f32.gmra.mxu0 %v3673
    %v7846 = vpop.f32.mrf.mxu0
    %v7847 = vadd.f32 %v7734, %v7846
    %7848 = vmatmul.f32.gmra.mxu0 %v3677
    %v7849 = vpop.f32.mrf.mxu0
    %v7850 = vadd.f32 %v7737, %v7849
    %7851 = vmatmul.f32.gmra.mxu0 %v3681
    %v7852 = vpop.f32.mrf.mxu0
    %v7853 = vadd.f32 %v7740, %v7852
    %7854 = vmatmul.f32.gmra.mxu0 %v3685
    %v7855 = vpop.f32.mrf.mxu0
    %v7856 = vadd.f32 %v7743, %v7855
    %7857 = vmatmul.f32.gmra.mxu0 %v3689
    %v7858 = vpop.f32.mrf.mxu0
    %v7859 = vadd.f32 %v7746, %v7858
    %7860 = vmatmul.f32.gmra.mxu0 %v3693
    %v7861 = vpop.f32.mrf.mxu0
    %v7862 = vadd.f32 %v7749, %v7861
    %7863 = vmatmul.f32.gmra.mxu0 %v3697
    %v7864 = vpop.f32.mrf.mxu0
    %v7865 = vadd.f32 %v7752, %v7864
    %7866 = vmatmul.f32.gmra.mxu0 %v3701
    %v7867 = vpop.f32.mrf.mxu0
    %v7868 = vadd.f32 %v7755, %v7867
    %7869 = vmatmul.f32.gmra.mxu0 %v3705
    %v7870 = vpop.f32.mrf.mxu0
    %v7871 = vadd.f32 %v7758, %v7870
    %7872 = vmatmul.f32.gmra.mxu0 %v3709
    %v7873 = vpop.f32.mrf.mxu0
    %v7874 = vadd.f32 %v7761, %v7873
    %7875 = vmatmul.f32.gmra.mxu0 %v3713
    %v7876 = vpop.f32.mrf.mxu0
    %v7877 = vadd.f32 %v7764, %v7876
    %7878 = vmatmul.f32.gmra.mxu0 %v3717
    %v7879 = vpop.f32.mrf.mxu0
    %v7880 = vadd.f32 %v7767, %v7879
    %7881 = vmatmul.f32.gmra.mxu0 %v3721
    %v7882 = vpop.f32.mrf.mxu0
    %v7883 = vadd.f32 %v7770, %v7882
    %7884 = vmatmul.f32.gmra.mxu0 %v3725
    %v7885 = vpop.f32.mrf.mxu0
    %v7886 = vadd.f32 %v7773, %v7885
    %7887 = vmatmul.f32.gmra.mxu0 %v3729
    %v7888 = vpop.f32.mrf.mxu0
    %v7889 = vadd.f32 %v7776, %v7888
    %7890 = vmatmul.f32.gmra.mxu0 %v3733
    %v7891 = vpop.f32.mrf.mxu0
    %v7892 = vadd.f32 %v7779, %v7891
    %7893 = vdwg.mxu0
    %7894 = vmatpush.msra.mxu0 %v4375
    %7895 = vmatpush.msra.mxu0 %v4367
    %7896 = vmatpush.msra.mxu0 %v4359
    %7897 = vmatpush.msra.mxu0 %v4351
    %7898 = vmatpush.msra.mxu0 %v4343
    %7899 = vmatpush.msra.mxu0 %v4335
    %7900 = vmatpush.msra.mxu0 %v4327
    %7901 = vmatpush.msra.mxu0 %v4319
    %7902 = vmatpush.msra.mxu0 %v4311
    %7903 = vmatpush.msra.mxu0 %v4303
    %7904 = vmatpush.msra.mxu0 %v4295
    %7905 = vmatpush.msra.mxu0 %v4287
    %7906 = vmatpush.msra.mxu0 %v4279
    %7907 = vmatpush.msra.mxu0 %v4271
    %7908 = vmatpush.msra.mxu0 %v4263
    %7909 = vmatpush.msra.mxu0 %v4255
    %7910 = vmatmul.f32.gmra.mxu0 %v3610
    %v7911 = vpop.f32.mrf.mxu0
    %v7912 = vadd.f32 %v7799, %v7911
    %7913 = vmatmul.f32.gmra.mxu0 %v3614
    %v7914 = vpop.f32.mrf.mxu0
    %v7915 = vadd.f32 %v7802, %v7914
    %7916 = vmatmul.f32.gmra.mxu0 %v3618
    %v7917 = vpop.f32.mrf.mxu0
    %v7918 = vadd.f32 %v7805, %v7917
    %7919 = vmatmul.f32.gmra.mxu0 %v3622
    %v7920 = vpop.f32.mrf.mxu0
    %v7921 = vadd.f32 %v7808, %v7920
    %7922 = vmatmul.f32.gmra.mxu0 %v3626
    %v7923 = vpop.f32.mrf.mxu0
    %v7924 = vadd.f32 %v7811, %v7923
    %7925 = vmatmul.f32.gmra.mxu0 %v3630
    %v7926 = vpop.f32.mrf.mxu0
    %v7927 = vadd.f32 %v7814, %v7926
    %7928 = vmatmul.f32.gmra.mxu0 %v3634
    %v7929 = vpop.f32.mrf.mxu0
    %v7930 = vadd.f32 %v7817, %v7929
    %7931 = vmatmul.f32.gmra.mxu0 %v3638
    %v7932 = vpop.f32.mrf.mxu0
    %v7933 = vadd.f32 %v7820, %v7932
    %7934 = vmatmul.f32.gmra.mxu0 %v3642
    %v7935 = vpop.f32.mrf.mxu0
    %v7936 = vadd.f32 %v7823, %v7935
    %7937 = vmatmul.f32.gmra.mxu0 %v3646
    %v7938 = vpop.f32.mrf.mxu0
    %v7939 = vadd.f32 %v7826, %v7938
    %7940 = vmatmul.f32.gmra.mxu0 %v3650
    %v7941 = vpop.f32.mrf.mxu0
    %v7942 = vadd.f32 %v7829, %v7941
    %7943 = vmatmul.f32.gmra.mxu0 %v3654
    %v7944 = vpop.f32.mrf.mxu0
    %v7945 = vadd.f32 %v7832, %v7944
    %7946 = vmatmul.f32.gmra.mxu0 %v3658
    %v7947 = vpop.f32.mrf.mxu0
    %v7948 = vadd.f32 %v7835, %v7947
    %7949 = vmatmul.f32.gmra.mxu0 %v3662
    %v7950 = vpop.f32.mrf.mxu0
    %v7951 = vadd.f32 %v7838, %v7950
    %7952 = vmatmul.f32.gmra.mxu0 %v3666
    %v7953 = vpop.f32.mrf.mxu0
    %v7954 = vadd.f32 %v7841, %v7953
    %7955 = vmatmul.f32.gmra.mxu0 %v3670
    %v7956 = vpop.f32.mrf.mxu0
    %v7957 = vadd.f32 %v7844, %v7956
    %7958 = vmatmul.f32.gmra.mxu0 %v3674
    %v7959 = vpop.f32.mrf.mxu0
    %v7960 = vadd.f32 %v7847, %v7959
    %7961 = vmatmul.f32.gmra.mxu0 %v3678
    %v7962 = vpop.f32.mrf.mxu0
    %v7963 = vadd.f32 %v7850, %v7962
    %7964 = vmatmul.f32.gmra.mxu0 %v3682
    %v7965 = vpop.f32.mrf.mxu0
    %v7966 = vadd.f32 %v7853, %v7965
    %7967 = vmatmul.f32.gmra.mxu0 %v3686
    %v7968 = vpop.f32.mrf.mxu0
    %v7969 = vadd.f32 %v7856, %v7968
    %7970 = vmatmul.f32.gmra.mxu0 %v3690
    %v7971 = vpop.f32.mrf.mxu0
    %v7972 = vadd.f32 %v7859, %v7971
    %7973 = vmatmul.f32.gmra.mxu0 %v3694
    %v7974 = vpop.f32.mrf.mxu0
    %v7975 = vadd.f32 %v7862, %v7974
    %7976 = vmatmul.f32.gmra.mxu0 %v3698
    %v7977 = vpop.f32.mrf.mxu0
    %v7978 = vadd.f32 %v7865, %v7977
    %7979 = vmatmul.f32.gmra.mxu0 %v3702
    %v7980 = vpop.f32.mrf.mxu0
    %v7981 = vadd.f32 %v7868, %v7980
    %7982 = vmatmul.f32.gmra.mxu0 %v3706
    %v7983 = vpop.f32.mrf.mxu0
    %v7984 = vadd.f32 %v7871, %v7983
    %7985 = vmatmul.f32.gmra.mxu0 %v3710
    %v7986 = vpop.f32.mrf.mxu0
    %v7987 = vadd.f32 %v7874, %v7986
    %7988 = vmatmul.f32.gmra.mxu0 %v3714
    %v7989 = vpop.f32.mrf.mxu0
    %v7990 = vadd.f32 %v7877, %v7989
    %7991 = vmatmul.f32.gmra.mxu0 %v3718
    %v7992 = vpop.f32.mrf.mxu0
    %v7993 = vadd.f32 %v7880, %v7992
    %7994 = vmatmul.f32.gmra.mxu0 %v3722
    %v7995 = vpop.f32.mrf.mxu0
    %v7996 = vadd.f32 %v7883, %v7995
    %7997 = vmatmul.f32.gmra.mxu0 %v3726
    %v7998 = vpop.f32.mrf.mxu0
    %v7999 = vadd.f32 %v7886, %v7998
    %8000 = vmatmul.f32.gmra.mxu0 %v3730
    %v8001 = vpop.f32.mrf.mxu0
    %v8002 = vadd.f32 %v7889, %v8001
    %8003 = vmatmul.f32.gmra.mxu0 %v3734
    %v8004 = vpop.f32.mrf.mxu0
    %v8005 = vadd.f32 %v7892, %v8004
    %8006 = vdwg.mxu0
    %8007 = vmatpush.msra.mxu0 %v4503
    %8008 = vmatpush.msra.mxu0 %v4495
    %8009 = vmatpush.msra.mxu0 %v4487
    %8010 = vmatpush.msra.mxu0 %v4479
    %8011 = vmatpush.msra.mxu0 %v4471
    %8012 = vmatpush.msra.mxu0 %v4463
    %8013 = vmatpush.msra.mxu0 %v4455
    %8014 = vmatpush.msra.mxu0 %v4447
    %8015 = vmatpush.msra.mxu0 %v4439
    %8016 = vmatpush.msra.mxu0 %v4431
    %8017 = vmatpush.msra.mxu0 %v4423
    %8018 = vmatpush.msra.mxu0 %v4415
    %8019 = vmatpush.msra.mxu0 %v4407
    %8020 = vmatpush.msra.mxu0 %v4399
    %8021 = vmatpush.msra.mxu0 %v4391
    %8022 = vmatpush.msra.mxu0 %v4383
    %8023 = vmatmul.f32.gmra.mxu0 %v3611
    %v8024 = vpop.f32.mrf.mxu0
    %v8025 = vadd.f32 %v7912, %v8024
    %8026 = vmatmul.f32.gmra.mxu0 %v3615
    %v8027 = vpop.f32.mrf.mxu0
    %v8028 = vadd.f32 %v7915, %v8027
    %8029 = vmatmul.f32.gmra.mxu0 %v3619
    %v8030 = vpop.f32.mrf.mxu0
    %v8031 = vadd.f32 %v7918, %v8030
    %8032 = vmatmul.f32.gmra.mxu0 %v3623
    %v8033 = vpop.f32.mrf.mxu0
    %v8034 = vadd.f32 %v7921, %v8033
    %8035 = vmatmul.f32.gmra.mxu0 %v3627
    %v8036 = vpop.f32.mrf.mxu0
    %v8037 = vadd.f32 %v7924, %v8036
    %8038 = vmatmul.f32.gmra.mxu0 %v3631
    %v8039 = vpop.f32.mrf.mxu0
    %v8040 = vadd.f32 %v7927, %v8039
    %8041 = vmatmul.f32.gmra.mxu0 %v3635
    %v8042 = vpop.f32.mrf.mxu0
    %v8043 = vadd.f32 %v7930, %v8042
    %8044 = vmatmul.f32.gmra.mxu0 %v3639
    %v8045 = vpop.f32.mrf.mxu0
    %v8046 = vadd.f32 %v7933, %v8045
    %8047 = vmatmul.f32.gmra.mxu0 %v3643
    %v8048 = vpop.f32.mrf.mxu0
    %v8049 = vadd.f32 %v7936, %v8048
    %8050 = vmatmul.f32.gmra.mxu0 %v3647
    %v8051 = vpop.f32.mrf.mxu0
    %v8052 = vadd.f32 %v7939, %v8051
    %8053 = vmatmul.f32.gmra.mxu0 %v3651
    %v8054 = vpop.f32.mrf.mxu0
    %v8055 = vadd.f32 %v7942, %v8054
    %8056 = vmatmul.f32.gmra.mxu0 %v3655
    %v8057 = vpop.f32.mrf.mxu0
    %v8058 = vadd.f32 %v7945, %v8057
    %8059 = vmatmul.f32.gmra.mxu0 %v3659
    %v8060 = vpop.f32.mrf.mxu0
    %v8061 = vadd.f32 %v7948, %v8060
    %8062 = vmatmul.f32.gmra.mxu0 %v3663
    %v8063 = vpop.f32.mrf.mxu0
    %v8064 = vadd.f32 %v7951, %v8063
    %8065 = vmatmul.f32.gmra.mxu0 %v3667
    %v8066 = vpop.f32.mrf.mxu0
    %v8067 = vadd.f32 %v7954, %v8066
    %8068 = vmatmul.f32.gmra.mxu0 %v3671
    %v8069 = vpop.f32.mrf.mxu0
    %v8070 = vadd.f32 %v7957, %v8069
    %8071 = vmatmul.f32.gmra.mxu0 %v3675
    %v8072 = vpop.f32.mrf.mxu0
    %v8073 = vadd.f32 %v7960, %v8072
    %8074 = vmatmul.f32.gmra.mxu0 %v3679
    %v8075 = vpop.f32.mrf.mxu0
    %v8076 = vadd.f32 %v7963, %v8075
    %8077 = vmatmul.f32.gmra.mxu0 %v3683
    %v8078 = vpop.f32.mrf.mxu0
    %v8079 = vadd.f32 %v7966, %v8078
    %8080 = vmatmul.f32.gmra.mxu0 %v3687
    %v8081 = vpop.f32.mrf.mxu0
    %v8082 = vadd.f32 %v7969, %v8081
    %8083 = vmatmul.f32.gmra.mxu0 %v3691
    %v8084 = vpop.f32.mrf.mxu0
    %v8085 = vadd.f32 %v7972, %v8084
    %8086 = vmatmul.f32.gmra.mxu0 %v3695
    %v8087 = vpop.f32.mrf.mxu0
    %v8088 = vadd.f32 %v7975, %v8087
    %8089 = vmatmul.f32.gmra.mxu0 %v3699
    %v8090 = vpop.f32.mrf.mxu0
    %v8091 = vadd.f32 %v7978, %v8090
    %8092 = vmatmul.f32.gmra.mxu0 %v3703
    %v8093 = vpop.f32.mrf.mxu0
    %v8094 = vadd.f32 %v7981, %v8093
    %8095 = vmatmul.f32.gmra.mxu0 %v3707
    %v8096 = vpop.f32.mrf.mxu0
    %v8097 = vadd.f32 %v7984, %v8096
    %8098 = vmatmul.f32.gmra.mxu0 %v3711
    %v8099 = vpop.f32.mrf.mxu0
    %v8100 = vadd.f32 %v7987, %v8099
    %8101 = vmatmul.f32.gmra.mxu0 %v3715
    %v8102 = vpop.f32.mrf.mxu0
    %v8103 = vadd.f32 %v7990, %v8102
    %8104 = vmatmul.f32.gmra.mxu0 %v3719
    %v8105 = vpop.f32.mrf.mxu0
    %v8106 = vadd.f32 %v7993, %v8105
    %8107 = vmatmul.f32.gmra.mxu0 %v3723
    %v8108 = vpop.f32.mrf.mxu0
    %v8109 = vadd.f32 %v7996, %v8108
    %8110 = vmatmul.f32.gmra.mxu0 %v3727
    %v8111 = vpop.f32.mrf.mxu0
    %v8112 = vadd.f32 %v7999, %v8111
    %8113 = vmatmul.f32.gmra.mxu0 %v3731
    %v8114 = vpop.f32.mrf.mxu0
    %v8115 = vadd.f32 %v8002, %v8114
    %8116 = vmatmul.f32.gmra.mxu0 %v3735
    %v8117 = vpop.f32.mrf.mxu0
    %v8118 = vadd.f32 %v8005, %v8117
    %8119 = vdwg.mxu0
    %v8120 = vadd.f32 %v4861, %v4864
    %v8121 = vadd.f32 %v8120, %v4867
    %v8122 = vadd.f32 %v8121, %v4870
    %v8123 = vadd.f32 %v8122, %v4873
    %v8124 = vadd.f32 %v8123, %v4876
    %v8125 = vadd.f32 %v8124, %v4879
    %v8126 = vadd.f32 %v8125, %v4882
    %v8127 = vadd.f32 %v8126, %v4885
    %v8128 = vadd.f32 %v8127, %v4888
    %v8129 = vadd.f32 %v8128, %v4891
    %v8130 = vadd.f32 %v8129, %v4894
    %v8131 = vadd.f32 %v8130, %v4897
    %v8132 = vadd.f32 %v8131, %v4900
    %v8133 = vadd.f32 %v8132, %v4903
    %v8134 = vadd.f32 %v8133, %v4906
    %v8135 = vadd.f32 %v8134, %v4909
    %v8136 = vadd.f32 %v8135, %v4912
    %v8137 = vadd.f32 %v8136, %v4915
    %v8138 = vadd.f32 %v8137, %v4918
    %v8139 = vadd.f32 %v8138, %v4921
    %v8140 = vadd.f32 %v8139, %v4924
    %v8141 = vadd.f32 %v8140, %v4927
    %v8142 = vadd.f32 %v8141, %v4930
    %v8143 = vadd.f32 %v8142, %v4933
    %v8144 = vadd.f32 %v8143, %v4936
    %v8145 = vadd.f32 %v8144, %v4939
    %v8146 = vadd.f32 %v8145, %v4942
    %v8147 = vadd.f32 %v8146, %v4945
    %v8148 = vadd.f32 %v8147, %v4948
    %v8149 = vadd.f32 %v8148, %v4951
    %v8150 = vadd.f32 %v8149, %v4954
    %v8151 = vrot.slane %v8150, 4
    %v8152 = vadd.f32 %v8150, %v8151
    %v8153 = vrot.slane %v8152, 2
    %v8154 = vadd.f32 %v8152, %v8153
    %v8155 = vrot.slane %v8154, 1
    %v8156 = vadd.f32 %v8154, %v8155
    %v8157 = vadd.f32 %v5313, %v5316
    %v8158 = vadd.f32 %v8157, %v5319
    %v8159 = vadd.f32 %v8158, %v5322
    %v8160 = vadd.f32 %v8159, %v5325
    %v8161 = vadd.f32 %v8160, %v5328
    %v8162 = vadd.f32 %v8161, %v5331
    %v8163 = vadd.f32 %v8162, %v5334
    %v8164 = vadd.f32 %v8163, %v5337
    %v8165 = vadd.f32 %v8164, %v5340
    %v8166 = vadd.f32 %v8165, %v5343
    %v8167 = vadd.f32 %v8166, %v5346
    %v8168 = vadd.f32 %v8167, %v5349
    %v8169 = vadd.f32 %v8168, %v5352
    %v8170 = vadd.f32 %v8169, %v5355
    %v8171 = vadd.f32 %v8170, %v5358
    %v8172 = vadd.f32 %v8171, %v5361
    %v8173 = vadd.f32 %v8172, %v5364
    %v8174 = vadd.f32 %v8173, %v5367
    %v8175 = vadd.f32 %v8174, %v5370
    %v8176 = vadd.f32 %v8175, %v5373
    %v8177 = vadd.f32 %v8176, %v5376
    %v8178 = vadd.f32 %v8177, %v5379
    %v8179 = vadd.f32 %v8178, %v5382
    %v8180 = vadd.f32 %v8179, %v5385
    %v8181 = vadd.f32 %v8180, %v5388
    %v8182 = vadd.f32 %v8181, %v5391
    %v8183 = vadd.f32 %v8182, %v5394
    %v8184 = vadd.f32 %v8183, %v5397
    %v8185 = vadd.f32 %v8184, %v5400
    %v8186 = vadd.f32 %v8185, %v5403
    %v8187 = vadd.f32 %v8186, %v5406
    %v8188 = vrot.slane %v8187, 4
    %v8189 = vadd.f32 %v8187, %v8188
    %v8190 = vrot.slane %v8189, 2
    %v8191 = vadd.f32 %v8189, %v8190
    %v8192 = vrot.slane %v8191, 1
    %v8193 = vadd.f32 %v8191, %v8192
    %v8194 = vadd.f32 %v5765, %v5768
    %v8195 = vadd.f32 %v8194, %v5771
    %v8196 = vadd.f32 %v8195, %v5774
    %v8197 = vadd.f32 %v8196, %v5777
    %v8198 = vadd.f32 %v8197, %v5780
    %v8199 = vadd.f32 %v8198, %v5783
    %v8200 = vadd.f32 %v8199, %v5786
    %v8201 = vadd.f32 %v8200, %v5789
    %v8202 = vadd.f32 %v8201, %v5792
    %v8203 = vadd.f32 %v8202, %v5795
    %v8204 = vadd.f32 %v8203, %v5798
    %v8205 = vadd.f32 %v8204, %v5801
    %v8206 = vadd.f32 %v8205, %v5804
    %v8207 = vadd.f32 %v8206, %v5807
    %v8208 = vadd.f32 %v8207, %v5810
    %v8209 = vadd.f32 %v8208, %v5813
    %v8210 = vadd.f32 %v8209, %v5816
    %v8211 = vadd.f32 %v8210, %v5819
    %v8212 = vadd.f32 %v8211, %v5822
    %v8213 = vadd.f32 %v8212, %v5825
    %v8214 = vadd.f32 %v8213, %v5828
    %v8215 = vadd.f32 %v8214, %v5831
    %v8216 = vadd.f32 %v8215, %v5834
    %v8217 = vadd.f32 %v8216, %v5837
    %v8218 = vadd.f32 %v8217, %v5840
    %v8219 = vadd.f32 %v8218, %v5843
    %v8220 = vadd.f32 %v8219, %v5846
    %v8221 = vadd.f32 %v8220, %v5849
    %v8222 = vadd.f32 %v8221, %v5852
    %v8223 = vadd.f32 %v8222, %v5855
    %v8224 = vadd.f32 %v8223, %v5858
    %v8225 = vrot.slane %v8224, 4
    %v8226 = vadd.f32 %v8224, %v8225
    %v8227 = vrot.slane %v8226, 2
    %v8228 = vadd.f32 %v8226, %v8227
    %v8229 = vrot.slane %v8228, 1
    %v8230 = vadd.f32 %v8228, %v8229
    %v8231 = vadd.f32 %v6217, %v6220
    %v8232 = vadd.f32 %v8231, %v6223
    %v8233 = vadd.f32 %v8232, %v6226
    %v8234 = vadd.f32 %v8233, %v6229
    %v8235 = vadd.f32 %v8234, %v6232
    %v8236 = vadd.f32 %v8235, %v6235
    %v8237 = vadd.f32 %v8236, %v6238
    %v8238 = vadd.f32 %v8237, %v6241
    %v8239 = vadd.f32 %v8238, %v6244
    %v8240 = vadd.f32 %v8239, %v6247
    %v8241 = vadd.f32 %v8240, %v6250
    %v8242 = vadd.f32 %v8241, %v6253
    %v8243 = vadd.f32 %v8242, %v6256
    %v8244 = vadd.f32 %v8243, %v6259
    %v8245 = vadd.f32 %v8244, %v6262
    %v8246 = vadd.f32 %v8245, %v6265
    %v8247 = vadd.f32 %v8246, %v6268
    %v8248 = vadd.f32 %v8247, %v6271
    %v8249 = vadd.f32 %v8248, %v6274
    %v8250 = vadd.f32 %v8249, %v6277
    %v8251 = vadd.f32 %v8250, %v6280
    %v8252 = vadd.f32 %v8251, %v6283
    %v8253 = vadd.f32 %v8252, %v6286
    %v8254 = vadd.f32 %v8253, %v6289
    %v8255 = vadd.f32 %v8254, %v6292
    %v8256 = vadd.f32 %v8255, %v6295
    %v8257 = vadd.f32 %v8256, %v6298
    %v8258 = vadd.f32 %v8257, %v6301
    %v8259 = vadd.f32 %v8258, %v6304
    %v8260 = vadd.f32 %v8259, %v6307
    %v8261 = vadd.f32 %v8260, %v6310
    %v8262 = vrot.slane %v8261, 4
    %v8263 = vadd.f32 %v8261, %v8262
    %v8264 = vrot.slane %v8263, 2
    %v8265 = vadd.f32 %v8263, %v8264
    %v8266 = vrot.slane %v8265, 1
    %v8267 = vadd.f32 %v8265, %v8266
    %v8268 = vadd.f32 %v6669, %v6672
    %v8269 = vadd.f32 %v8268, %v6675
    %v8270 = vadd.f32 %v8269, %v6678
    %v8271 = vadd.f32 %v8270, %v6681
    %v8272 = vadd.f32 %v8271, %v6684
    %v8273 = vadd.f32 %v8272, %v6687
    %v8274 = vadd.f32 %v8273, %v6690
    %v8275 = vadd.f32 %v8274, %v6693
    %v8276 = vadd.f32 %v8275, %v6696
    %v8277 = vadd.f32 %v8276, %v6699
    %v8278 = vadd.f32 %v8277, %v6702
    %v8279 = vadd.f32 %v8278, %v6705
    %v8280 = vadd.f32 %v8279, %v6708
    %v8281 = vadd.f32 %v8280, %v6711
    %v8282 = vadd.f32 %v8281, %v6714
    %v8283 = vadd.f32 %v8282, %v6717
    %v8284 = vadd.f32 %v8283, %v6720
    %v8285 = vadd.f32 %v8284, %v6723
    %v8286 = vadd.f32 %v8285, %v6726
    %v8287 = vadd.f32 %v8286, %v6729
    %v8288 = vadd.f32 %v8287, %v6732
    %v8289 = vadd.f32 %v8288, %v6735
    %v8290 = vadd.f32 %v8289, %v6738
    %v8291 = vadd.f32 %v8290, %v6741
    %v8292 = vadd.f32 %v8291, %v6744
    %v8293 = vadd.f32 %v8292, %v6747
    %v8294 = vadd.f32 %v8293, %v6750
    %v8295 = vadd.f32 %v8294, %v6753
    %v8296 = vadd.f32 %v8295, %v6756
    %v8297 = vadd.f32 %v8296, %v6759
    %v8298 = vadd.f32 %v8297, %v6762
    %v8299 = vrot.slane %v8298, 4
    %v8300 = vadd.f32 %v8298, %v8299
    %v8301 = vrot.slane %v8300, 2
    %v8302 = vadd.f32 %v8300, %v8301
    %v8303 = vrot.slane %v8302, 1
    %v8304 = vadd.f32 %v8302, %v8303
    %v8305 = vadd.f32 %v7121, %v7124
    %v8306 = vadd.f32 %v8305, %v7127
    %v8307 = vadd.f32 %v8306, %v7130
    %v8308 = vadd.f32 %v8307, %v7133
    %v8309 = vadd.f32 %v8308, %v7136
    %v8310 = vadd.f32 %v8309, %v7139
    %v8311 = vadd.f32 %v8310, %v7142
    %v8312 = vadd.f32 %v8311, %v7145
    %v8313 = vadd.f32 %v8312, %v7148
    %v8314 = vadd.f32 %v8313, %v7151
    %v8315 = vadd.f32 %v8314, %v7154
    %v8316 = vadd.f32 %v8315, %v7157
    %v8317 = vadd.f32 %v8316, %v7160
    %v8318 = vadd.f32 %v8317, %v7163
    %v8319 = vadd.f32 %v8318, %v7166
    %v8320 = vadd.f32 %v8319, %v7169
    %v8321 = vadd.f32 %v8320, %v7172
    %v8322 = vadd.f32 %v8321, %v7175
    %v8323 = vadd.f32 %v8322, %v7178
    %v8324 = vadd.f32 %v8323, %v7181
    %v8325 = vadd.f32 %v8324, %v7184
    %v8326 = vadd.f32 %v8325, %v7187
    %v8327 = vadd.f32 %v8326, %v7190
    %v8328 = vadd.f32 %v8327, %v7193
    %v8329 = vadd.f32 %v8328, %v7196
    %v8330 = vadd.f32 %v8329, %v7199
    %v8331 = vadd.f32 %v8330, %v7202
    %v8332 = vadd.f32 %v8331, %v7205
    %v8333 = vadd.f32 %v8332, %v7208
    %v8334 = vadd.f32 %v8333, %v7211
    %v8335 = vadd.f32 %v8334, %v7214
    %v8336 = vrot.slane %v8335, 4
    %v8337 = vadd.f32 %v8335, %v8336
    %v8338 = vrot.slane %v8337, 2
    %v8339 = vadd.f32 %v8337, %v8338
    %v8340 = vrot.slane %v8339, 1
    %v8341 = vadd.f32 %v8339, %v8340
    %v8342 = vadd.f32 %v7573, %v7576
    %v8343 = vadd.f32 %v8342, %v7579
    %v8344 = vadd.f32 %v8343, %v7582
    %v8345 = vadd.f32 %v8344, %v7585
    %v8346 = vadd.f32 %v8345, %v7588
    %v8347 = vadd.f32 %v8346, %v7591
    %v8348 = vadd.f32 %v8347, %v7594
    %v8349 = vadd.f32 %v8348, %v7597
    %v8350 = vadd.f32 %v8349, %v7600
    %v8351 = vadd.f32 %v8350, %v7603
    %v8352 = vadd.f32 %v8351, %v7606
    %v8353 = vadd.f32 %v8352, %v7609
    %v8354 = vadd.f32 %v8353, %v7612
    %v8355 = vadd.f32 %v8354, %v7615
    %v8356 = vadd.f32 %v8355, %v7618
    %v8357 = vadd.f32 %v8356, %v7621
    %v8358 = vadd.f32 %v8357, %v7624
    %v8359 = vadd.f32 %v8358, %v7627
    %v8360 = vadd.f32 %v8359, %v7630
    %v8361 = vadd.f32 %v8360, %v7633
    %v8362 = vadd.f32 %v8361, %v7636
    %v8363 = vadd.f32 %v8362, %v7639
    %v8364 = vadd.f32 %v8363, %v7642
    %v8365 = vadd.f32 %v8364, %v7645
    %v8366 = vadd.f32 %v8365, %v7648
    %v8367 = vadd.f32 %v8366, %v7651
    %v8368 = vadd.f32 %v8367, %v7654
    %v8369 = vadd.f32 %v8368, %v7657
    %v8370 = vadd.f32 %v8369, %v7660
    %v8371 = vadd.f32 %v8370, %v7663
    %v8372 = vadd.f32 %v8371, %v7666
    %v8373 = vrot.slane %v8372, 4
    %v8374 = vadd.f32 %v8372, %v8373
    %v8375 = vrot.slane %v8374, 2
    %v8376 = vadd.f32 %v8374, %v8375
    %v8377 = vrot.slane %v8376, 1
    %v8378 = vadd.f32 %v8376, %v8377
    %v8379 = vadd.f32 %v8025, %v8028
    %v8380 = vadd.f32 %v8379, %v8031
    %v8381 = vadd.f32 %v8380, %v8034
    %v8382 = vadd.f32 %v8381, %v8037
    %v8383 = vadd.f32 %v8382, %v8040
    %v8384 = vadd.f32 %v8383, %v8043
    %v8385 = vadd.f32 %v8384, %v8046
    %v8386 = vadd.f32 %v8385, %v8049
    %v8387 = vadd.f32 %v8386, %v8052
    %v8388 = vadd.f32 %v8387, %v8055
    %v8389 = vadd.f32 %v8388, %v8058
    %v8390 = vadd.f32 %v8389, %v8061
    %v8391 = vadd.f32 %v8390, %v8064
    %v8392 = vadd.f32 %v8391, %v8067
    %v8393 = vadd.f32 %v8392, %v8070
    %v8394 = vadd.f32 %v8393, %v8073
    %v8395 = vadd.f32 %v8394, %v8076
    %v8396 = vadd.f32 %v8395, %v8079
    %v8397 = vadd.f32 %v8396, %v8082
    %v8398 = vadd.f32 %v8397, %v8085
    %v8399 = vadd.f32 %v8398, %v8088
    %v8400 = vadd.f32 %v8399, %v8091
    %v8401 = vadd.f32 %v8400, %v8094
    %v8402 = vadd.f32 %v8401, %v8097
    %v8403 = vadd.f32 %v8402, %v8100
    %v8404 = vadd.f32 %v8403, %v8103
    %v8405 = vadd.f32 %v8404, %v8106
    %v8406 = vadd.f32 %v8405, %v8109
    %v8407 = vadd.f32 %v8406, %v8112
    %v8408 = vadd.f32 %v8407, %v8115
    %v8409 = vadd.f32 %v8408, %v8118
    %v8410 = vrot.slane %v8409, 4
    %v8411 = vadd.f32 %v8409, %v8410
    %v8412 = vrot.slane %v8411, 2
    %v8413 = vadd.f32 %v8411, %v8412
    %v8414 = vrot.slane %v8413, 1
    %v8415 = vadd.f32 %v8413, %v8414
    %v8416 = vmul.f32 %v8156, %v1142
    %v8417 = vmul.f32 %v8193, %v1142
    %v8418 = vmul.f32 %v8230, %v1142
    %v8419 = vmul.f32 %v8267, %v1142
    %v8420 = vmul.f32 %v8304, %v1142
    %v8421 = vmul.f32 %v8341, %v1142
    %v8422 = vmul.f32 %v8378, %v1142
    %v8423 = vmul.f32 %v8415, %v1142
    %v8424 = vmul.f32 %v4861, %v4861
    %v8425 = vmul.f32 %v5313, %v5313
    %v8426 = vmul.f32 %v5765, %v5765
    %v8427 = vmul.f32 %v6217, %v6217
    %v8428 = vmul.f32 %v6669, %v6669
    %v8429 = vmul.f32 %v7121, %v7121
    %v8430 = vmul.f32 %v7573, %v7573
    %v8431 = vmul.f32 %v8025, %v8025
    %v8432 = vmul.f32 %v4864, %v4864
    %v8433 = vmul.f32 %v5316, %v5316
    %v8434 = vmul.f32 %v5768, %v5768
    %v8435 = vmul.f32 %v6220, %v6220
    %v8436 = vmul.f32 %v6672, %v6672
    %v8437 = vmul.f32 %v7124, %v7124
    %v8438 = vmul.f32 %v7576, %v7576
    %v8439 = vmul.f32 %v8028, %v8028
    %v8440 = vmul.f32 %v4867, %v4867
    %v8441 = vmul.f32 %v5319, %v5319
    %v8442 = vmul.f32 %v5771, %v5771
    %v8443 = vmul.f32 %v6223, %v6223
    %v8444 = vmul.f32 %v6675, %v6675
    %v8445 = vmul.f32 %v7127, %v7127
    %v8446 = vmul.f32 %v7579, %v7579
    %v8447 = vmul.f32 %v8031, %v8031
    %v8448 = vmul.f32 %v4870, %v4870
    %v8449 = vmul.f32 %v5322, %v5322
    %v8450 = vmul.f32 %v5774, %v5774
    %v8451 = vmul.f32 %v6226, %v6226
    %v8452 = vmul.f32 %v6678, %v6678
    %v8453 = vmul.f32 %v7130, %v7130
    %v8454 = vmul.f32 %v7582, %v7582
    %v8455 = vmul.f32 %v8034, %v8034
    %v8456 = vmul.f32 %v4873, %v4873
    %v8457 = vmul.f32 %v5325, %v5325
    %v8458 = vmul.f32 %v5777, %v5777
    %v8459 = vmul.f32 %v6229, %v6229
    %v8460 = vmul.f32 %v6681, %v6681
    %v8461 = vmul.f32 %v7133, %v7133
    %v8462 = vmul.f32 %v7585, %v7585
    %v8463 = vmul.f32 %v8037, %v8037
    %v8464 = vmul.f32 %v4876, %v4876
    %v8465 = vmul.f32 %v5328, %v5328
    %v8466 = vmul.f32 %v5780, %v5780
    %v8467 = vmul.f32 %v6232, %v6232
    %v8468 = vmul.f32 %v6684, %v6684
    %v8469 = vmul.f32 %v7136, %v7136
    %v8470 = vmul.f32 %v7588, %v7588
    %v8471 = vmul.f32 %v8040, %v8040
    %v8472 = vmul.f32 %v4879, %v4879
    %v8473 = vmul.f32 %v5331, %v5331
    %v8474 = vmul.f32 %v5783, %v5783
    %v8475 = vmul.f32 %v6235, %v6235
    %v8476 = vmul.f32 %v6687, %v6687
    %v8477 = vmul.f32 %v7139, %v7139
    %v8478 = vmul.f32 %v7591, %v7591
    %v8479 = vmul.f32 %v8043, %v8043
    %v8480 = vmul.f32 %v4882, %v4882
    %v8481 = vmul.f32 %v5334, %v5334
    %v8482 = vmul.f32 %v5786, %v5786
    %v8483 = vmul.f32 %v6238, %v6238
    %v8484 = vmul.f32 %v6690, %v6690
    %v8485 = vmul.f32 %v7142, %v7142
    %v8486 = vmul.f32 %v7594, %v7594
    %v8487 = vmul.f32 %v8046, %v8046
    %v8488 = vmul.f32 %v4885, %v4885
    %v8489 = vmul.f32 %v5337, %v5337
    %v8490 = vmul.f32 %v5789, %v5789
    %v8491 = vmul.f32 %v6241, %v6241
    %v8492 = vmul.f32 %v6693, %v6693
    %v8493 = vmul.f32 %v7145, %v7145
    %v8494 = vmul.f32 %v7597, %v7597
    %v8495 = vmul.f32 %v8049, %v8049
    %v8496 = vmul.f32 %v4888, %v4888
    %v8497 = vmul.f32 %v5340, %v5340
    %v8498 = vmul.f32 %v5792, %v5792
    %v8499 = vmul.f32 %v6244, %v6244
    %v8500 = vmul.f32 %v6696, %v6696
    %v8501 = vmul.f32 %v7148, %v7148
    %v8502 = vmul.f32 %v7600, %v7600
    %v8503 = vmul.f32 %v8052, %v8052
    %v8504 = vmul.f32 %v4891, %v4891
    %v8505 = vmul.f32 %v5343, %v5343
    %v8506 = vmul.f32 %v5795, %v5795
    %v8507 = vmul.f32 %v6247, %v6247
    %v8508 = vmul.f32 %v6699, %v6699
    %v8509 = vmul.f32 %v7151, %v7151
    %v8510 = vmul.f32 %v7603, %v7603
    %v8511 = vmul.f32 %v8055, %v8055
    %v8512 = vmul.f32 %v4894, %v4894
    %v8513 = vmul.f32 %v5346, %v5346
    %v8514 = vmul.f32 %v5798, %v5798
    %v8515 = vmul.f32 %v6250, %v6250
    %v8516 = vmul.f32 %v6702, %v6702
    %v8517 = vmul.f32 %v7154, %v7154
    %v8518 = vmul.f32 %v7606, %v7606
    %v8519 = vmul.f32 %v8058, %v8058
    %v8520 = vmul.f32 %v4897, %v4897
    %v8521 = vmul.f32 %v5349, %v5349
    %v8522 = vmul.f32 %v5801, %v5801
    %v8523 = vmul.f32 %v6253, %v6253
    %v8524 = vmul.f32 %v6705, %v6705
    %v8525 = vmul.f32 %v7157, %v7157
    %v8526 = vmul.f32 %v7609, %v7609
    %v8527 = vmul.f32 %v8061, %v8061
    %v8528 = vmul.f32 %v4900, %v4900
    %v8529 = vmul.f32 %v5352, %v5352
    %v8530 = vmul.f32 %v5804, %v5804
    %v8531 = vmul.f32 %v6256, %v6256
    %v8532 = vmul.f32 %v6708, %v6708
    %v8533 = vmul.f32 %v7160, %v7160
    %v8534 = vmul.f32 %v7612, %v7612
    %v8535 = vmul.f32 %v8064, %v8064
    %v8536 = vmul.f32 %v4903, %v4903
    %v8537 = vmul.f32 %v5355, %v5355
    %v8538 = vmul.f32 %v5807, %v5807
    %v8539 = vmul.f32 %v6259, %v6259
    %v8540 = vmul.f32 %v6711, %v6711
    %v8541 = vmul.f32 %v7163, %v7163
    %v8542 = vmul.f32 %v7615, %v7615
    %v8543 = vmul.f32 %v8067, %v8067
    %v8544 = vmul.f32 %v4906, %v4906
    %v8545 = vmul.f32 %v5358, %v5358
    %v8546 = vmul.f32 %v5810, %v5810
    %v8547 = vmul.f32 %v6262, %v6262
    %v8548 = vmul.f32 %v6714, %v6714
    %v8549 = vmul.f32 %v7166, %v7166
    %v8550 = vmul.f32 %v7618, %v7618
    %v8551 = vmul.f32 %v8070, %v8070
    %v8552 = vmul.f32 %v4909, %v4909
    %v8553 = vmul.f32 %v5361, %v5361
    %v8554 = vmul.f32 %v5813, %v5813
    %v8555 = vmul.f32 %v6265, %v6265
    %v8556 = vmul.f32 %v6717, %v6717
    %v8557 = vmul.f32 %v7169, %v7169
    %v8558 = vmul.f32 %v7621, %v7621
    %v8559 = vmul.f32 %v8073, %v8073
    %v8560 = vmul.f32 %v4912, %v4912
    %v8561 = vmul.f32 %v5364, %v5364
    %v8562 = vmul.f32 %v5816, %v5816
    %v8563 = vmul.f32 %v6268, %v6268
    %v8564 = vmul.f32 %v6720, %v6720
    %v8565 = vmul.f32 %v7172, %v7172
    %v8566 = vmul.f32 %v7624, %v7624
    %v8567 = vmul.f32 %v8076, %v8076
    %v8568 = vmul.f32 %v4915, %v4915
    %v8569 = vmul.f32 %v5367, %v5367
    %v8570 = vmul.f32 %v5819, %v5819
    %v8571 = vmul.f32 %v6271, %v6271
    %v8572 = vmul.f32 %v6723, %v6723
    %v8573 = vmul.f32 %v7175, %v7175
    %v8574 = vmul.f32 %v7627, %v7627
    %v8575 = vmul.f32 %v8079, %v8079
    %v8576 = vmul.f32 %v4918, %v4918
    %v8577 = vmul.f32 %v5370, %v5370
    %v8578 = vmul.f32 %v5822, %v5822
    %v8579 = vmul.f32 %v6274, %v6274
    %v8580 = vmul.f32 %v6726, %v6726
    %v8581 = vmul.f32 %v7178, %v7178
    %v8582 = vmul.f32 %v7630, %v7630
    %v8583 = vmul.f32 %v8082, %v8082
    %v8584 = vmul.f32 %v4921, %v4921
    %v8585 = vmul.f32 %v5373, %v5373
    %v8586 = vmul.f32 %v5825, %v5825
    %v8587 = vmul.f32 %v6277, %v6277
    %v8588 = vmul.f32 %v6729, %v6729
    %v8589 = vmul.f32 %v7181, %v7181
    %v8590 = vmul.f32 %v7633, %v7633
    %v8591 = vmul.f32 %v8085, %v8085
    %v8592 = vmul.f32 %v4924, %v4924
    %v8593 = vmul.f32 %v5376, %v5376
    %v8594 = vmul.f32 %v5828, %v5828
    %v8595 = vmul.f32 %v6280, %v6280
    %v8596 = vmul.f32 %v6732, %v6732
    %v8597 = vmul.f32 %v7184, %v7184
    %v8598 = vmul.f32 %v7636, %v7636
    %v8599 = vmul.f32 %v8088, %v8088
    %v8600 = vmul.f32 %v4927, %v4927
    %v8601 = vmul.f32 %v5379, %v5379
    %v8602 = vmul.f32 %v5831, %v5831
    %v8603 = vmul.f32 %v6283, %v6283
    %v8604 = vmul.f32 %v6735, %v6735
    %v8605 = vmul.f32 %v7187, %v7187
    %v8606 = vmul.f32 %v7639, %v7639
    %v8607 = vmul.f32 %v8091, %v8091
    %v8608 = vmul.f32 %v4930, %v4930
    %v8609 = vmul.f32 %v5382, %v5382
    %v8610 = vmul.f32 %v5834, %v5834
    %v8611 = vmul.f32 %v6286, %v6286
    %v8612 = vmul.f32 %v6738, %v6738
    %v8613 = vmul.f32 %v7190, %v7190
    %v8614 = vmul.f32 %v7642, %v7642
    %v8615 = vmul.f32 %v8094, %v8094
    %v8616 = vmul.f32 %v4933, %v4933
    %v8617 = vmul.f32 %v5385, %v5385
    %v8618 = vmul.f32 %v5837, %v5837
    %v8619 = vmul.f32 %v6289, %v6289
    %v8620 = vmul.f32 %v6741, %v6741
    %v8621 = vmul.f32 %v7193, %v7193
    %v8622 = vmul.f32 %v7645, %v7645
    %v8623 = vmul.f32 %v8097, %v8097
    %v8624 = vmul.f32 %v4936, %v4936
    %v8625 = vmul.f32 %v5388, %v5388
    %v8626 = vmul.f32 %v5840, %v5840
    %v8627 = vmul.f32 %v6292, %v6292
    %v8628 = vmul.f32 %v6744, %v6744
    %v8629 = vmul.f32 %v7196, %v7196
    %v8630 = vmul.f32 %v7648, %v7648
    %v8631 = vmul.f32 %v8100, %v8100
    %v8632 = vmul.f32 %v4939, %v4939
    %v8633 = vmul.f32 %v5391, %v5391
    %v8634 = vmul.f32 %v5843, %v5843
    %v8635 = vmul.f32 %v6295, %v6295
    %v8636 = vmul.f32 %v6747, %v6747
    %v8637 = vmul.f32 %v7199, %v7199
    %v8638 = vmul.f32 %v7651, %v7651
    %v8639 = vmul.f32 %v8103, %v8103
    %v8640 = vmul.f32 %v4942, %v4942
    %v8641 = vmul.f32 %v5394, %v5394
    %v8642 = vmul.f32 %v5846, %v5846
    %v8643 = vmul.f32 %v6298, %v6298
    %v8644 = vmul.f32 %v6750, %v6750
    %v8645 = vmul.f32 %v7202, %v7202
    %v8646 = vmul.f32 %v7654, %v7654
    %v8647 = vmul.f32 %v8106, %v8106
    %v8648 = vmul.f32 %v4945, %v4945
    %v8649 = vmul.f32 %v5397, %v5397
    %v8650 = vmul.f32 %v5849, %v5849
    %v8651 = vmul.f32 %v6301, %v6301
    %v8652 = vmul.f32 %v6753, %v6753
    %v8653 = vmul.f32 %v7205, %v7205
    %v8654 = vmul.f32 %v7657, %v7657
    %v8655 = vmul.f32 %v8109, %v8109
    %v8656 = vmul.f32 %v4948, %v4948
    %v8657 = vmul.f32 %v5400, %v5400
    %v8658 = vmul.f32 %v5852, %v5852
    %v8659 = vmul.f32 %v6304, %v6304
    %v8660 = vmul.f32 %v6756, %v6756
    %v8661 = vmul.f32 %v7208, %v7208
    %v8662 = vmul.f32 %v7660, %v7660
    %v8663 = vmul.f32 %v8112, %v8112
    %v8664 = vmul.f32 %v4951, %v4951
    %v8665 = vmul.f32 %v5403, %v5403
    %v8666 = vmul.f32 %v5855, %v5855
    %v8667 = vmul.f32 %v6307, %v6307
    %v8668 = vmul.f32 %v6759, %v6759
    %v8669 = vmul.f32 %v7211, %v7211
    %v8670 = vmul.f32 %v7663, %v7663
    %v8671 = vmul.f32 %v8115, %v8115
    %v8672 = vmul.f32 %v4954, %v4954
    %v8673 = vmul.f32 %v5406, %v5406
    %v8674 = vmul.f32 %v5858, %v5858
    %v8675 = vmul.f32 %v6310, %v6310
    %v8676 = vmul.f32 %v6762, %v6762
    %v8677 = vmul.f32 %v7214, %v7214
    %v8678 = vmul.f32 %v7666, %v7666
    %v8679 = vmul.f32 %v8118, %v8118
    %v8680 = vadd.f32 %v8424, %v8432
    %v8681 = vadd.f32 %v8680, %v8440
    %v8682 = vadd.f32 %v8681, %v8448
    %v8683 = vadd.f32 %v8682, %v8456
    %v8684 = vadd.f32 %v8683, %v8464
    %v8685 = vadd.f32 %v8684, %v8472
    %v8686 = vadd.f32 %v8685, %v8480
    %v8687 = vadd.f32 %v8686, %v8488
    %v8688 = vadd.f32 %v8687, %v8496
    %v8689 = vadd.f32 %v8688, %v8504
    %v8690 = vadd.f32 %v8689, %v8512
    %v8691 = vadd.f32 %v8690, %v8520
    %v8692 = vadd.f32 %v8691, %v8528
    %v8693 = vadd.f32 %v8692, %v8536
    %v8694 = vadd.f32 %v8693, %v8544
    %v8695 = vadd.f32 %v8694, %v8552
    %v8696 = vadd.f32 %v8695, %v8560
    %v8697 = vadd.f32 %v8696, %v8568
    %v8698 = vadd.f32 %v8697, %v8576
    %v8699 = vadd.f32 %v8698, %v8584
    %v8700 = vadd.f32 %v8699, %v8592
    %v8701 = vadd.f32 %v8700, %v8600
    %v8702 = vadd.f32 %v8701, %v8608
    %v8703 = vadd.f32 %v8702, %v8616
    %v8704 = vadd.f32 %v8703, %v8624
    %v8705 = vadd.f32 %v8704, %v8632
    %v8706 = vadd.f32 %v8705, %v8640
    %v8707 = vadd.f32 %v8706, %v8648
    %v8708 = vadd.f32 %v8707, %v8656
    %v8709 = vadd.f32 %v8708, %v8664
    %v8710 = vadd.f32 %v8709, %v8672
    %v8711 = vrot.slane %v8710, 4
    %v8712 = vadd.f32 %v8710, %v8711
    %v8713 = vrot.slane %v8712, 2
    %v8714 = vadd.f32 %v8712, %v8713
    %v8715 = vrot.slane %v8714, 1
    %v8716 = vadd.f32 %v8714, %v8715
    %v8717 = vadd.f32 %v8425, %v8433
    %v8718 = vadd.f32 %v8717, %v8441
    %v8719 = vadd.f32 %v8718, %v8449
    %v8720 = vadd.f32 %v8719, %v8457
    %v8721 = vadd.f32 %v8720, %v8465
    %v8722 = vadd.f32 %v8721, %v8473
    %v8723 = vadd.f32 %v8722, %v8481
    %v8724 = vadd.f32 %v8723, %v8489
    %v8725 = vadd.f32 %v8724, %v8497
    %v8726 = vadd.f32 %v8725, %v8505
    %v8727 = vadd.f32 %v8726, %v8513
    %v8728 = vadd.f32 %v8727, %v8521
    %v8729 = vadd.f32 %v8728, %v8529
    %v8730 = vadd.f32 %v8729, %v8537
    %v8731 = vadd.f32 %v8730, %v8545
    %v8732 = vadd.f32 %v8731, %v8553
    %v8733 = vadd.f32 %v8732, %v8561
    %v8734 = vadd.f32 %v8733, %v8569
    %v8735 = vadd.f32 %v8734, %v8577
    %v8736 = vadd.f32 %v8735, %v8585
    %v8737 = vadd.f32 %v8736, %v8593
    %v8738 = vadd.f32 %v8737, %v8601
    %v8739 = vadd.f32 %v8738, %v8609
    %v8740 = vadd.f32 %v8739, %v8617
    %v8741 = vadd.f32 %v8740, %v8625
    %v8742 = vadd.f32 %v8741, %v8633
    %v8743 = vadd.f32 %v8742, %v8641
    %v8744 = vadd.f32 %v8743, %v8649
    %v8745 = vadd.f32 %v8744, %v8657
    %v8746 = vadd.f32 %v8745, %v8665
    %v8747 = vadd.f32 %v8746, %v8673
    %v8748 = vrot.slane %v8747, 4
    %v8749 = vadd.f32 %v8747, %v8748
    %v8750 = vrot.slane %v8749, 2
    %v8751 = vadd.f32 %v8749, %v8750
    %v8752 = vrot.slane %v8751, 1
    %v8753 = vadd.f32 %v8751, %v8752
    %v8754 = vadd.f32 %v8426, %v8434
    %v8755 = vadd.f32 %v8754, %v8442
    %v8756 = vadd.f32 %v8755, %v8450
    %v8757 = vadd.f32 %v8756, %v8458
    %v8758 = vadd.f32 %v8757, %v8466
    %v8759 = vadd.f32 %v8758, %v8474
    %v8760 = vadd.f32 %v8759, %v8482
    %v8761 = vadd.f32 %v8760, %v8490
    %v8762 = vadd.f32 %v8761, %v8498
    %v8763 = vadd.f32 %v8762, %v8506
    %v8764 = vadd.f32 %v8763, %v8514
    %v8765 = vadd.f32 %v8764, %v8522
    %v8766 = vadd.f32 %v8765, %v8530
    %v8767 = vadd.f32 %v8766, %v8538
    %v8768 = vadd.f32 %v8767, %v8546
    %v8769 = vadd.f32 %v8768, %v8554
    %v8770 = vadd.f32 %v8769, %v8562
    %v8771 = vadd.f32 %v8770, %v8570
    %v8772 = vadd.f32 %v8771, %v8578
    %v8773 = vadd.f32 %v8772, %v8586
    %v8774 = vadd.f32 %v8773, %v8594
    %v8775 = vadd.f32 %v8774, %v8602
    %v8776 = vadd.f32 %v8775, %v8610
    %v8777 = vadd.f32 %v8776, %v8618
    %v8778 = vadd.f32 %v8777, %v8626
    %v8779 = vadd.f32 %v8778, %v8634
    %v8780 = vadd.f32 %v8779, %v8642
    %v8781 = vadd.f32 %v8780, %v8650
    %v8782 = vadd.f32 %v8781, %v8658
    %v8783 = vadd.f32 %v8782, %v8666
    %v8784 = vadd.f32 %v8783, %v8674
    %v8785 = vrot.slane %v8784, 4
    %v8786 = vadd.f32 %v8784, %v8785
    %v8787 = vrot.slane %v8786, 2
    %v8788 = vadd.f32 %v8786, %v8787
    %v8789 = vrot.slane %v8788, 1
    %v8790 = vadd.f32 %v8788, %v8789
    %v8791 = vadd.f32 %v8427, %v8435
    %v8792 = vadd.f32 %v8791, %v8443
    %v8793 = vadd.f32 %v8792, %v8451
    %v8794 = vadd.f32 %v8793, %v8459
    %v8795 = vadd.f32 %v8794, %v8467
    %v8796 = vadd.f32 %v8795, %v8475
    %v8797 = vadd.f32 %v8796, %v8483
    %v8798 = vadd.f32 %v8797, %v8491
    %v8799 = vadd.f32 %v8798, %v8499
    %v8800 = vadd.f32 %v8799, %v8507
    %v8801 = vadd.f32 %v8800, %v8515
    %v8802 = vadd.f32 %v8801, %v8523
    %v8803 = vadd.f32 %v8802, %v8531
    %v8804 = vadd.f32 %v8803, %v8539
    %v8805 = vadd.f32 %v8804, %v8547
    %v8806 = vadd.f32 %v8805, %v8555
    %v8807 = vadd.f32 %v8806, %v8563
    %v8808 = vadd.f32 %v8807, %v8571
    %v8809 = vadd.f32 %v8808, %v8579
    %v8810 = vadd.f32 %v8809, %v8587
    %v8811 = vadd.f32 %v8810, %v8595
    %v8812 = vadd.f32 %v8811, %v8603
    %v8813 = vadd.f32 %v8812, %v8611
    %v8814 = vadd.f32 %v8813, %v8619
    %v8815 = vadd.f32 %v8814, %v8627
    %v8816 = vadd.f32 %v8815, %v8635
    %v8817 = vadd.f32 %v8816, %v8643
    %v8818 = vadd.f32 %v8817, %v8651
    %v8819 = vadd.f32 %v8818, %v8659
    %v8820 = vadd.f32 %v8819, %v8667
    %v8821 = vadd.f32 %v8820, %v8675
    %v8822 = vrot.slane %v8821, 4
    %v8823 = vadd.f32 %v8821, %v8822
    %v8824 = vrot.slane %v8823, 2
    %v8825 = vadd.f32 %v8823, %v8824
    %v8826 = vrot.slane %v8825, 1
    %v8827 = vadd.f32 %v8825, %v8826
    %v8828 = vadd.f32 %v8428, %v8436
    %v8829 = vadd.f32 %v8828, %v8444
    %v8830 = vadd.f32 %v8829, %v8452
    %v8831 = vadd.f32 %v8830, %v8460
    %v8832 = vadd.f32 %v8831, %v8468
    %v8833 = vadd.f32 %v8832, %v8476
    %v8834 = vadd.f32 %v8833, %v8484
    %v8835 = vadd.f32 %v8834, %v8492
    %v8836 = vadd.f32 %v8835, %v8500
    %v8837 = vadd.f32 %v8836, %v8508
    %v8838 = vadd.f32 %v8837, %v8516
    %v8839 = vadd.f32 %v8838, %v8524
    %v8840 = vadd.f32 %v8839, %v8532
    %v8841 = vadd.f32 %v8840, %v8540
    %v8842 = vadd.f32 %v8841, %v8548
    %v8843 = vadd.f32 %v8842, %v8556
    %v8844 = vadd.f32 %v8843, %v8564
    %v8845 = vadd.f32 %v8844, %v8572
    %v8846 = vadd.f32 %v8845, %v8580
    %v8847 = vadd.f32 %v8846, %v8588
    %v8848 = vadd.f32 %v8847, %v8596
    %v8849 = vadd.f32 %v8848, %v8604
    %v8850 = vadd.f32 %v8849, %v8612
    %v8851 = vadd.f32 %v8850, %v8620
    %v8852 = vadd.f32 %v8851, %v8628
    %v8853 = vadd.f32 %v8852, %v8636
    %v8854 = vadd.f32 %v8853, %v8644
    %v8855 = vadd.f32 %v8854, %v8652
    %v8856 = vadd.f32 %v8855, %v8660
    %v8857 = vadd.f32 %v8856, %v8668
    %v8858 = vadd.f32 %v8857, %v8676
    %v8859 = vrot.slane %v8858, 4
    %v8860 = vadd.f32 %v8858, %v8859
    %v8861 = vrot.slane %v8860, 2
    %v8862 = vadd.f32 %v8860, %v8861
    %v8863 = vrot.slane %v8862, 1
    %v8864 = vadd.f32 %v8862, %v8863
    %v8865 = vadd.f32 %v8429, %v8437
    %v8866 = vadd.f32 %v8865, %v8445
    %v8867 = vadd.f32 %v8866, %v8453
    %v8868 = vadd.f32 %v8867, %v8461
    %v8869 = vadd.f32 %v8868, %v8469
    %v8870 = vadd.f32 %v8869, %v8477
    %v8871 = vadd.f32 %v8870, %v8485
    %v8872 = vadd.f32 %v8871, %v8493
    %v8873 = vadd.f32 %v8872, %v8501
    %v8874 = vadd.f32 %v8873, %v8509
    %v8875 = vadd.f32 %v8874, %v8517
    %v8876 = vadd.f32 %v8875, %v8525
    %v8877 = vadd.f32 %v8876, %v8533
    %v8878 = vadd.f32 %v8877, %v8541
    %v8879 = vadd.f32 %v8878, %v8549
    %v8880 = vadd.f32 %v8879, %v8557
    %v8881 = vadd.f32 %v8880, %v8565
    %v8882 = vadd.f32 %v8881, %v8573
    %v8883 = vadd.f32 %v8882, %v8581
    %v8884 = vadd.f32 %v8883, %v8589
    %v8885 = vadd.f32 %v8884, %v8597
    %v8886 = vadd.f32 %v8885, %v8605
    %v8887 = vadd.f32 %v8886, %v8613
    %v8888 = vadd.f32 %v8887, %v8621
    %v8889 = vadd.f32 %v8888, %v8629
    %v8890 = vadd.f32 %v8889, %v8637
    %v8891 = vadd.f32 %v8890, %v8645
    %v8892 = vadd.f32 %v8891, %v8653
    %v8893 = vadd.f32 %v8892, %v8661
    %v8894 = vadd.f32 %v8893, %v8669
    %v8895 = vadd.f32 %v8894, %v8677
    %v8896 = vrot.slane %v8895, 4
    %v8897 = vadd.f32 %v8895, %v8896
    %v8898 = vrot.slane %v8897, 2
    %v8899 = vadd.f32 %v8897, %v8898
    %v8900 = vrot.slane %v8899, 1
    %v8901 = vadd.f32 %v8899, %v8900
    %v8902 = vadd.f32 %v8430, %v8438
    %v8903 = vadd.f32 %v8902, %v8446
    %v8904 = vadd.f32 %v8903, %v8454
    %v8905 = vadd.f32 %v8904, %v8462
    %v8906 = vadd.f32 %v8905, %v8470
    %v8907 = vadd.f32 %v8906, %v8478
    %v8908 = vadd.f32 %v8907, %v8486
    %v8909 = vadd.f32 %v8908, %v8494
    %v8910 = vadd.f32 %v8909, %v8502
    %v8911 = vadd.f32 %v8910, %v8510
    %v8912 = vadd.f32 %v8911, %v8518
    %v8913 = vadd.f32 %v8912, %v8526
    %v8914 = vadd.f32 %v8913, %v8534
    %v8915 = vadd.f32 %v8914, %v8542
    %v8916 = vadd.f32 %v8915, %v8550
    %v8917 = vadd.f32 %v8916, %v8558
    %v8918 = vadd.f32 %v8917, %v8566
    %v8919 = vadd.f32 %v8918, %v8574
    %v8920 = vadd.f32 %v8919, %v8582
    %v8921 = vadd.f32 %v8920, %v8590
    %v8922 = vadd.f32 %v8921, %v8598
    %v8923 = vadd.f32 %v8922, %v8606
    %v8924 = vadd.f32 %v8923, %v8614
    %v8925 = vadd.f32 %v8924, %v8622
    %v8926 = vadd.f32 %v8925, %v8630
    %v8927 = vadd.f32 %v8926, %v8638
    %v8928 = vadd.f32 %v8927, %v8646
    %v8929 = vadd.f32 %v8928, %v8654
    %v8930 = vadd.f32 %v8929, %v8662
    %v8931 = vadd.f32 %v8930, %v8670
    %v8932 = vadd.f32 %v8931, %v8678
    %v8933 = vrot.slane %v8932, 4
    %v8934 = vadd.f32 %v8932, %v8933
    %v8935 = vrot.slane %v8934, 2
    %v8936 = vadd.f32 %v8934, %v8935
    %v8937 = vrot.slane %v8936, 1
    %v8938 = vadd.f32 %v8936, %v8937
    %v8939 = vadd.f32 %v8431, %v8439
    %v8940 = vadd.f32 %v8939, %v8447
    %v8941 = vadd.f32 %v8940, %v8455
    %v8942 = vadd.f32 %v8941, %v8463
    %v8943 = vadd.f32 %v8942, %v8471
    %v8944 = vadd.f32 %v8943, %v8479
    %v8945 = vadd.f32 %v8944, %v8487
    %v8946 = vadd.f32 %v8945, %v8495
    %v8947 = vadd.f32 %v8946, %v8503
    %v8948 = vadd.f32 %v8947, %v8511
    %v8949 = vadd.f32 %v8948, %v8519
    %v8950 = vadd.f32 %v8949, %v8527
    %v8951 = vadd.f32 %v8950, %v8535
    %v8952 = vadd.f32 %v8951, %v8543
    %v8953 = vadd.f32 %v8952, %v8551
    %v8954 = vadd.f32 %v8953, %v8559
    %v8955 = vadd.f32 %v8954, %v8567
    %v8956 = vadd.f32 %v8955, %v8575
    %v8957 = vadd.f32 %v8956, %v8583
    %v8958 = vadd.f32 %v8957, %v8591
    %v8959 = vadd.f32 %v8958, %v8599
    %v8960 = vadd.f32 %v8959, %v8607
    %v8961 = vadd.f32 %v8960, %v8615
    %v8962 = vadd.f32 %v8961, %v8623
    %v8963 = vadd.f32 %v8962, %v8631
    %v8964 = vadd.f32 %v8963, %v8639
    %v8965 = vadd.f32 %v8964, %v8647
    %v8966 = vadd.f32 %v8965, %v8655
    %v8967 = vadd.f32 %v8966, %v8663
    %v8968 = vadd.f32 %v8967, %v8671
    %v8969 = vadd.f32 %v8968, %v8679
    %v8970 = vrot.slane %v8969, 4
    %v8971 = vadd.f32 %v8969, %v8970
    %v8972 = vrot.slane %v8971, 2
    %v8973 = vadd.f32 %v8971, %v8972
    %v8974 = vrot.slane %v8973, 1
    %v8975 = vadd.f32 %v8973, %v8974
    %v8976 = vmul.f32 %v8716, %v1142
    %v8977 = vmul.f32 %v8753, %v1142
    %v8978 = vmul.f32 %v8790, %v1142
    %v8979 = vmul.f32 %v8827, %v1142
    %v8980 = vmul.f32 %v8864, %v1142
    %v8981 = vmul.f32 %v8901, %v1142
    %v8982 = vmul.f32 %v8938, %v1142
    %v8983 = vmul.f32 %v8975, %v1142
    %v8984 = vmul.f32 %v8416, %v8416
    %v8985 = vmul.f32 %v8417, %v8417
    %v8986 = vmul.f32 %v8418, %v8418
    %v8987 = vmul.f32 %v8419, %v8419
    %v8988 = vmul.f32 %v8420, %v8420
    %v8989 = vmul.f32 %v8421, %v8421
    %v8990 = vmul.f32 %v8422, %v8422
    %v8991 = vmul.f32 %v8423, %v8423
    %v8992 = vsub.f32 %v8976, %v8984
    %v8993 = vsub.f32 %v8977, %v8985
    %v8994 = vsub.f32 %v8978, %v8986
    %v8995 = vsub.f32 %v8979, %v8987
    %v8996 = vsub.f32 %v8980, %v8988
    %v8997 = vsub.f32 %v8981, %v8989
    %v8998 = vsub.f32 %v8982, %v8990
    %v8999 = vsub.f32 %v8983, %v8991
    %v9000 = vld [vmem:[%s12] sm:$0xff]
    %v9001 = vadd.f32 %v8992, 0.8
    %v9002 = vadd.f32 %v8993, 0.8
    %v9003 = vadd.f32 %v8994, 0.8
    %v9004 = vadd.f32 %v8995, 0.8
    %v9005 = vadd.f32 %v8996, 0.8
    %v9006 = vadd.f32 %v8997, 0.8
    %v9007 = vadd.f32 %v8998, 0.8
    %v9008 = vadd.f32 %v8999, 0.8
    %v9009 = vrsqrt.pop %v9001
    %v9010 = vmul.f32 %v9009, %v9001
    %v9011 = vmul.f32 %v9010, %v9009
    %v9012 = vmul.f32 0.5, %v9011
    %v9013 = vsub.f32 1.5, %v9012
    %v9014 = vmul.f32 %v9009, %v9013
    %vm9015 = vweird.f32 %v9001
    %vm9016 = vweird.f32 %v9009
    %vm9017 = vmor %vm9015, %vm9016
    %v9018 = vsel %vm9017, %v9009, %v9014
    %v9019 = vrsqrt.pop %v9002
    %v9020 = vmul.f32 %v9019, %v9002
    %v9021 = vmul.f32 %v9020, %v9019
    %v9022 = vmul.f32 0.5, %v9021
    %v9023 = vsub.f32 1.5, %v9022
    %v9024 = vmul.f32 %v9019, %v9023
    %vm9025 = vweird.f32 %v9002
    %vm9026 = vweird.f32 %v9019
    %vm9027 = vmor %vm9025, %vm9026
    %v9028 = vsel %vm9027, %v9019, %v9024
    %v9029 = vrsqrt.pop %v9003
    %v9030 = vmul.f32 %v9029, %v9003
    %v9031 = vmul.f32 %v9030, %v9029
    %v9032 = vmul.f32 0.5, %v9031
    %v9033 = vsub.f32 1.5, %v9032
    %v9034 = vmul.f32 %v9029, %v9033
    %vm9035 = vweird.f32 %v9003
    %vm9036 = vweird.f32 %v9029
    %vm9037 = vmor %vm9035, %vm9036
    %v9038 = vsel %vm9037, %v9029, %v9034
    %v9039 = vrsqrt.pop %v9004
    %v9040 = vmul.f32 %v9039, %v9004
    %v9041 = vmul.f32 %v9040, %v9039
    %v9042 = vmul.f32 0.5, %v9041
    %v9043 = vsub.f32 1.5, %v9042
    %v9044 = vmul.f32 %v9039, %v9043
    %vm9045 = vweird.f32 %v9004
    %vm9046 = vweird.f32 %v9039
    %vm9047 = vmor %vm9045, %vm9046
    %v9048 = vsel %vm9047, %v9039, %v9044
    %v9049 = vrsqrt.pop %v9005
    %v9050 = vmul.f32 %v9049, %v9005
    %v9051 = vmul.f32 %v9050, %v9049
    %v9052 = vmul.f32 0.5, %v9051
    %v9053 = vsub.f32 1.5, %v9052
    %v9054 = vmul.f32 %v9049, %v9053
    %vm9055 = vweird.f32 %v9005
    %vm9056 = vweird.f32 %v9049
    %vm9057 = vmor %vm9055, %vm9056
    %v9058 = vsel %vm9057, %v9049, %v9054
    %v9059 = vrsqrt.pop %v9006
    %v9060 = vmul.f32 %v9059, %v9006
    %v9061 = vmul.f32 %v9060, %v9059
    %v9062 = vmul.f32 0.5, %v9061
    %v9063 = vsub.f32 1.5, %v9062
    %v9064 = vmul.f32 %v9059, %v9063
    %vm9065 = vweird.f32 %v9006
    %vm9066 = vweird.f32 %v9059
    %vm9067 = vmor %vm9065, %vm9066
    %v9068 = vsel %vm9067, %v9059, %v9064
    %v9069 = vrsqrt.pop %v9007
    %v9070 = vmul.f32 %v9069, %v9007
    %v9071 = vmul.f32 %v9070, %v9069
    %v9072 = vmul.f32 0.5, %v9071
    %v9073 = vsub.f32 1.5, %v9072
    %v9074 = vmul.f32 %v9069, %v9073
    %vm9075 = vweird.f32 %v9007
    %vm9076 = vweird.f32 %v9069
    %vm9077 = vmor %vm9075, %vm9076
    %v9078 = vsel %vm9077, %v9069, %v9074
    %v9079 = vrsqrt.pop %v9008
    %v9080 = vmul.f32 %v9079, %v9008
    %v9081 = vmul.f32 %v9080, %v9079
    %v9082 = vmul.f32 0.5, %v9081
    %v9083 = vsub.f32 1.5, %v9082
    %v9084 = vmul.f32 %v9079, %v9083
    %vm9085 = vweird.f32 %v9008
    %vm9086 = vweird.f32 %v9079
    %vm9087 = vmor %vm9085, %vm9086
    %v9088 = vsel %vm9087, %v9079, %v9084
    %v9097 = vrot.slane %v9028, 7
    %v9098 = vrot.slane %v9038, 6
    %v9099 = vrot.slane %v9048, 5
    %v9100 = vrot.slane %v9058, 4
    %v9101 = vrot.slane %v9068, 3
    %v9102 = vrot.slane %v9078, 2
    %v9103 = vrot.slane %v9088, 1
    %v9104 = vsel %vm1315, %v9018, %v9097
    %v9105 = vsel %vm3183, %v9098, %v9099
    %v9106 = vsel %vm3185, %v9104, %v9105
    %vm9107 = vcmask 1044484
    %v9108 = vsel %vm9107, %v9100, %v9101
    %vm9109 = vcmask 1046534
    %v9110 = vsel %vm9109, %v9102, %v9103
    %vm9111 = vcmask 1045508
    %v9112 = vsel %vm9111, %v9108, %v9110
    %v9113 = vsel %vm571, %v9106, %v9112
    %v9115 = vmul.f32 %v9000, %v9113
    %v9116 = vld [vmem:[%s13] sm:$0xff]
    %v9118 = vperm.slane %v9115, 0
    %v9119 = vperm.slane %v9115, 1
    %v9120 = vperm.slane %v9115, 2
    %v9121 = vperm.slane %v9115, 3
    %v9122 = vperm.slane %v9115, 4
    %v9123 = vperm.slane %v9115, 5
    %v9124 = vperm.slane %v9115, 6
    %v9125 = vperm.slane %v9115, 7
    %v9134 = vmul.f32 %v8416, %v9118
    %v9135 = vmul.f32 %v8417, %v9119
    %v9136 = vmul.f32 %v8418, %v9120
    %v9137 = vmul.f32 %v8419, %v9121
    %v9138 = vmul.f32 %v8420, %v9122
    %v9139 = vmul.f32 %v8421, %v9123
    %v9140 = vmul.f32 %v8422, %v9124
    %v9141 = vmul.f32 %v8423, %v9125
    %v9150 = vrot.slane %v9135, 7
    %v9151 = vrot.slane %v9136, 6
    %v9152 = vrot.slane %v9137, 5
    %v9153 = vrot.slane %v9138, 4
    %v9154 = vrot.slane %v9139, 3
    %v9155 = vrot.slane %v9140, 2
    %v9156 = vrot.slane %v9141, 1
    %v9157 = vsel %vm1315, %v9134, %v9150
    %v9158 = vsel %vm3183, %v9151, %v9152
    %v9159 = vsel %vm3185, %v9157, %v9158
    %v9160 = vsel %vm9107, %v9153, %v9154
    %v9161 = vsel %vm9109, %v9155, %v9156
    %v9162 = vsel %vm9111, %v9160, %v9161
    %v9163 = vsel %vm571, %v9159, %v9162
    %v9165 = vsub.f32 %v9116, %v9163
    %v9166 = vmul.f32 %v4861, %v9118
    %v9167 = vmul.f32 %v5313, %v9119
    %v9168 = vmul.f32 %v5765, %v9120
    %v9169 = vmul.f32 %v6217, %v9121
    %v9170 = vmul.f32 %v6669, %v9122
    %v9171 = vmul.f32 %v7121, %v9123
    %v9172 = vmul.f32 %v7573, %v9124
    %v9173 = vmul.f32 %v8025, %v9125
    %v9174 = vmul.f32 %v4864, %v9118
    %v9175 = vmul.f32 %v5316, %v9119
    %v9176 = vmul.f32 %v5768, %v9120
    %v9177 = vmul.f32 %v6220, %v9121
    %v9178 = vmul.f32 %v6672, %v9122
    %v9179 = vmul.f32 %v7124, %v9123
    %v9180 = vmul.f32 %v7576, %v9124
    %v9181 = vmul.f32 %v8028, %v9125
    %v9182 = vmul.f32 %v4867, %v9118
    %v9183 = vmul.f32 %v5319, %v9119
    %v9184 = vmul.f32 %v5771, %v9120
    %v9185 = vmul.f32 %v6223, %v9121
    %v9186 = vmul.f32 %v6675, %v9122
    %v9187 = vmul.f32 %v7127, %v9123
    %v9188 = vmul.f32 %v7579, %v9124
    %v9189 = vmul.f32 %v8031, %v9125
    %v9190 = vmul.f32 %v4870, %v9118
    %v9191 = vmul.f32 %v5322, %v9119
    %v9192 = vmul.f32 %v5774, %v9120
    %v9193 = vmul.f32 %v6226, %v9121
    %v9194 = vmul.f32 %v6678, %v9122
    %v9195 = vmul.f32 %v7130, %v9123
    %v9196 = vmul.f32 %v7582, %v9124
    %v9197 = vmul.f32 %v8034, %v9125
    %v9198 = vmul.f32 %v4873, %v9118
    %v9199 = vmul.f32 %v5325, %v9119
    %v9200 = vmul.f32 %v5777, %v9120
    %v9201 = vmul.f32 %v6229, %v9121
    %v9202 = vmul.f32 %v6681, %v9122
    %v9203 = vmul.f32 %v7133, %v9123
    %v9204 = vmul.f32 %v7585, %v9124
    %v9205 = vmul.f32 %v8037, %v9125
    %v9206 = vmul.f32 %v4876, %v9118
    %v9207 = vmul.f32 %v5328, %v9119
    %v9208 = vmul.f32 %v5780, %v9120
    %v9209 = vmul.f32 %v6232, %v9121
    %v9210 = vmul.f32 %v6684, %v9122
    %v9211 = vmul.f32 %v7136, %v9123
    %v9212 = vmul.f32 %v7588, %v9124
    %v9213 = vmul.f32 %v8040, %v9125
    %v9214 = vmul.f32 %v4879, %v9118
    %v9215 = vmul.f32 %v5331, %v9119
    %v9216 = vmul.f32 %v5783, %v9120
    %v9217 = vmul.f32 %v6235, %v9121
    %v9218 = vmul.f32 %v6687, %v9122
    %v9219 = vmul.f32 %v7139, %v9123
    %v9220 = vmul.f32 %v7591, %v9124
    %v9221 = vmul.f32 %v8043, %v9125
    %v9222 = vmul.f32 %v4882, %v9118
    %v9223 = vmul.f32 %v5334, %v9119
    %v9224 = vmul.f32 %v5786, %v9120
    %v9225 = vmul.f32 %v6238, %v9121
    %v9226 = vmul.f32 %v6690, %v9122
    %v9227 = vmul.f32 %v7142, %v9123
    %v9228 = vmul.f32 %v7594, %v9124
    %v9229 = vmul.f32 %v8046, %v9125
    %v9230 = vmul.f32 %v4885, %v9118
    %v9231 = vmul.f32 %v5337, %v9119
    %v9232 = vmul.f32 %v5789, %v9120
    %v9233 = vmul.f32 %v6241, %v9121
    %v9234 = vmul.f32 %v6693, %v9122
    %v9235 = vmul.f32 %v7145, %v9123
    %v9236 = vmul.f32 %v7597, %v9124
    %v9237 = vmul.f32 %v8049, %v9125
    %v9238 = vmul.f32 %v4888, %v9118
    %v9239 = vmul.f32 %v5340, %v9119
    %v9240 = vmul.f32 %v5792, %v9120
    %v9241 = vmul.f32 %v6244, %v9121
    %v9242 = vmul.f32 %v6696, %v9122
    %v9243 = vmul.f32 %v7148, %v9123
    %v9244 = vmul.f32 %v7600, %v9124
    %v9245 = vmul.f32 %v8052, %v9125
    %v9246 = vmul.f32 %v4891, %v9118
    %v9247 = vmul.f32 %v5343, %v9119
    %v9248 = vmul.f32 %v5795, %v9120
    %v9249 = vmul.f32 %v6247, %v9121
    %v9250 = vmul.f32 %v6699, %v9122
    %v9251 = vmul.f32 %v7151, %v9123
    %v9252 = vmul.f32 %v7603, %v9124
    %v9253 = vmul.f32 %v8055, %v9125
    %v9254 = vmul.f32 %v4894, %v9118
    %v9255 = vmul.f32 %v5346, %v9119
    %v9256 = vmul.f32 %v5798, %v9120
    %v9257 = vmul.f32 %v6250, %v9121
    %v9258 = vmul.f32 %v6702, %v9122
    %v9259 = vmul.f32 %v7154, %v9123
    %v9260 = vmul.f32 %v7606, %v9124
    %v9261 = vmul.f32 %v8058, %v9125
    %v9262 = vmul.f32 %v4897, %v9118
    %v9263 = vmul.f32 %v5349, %v9119
    %v9264 = vmul.f32 %v5801, %v9120
    %v9265 = vmul.f32 %v6253, %v9121
    %v9266 = vmul.f32 %v6705, %v9122
    %v9267 = vmul.f32 %v7157, %v9123
    %v9268 = vmul.f32 %v7609, %v9124
    %v9269 = vmul.f32 %v8061, %v9125
    %v9270 = vmul.f32 %v4900, %v9118
    %v9271 = vmul.f32 %v5352, %v9119
    %v9272 = vmul.f32 %v5804, %v9120
    %v9273 = vmul.f32 %v6256, %v9121
    %v9274 = vmul.f32 %v6708, %v9122
    %v9275 = vmul.f32 %v7160, %v9123
    %v9276 = vmul.f32 %v7612, %v9124
    %v9277 = vmul.f32 %v8064, %v9125
    %v9278 = vmul.f32 %v4903, %v9118
    %v9279 = vmul.f32 %v5355, %v9119
    %v9280 = vmul.f32 %v5807, %v9120
    %v9281 = vmul.f32 %v6259, %v9121
    %v9282 = vmul.f32 %v6711, %v9122
    %v9283 = vmul.f32 %v7163, %v9123
    %v9284 = vmul.f32 %v7615, %v9124
    %v9285 = vmul.f32 %v8067, %v9125
    %v9286 = vmul.f32 %v4906, %v9118
    %v9287 = vmul.f32 %v5358, %v9119
    %v9288 = vmul.f32 %v5810, %v9120
    %v9289 = vmul.f32 %v6262, %v9121
    %v9290 = vmul.f32 %v6714, %v9122
    %v9291 = vmul.f32 %v7166, %v9123
    %v9292 = vmul.f32 %v7618, %v9124
    %v9293 = vmul.f32 %v8070, %v9125
    %v9294 = vmul.f32 %v4909, %v9118
    %v9295 = vmul.f32 %v5361, %v9119
    %v9296 = vmul.f32 %v5813, %v9120
    %v9297 = vmul.f32 %v6265, %v9121
    %v9298 = vmul.f32 %v6717, %v9122
    %v9299 = vmul.f32 %v7169, %v9123
    %v9300 = vmul.f32 %v7621, %v9124
    %v9301 = vmul.f32 %v8073, %v9125
    %v9302 = vmul.f32 %v4912, %v9118
    %v9303 = vmul.f32 %v5364, %v9119
    %v9304 = vmul.f32 %v5816, %v9120
    %v9305 = vmul.f32 %v6268, %v9121
    %v9306 = vmul.f32 %v6720, %v9122
    %v9307 = vmul.f32 %v7172, %v9123
    %v9308 = vmul.f32 %v7624, %v9124
    %v9309 = vmul.f32 %v8076, %v9125
    %v9310 = vmul.f32 %v4915, %v9118
    %v9311 = vmul.f32 %v5367, %v9119
    %v9312 = vmul.f32 %v5819, %v9120
    %v9313 = vmul.f32 %v6271, %v9121
    %v9314 = vmul.f32 %v6723, %v9122
    %v9315 = vmul.f32 %v7175, %v9123
    %v9316 = vmul.f32 %v7627, %v9124
    %v9317 = vmul.f32 %v8079, %v9125
    %v9318 = vmul.f32 %v4918, %v9118
    %v9319 = vmul.f32 %v5370, %v9119
    %v9320 = vmul.f32 %v5822, %v9120
    %v9321 = vmul.f32 %v6274, %v9121
    %v9322 = vmul.f32 %v6726, %v9122
    %v9323 = vmul.f32 %v7178, %v9123
    %v9324 = vmul.f32 %v7630, %v9124
    %v9325 = vmul.f32 %v8082, %v9125
    %v9326 = vmul.f32 %v4921, %v9118
    %v9327 = vmul.f32 %v5373, %v9119
    %v9328 = vmul.f32 %v5825, %v9120
    %v9329 = vmul.f32 %v6277, %v9121
    %v9330 = vmul.f32 %v6729, %v9122
    %v9331 = vmul.f32 %v7181, %v9123
    %v9332 = vmul.f32 %v7633, %v9124
    %v9333 = vmul.f32 %v8085, %v9125
    %v9334 = vmul.f32 %v4924, %v9118
    %v9335 = vmul.f32 %v5376, %v9119
    %v9336 = vmul.f32 %v5828, %v9120
    %v9337 = vmul.f32 %v6280, %v9121
    %v9338 = vmul.f32 %v6732, %v9122
    %v9339 = vmul.f32 %v7184, %v9123
    %v9340 = vmul.f32 %v7636, %v9124
    %v9341 = vmul.f32 %v8088, %v9125
    %v9342 = vmul.f32 %v4927, %v9118
    %v9343 = vmul.f32 %v5379, %v9119
    %v9344 = vmul.f32 %v5831, %v9120
    %v9345 = vmul.f32 %v6283, %v9121
    %v9346 = vmul.f32 %v6735, %v9122
    %v9347 = vmul.f32 %v7187, %v9123
    %v9348 = vmul.f32 %v7639, %v9124
    %v9349 = vmul.f32 %v8091, %v9125
    %v9350 = vmul.f32 %v4930, %v9118
    %v9351 = vmul.f32 %v5382, %v9119
    %v9352 = vmul.f32 %v5834, %v9120
    %v9353 = vmul.f32 %v6286, %v9121
    %v9354 = vmul.f32 %v6738, %v9122
    %v9355 = vmul.f32 %v7190, %v9123
    %v9356 = vmul.f32 %v7642, %v9124
    %v9357 = vmul.f32 %v8094, %v9125
    %v9358 = vmul.f32 %v4933, %v9118
    %v9359 = vmul.f32 %v5385, %v9119
    %v9360 = vmul.f32 %v5837, %v9120
    %v9361 = vmul.f32 %v6289, %v9121
    %v9362 = vmul.f32 %v6741, %v9122
    %v9363 = vmul.f32 %v7193, %v9123
    %v9364 = vmul.f32 %v7645, %v9124
    %v9365 = vmul.f32 %v8097, %v9125
    %v9366 = vmul.f32 %v4936, %v9118
    %v9367 = vmul.f32 %v5388, %v9119
    %v9368 = vmul.f32 %v5840, %v9120
    %v9369 = vmul.f32 %v6292, %v9121
    %v9370 = vmul.f32 %v6744, %v9122
    %v9371 = vmul.f32 %v7196, %v9123
    %v9372 = vmul.f32 %v7648, %v9124
    %v9373 = vmul.f32 %v8100, %v9125
    %v9374 = vmul.f32 %v4939, %v9118
    %v9375 = vmul.f32 %v5391, %v9119
    %v9376 = vmul.f32 %v5843, %v9120
    %v9377 = vmul.f32 %v6295, %v9121
    %v9378 = vmul.f32 %v6747, %v9122
    %v9379 = vmul.f32 %v7199, %v9123
    %v9380 = vmul.f32 %v7651, %v9124
    %v9381 = vmul.f32 %v8103, %v9125
    %v9382 = vmul.f32 %v4942, %v9118
    %v9383 = vmul.f32 %v5394, %v9119
    %v9384 = vmul.f32 %v5846, %v9120
    %v9385 = vmul.f32 %v6298, %v9121
    %v9386 = vmul.f32 %v6750, %v9122
    %v9387 = vmul.f32 %v7202, %v9123
    %v9388 = vmul.f32 %v7654, %v9124
    %v9389 = vmul.f32 %v8106, %v9125
    %v9390 = vmul.f32 %v4945, %v9118
    %v9391 = vmul.f32 %v5397, %v9119
    %v9392 = vmul.f32 %v5849, %v9120
    %v9393 = vmul.f32 %v6301, %v9121
    %v9394 = vmul.f32 %v6753, %v9122
    %v9395 = vmul.f32 %v7205, %v9123
    %v9396 = vmul.f32 %v7657, %v9124
    %v9397 = vmul.f32 %v8109, %v9125
    %v9398 = vmul.f32 %v4948, %v9118
    %v9399 = vmul.f32 %v5400, %v9119
    %v9400 = vmul.f32 %v5852, %v9120
    %v9401 = vmul.f32 %v6304, %v9121
    %v9402 = vmul.f32 %v6756, %v9122
    %v9403 = vmul.f32 %v7208, %v9123
    %v9404 = vmul.f32 %v7660, %v9124
    %v9405 = vmul.f32 %v8112, %v9125
    %v9406 = vmul.f32 %v4951, %v9118
    %v9407 = vmul.f32 %v5403, %v9119
    %v9408 = vmul.f32 %v5855, %v9120
    %v9409 = vmul.f32 %v6307, %v9121
    %v9410 = vmul.f32 %v6759, %v9122
    %v9411 = vmul.f32 %v7211, %v9123
    %v9412 = vmul.f32 %v7663, %v9124
    %v9413 = vmul.f32 %v8115, %v9125
    %v9414 = vmul.f32 %v4954, %v9118
    %v9415 = vmul.f32 %v5406, %v9119
    %v9416 = vmul.f32 %v5858, %v9120
    %v9417 = vmul.f32 %v6310, %v9121
    %v9418 = vmul.f32 %v6762, %v9122
    %v9419 = vmul.f32 %v7214, %v9123
    %v9420 = vmul.f32 %v7666, %v9124
    %v9421 = vmul.f32 %v8118, %v9125
    %v9423 = vperm.slane %v9165, 0
    %v9424 = vperm.slane %v9165, 1
    %v9425 = vperm.slane %v9165, 2
    %v9426 = vperm.slane %v9165, 3
    %v9427 = vperm.slane %v9165, 4
    %v9428 = vperm.slane %v9165, 5
    %v9429 = vperm.slane %v9165, 6
    %v9430 = vperm.slane %v9165, 7
    %v9439 = vadd.f32 %v9166, %v9423
    %v9440 = vadd.f32 %v9167, %v9424
    %v9441 = vadd.f32 %v9168, %v9425
    %v9442 = vadd.f32 %v9169, %v9426
    %v9443 = vadd.f32 %v9170, %v9427
    %v9444 = vadd.f32 %v9171, %v9428
    %v9445 = vadd.f32 %v9172, %v9429
    %v9446 = vadd.f32 %v9173, %v9430
    %v9447 = vadd.f32 %v9174, %v9423
    %v9448 = vadd.f32 %v9175, %v9424
    %v9449 = vadd.f32 %v9176, %v9425
    %v9450 = vadd.f32 %v9177, %v9426
    %v9451 = vadd.f32 %v9178, %v9427
    %v9452 = vadd.f32 %v9179, %v9428
    %v9453 = vadd.f32 %v9180, %v9429
    %v9454 = vadd.f32 %v9181, %v9430
    %v9455 = vadd.f32 %v9182, %v9423
    %v9456 = vadd.f32 %v9183, %v9424
    %v9457 = vadd.f32 %v9184, %v9425
    %v9458 = vadd.f32 %v9185, %v9426
    %v9459 = vadd.f32 %v9186, %v9427
    %v9460 = vadd.f32 %v9187, %v9428
    %v9461 = vadd.f32 %v9188, %v9429
    %v9462 = vadd.f32 %v9189, %v9430
    %v9463 = vadd.f32 %v9190, %v9423
    %v9464 = vadd.f32 %v9191, %v9424
    %v9465 = vadd.f32 %v9192, %v9425
    %v9466 = vadd.f32 %v9193, %v9426
    %v9467 = vadd.f32 %v9194, %v9427
    %v9468 = vadd.f32 %v9195, %v9428
    %v9469 = vadd.f32 %v9196, %v9429
    %v9470 = vadd.f32 %v9197, %v9430
    %v9471 = vadd.f32 %v9198, %v9423
    %v9472 = vadd.f32 %v9199, %v9424
    %v9473 = vadd.f32 %v9200, %v9425
    %v9474 = vadd.f32 %v9201, %v9426
    %v9475 = vadd.f32 %v9202, %v9427
    %v9476 = vadd.f32 %v9203, %v9428
    %v9477 = vadd.f32 %v9204, %v9429
    %v9478 = vadd.f32 %v9205, %v9430
    %v9479 = vadd.f32 %v9206, %v9423
    %v9480 = vadd.f32 %v9207, %v9424
    %v9481 = vadd.f32 %v9208, %v9425
    %v9482 = vadd.f32 %v9209, %v9426
    %v9483 = vadd.f32 %v9210, %v9427
    %v9484 = vadd.f32 %v9211, %v9428
    %v9485 = vadd.f32 %v9212, %v9429
    %v9486 = vadd.f32 %v9213, %v9430
    %v9487 = vadd.f32 %v9214, %v9423
    %v9488 = vadd.f32 %v9215, %v9424
    %v9489 = vadd.f32 %v9216, %v9425
    %v9490 = vadd.f32 %v9217, %v9426
    %v9491 = vadd.f32 %v9218, %v9427
    %v9492 = vadd.f32 %v9219, %v9428
    %v9493 = vadd.f32 %v9220, %v9429
    %v9494 = vadd.f32 %v9221, %v9430
    %v9495 = vadd.f32 %v9222, %v9423
    %v9496 = vadd.f32 %v9223, %v9424
    %v9497 = vadd.f32 %v9224, %v9425
    %v9498 = vadd.f32 %v9225, %v9426
    %v9499 = vadd.f32 %v9226, %v9427
    %v9500 = vadd.f32 %v9227, %v9428
    %v9501 = vadd.f32 %v9228, %v9429
    %v9502 = vadd.f32 %v9229, %v9430
    %v9503 = vadd.f32 %v9230, %v9423
    %v9504 = vadd.f32 %v9231, %v9424
    %v9505 = vadd.f32 %v9232, %v9425
    %v9506 = vadd.f32 %v9233, %v9426
    %v9507 = vadd.f32 %v9234, %v9427
    %v9508 = vadd.f32 %v9235, %v9428
    %v9509 = vadd.f32 %v9236, %v9429
    %v9510 = vadd.f32 %v9237, %v9430
    %v9511 = vadd.f32 %v9238, %v9423
    %v9512 = vadd.f32 %v9239, %v9424
    %v9513 = vadd.f32 %v9240, %v9425
    %v9514 = vadd.f32 %v9241, %v9426
    %v9515 = vadd.f32 %v9242, %v9427
    %v9516 = vadd.f32 %v9243, %v9428
    %v9517 = vadd.f32 %v9244, %v9429
    %v9518 = vadd.f32 %v9245, %v9430
    %v9519 = vadd.f32 %v9246, %v9423
    %v9520 = vadd.f32 %v9247, %v9424
    %v9521 = vadd.f32 %v9248, %v9425
    %v9522 = vadd.f32 %v9249, %v9426
    %v9523 = vadd.f32 %v9250, %v9427
    %v9524 = vadd.f32 %v9251, %v9428
    %v9525 = vadd.f32 %v9252, %v9429
    %v9526 = vadd.f32 %v9253, %v9430
    %v9527 = vadd.f32 %v9254, %v9423
    %v9528 = vadd.f32 %v9255, %v9424
    %v9529 = vadd.f32 %v9256, %v9425
    %v9530 = vadd.f32 %v9257, %v9426
    %v9531 = vadd.f32 %v9258, %v9427
    %v9532 = vadd.f32 %v9259, %v9428
    %v9533 = vadd.f32 %v9260, %v9429
    %v9534 = vadd.f32 %v9261, %v9430
    %v9535 = vadd.f32 %v9262, %v9423
    %v9536 = vadd.f32 %v9263, %v9424
    %v9537 = vadd.f32 %v9264, %v9425
    %v9538 = vadd.f32 %v9265, %v9426
    %v9539 = vadd.f32 %v9266, %v9427
    %v9540 = vadd.f32 %v9267, %v9428
    %v9541 = vadd.f32 %v9268, %v9429
    %v9542 = vadd.f32 %v9269, %v9430
    %v9543 = vadd.f32 %v9270, %v9423
    %v9544 = vadd.f32 %v9271, %v9424
    %v9545 = vadd.f32 %v9272, %v9425
    %v9546 = vadd.f32 %v9273, %v9426
    %v9547 = vadd.f32 %v9274, %v9427
    %v9548 = vadd.f32 %v9275, %v9428
    %v9549 = vadd.f32 %v9276, %v9429
    %v9550 = vadd.f32 %v9277, %v9430
    %v9551 = vadd.f32 %v9278, %v9423
    %v9552 = vadd.f32 %v9279, %v9424
    %v9553 = vadd.f32 %v9280, %v9425
    %v9554 = vadd.f32 %v9281, %v9426
    %v9555 = vadd.f32 %v9282, %v9427
    %v9556 = vadd.f32 %v9283, %v9428
    %v9557 = vadd.f32 %v9284, %v9429
    %v9558 = vadd.f32 %v9285, %v9430
    %v9559 = vadd.f32 %v9286, %v9423
    %v9560 = vadd.f32 %v9287, %v9424
    %v9561 = vadd.f32 %v9288, %v9425
    %v9562 = vadd.f32 %v9289, %v9426
    %v9563 = vadd.f32 %v9290, %v9427
    %v9564 = vadd.f32 %v9291, %v9428
    %v9565 = vadd.f32 %v9292, %v9429
    %v9566 = vadd.f32 %v9293, %v9430
    %v9567 = vadd.f32 %v9294, %v9423
    %v9568 = vadd.f32 %v9295, %v9424
    %v9569 = vadd.f32 %v9296, %v9425
    %v9570 = vadd.f32 %v9297, %v9426
    %v9571 = vadd.f32 %v9298, %v9427
    %v9572 = vadd.f32 %v9299, %v9428
    %v9573 = vadd.f32 %v9300, %v9429
    %v9574 = vadd.f32 %v9301, %v9430
    %v9575 = vadd.f32 %v9302, %v9423
    %v9576 = vadd.f32 %v9303, %v9424
    %v9577 = vadd.f32 %v9304, %v9425
    %v9578 = vadd.f32 %v9305, %v9426
    %v9579 = vadd.f32 %v9306, %v9427
    %v9580 = vadd.f32 %v9307, %v9428
    %v9581 = vadd.f32 %v9308, %v9429
    %v9582 = vadd.f32 %v9309, %v9430
    %v9583 = vadd.f32 %v9310, %v9423
    %v9584 = vadd.f32 %v9311, %v9424
    %v9585 = vadd.f32 %v9312, %v9425
    %v9586 = vadd.f32 %v9313, %v9426
    %v9587 = vadd.f32 %v9314, %v9427
    %v9588 = vadd.f32 %v9315, %v9428
    %v9589 = vadd.f32 %v9316, %v9429
    %v9590 = vadd.f32 %v9317, %v9430
    %v9591 = vadd.f32 %v9318, %v9423
    %v9592 = vadd.f32 %v9319, %v9424
    %v9593 = vadd.f32 %v9320, %v9425
    %v9594 = vadd.f32 %v9321, %v9426
    %v9595 = vadd.f32 %v9322, %v9427
    %v9596 = vadd.f32 %v9323, %v9428
    %v9597 = vadd.f32 %v9324, %v9429
    %v9598 = vadd.f32 %v9325, %v9430
    %v9599 = vadd.f32 %v9326, %v9423
    %v9600 = vadd.f32 %v9327, %v9424
    %v9601 = vadd.f32 %v9328, %v9425
    %v9602 = vadd.f32 %v9329, %v9426
    %v9603 = vadd.f32 %v9330, %v9427
    %v9604 = vadd.f32 %v9331, %v9428
    %v9605 = vadd.f32 %v9332, %v9429
    %v9606 = vadd.f32 %v9333, %v9430
    %v9607 = vadd.f32 %v9334, %v9423
    %v9608 = vadd.f32 %v9335, %v9424
    %v9609 = vadd.f32 %v9336, %v9425
    %v9610 = vadd.f32 %v9337, %v9426
    %v9611 = vadd.f32 %v9338, %v9427
    %v9612 = vadd.f32 %v9339, %v9428
    %v9613 = vadd.f32 %v9340, %v9429
    %v9614 = vadd.f32 %v9341, %v9430
    %v9615 = vadd.f32 %v9342, %v9423
    %v9616 = vadd.f32 %v9343, %v9424
    %v9617 = vadd.f32 %v9344, %v9425
    %v9618 = vadd.f32 %v9345, %v9426
    %v9619 = vadd.f32 %v9346, %v9427
    %v9620 = vadd.f32 %v9347, %v9428
    %v9621 = vadd.f32 %v9348, %v9429
    %v9622 = vadd.f32 %v9349, %v9430
    %v9623 = vadd.f32 %v9350, %v9423
    %v9624 = vadd.f32 %v9351, %v9424
    %v9625 = vadd.f32 %v9352, %v9425
    %v9626 = vadd.f32 %v9353, %v9426
    %v9627 = vadd.f32 %v9354, %v9427
    %v9628 = vadd.f32 %v9355, %v9428
    %v9629 = vadd.f32 %v9356, %v9429
    %v9630 = vadd.f32 %v9357, %v9430
    %v9631 = vadd.f32 %v9358, %v9423
    %v9632 = vadd.f32 %v9359, %v9424
    %v9633 = vadd.f32 %v9360, %v9425
    %v9634 = vadd.f32 %v9361, %v9426
    %v9635 = vadd.f32 %v9362, %v9427
    %v9636 = vadd.f32 %v9363, %v9428
    %v9637 = vadd.f32 %v9364, %v9429
    %v9638 = vadd.f32 %v9365, %v9430
    %v9639 = vadd.f32 %v9366, %v9423
    %v9640 = vadd.f32 %v9367, %v9424
    %v9641 = vadd.f32 %v9368, %v9425
    %v9642 = vadd.f32 %v9369, %v9426
    %v9643 = vadd.f32 %v9370, %v9427
    %v9644 = vadd.f32 %v9371, %v9428
    %v9645 = vadd.f32 %v9372, %v9429
    %v9646 = vadd.f32 %v9373, %v9430
    %v9647 = vadd.f32 %v9374, %v9423
    %v9648 = vadd.f32 %v9375, %v9424
    %v9649 = vadd.f32 %v9376, %v9425
    %v9650 = vadd.f32 %v9377, %v9426
    %v9651 = vadd.f32 %v9378, %v9427
    %v9652 = vadd.f32 %v9379, %v9428
    %v9653 = vadd.f32 %v9380, %v9429
    %v9654 = vadd.f32 %v9381, %v9430
    %v9655 = vadd.f32 %v9382, %v9423
    %v9656 = vadd.f32 %v9383, %v9424
    %v9657 = vadd.f32 %v9384, %v9425
    %v9658 = vadd.f32 %v9385, %v9426
    %v9659 = vadd.f32 %v9386, %v9427
    %v9660 = vadd.f32 %v9387, %v9428
    %v9661 = vadd.f32 %v9388, %v9429
    %v9662 = vadd.f32 %v9389, %v9430
    %v9663 = vadd.f32 %v9390, %v9423
    %v9664 = vadd.f32 %v9391, %v9424
    %v9665 = vadd.f32 %v9392, %v9425
    %v9666 = vadd.f32 %v9393, %v9426
    %v9667 = vadd.f32 %v9394, %v9427
    %v9668 = vadd.f32 %v9395, %v9428
    %v9669 = vadd.f32 %v9396, %v9429
    %v9670 = vadd.f32 %v9397, %v9430
    %v9671 = vadd.f32 %v9398, %v9423
    %v9672 = vadd.f32 %v9399, %v9424
    %v9673 = vadd.f32 %v9400, %v9425
    %v9674 = vadd.f32 %v9401, %v9426
    %v9675 = vadd.f32 %v9402, %v9427
    %v9676 = vadd.f32 %v9403, %v9428
    %v9677 = vadd.f32 %v9404, %v9429
    %v9678 = vadd.f32 %v9405, %v9430
    %v9679 = vadd.f32 %v9406, %v9423
    %v9680 = vadd.f32 %v9407, %v9424
    %v9681 = vadd.f32 %v9408, %v9425
    %v9682 = vadd.f32 %v9409, %v9426
    %v9683 = vadd.f32 %v9410, %v9427
    %v9684 = vadd.f32 %v9411, %v9428
    %v9685 = vadd.f32 %v9412, %v9429
    %v9686 = vadd.f32 %v9413, %v9430
    %v9687 = vadd.f32 %v9414, %v9423
    %v9688 = vadd.f32 %v9415, %v9424
    %v9689 = vadd.f32 %v9416, %v9425
    %v9690 = vadd.f32 %v9417, %v9426
    %v9691 = vadd.f32 %v9418, %v9427
    %v9692 = vadd.f32 %v9419, %v9428
    %v9693 = vadd.f32 %v9420, %v9429
    %v9694 = vadd.f32 %v9421, %v9430
    %v9695 = vmul.f32 %v9439, 0.2
    %v9696 = vmul.f32 %v9440, 0.2
    %v9697 = vmul.f32 %v9441, 0.2
    %v9698 = vmul.f32 %v9442, 0.2
    %v9699 = vmul.f32 %v9443, 0.2
    %v9700 = vmul.f32 %v9444, 0.2
    %v9701 = vmul.f32 %v9445, 0.2
    %v9702 = vmul.f32 %v9446, 0.2
    %v9703 = vmul.f32 %v9447, 0.2
    %v9704 = vmul.f32 %v9448, 0.2
    %v9705 = vmul.f32 %v9449, 0.2
    %v9706 = vmul.f32 %v9450, 0.2
    %v9707 = vmul.f32 %v9451, 0.2
    %v9708 = vmul.f32 %v9452, 0.2
    %v9709 = vmul.f32 %v9453, 0.2
    %v9710 = vmul.f32 %v9454, 0.2
    %v9711 = vmul.f32 %v9455, 0.2
    %v9712 = vmul.f32 %v9456, 0.2
    %v9713 = vmul.f32 %v9457, 0.2
    %v9714 = vmul.f32 %v9458, 0.2
    %v9715 = vmul.f32 %v9459, 0.2
    %v9716 = vmul.f32 %v9460, 0.2
    %v9717 = vmul.f32 %v9461, 0.2
    %v9718 = vmul.f32 %v9462, 0.2
    %v9719 = vmul.f32 %v9463, 0.2
    %v9720 = vmul.f32 %v9464, 0.2
    %v9721 = vmul.f32 %v9465, 0.2
    %v9722 = vmul.f32 %v9466, 0.2
    %v9723 = vmul.f32 %v9467, 0.2
    %v9724 = vmul.f32 %v9468, 0.2
    %v9725 = vmul.f32 %v9469, 0.2
    %v9726 = vmul.f32 %v9470, 0.2
    %v9727 = vmul.f32 %v9471, 0.2
    %v9728 = vmul.f32 %v9472, 0.2
    %v9729 = vmul.f32 %v9473, 0.2
    %v9730 = vmul.f32 %v9474, 0.2
    %v9731 = vmul.f32 %v9475, 0.2
    %v9732 = vmul.f32 %v9476, 0.2
    %v9733 = vmul.f32 %v9477, 0.2
    %v9734 = vmul.f32 %v9478, 0.2
    %v9735 = vmul.f32 %v9479, 0.2
    %v9736 = vmul.f32 %v9480, 0.2
    %v9737 = vmul.f32 %v9481, 0.2
    %v9738 = vmul.f32 %v9482, 0.2
    %v9739 = vmul.f32 %v9483, 0.2
    %v9740 = vmul.f32 %v9484, 0.2
    %v9741 = vmul.f32 %v9485, 0.2
    %v9742 = vmul.f32 %v9486, 0.2
    %v9743 = vmul.f32 %v9487, 0.2
    %v9744 = vmul.f32 %v9488, 0.2
    %v9745 = vmul.f32 %v9489, 0.2
    %v9746 = vmul.f32 %v9490, 0.2
    %v9747 = vmul.f32 %v9491, 0.2
    %v9748 = vmul.f32 %v9492, 0.2
    %v9749 = vmul.f32 %v9493, 0.2
    %v9750 = vmul.f32 %v9494, 0.2
    %v9751 = vmul.f32 %v9495, 0.2
    %v9752 = vmul.f32 %v9496, 0.2
    %v9753 = vmul.f32 %v9497, 0.2
    %v9754 = vmul.f32 %v9498, 0.2
    %v9755 = vmul.f32 %v9499, 0.2
    %v9756 = vmul.f32 %v9500, 0.2
    %v9757 = vmul.f32 %v9501, 0.2
    %v9758 = vmul.f32 %v9502, 0.2
    %v9759 = vmul.f32 %v9503, 0.2
    %v9760 = vmul.f32 %v9504, 0.2
    %v9761 = vmul.f32 %v9505, 0.2
    %v9762 = vmul.f32 %v9506, 0.2
    %v9763 = vmul.f32 %v9507, 0.2
    %v9764 = vmul.f32 %v9508, 0.2
    %v9765 = vmul.f32 %v9509, 0.2
    %v9766 = vmul.f32 %v9510, 0.2
    %v9767 = vmul.f32 %v9511, 0.2
    %v9768 = vmul.f32 %v9512, 0.2
    %v9769 = vmul.f32 %v9513, 0.2
    %v9770 = vmul.f32 %v9514, 0.2
    %v9771 = vmul.f32 %v9515, 0.2
    %v9772 = vmul.f32 %v9516, 0.2
    %v9773 = vmul.f32 %v9517, 0.2
    %v9774 = vmul.f32 %v9518, 0.2
    %v9775 = vmul.f32 %v9519, 0.2
    %v9776 = vmul.f32 %v9520, 0.2
    %v9777 = vmul.f32 %v9521, 0.2
    %v9778 = vmul.f32 %v9522, 0.2
    %v9779 = vmul.f32 %v9523, 0.2
    %v9780 = vmul.f32 %v9524, 0.2
    %v9781 = vmul.f32 %v9525, 0.2
    %v9782 = vmul.f32 %v9526, 0.2
    %v9783 = vmul.f32 %v9527, 0.2
    %v9784 = vmul.f32 %v9528, 0.2
    %v9785 = vmul.f32 %v9529, 0.2
    %v9786 = vmul.f32 %v9530, 0.2
    %v9787 = vmul.f32 %v9531, 0.2
    %v9788 = vmul.f32 %v9532, 0.2
    %v9789 = vmul.f32 %v9533, 0.2
    %v9790 = vmul.f32 %v9534, 0.2
    %v9791 = vmul.f32 %v9535, 0.2
    %v9792 = vmul.f32 %v9536, 0.2
    %v9793 = vmul.f32 %v9537, 0.2
    %v9794 = vmul.f32 %v9538, 0.2
    %v9795 = vmul.f32 %v9539, 0.2
    %v9796 = vmul.f32 %v9540, 0.2
    %v9797 = vmul.f32 %v9541, 0.2
    %v9798 = vmul.f32 %v9542, 0.2
    %v9799 = vmul.f32 %v9543, 0.2
    %v9800 = vmul.f32 %v9544, 0.2
    %v9801 = vmul.f32 %v9545, 0.2
    %v9802 = vmul.f32 %v9546, 0.2
    %v9803 = vmul.f32 %v9547, 0.2
    %v9804 = vmul.f32 %v9548, 0.2
    %v9805 = vmul.f32 %v9549, 0.2
    %v9806 = vmul.f32 %v9550, 0.2
    %v9807 = vmul.f32 %v9551, 0.2
    %v9808 = vmul.f32 %v9552, 0.2
    %v9809 = vmul.f32 %v9553, 0.2
    %v9810 = vmul.f32 %v9554, 0.2
    %v9811 = vmul.f32 %v9555, 0.2
    %v9812 = vmul.f32 %v9556, 0.2
    %v9813 = vmul.f32 %v9557, 0.2
    %v9814 = vmul.f32 %v9558, 0.2
    %v9815 = vmul.f32 %v9559, 0.2
    %v9816 = vmul.f32 %v9560, 0.2
    %v9817 = vmul.f32 %v9561, 0.2
    %v9818 = vmul.f32 %v9562, 0.2
    %v9819 = vmul.f32 %v9563, 0.2
    %v9820 = vmul.f32 %v9564, 0.2
    %v9821 = vmul.f32 %v9565, 0.2
    %v9822 = vmul.f32 %v9566, 0.2
    %v9823 = vmul.f32 %v9567, 0.2
    %v9824 = vmul.f32 %v9568, 0.2
    %v9825 = vmul.f32 %v9569, 0.2
    %v9826 = vmul.f32 %v9570, 0.2
    %v9827 = vmul.f32 %v9571, 0.2
    %v9828 = vmul.f32 %v9572, 0.2
    %v9829 = vmul.f32 %v9573, 0.2
    %v9830 = vmul.f32 %v9574, 0.2
    %v9831 = vmul.f32 %v9575, 0.2
    %v9832 = vmul.f32 %v9576, 0.2
    %v9833 = vmul.f32 %v9577, 0.2
    %v9834 = vmul.f32 %v9578, 0.2
    %v9835 = vmul.f32 %v9579, 0.2
    %v9836 = vmul.f32 %v9580, 0.2
    %v9837 = vmul.f32 %v9581, 0.2
    %v9838 = vmul.f32 %v9582, 0.2
    %v9839 = vmul.f32 %v9583, 0.2
    %v9840 = vmul.f32 %v9584, 0.2
    %v9841 = vmul.f32 %v9585, 0.2
    %v9842 = vmul.f32 %v9586, 0.2
    %v9843 = vmul.f32 %v9587, 0.2
    %v9844 = vmul.f32 %v9588, 0.2
    %v9845 = vmul.f32 %v9589, 0.2
    %v9846 = vmul.f32 %v9590, 0.2
    %v9847 = vmul.f32 %v9591, 0.2
    %v9848 = vmul.f32 %v9592, 0.2
    %v9849 = vmul.f32 %v9593, 0.2
    %v9850 = vmul.f32 %v9594, 0.2
    %v9851 = vmul.f32 %v9595, 0.2
    %v9852 = vmul.f32 %v9596, 0.2
    %v9853 = vmul.f32 %v9597, 0.2
    %v9854 = vmul.f32 %v9598, 0.2
    %v9855 = vmul.f32 %v9599, 0.2
    %v9856 = vmul.f32 %v9600, 0.2
    %v9857 = vmul.f32 %v9601, 0.2
    %v9858 = vmul.f32 %v9602, 0.2
    %v9859 = vmul.f32 %v9603, 0.2
    %v9860 = vmul.f32 %v9604, 0.2
    %v9861 = vmul.f32 %v9605, 0.2
    %v9862 = vmul.f32 %v9606, 0.2
    %v9863 = vmul.f32 %v9607, 0.2
    %v9864 = vmul.f32 %v9608, 0.2
    %v9865 = vmul.f32 %v9609, 0.2
    %v9866 = vmul.f32 %v9610, 0.2
    %v9867 = vmul.f32 %v9611, 0.2
    %v9868 = vmul.f32 %v9612, 0.2
    %v9869 = vmul.f32 %v9613, 0.2
    %v9870 = vmul.f32 %v9614, 0.2
    %v9871 = vmul.f32 %v9615, 0.2
    %v9872 = vmul.f32 %v9616, 0.2
    %v9873 = vmul.f32 %v9617, 0.2
    %v9874 = vmul.f32 %v9618, 0.2
    %v9875 = vmul.f32 %v9619, 0.2
    %v9876 = vmul.f32 %v9620, 0.2
    %v9877 = vmul.f32 %v9621, 0.2
    %v9878 = vmul.f32 %v9622, 0.2
    %v9879 = vmul.f32 %v9623, 0.2
    %v9880 = vmul.f32 %v9624, 0.2
    %v9881 = vmul.f32 %v9625, 0.2
    %v9882 = vmul.f32 %v9626, 0.2
    %v9883 = vmul.f32 %v9627, 0.2
    %v9884 = vmul.f32 %v9628, 0.2
    %v9885 = vmul.f32 %v9629, 0.2
    %v9886 = vmul.f32 %v9630, 0.2
    %v9887 = vmul.f32 %v9631, 0.2
    %v9888 = vmul.f32 %v9632, 0.2
    %v9889 = vmul.f32 %v9633, 0.2
    %v9890 = vmul.f32 %v9634, 0.2
    %v9891 = vmul.f32 %v9635, 0.2
    %v9892 = vmul.f32 %v9636, 0.2
    %v9893 = vmul.f32 %v9637, 0.2
    %v9894 = vmul.f32 %v9638, 0.2
    %v9895 = vmul.f32 %v9639, 0.2
    %v9896 = vmul.f32 %v9640, 0.2
    %v9897 = vmul.f32 %v9641, 0.2
    %v9898 = vmul.f32 %v9642, 0.2
    %v9899 = vmul.f32 %v9643, 0.2
    %v9900 = vmul.f32 %v9644, 0.2
    %v9901 = vmul.f32 %v9645, 0.2
    %v9902 = vmul.f32 %v9646, 0.2
    %v9903 = vmul.f32 %v9647, 0.2
    %v9904 = vmul.f32 %v9648, 0.2
    %v9905 = vmul.f32 %v9649, 0.2
    %v9906 = vmul.f32 %v9650, 0.2
    %v9907 = vmul.f32 %v9651, 0.2
    %v9908 = vmul.f32 %v9652, 0.2
    %v9909 = vmul.f32 %v9653, 0.2
    %v9910 = vmul.f32 %v9654, 0.2
    %v9911 = vmul.f32 %v9655, 0.2
    %v9912 = vmul.f32 %v9656, 0.2
    %v9913 = vmul.f32 %v9657, 0.2
    %v9914 = vmul.f32 %v9658, 0.2
    %v9915 = vmul.f32 %v9659, 0.2
    %v9916 = vmul.f32 %v9660, 0.2
    %v9917 = vmul.f32 %v9661, 0.2
    %v9918 = vmul.f32 %v9662, 0.2
    %v9919 = vmul.f32 %v9663, 0.2
    %v9920 = vmul.f32 %v9664, 0.2
    %v9921 = vmul.f32 %v9665, 0.2
    %v9922 = vmul.f32 %v9666, 0.2
    %v9923 = vmul.f32 %v9667, 0.2
    %v9924 = vmul.f32 %v9668, 0.2
    %v9925 = vmul.f32 %v9669, 0.2
    %v9926 = vmul.f32 %v9670, 0.2
    %v9927 = vmul.f32 %v9671, 0.2
    %v9928 = vmul.f32 %v9672, 0.2
    %v9929 = vmul.f32 %v9673, 0.2
    %v9930 = vmul.f32 %v9674, 0.2
    %v9931 = vmul.f32 %v9675, 0.2
    %v9932 = vmul.f32 %v9676, 0.2
    %v9933 = vmul.f32 %v9677, 0.2
    %v9934 = vmul.f32 %v9678, 0.2
    %v9935 = vmul.f32 %v9679, 0.2
    %v9936 = vmul.f32 %v9680, 0.2
    %v9937 = vmul.f32 %v9681, 0.2
    %v9938 = vmul.f32 %v9682, 0.2
    %v9939 = vmul.f32 %v9683, 0.2
    %v9940 = vmul.f32 %v9684, 0.2
    %v9941 = vmul.f32 %v9685, 0.2
    %v9942 = vmul.f32 %v9686, 0.2
    %v9943 = vmul.f32 %v9687, 0.2
    %v9944 = vmul.f32 %v9688, 0.2
    %v9945 = vmul.f32 %v9689, 0.2
    %v9946 = vmul.f32 %v9690, 0.2
    %v9947 = vmul.f32 %v9691, 0.2
    %v9948 = vmul.f32 %v9692, 0.2
    %v9949 = vmul.f32 %v9693, 0.2
    %v9950 = vmul.f32 %v9694, 0.2
    %v9951 = vmax.f32 %v9439, %v9695
    %v9952 = vmax.f32 %v9440, %v9696
    %v9953 = vmax.f32 %v9441, %v9697
    %v9954 = vmax.f32 %v9442, %v9698
    %v9955 = vmax.f32 %v9443, %v9699
    %v9956 = vmax.f32 %v9444, %v9700
    %v9957 = vmax.f32 %v9445, %v9701
    %v9958 = vmax.f32 %v9446, %v9702
    %v9959 = vmax.f32 %v9447, %v9703
    %v9960 = vmax.f32 %v9448, %v9704
    %v9961 = vmax.f32 %v9449, %v9705
    %v9962 = vmax.f32 %v9450, %v9706
    %v9963 = vmax.f32 %v9451, %v9707
    %v9964 = vmax.f32 %v9452, %v9708
    %v9965 = vmax.f32 %v9453, %v9709
    %v9966 = vmax.f32 %v9454, %v9710
    %v9967 = vmax.f32 %v9455, %v9711
    %v9968 = vmax.f32 %v9456, %v9712
    %v9969 = vmax.f32 %v9457, %v9713
    %v9970 = vmax.f32 %v9458, %v9714
    %v9971 = vmax.f32 %v9459, %v9715
    %v9972 = vmax.f32 %v9460, %v9716
    %v9973 = vmax.f32 %v9461, %v9717
    %v9974 = vmax.f32 %v9462, %v9718
    %v9975 = vmax.f32 %v9463, %v9719
    %v9976 = vmax.f32 %v9464, %v9720
    %v9977 = vmax.f32 %v9465, %v9721
    %v9978 = vmax.f32 %v9466, %v9722
    %v9979 = vmax.f32 %v9467, %v9723
    %v9980 = vmax.f32 %v9468, %v9724
    %v9981 = vmax.f32 %v9469, %v9725
    %v9982 = vmax.f32 %v9470, %v9726
    %v9983 = vmax.f32 %v9471, %v9727
    %v9984 = vmax.f32 %v9472, %v9728
    %v9985 = vmax.f32 %v9473, %v9729
    %v9986 = vmax.f32 %v9474, %v9730
    %v9987 = vmax.f32 %v9475, %v9731
    %v9988 = vmax.f32 %v9476, %v9732
    %v9989 = vmax.f32 %v9477, %v9733
    %v9990 = vmax.f32 %v9478, %v9734
    %v9991 = vmax.f32 %v9479, %v9735
    %v9992 = vmax.f32 %v9480, %v9736
    %v9993 = vmax.f32 %v9481, %v9737
    %v9994 = vmax.f32 %v9482, %v9738
    %v9995 = vmax.f32 %v9483, %v9739
    %v9996 = vmax.f32 %v9484, %v9740
    %v9997 = vmax.f32 %v9485, %v9741
    %v9998 = vmax.f32 %v9486, %v9742
    %v9999 = vmax.f32 %v9487, %v9743
    %v10000 = vmax.f32 %v9488, %v9744
    %v10001 = vmax.f32 %v9489, %v9745
    %v10002 = vmax.f32 %v9490, %v9746
    %v10003 = vmax.f32 %v9491, %v9747
    %v10004 = vmax.f32 %v9492, %v9748
    %v10005 = vmax.f32 %v9493, %v9749
    %v10006 = vmax.f32 %v9494, %v9750
    %v10007 = vmax.f32 %v9495, %v9751
    %v10008 = vmax.f32 %v9496, %v9752
    %v10009 = vmax.f32 %v9497, %v9753
    %v10010 = vmax.f32 %v9498, %v9754
    %v10011 = vmax.f32 %v9499, %v9755
    %v10012 = vmax.f32 %v9500, %v9756
    %v10013 = vmax.f32 %v9501, %v9757
    %v10014 = vmax.f32 %v9502, %v9758
    %v10015 = vmax.f32 %v9503, %v9759
    %v10016 = vmax.f32 %v9504, %v9760
    %v10017 = vmax.f32 %v9505, %v9761
    %v10018 = vmax.f32 %v9506, %v9762
    %v10019 = vmax.f32 %v9507, %v9763
    %v10020 = vmax.f32 %v9508, %v9764
    %v10021 = vmax.f32 %v9509, %v9765
    %v10022 = vmax.f32 %v9510, %v9766
    %v10023 = vmax.f32 %v9511, %v9767
    %v10024 = vmax.f32 %v9512, %v9768
    %v10025 = vmax.f32 %v9513, %v9769
    %v10026 = vmax.f32 %v9514, %v9770
    %v10027 = vmax.f32 %v9515, %v9771
    %v10028 = vmax.f32 %v9516, %v9772
    %v10029 = vmax.f32 %v9517, %v9773
    %v10030 = vmax.f32 %v9518, %v9774
    %v10031 = vmax.f32 %v9519, %v9775
    %v10032 = vmax.f32 %v9520, %v9776
    %v10033 = vmax.f32 %v9521, %v9777
    %v10034 = vmax.f32 %v9522, %v9778
    %v10035 = vmax.f32 %v9523, %v9779
    %v10036 = vmax.f32 %v9524, %v9780
    %v10037 = vmax.f32 %v9525, %v9781
    %v10038 = vmax.f32 %v9526, %v9782
    %v10039 = vmax.f32 %v9527, %v9783
    %v10040 = vmax.f32 %v9528, %v9784
    %v10041 = vmax.f32 %v9529, %v9785
    %v10042 = vmax.f32 %v9530, %v9786
    %v10043 = vmax.f32 %v9531, %v9787
    %v10044 = vmax.f32 %v9532, %v9788
    %v10045 = vmax.f32 %v9533, %v9789
    %v10046 = vmax.f32 %v9534, %v9790
    %v10047 = vmax.f32 %v9535, %v9791
    %v10048 = vmax.f32 %v9536, %v9792
    %v10049 = vmax.f32 %v9537, %v9793
    %v10050 = vmax.f32 %v9538, %v9794
    %v10051 = vmax.f32 %v9539, %v9795
    %v10052 = vmax.f32 %v9540, %v9796
    %v10053 = vmax.f32 %v9541, %v9797
    %v10054 = vmax.f32 %v9542, %v9798
    %v10055 = vmax.f32 %v9543, %v9799
    %v10056 = vmax.f32 %v9544, %v9800
    %v10057 = vmax.f32 %v9545, %v9801
    %v10058 = vmax.f32 %v9546, %v9802
    %v10059 = vmax.f32 %v9547, %v9803
    %v10060 = vmax.f32 %v9548, %v9804
    %v10061 = vmax.f32 %v9549, %v9805
    %v10062 = vmax.f32 %v9550, %v9806
    %v10063 = vmax.f32 %v9551, %v9807
    %v10064 = vmax.f32 %v9552, %v9808
    %v10065 = vmax.f32 %v9553, %v9809
    %v10066 = vmax.f32 %v9554, %v9810
    %v10067 = vmax.f32 %v9555, %v9811
    %v10068 = vmax.f32 %v9556, %v9812
    %v10069 = vmax.f32 %v9557, %v9813
    %v10070 = vmax.f32 %v9558, %v9814
    %v10071 = vmax.f32 %v9559, %v9815
    %v10072 = vmax.f32 %v9560, %v9816
    %v10073 = vmax.f32 %v9561, %v9817
    %v10074 = vmax.f32 %v9562, %v9818
    %v10075 = vmax.f32 %v9563, %v9819
    %v10076 = vmax.f32 %v9564, %v9820
    %v10077 = vmax.f32 %v9565, %v9821
    %v10078 = vmax.f32 %v9566, %v9822
    %v10079 = vmax.f32 %v9567, %v9823
    %v10080 = vmax.f32 %v9568, %v9824
    %v10081 = vmax.f32 %v9569, %v9825
    %v10082 = vmax.f32 %v9570, %v9826
    %v10083 = vmax.f32 %v9571, %v9827
    %v10084 = vmax.f32 %v9572, %v9828
    %v10085 = vmax.f32 %v9573, %v9829
    %v10086 = vmax.f32 %v9574, %v9830
    %v10087 = vmax.f32 %v9575, %v9831
    %v10088 = vmax.f32 %v9576, %v9832
    %v10089 = vmax.f32 %v9577, %v9833
    %v10090 = vmax.f32 %v9578, %v9834
    %v10091 = vmax.f32 %v9579, %v9835
    %v10092 = vmax.f32 %v9580, %v9836
    %v10093 = vmax.f32 %v9581, %v9837
    %v10094 = vmax.f32 %v9582, %v9838
    %v10095 = vmax.f32 %v9583, %v9839
    %v10096 = vmax.f32 %v9584, %v9840
    %v10097 = vmax.f32 %v9585, %v9841
    %v10098 = vmax.f32 %v9586, %v9842
    %v10099 = vmax.f32 %v9587, %v9843
    %v10100 = vmax.f32 %v9588, %v9844
    %v10101 = vmax.f32 %v9589, %v9845
    %v10102 = vmax.f32 %v9590, %v9846
    %v10103 = vmax.f32 %v9591, %v9847
    %v10104 = vmax.f32 %v9592, %v9848
    %v10105 = vmax.f32 %v9593, %v9849
    %v10106 = vmax.f32 %v9594, %v9850
    %v10107 = vmax.f32 %v9595, %v9851
    %v10108 = vmax.f32 %v9596, %v9852
    %v10109 = vmax.f32 %v9597, %v9853
    %v10110 = vmax.f32 %v9598, %v9854
    %v10111 = vmax.f32 %v9599, %v9855
    %v10112 = vmax.f32 %v9600, %v9856
    %v10113 = vmax.f32 %v9601, %v9857
    %v10114 = vmax.f32 %v9602, %v9858
    %v10115 = vmax.f32 %v9603, %v9859
    %v10116 = vmax.f32 %v9604, %v9860
    %v10117 = vmax.f32 %v9605, %v9861
    %v10118 = vmax.f32 %v9606, %v9862
    %v10119 = vmax.f32 %v9607, %v9863
    %v10120 = vmax.f32 %v9608, %v9864
    %v10121 = vmax.f32 %v9609, %v9865
    %v10122 = vmax.f32 %v9610, %v9866
    %v10123 = vmax.f32 %v9611, %v9867
    %v10124 = vmax.f32 %v9612, %v9868
    %v10125 = vmax.f32 %v9613, %v9869
    %v10126 = vmax.f32 %v9614, %v9870
    %v10127 = vmax.f32 %v9615, %v9871
    %v10128 = vmax.f32 %v9616, %v9872
    %v10129 = vmax.f32 %v9617, %v9873
    %v10130 = vmax.f32 %v9618, %v9874
    %v10131 = vmax.f32 %v9619, %v9875
    %v10132 = vmax.f32 %v9620, %v9876
    %v10133 = vmax.f32 %v9621, %v9877
    %v10134 = vmax.f32 %v9622, %v9878
    %v10135 = vmax.f32 %v9623, %v9879
    %v10136 = vmax.f32 %v9624, %v9880
    %v10137 = vmax.f32 %v9625, %v9881
    %v10138 = vmax.f32 %v9626, %v9882
    %v10139 = vmax.f32 %v9627, %v9883
    %v10140 = vmax.f32 %v9628, %v9884
    %v10141 = vmax.f32 %v9629, %v9885
    %v10142 = vmax.f32 %v9630, %v9886
    %v10143 = vmax.f32 %v9631, %v9887
    %v10144 = vmax.f32 %v9632, %v9888
    %v10145 = vmax.f32 %v9633, %v9889
    %v10146 = vmax.f32 %v9634, %v9890
    %v10147 = vmax.f32 %v9635, %v9891
    %v10148 = vmax.f32 %v9636, %v9892
    %v10149 = vmax.f32 %v9637, %v9893
    %v10150 = vmax.f32 %v9638, %v9894
    %v10151 = vmax.f32 %v9639, %v9895
    %v10152 = vmax.f32 %v9640, %v9896
    %v10153 = vmax.f32 %v9641, %v9897
    %v10154 = vmax.f32 %v9642, %v9898
    %v10155 = vmax.f32 %v9643, %v9899
    %v10156 = vmax.f32 %v9644, %v9900
    %v10157 = vmax.f32 %v9645, %v9901
    %v10158 = vmax.f32 %v9646, %v9902
    %v10159 = vmax.f32 %v9647, %v9903
    %v10160 = vmax.f32 %v9648, %v9904
    %v10161 = vmax.f32 %v9649, %v9905
    %v10162 = vmax.f32 %v9650, %v9906
    %v10163 = vmax.f32 %v9651, %v9907
    %v10164 = vmax.f32 %v9652, %v9908
    %v10165 = vmax.f32 %v9653, %v9909
    %v10166 = vmax.f32 %v9654, %v9910
    %v10167 = vmax.f32 %v9655, %v9911
    %v10168 = vmax.f32 %v9656, %v9912
    %v10169 = vmax.f32 %v9657, %v9913
    %v10170 = vmax.f32 %v9658, %v9914
    %v10171 = vmax.f32 %v9659, %v9915
    %v10172 = vmax.f32 %v9660, %v9916
    %v10173 = vmax.f32 %v9661, %v9917
    %v10174 = vmax.f32 %v9662, %v9918
    %v10175 = vmax.f32 %v9663, %v9919
    %v10176 = vmax.f32 %v9664, %v9920
    %v10177 = vmax.f32 %v9665, %v9921
    %v10178 = vmax.f32 %v9666, %v9922
    %v10179 = vmax.f32 %v9667, %v9923
    %v10180 = vmax.f32 %v9668, %v9924
    %v10181 = vmax.f32 %v9669, %v9925
    %v10182 = vmax.f32 %v9670, %v9926
    %v10183 = vmax.f32 %v9671, %v9927
    %v10184 = vmax.f32 %v9672, %v9928
    %v10185 = vmax.f32 %v9673, %v9929
    %v10186 = vmax.f32 %v9674, %v9930
    %v10187 = vmax.f32 %v9675, %v9931
    %v10188 = vmax.f32 %v9676, %v9932
    %v10189 = vmax.f32 %v9677, %v9933
    %v10190 = vmax.f32 %v9678, %v9934
    %v10191 = vmax.f32 %v9679, %v9935
    %v10192 = vmax.f32 %v9680, %v9936
    %v10193 = vmax.f32 %v9681, %v9937
    %v10194 = vmax.f32 %v9682, %v9938
    %v10195 = vmax.f32 %v9683, %v9939
    %v10196 = vmax.f32 %v9684, %v9940
    %v10197 = vmax.f32 %v9685, %v9941
    %v10198 = vmax.f32 %v9686, %v9942
    %v10199 = vmax.f32 %v9687, %v9943
    %v10200 = vmax.f32 %v9688, %v9944
    %v10201 = vmax.f32 %v9689, %v9945
    %v10202 = vmax.f32 %v9690, %v9946
    %v10203 = vmax.f32 %v9691, %v9947
    %v10204 = vmax.f32 %v9692, %v9948
    %v10205 = vmax.f32 %v9693, %v9949
    %v10206 = vmax.f32 %v9694, %v9950
    %v10207 = vld [vmem:[#allocation12] sm:$0xf]
    %v10208 = vld [vmem:[#allocation12 + $0x4] sm:$0xf]
    %v10209 = vld [vmem:[#allocation12 + $0x8] sm:$0xf]
    %v10210 = vld [vmem:[#allocation12 + $0xc] sm:$0xf]
    %v10211 = vld [vmem:[#allocation12 + $0x10] sm:$0xf]
    %v10212 = vld [vmem:[#allocation12 + $0x14] sm:$0xf]
    %v10213 = vld [vmem:[#allocation12 + $0x18] sm:$0xf]
    %v10214 = vld [vmem:[#allocation12 + $0x1c] sm:$0xf]
    %v10215 = vld [vmem:[#allocation12 + $0x20] sm:$0xf]
    %v10216 = vld [vmem:[#allocation12 + $0x24] sm:$0xf]
    %v10217 = vld [vmem:[#allocation12 + $0x28] sm:$0xf]
    %v10218 = vld [vmem:[#allocation12 + $0x2c] sm:$0xf]
    %v10219 = vld [vmem:[#allocation12 + $0x30] sm:$0xf]
    %v10220 = vld [vmem:[#allocation12 + $0x34] sm:$0xf]
    %v10221 = vld [vmem:[#allocation12 + $0x38] sm:$0xf]
    %v10222 = vld [vmem:[#allocation12 + $0x3c] sm:$0xf]
    %v10223 = vld [vmem:[#allocation12 + $0x40] sm:$0xf]
    %v10224 = vld [vmem:[#allocation12 + $0x44] sm:$0xf]
    %v10225 = vld [vmem:[#allocation12 + $0x48] sm:$0xf]
    %v10226 = vld [vmem:[#allocation12 + $0x4c] sm:$0xf]
    %v10227 = vld [vmem:[#allocation12 + $0x50] sm:$0xf]
    %v10228 = vld [vmem:[#allocation12 + $0x54] sm:$0xf]
    %v10229 = vld [vmem:[#allocation12 + $0x58] sm:$0xf]
    %v10230 = vld [vmem:[#allocation12 + $0x5c] sm:$0xf]
    %v10231 = vld [vmem:[#allocation12 + $0x60] sm:$0xf]
    %v10232 = vld [vmem:[#allocation12 + $0x64] sm:$0xf]
    %v10233 = vld [vmem:[#allocation12 + $0x68] sm:$0xf]
    %v10234 = vld [vmem:[#allocation12 + $0x6c] sm:$0xf]
    %v10235 = vld [vmem:[#allocation12 + $0x70] sm:$0xf]
    %v10236 = vld [vmem:[#allocation12 + $0x74] sm:$0xf]
    %v10237 = vld [vmem:[#allocation12 + $0x78] sm:$0xf]
    %v10238 = vld [vmem:[#allocation12 + $0x7c] sm:$0xf]
    %v10239 = vld [vmem:[#allocation12 + $0x80] sm:$0xf]
    %v10240 = vld [vmem:[#allocation12 + $0x84] sm:$0xf]
    %v10241 = vld [vmem:[#allocation12 + $0x88] sm:$0xf]
    %v10242 = vld [vmem:[#allocation12 + $0x8c] sm:$0xf]
    %v10243 = vld [vmem:[#allocation12 + $0x90] sm:$0xf]
    %v10244 = vld [vmem:[#allocation12 + $0x94] sm:$0xf]
    %v10245 = vld [vmem:[#allocation12 + $0x98] sm:$0xf]
    %v10246 = vld [vmem:[#allocation12 + $0x9c] sm:$0xf]
    %v10247 = vld [vmem:[#allocation12 + $0xa0] sm:$0xf]
    %v10248 = vld [vmem:[#allocation12 + $0xa4] sm:$0xf]
    %v10249 = vld [vmem:[#allocation12 + $0xa8] sm:$0xf]
    %v10250 = vld [vmem:[#allocation12 + $0xac] sm:$0xf]
    %v10251 = vld [vmem:[#allocation12 + $0xb0] sm:$0xf]
    %v10252 = vld [vmem:[#allocation12 + $0xb4] sm:$0xf]
    %v10253 = vld [vmem:[#allocation12 + $0xb8] sm:$0xf]
    %v10254 = vld [vmem:[#allocation12 + $0xbc] sm:$0xf]
    %v10255 = vld [vmem:[#allocation12 + $0xc0] sm:$0xf]
    %v10256 = vld [vmem:[#allocation12 + $0xc4] sm:$0xf]
    %v10257 = vld [vmem:[#allocation12 + $0xc8] sm:$0xf]
    %v10258 = vld [vmem:[#allocation12 + $0xcc] sm:$0xf]
    %v10259 = vld [vmem:[#allocation12 + $0xd0] sm:$0xf]
    %v10260 = vld [vmem:[#allocation12 + $0xd4] sm:$0xf]
    %v10261 = vld [vmem:[#allocation12 + $0xd8] sm:$0xf]
    %v10262 = vld [vmem:[#allocation12 + $0xdc] sm:$0xf]
    %v10263 = vld [vmem:[#allocation12 + $0xe0] sm:$0xf]
    %v10264 = vld [vmem:[#allocation12 + $0xe4] sm:$0xf]
    %v10265 = vld [vmem:[#allocation12 + $0xe8] sm:$0xf]
    %v10266 = vld [vmem:[#allocation12 + $0xec] sm:$0xf]
    %v10267 = vld [vmem:[#allocation12 + $0xf0] sm:$0xf]
    %v10268 = vld [vmem:[#allocation12 + $0xf4] sm:$0xf]
    %v10269 = vld [vmem:[#allocation12 + $0xf8] sm:$0xf]
    %v10270 = vld [vmem:[#allocation12 + $0xfc] sm:$0xf]
    %v10271 = vld [vmem:[#allocation12 + $0x100] sm:$0xf]
    %v10272 = vld [vmem:[#allocation12 + $0x104] sm:$0xf]
    %v10273 = vld [vmem:[#allocation12 + $0x108] sm:$0xf]
    %v10274 = vld [vmem:[#allocation12 + $0x10c] sm:$0xf]
    %v10275 = vld [vmem:[#allocation12 + $0x110] sm:$0xf]
    %v10276 = vld [vmem:[#allocation12 + $0x114] sm:$0xf]
    %v10277 = vld [vmem:[#allocation12 + $0x118] sm:$0xf]
    %v10278 = vld [vmem:[#allocation12 + $0x11c] sm:$0xf]
    %v10279 = vld [vmem:[#allocation12 + $0x120] sm:$0xf]
    %v10280 = vld [vmem:[#allocation12 + $0x124] sm:$0xf]
    %v10281 = vld [vmem:[#allocation12 + $0x128] sm:$0xf]
    %v10282 = vld [vmem:[#allocation12 + $0x12c] sm:$0xf]
    %v10283 = vld [vmem:[#allocation12 + $0x130] sm:$0xf]
    %v10284 = vld [vmem:[#allocation12 + $0x134] sm:$0xf]
    %v10285 = vld [vmem:[#allocation12 + $0x138] sm:$0xf]
    %v10286 = vld [vmem:[#allocation12 + $0x13c] sm:$0xf]
    %v10287 = vld [vmem:[#allocation12 + $0x140] sm:$0xf]
    %v10288 = vld [vmem:[#allocation12 + $0x144] sm:$0xf]
    %v10289 = vld [vmem:[#allocation12 + $0x148] sm:$0xf]
    %v10290 = vld [vmem:[#allocation12 + $0x14c] sm:$0xf]
    %v10291 = vld [vmem:[#allocation12 + $0x150] sm:$0xf]
    %v10292 = vld [vmem:[#allocation12 + $0x154] sm:$0xf]
    %v10293 = vld [vmem:[#allocation12 + $0x158] sm:$0xf]
    %v10294 = vld [vmem:[#allocation12 + $0x15c] sm:$0xf]
    %v10295 = vld [vmem:[#allocation12 + $0x160] sm:$0xf]
    %v10296 = vld [vmem:[#allocation12 + $0x164] sm:$0xf]
    %v10297 = vld [vmem:[#allocation12 + $0x168] sm:$0xf]
    %v10298 = vld [vmem:[#allocation12 + $0x16c] sm:$0xf]
    %v10299 = vld [vmem:[#allocation12 + $0x170] sm:$0xf]
    %v10300 = vld [vmem:[#allocation12 + $0x174] sm:$0xf]
    %v10301 = vld [vmem:[#allocation12 + $0x178] sm:$0xf]
    %v10302 = vld [vmem:[#allocation12 + $0x17c] sm:$0xf]
    %v10303 = vld [vmem:[#allocation12 + $0x180] sm:$0xf]
    %v10304 = vld [vmem:[#allocation12 + $0x184] sm:$0xf]
    %v10305 = vld [vmem:[#allocation12 + $0x188] sm:$0xf]
    %v10306 = vld [vmem:[#allocation12 + $0x18c] sm:$0xf]
    %v10307 = vld [vmem:[#allocation12 + $0x190] sm:$0xf]
    %v10308 = vld [vmem:[#allocation12 + $0x194] sm:$0xf]
    %v10309 = vld [vmem:[#allocation12 + $0x198] sm:$0xf]
    %v10310 = vld [vmem:[#allocation12 + $0x19c] sm:$0xf]
    %v10311 = vld [vmem:[#allocation12 + $0x1a0] sm:$0xf]
    %v10312 = vld [vmem:[#allocation12 + $0x1a4] sm:$0xf]
    %v10313 = vld [vmem:[#allocation12 + $0x1a8] sm:$0xf]
    %v10314 = vld [vmem:[#allocation12 + $0x1ac] sm:$0xf]
    %v10315 = vld [vmem:[#allocation12 + $0x1b0] sm:$0xf]
    %v10316 = vld [vmem:[#allocation12 + $0x1b4] sm:$0xf]
    %v10317 = vld [vmem:[#allocation12 + $0x1b8] sm:$0xf]
    %v10318 = vld [vmem:[#allocation12 + $0x1bc] sm:$0xf]
    %v10319 = vld [vmem:[#allocation12 + $0x1c0] sm:$0xf]
    %v10320 = vld [vmem:[#allocation12 + $0x1c4] sm:$0xf]
    %v10321 = vld [vmem:[#allocation12 + $0x1c8] sm:$0xf]
    %v10322 = vld [vmem:[#allocation12 + $0x1cc] sm:$0xf]
    %v10323 = vld [vmem:[#allocation12 + $0x1d0] sm:$0xf]
    %v10324 = vld [vmem:[#allocation12 + $0x1d4] sm:$0xf]
    %v10325 = vld [vmem:[#allocation12 + $0x1d8] sm:$0xf]
    %v10326 = vld [vmem:[#allocation12 + $0x1dc] sm:$0xf]
    %v10327 = vld [vmem:[#allocation12 + $0x1e0] sm:$0xf]
    %v10328 = vld [vmem:[#allocation12 + $0x1e4] sm:$0xf]
    %v10329 = vld [vmem:[#allocation12 + $0x1e8] sm:$0xf]
    %v10330 = vld [vmem:[#allocation12 + $0x1ec] sm:$0xf]
    %v10331 = vld [vmem:[#allocation12 + $0x1f0] sm:$0xf]
    %v10332 = vld [vmem:[#allocation12 + $0x1f4] sm:$0xf]
    %v10333 = vld [vmem:[#allocation12 + $0x1f8] sm:$0xf]
    %v10334 = vld [vmem:[#allocation12 + $0x1fc] sm:$0xf]
    %v10335 = vunpack.c.l.bf16 %v10207
    %v10336 = vunpack.c.l.bf16 %v10208
    %v10337 = vunpack.c.l.bf16 %v10209
    %v10338 = vunpack.c.l.bf16 %v10210
    %v10339 = vunpack.c.l.bf16 %v10211
    %v10340 = vunpack.c.l.bf16 %v10212
    %v10341 = vunpack.c.l.bf16 %v10213
    %v10342 = vunpack.c.l.bf16 %v10214
    %v10343 = vunpack.c.l.bf16 %v10215
    %v10344 = vunpack.c.l.bf16 %v10216
    %v10345 = vunpack.c.l.bf16 %v10217
    %v10346 = vunpack.c.l.bf16 %v10218
    %v10347 = vunpack.c.l.bf16 %v10219
    %v10348 = vunpack.c.l.bf16 %v10220
    %v10349 = vunpack.c.l.bf16 %v10221
    %v10350 = vunpack.c.l.bf16 %v10222
    %v10351 = vunpack.c.l.bf16 %v10223
    %v10352 = vunpack.c.l.bf16 %v10224
    %v10353 = vunpack.c.l.bf16 %v10225
    %v10354 = vunpack.c.l.bf16 %v10226
    %v10355 = vunpack.c.l.bf16 %v10227
    %v10356 = vunpack.c.l.bf16 %v10228
    %v10357 = vunpack.c.l.bf16 %v10229
    %v10358 = vunpack.c.l.bf16 %v10230
    %v10359 = vunpack.c.l.bf16 %v10231
    %v10360 = vunpack.c.l.bf16 %v10232
    %v10361 = vunpack.c.l.bf16 %v10233
    %v10362 = vunpack.c.l.bf16 %v10234
    %v10363 = vunpack.c.l.bf16 %v10235
    %v10364 = vunpack.c.l.bf16 %v10236
    %v10365 = vunpack.c.l.bf16 %v10237
    %v10366 = vunpack.c.l.bf16 %v10238
    %v10367 = vunpack.c.l.bf16 %v10239
    %v10368 = vunpack.c.l.bf16 %v10240
    %v10369 = vunpack.c.l.bf16 %v10241
    %v10370 = vunpack.c.l.bf16 %v10242
    %v10371 = vunpack.c.l.bf16 %v10243
    %v10372 = vunpack.c.l.bf16 %v10244
    %v10373 = vunpack.c.l.bf16 %v10245
    %v10374 = vunpack.c.l.bf16 %v10246
    %v10375 = vunpack.c.l.bf16 %v10247
    %v10376 = vunpack.c.l.bf16 %v10248
    %v10377 = vunpack.c.l.bf16 %v10249
    %v10378 = vunpack.c.l.bf16 %v10250
    %v10379 = vunpack.c.l.bf16 %v10251
    %v10380 = vunpack.c.l.bf16 %v10252
    %v10381 = vunpack.c.l.bf16 %v10253
    %v10382 = vunpack.c.l.bf16 %v10254
    %v10383 = vunpack.c.l.bf16 %v10255
    %v10384 = vunpack.c.l.bf16 %v10256
    %v10385 = vunpack.c.l.bf16 %v10257
    %v10386 = vunpack.c.l.bf16 %v10258
    %v10387 = vunpack.c.l.bf16 %v10259
    %v10388 = vunpack.c.l.bf16 %v10260
    %v10389 = vunpack.c.l.bf16 %v10261
    %v10390 = vunpack.c.l.bf16 %v10262
    %v10391 = vunpack.c.l.bf16 %v10263
    %v10392 = vunpack.c.l.bf16 %v10264
    %v10393 = vunpack.c.l.bf16 %v10265
    %v10394 = vunpack.c.l.bf16 %v10266
    %v10395 = vunpack.c.l.bf16 %v10267
    %v10396 = vunpack.c.l.bf16 %v10268
    %v10397 = vunpack.c.l.bf16 %v10269
    %v10398 = vunpack.c.l.bf16 %v10270
    %v10399 = vunpack.c.l.bf16 %v10271
    %v10400 = vunpack.c.l.bf16 %v10272
    %v10401 = vunpack.c.l.bf16 %v10273
    %v10402 = vunpack.c.l.bf16 %v10274
    %v10403 = vunpack.c.l.bf16 %v10275
    %v10404 = vunpack.c.l.bf16 %v10276
    %v10405 = vunpack.c.l.bf16 %v10277
    %v10406 = vunpack.c.l.bf16 %v10278
    %v10407 = vunpack.c.l.bf16 %v10279
    %v10408 = vunpack.c.l.bf16 %v10280
    %v10409 = vunpack.c.l.bf16 %v10281
    %v10410 = vunpack.c.l.bf16 %v10282
    %v10411 = vunpack.c.l.bf16 %v10283
    %v10412 = vunpack.c.l.bf16 %v10284
    %v10413 = vunpack.c.l.bf16 %v10285
    %v10414 = vunpack.c.l.bf16 %v10286
    %v10415 = vunpack.c.l.bf16 %v10287
    %v10416 = vunpack.c.l.bf16 %v10288
    %v10417 = vunpack.c.l.bf16 %v10289
    %v10418 = vunpack.c.l.bf16 %v10290
    %v10419 = vunpack.c.l.bf16 %v10291
    %v10420 = vunpack.c.l.bf16 %v10292
    %v10421 = vunpack.c.l.bf16 %v10293
    %v10422 = vunpack.c.l.bf16 %v10294
    %v10423 = vunpack.c.l.bf16 %v10295
    %v10424 = vunpack.c.l.bf16 %v10296
    %v10425 = vunpack.c.l.bf16 %v10297
    %v10426 = vunpack.c.l.bf16 %v10298
    %v10427 = vunpack.c.l.bf16 %v10299
    %v10428 = vunpack.c.l.bf16 %v10300
    %v10429 = vunpack.c.l.bf16 %v10301
    %v10430 = vunpack.c.l.bf16 %v10302
    %v10431 = vunpack.c.l.bf16 %v10303
    %v10432 = vunpack.c.l.bf16 %v10304
    %v10433 = vunpack.c.l.bf16 %v10305
    %v10434 = vunpack.c.l.bf16 %v10306
    %v10435 = vunpack.c.l.bf16 %v10307
    %v10436 = vunpack.c.l.bf16 %v10308
    %v10437 = vunpack.c.l.bf16 %v10309
    %v10438 = vunpack.c.l.bf16 %v10310
    %v10439 = vunpack.c.l.bf16 %v10311
    %v10440 = vunpack.c.l.bf16 %v10312
    %v10441 = vunpack.c.l.bf16 %v10313
    %v10442 = vunpack.c.l.bf16 %v10314
    %v10443 = vunpack.c.l.bf16 %v10315
    %v10444 = vunpack.c.l.bf16 %v10316
    %v10445 = vunpack.c.l.bf16 %v10317
    %v10446 = vunpack.c.l.bf16 %v10318
    %v10447 = vunpack.c.l.bf16 %v10319
    %v10448 = vunpack.c.l.bf16 %v10320
    %v10449 = vunpack.c.l.bf16 %v10321
    %v10450 = vunpack.c.l.bf16 %v10322
    %v10451 = vunpack.c.l.bf16 %v10323
    %v10452 = vunpack.c.l.bf16 %v10324
    %v10453 = vunpack.c.l.bf16 %v10325
    %v10454 = vunpack.c.l.bf16 %v10326
    %v10455 = vunpack.c.l.bf16 %v10327
    %v10456 = vunpack.c.l.bf16 %v10328
    %v10457 = vunpack.c.l.bf16 %v10329
    %v10458 = vunpack.c.l.bf16 %v10330
    %v10459 = vunpack.c.l.bf16 %v10331
    %v10460 = vunpack.c.l.bf16 %v10332
    %v10461 = vunpack.c.l.bf16 %v10333
    %v10462 = vunpack.c.l.bf16 %v10334
    %v10463 = vld [vmem:[#allocation13] sm:$0x1]
    %v10465 = vperm.slane %v10463, 0
    %10467 = vmatpush.msra.mxu0 %v10350
    %10468 = vmatpush.msra.mxu0 %v10349
    %10469 = vmatpush.msra.mxu0 %v10348
    %10470 = vmatpush.msra.mxu0 %v10347
    %10471 = vmatpush.msra.mxu0 %v10346
    %10472 = vmatpush.msra.mxu0 %v10345
    %10473 = vmatpush.msra.mxu0 %v10344
    %10474 = vmatpush.msra.mxu0 %v10343
    %10475 = vmatpush.msra.mxu0 %v10342
    %10476 = vmatpush.msra.mxu0 %v10341
    %10477 = vmatpush.msra.mxu0 %v10340
    %10478 = vmatpush.msra.mxu0 %v10339
    %10479 = vmatpush.msra.mxu0 %v10338
    %10480 = vmatpush.msra.mxu0 %v10337
    %10481 = vmatpush.msra.mxu0 %v10336
    %10482 = vmatpush.msra.mxu0 %v10335
    %10483 = vmatmul.f32.gmra.mxu0 %v9951
    %v10484 = vpop.f32.mrf.mxu0
    %v10485 = vadd.f32 %v10465, %v10484
    %10486 = vmatmul.f32.gmra.mxu0 %v9959
    %v10487 = vpop.f32.mrf.mxu0
    %v10488 = vadd.f32 %v10465, %v10487
    %10489 = vmatmul.f32.gmra.mxu0 %v9967
    %v10490 = vpop.f32.mrf.mxu0
    %v10491 = vadd.f32 %v10465, %v10490
    %10492 = vmatmul.f32.gmra.mxu0 %v9975
    %v10493 = vpop.f32.mrf.mxu0
    %v10494 = vadd.f32 %v10465, %v10493
    %10495 = vmatmul.f32.gmra.mxu0 %v9983
    %v10496 = vpop.f32.mrf.mxu0
    %v10497 = vadd.f32 %v10465, %v10496
    %10498 = vmatmul.f32.gmra.mxu0 %v9991
    %v10499 = vpop.f32.mrf.mxu0
    %v10500 = vadd.f32 %v10465, %v10499
    %10501 = vmatmul.f32.gmra.mxu0 %v9999
    %v10502 = vpop.f32.mrf.mxu0
    %v10503 = vadd.f32 %v10465, %v10502
    %10504 = vmatmul.f32.gmra.mxu0 %v10007
    %v10505 = vpop.f32.mrf.mxu0
    %v10506 = vadd.f32 %v10465, %v10505
    %10507 = vmatmul.f32.gmra.mxu0 %v10015
    %v10508 = vpop.f32.mrf.mxu0
    %v10509 = vadd.f32 %v10465, %v10508
    %10510 = vmatmul.f32.gmra.mxu0 %v10023
    %v10511 = vpop.f32.mrf.mxu0
    %v10512 = vadd.f32 %v10465, %v10511
    %10513 = vmatmul.f32.gmra.mxu0 %v10031
    %v10514 = vpop.f32.mrf.mxu0
    %v10515 = vadd.f32 %v10465, %v10514
    %10516 = vmatmul.f32.gmra.mxu0 %v10039
    %v10517 = vpop.f32.mrf.mxu0
    %v10518 = vadd.f32 %v10465, %v10517
    %10519 = vmatmul.f32.gmra.mxu0 %v10047
    %v10520 = vpop.f32.mrf.mxu0
    %v10521 = vadd.f32 %v10465, %v10520
    %10522 = vmatmul.f32.gmra.mxu0 %v10055
    %v10523 = vpop.f32.mrf.mxu0
    %v10524 = vadd.f32 %v10465, %v10523
    %10525 = vmatmul.f32.gmra.mxu0 %v10063
    %v10526 = vpop.f32.mrf.mxu0
    %v10527 = vadd.f32 %v10465, %v10526
    %10528 = vmatmul.f32.gmra.mxu0 %v10071
    %v10529 = vpop.f32.mrf.mxu0
    %v10530 = vadd.f32 %v10465, %v10529
    %10531 = vmatmul.f32.gmra.mxu0 %v10079
    %v10532 = vpop.f32.mrf.mxu0
    %v10533 = vadd.f32 %v10465, %v10532
    %10534 = vmatmul.f32.gmra.mxu0 %v10087
    %v10535 = vpop.f32.mrf.mxu0
    %v10536 = vadd.f32 %v10465, %v10535
    %10537 = vmatmul.f32.gmra.mxu0 %v10095
    %v10538 = vpop.f32.mrf.mxu0
    %v10539 = vadd.f32 %v10465, %v10538
    %10540 = vmatmul.f32.gmra.mxu0 %v10103
    %v10541 = vpop.f32.mrf.mxu0
    %v10542 = vadd.f32 %v10465, %v10541
    %10543 = vmatmul.f32.gmra.mxu0 %v10111
    %v10544 = vpop.f32.mrf.mxu0
    %v10545 = vadd.f32 %v10465, %v10544
    %10546 = vmatmul.f32.gmra.mxu0 %v10119
    %v10547 = vpop.f32.mrf.mxu0
    %v10548 = vadd.f32 %v10465, %v10547
    %10549 = vmatmul.f32.gmra.mxu0 %v10127
    %v10550 = vpop.f32.mrf.mxu0
    %v10551 = vadd.f32 %v10465, %v10550
    %10552 = vmatmul.f32.gmra.mxu0 %v10135
    %v10553 = vpop.f32.mrf.mxu0
    %v10554 = vadd.f32 %v10465, %v10553
    %10555 = vmatmul.f32.gmra.mxu0 %v10143
    %v10556 = vpop.f32.mrf.mxu0
    %v10557 = vadd.f32 %v10465, %v10556
    %10558 = vmatmul.f32.gmra.mxu0 %v10151
    %v10559 = vpop.f32.mrf.mxu0
    %v10560 = vadd.f32 %v10465, %v10559
    %10561 = vmatmul.f32.gmra.mxu0 %v10159
    %v10562 = vpop.f32.mrf.mxu0
    %v10563 = vadd.f32 %v10465, %v10562
    %10564 = vmatmul.f32.gmra.mxu0 %v10167
    %v10565 = vpop.f32.mrf.mxu0
    %v10566 = vadd.f32 %v10465, %v10565
    %10567 = vmatmul.f32.gmra.mxu0 %v10175
    %v10568 = vpop.f32.mrf.mxu0
    %v10569 = vadd.f32 %v10465, %v10568
    %10570 = vmatmul.f32.gmra.mxu0 %v10183
    %v10571 = vpop.f32.mrf.mxu0
    %v10572 = vadd.f32 %v10465, %v10571
    %10573 = vmatmul.f32.gmra.mxu0 %v10191
    %v10574 = vpop.f32.mrf.mxu0
    %v10575 = vadd.f32 %v10465, %v10574
    %10576 = vmatmul.f32.gmra.mxu0 %v10199
    %v10577 = vpop.f32.mrf.mxu0
    %v10578 = vadd.f32 %v10465, %v10577
    %10579 = vdwg.mxu0
    %10580 = vmatpush.msra.mxu0 %v10366
    %10581 = vmatpush.msra.mxu0 %v10365
    %10582 = vmatpush.msra.mxu0 %v10364
    %10583 = vmatpush.msra.mxu0 %v10363
    %10584 = vmatpush.msra.mxu0 %v10362
    %10585 = vmatpush.msra.mxu0 %v10361
    %10586 = vmatpush.msra.mxu0 %v10360
    %10587 = vmatpush.msra.mxu0 %v10359
    %10588 = vmatpush.msra.mxu0 %v10358
    %10589 = vmatpush.msra.mxu0 %v10357
    %10590 = vmatpush.msra.mxu0 %v10356
    %10591 = vmatpush.msra.mxu0 %v10355
    %10592 = vmatpush.msra.mxu0 %v10354
    %10593 = vmatpush.msra.mxu0 %v10353
    %10594 = vmatpush.msra.mxu0 %v10352
    %10595 = vmatpush.msra.mxu0 %v10351
    %10596 = vmatmul.f32.gmra.mxu0 %v9952
    %v10597 = vpop.f32.mrf.mxu0
    %v10598 = vadd.f32 %v10485, %v10597
    %10599 = vmatmul.f32.gmra.mxu0 %v9960
    %v10600 = vpop.f32.mrf.mxu0
    %v10601 = vadd.f32 %v10488, %v10600
    %10602 = vmatmul.f32.gmra.mxu0 %v9968
    %v10603 = vpop.f32.mrf.mxu0
    %v10604 = vadd.f32 %v10491, %v10603
    %10605 = vmatmul.f32.gmra.mxu0 %v9976
    %v10606 = vpop.f32.mrf.mxu0
    %v10607 = vadd.f32 %v10494, %v10606
    %10608 = vmatmul.f32.gmra.mxu0 %v9984
    %v10609 = vpop.f32.mrf.mxu0
    %v10610 = vadd.f32 %v10497, %v10609
    %10611 = vmatmul.f32.gmra.mxu0 %v9992
    %v10612 = vpop.f32.mrf.mxu0
    %v10613 = vadd.f32 %v10500, %v10612
    %10614 = vmatmul.f32.gmra.mxu0 %v10000
    %v10615 = vpop.f32.mrf.mxu0
    %v10616 = vadd.f32 %v10503, %v10615
    %10617 = vmatmul.f32.gmra.mxu0 %v10008
    %v10618 = vpop.f32.mrf.mxu0
    %v10619 = vadd.f32 %v10506, %v10618
    %10620 = vmatmul.f32.gmra.mxu0 %v10016
    %v10621 = vpop.f32.mrf.mxu0
    %v10622 = vadd.f32 %v10509, %v10621
    %10623 = vmatmul.f32.gmra.mxu0 %v10024
    %v10624 = vpop.f32.mrf.mxu0
    %v10625 = vadd.f32 %v10512, %v10624
    %10626 = vmatmul.f32.gmra.mxu0 %v10032
    %v10627 = vpop.f32.mrf.mxu0
    %v10628 = vadd.f32 %v10515, %v10627
    %10629 = vmatmul.f32.gmra.mxu0 %v10040
    %v10630 = vpop.f32.mrf.mxu0
    %v10631 = vadd.f32 %v10518, %v10630
    %10632 = vmatmul.f32.gmra.mxu0 %v10048
    %v10633 = vpop.f32.mrf.mxu0
    %v10634 = vadd.f32 %v10521, %v10633
    %10635 = vmatmul.f32.gmra.mxu0 %v10056
    %v10636 = vpop.f32.mrf.mxu0
    %v10637 = vadd.f32 %v10524, %v10636
    %10638 = vmatmul.f32.gmra.mxu0 %v10064
    %v10639 = vpop.f32.mrf.mxu0
    %v10640 = vadd.f32 %v10527, %v10639
    %10641 = vmatmul.f32.gmra.mxu0 %v10072
    %v10642 = vpop.f32.mrf.mxu0
    %v10643 = vadd.f32 %v10530, %v10642
    %10644 = vmatmul.f32.gmra.mxu0 %v10080
    %v10645 = vpop.f32.mrf.mxu0
    %v10646 = vadd.f32 %v10533, %v10645
    %10647 = vmatmul.f32.gmra.mxu0 %v10088
    %v10648 = vpop.f32.mrf.mxu0
    %v10649 = vadd.f32 %v10536, %v10648
    %10650 = vmatmul.f32.gmra.mxu0 %v10096
    %v10651 = vpop.f32.mrf.mxu0
    %v10652 = vadd.f32 %v10539, %v10651
    %10653 = vmatmul.f32.gmra.mxu0 %v10104
    %v10654 = vpop.f32.mrf.mxu0
    %v10655 = vadd.f32 %v10542, %v10654
    %10656 = vmatmul.f32.gmra.mxu0 %v10112
    %v10657 = vpop.f32.mrf.mxu0
    %v10658 = vadd.f32 %v10545, %v10657
    %10659 = vmatmul.f32.gmra.mxu0 %v10120
    %v10660 = vpop.f32.mrf.mxu0
    %v10661 = vadd.f32 %v10548, %v10660
    %10662 = vmatmul.f32.gmra.mxu0 %v10128
    %v10663 = vpop.f32.mrf.mxu0
    %v10664 = vadd.f32 %v10551, %v10663
    %10665 = vmatmul.f32.gmra.mxu0 %v10136
    %v10666 = vpop.f32.mrf.mxu0
    %v10667 = vadd.f32 %v10554, %v10666
    %10668 = vmatmul.f32.gmra.mxu0 %v10144
    %v10669 = vpop.f32.mrf.mxu0
    %v10670 = vadd.f32 %v10557, %v10669
    %10671 = vmatmul.f32.gmra.mxu0 %v10152
    %v10672 = vpop.f32.mrf.mxu0
    %v10673 = vadd.f32 %v10560, %v10672
    %10674 = vmatmul.f32.gmra.mxu0 %v10160
    %v10675 = vpop.f32.mrf.mxu0
    %v10676 = vadd.f32 %v10563, %v10675
    %10677 = vmatmul.f32.gmra.mxu0 %v10168
    %v10678 = vpop.f32.mrf.mxu0
    %v10679 = vadd.f32 %v10566, %v10678
    %10680 = vmatmul.f32.gmra.mxu0 %v10176
    %v10681 = vpop.f32.mrf.mxu0
    %v10682 = vadd.f32 %v10569, %v10681
    %10683 = vmatmul.f32.gmra.mxu0 %v10184
    %v10684 = vpop.f32.mrf.mxu0
    %v10685 = vadd.f32 %v10572, %v10684
    %10686 = vmatmul.f32.gmra.mxu0 %v10192
    %v10687 = vpop.f32.mrf.mxu0
    %v10688 = vadd.f32 %v10575, %v10687
    %10689 = vmatmul.f32.gmra.mxu0 %v10200
    %v10690 = vpop.f32.mrf.mxu0
    %v10691 = vadd.f32 %v10578, %v10690
    %10692 = vdwg.mxu0
    %10693 = vmatpush.msra.mxu0 %v10382
    %10694 = vmatpush.msra.mxu0 %v10381
    %10695 = vmatpush.msra.mxu0 %v10380
    %10696 = vmatpush.msra.mxu0 %v10379
    %10697 = vmatpush.msra.mxu0 %v10378
    %10698 = vmatpush.msra.mxu0 %v10377
    %10699 = vmatpush.msra.mxu0 %v10376
    %10700 = vmatpush.msra.mxu0 %v10375
    %10701 = vmatpush.msra.mxu0 %v10374
    %10702 = vmatpush.msra.mxu0 %v10373
    %10703 = vmatpush.msra.mxu0 %v10372
    %10704 = vmatpush.msra.mxu0 %v10371
    %10705 = vmatpush.msra.mxu0 %v10370
    %10706 = vmatpush.msra.mxu0 %v10369
    %10707 = vmatpush.msra.mxu0 %v10368
    %10708 = vmatpush.msra.mxu0 %v10367
    %10709 = vmatmul.f32.gmra.mxu0 %v9953
    %v10710 = vpop.f32.mrf.mxu0
    %v10711 = vadd.f32 %v10598, %v10710
    %10712 = vmatmul.f32.gmra.mxu0 %v9961
    %v10713 = vpop.f32.mrf.mxu0
    %v10714 = vadd.f32 %v10601, %v10713
    %10715 = vmatmul.f32.gmra.mxu0 %v9969
    %v10716 = vpop.f32.mrf.mxu0
    %v10717 = vadd.f32 %v10604, %v10716
    %10718 = vmatmul.f32.gmra.mxu0 %v9977
    %v10719 = vpop.f32.mrf.mxu0
    %v10720 = vadd.f32 %v10607, %v10719
    %10721 = vmatmul.f32.gmra.mxu0 %v9985
    %v10722 = vpop.f32.mrf.mxu0
    %v10723 = vadd.f32 %v10610, %v10722
    %10724 = vmatmul.f32.gmra.mxu0 %v9993
    %v10725 = vpop.f32.mrf.mxu0
    %v10726 = vadd.f32 %v10613, %v10725
    %10727 = vmatmul.f32.gmra.mxu0 %v10001
    %v10728 = vpop.f32.mrf.mxu0
    %v10729 = vadd.f32 %v10616, %v10728
    %10730 = vmatmul.f32.gmra.mxu0 %v10009
    %v10731 = vpop.f32.mrf.mxu0
    %v10732 = vadd.f32 %v10619, %v10731
    %10733 = vmatmul.f32.gmra.mxu0 %v10017
    %v10734 = vpop.f32.mrf.mxu0
    %v10735 = vadd.f32 %v10622, %v10734
    %10736 = vmatmul.f32.gmra.mxu0 %v10025
    %v10737 = vpop.f32.mrf.mxu0
    %v10738 = vadd.f32 %v10625, %v10737
    %10739 = vmatmul.f32.gmra.mxu0 %v10033
    %v10740 = vpop.f32.mrf.mxu0
    %v10741 = vadd.f32 %v10628, %v10740
    %10742 = vmatmul.f32.gmra.mxu0 %v10041
    %v10743 = vpop.f32.mrf.mxu0
    %v10744 = vadd.f32 %v10631, %v10743
    %10745 = vmatmul.f32.gmra.mxu0 %v10049
    %v10746 = vpop.f32.mrf.mxu0
    %v10747 = vadd.f32 %v10634, %v10746
    %10748 = vmatmul.f32.gmra.mxu0 %v10057
    %v10749 = vpop.f32.mrf.mxu0
    %v10750 = vadd.f32 %v10637, %v10749
    %10751 = vmatmul.f32.gmra.mxu0 %v10065
    %v10752 = vpop.f32.mrf.mxu0
    %v10753 = vadd.f32 %v10640, %v10752
    %10754 = vmatmul.f32.gmra.mxu0 %v10073
    %v10755 = vpop.f32.mrf.mxu0
    %v10756 = vadd.f32 %v10643, %v10755
    %10757 = vmatmul.f32.gmra.mxu0 %v10081
    %v10758 = vpop.f32.mrf.mxu0
    %v10759 = vadd.f32 %v10646, %v10758
    %10760 = vmatmul.f32.gmra.mxu0 %v10089
    %v10761 = vpop.f32.mrf.mxu0
    %v10762 = vadd.f32 %v10649, %v10761
    %10763 = vmatmul.f32.gmra.mxu0 %v10097
    %v10764 = vpop.f32.mrf.mxu0
    %v10765 = vadd.f32 %v10652, %v10764
    %10766 = vmatmul.f32.gmra.mxu0 %v10105
    %v10767 = vpop.f32.mrf.mxu0
    %v10768 = vadd.f32 %v10655, %v10767
    %10769 = vmatmul.f32.gmra.mxu0 %v10113
    %v10770 = vpop.f32.mrf.mxu0
    %v10771 = vadd.f32 %v10658, %v10770
    %10772 = vmatmul.f32.gmra.mxu0 %v10121
    %v10773 = vpop.f32.mrf.mxu0
    %v10774 = vadd.f32 %v10661, %v10773
    %10775 = vmatmul.f32.gmra.mxu0 %v10129
    %v10776 = vpop.f32.mrf.mxu0
    %v10777 = vadd.f32 %v10664, %v10776
    %10778 = vmatmul.f32.gmra.mxu0 %v10137
    %v10779 = vpop.f32.mrf.mxu0
    %v10780 = vadd.f32 %v10667, %v10779
    %10781 = vmatmul.f32.gmra.mxu0 %v10145
    %v10782 = vpop.f32.mrf.mxu0
    %v10783 = vadd.f32 %v10670, %v10782
    %10784 = vmatmul.f32.gmra.mxu0 %v10153
    %v10785 = vpop.f32.mrf.mxu0
    %v10786 = vadd.f32 %v10673, %v10785
    %10787 = vmatmul.f32.gmra.mxu0 %v10161
    %v10788 = vpop.f32.mrf.mxu0
    %v10789 = vadd.f32 %v10676, %v10788
    %10790 = vmatmul.f32.gmra.mxu0 %v10169
    %v10791 = vpop.f32.mrf.mxu0
    %v10792 = vadd.f32 %v10679, %v10791
    %10793 = vmatmul.f32.gmra.mxu0 %v10177
    %v10794 = vpop.f32.mrf.mxu0
    %v10795 = vadd.f32 %v10682, %v10794
    %10796 = vmatmul.f32.gmra.mxu0 %v10185
    %v10797 = vpop.f32.mrf.mxu0
    %v10798 = vadd.f32 %v10685, %v10797
    %10799 = vmatmul.f32.gmra.mxu0 %v10193
    %v10800 = vpop.f32.mrf.mxu0
    %v10801 = vadd.f32 %v10688, %v10800
    %10802 = vmatmul.f32.gmra.mxu0 %v10201
    %v10803 = vpop.f32.mrf.mxu0
    %v10804 = vadd.f32 %v10691, %v10803
    %10805 = vdwg.mxu0
    %10806 = vmatpush.msra.mxu0 %v10398
    %10807 = vmatpush.msra.mxu0 %v10397
    %10808 = vmatpush.msra.mxu0 %v10396
    %10809 = vmatpush.msra.mxu0 %v10395
    %10810 = vmatpush.msra.mxu0 %v10394
    %10811 = vmatpush.msra.mxu0 %v10393
    %10812 = vmatpush.msra.mxu0 %v10392
    %10813 = vmatpush.msra.mxu0 %v10391
    %10814 = vmatpush.msra.mxu0 %v10390
    %10815 = vmatpush.msra.mxu0 %v10389
    %10816 = vmatpush.msra.mxu0 %v10388
    %10817 = vmatpush.msra.mxu0 %v10387
    %10818 = vmatpush.msra.mxu0 %v10386
    %10819 = vmatpush.msra.mxu0 %v10385
    %10820 = vmatpush.msra.mxu0 %v10384
    %10821 = vmatpush.msra.mxu0 %v10383
    %10822 = vmatmul.f32.gmra.mxu0 %v9954
    %v10823 = vpop.f32.mrf.mxu0
    %v10824 = vadd.f32 %v10711, %v10823
    %10825 = vmatmul.f32.gmra.mxu0 %v9962
    %v10826 = vpop.f32.mrf.mxu0
    %v10827 = vadd.f32 %v10714, %v10826
    %10828 = vmatmul.f32.gmra.mxu0 %v9970
    %v10829 = vpop.f32.mrf.mxu0
    %v10830 = vadd.f32 %v10717, %v10829
    %10831 = vmatmul.f32.gmra.mxu0 %v9978
    %v10832 = vpop.f32.mrf.mxu0
    %v10833 = vadd.f32 %v10720, %v10832
    %10834 = vmatmul.f32.gmra.mxu0 %v9986
    %v10835 = vpop.f32.mrf.mxu0
    %v10836 = vadd.f32 %v10723, %v10835
    %10837 = vmatmul.f32.gmra.mxu0 %v9994
    %v10838 = vpop.f32.mrf.mxu0
    %v10839 = vadd.f32 %v10726, %v10838
    %10840 = vmatmul.f32.gmra.mxu0 %v10002
    %v10841 = vpop.f32.mrf.mxu0
    %v10842 = vadd.f32 %v10729, %v10841
    %10843 = vmatmul.f32.gmra.mxu0 %v10010
    %v10844 = vpop.f32.mrf.mxu0
    %v10845 = vadd.f32 %v10732, %v10844
    %10846 = vmatmul.f32.gmra.mxu0 %v10018
    %v10847 = vpop.f32.mrf.mxu0
    %v10848 = vadd.f32 %v10735, %v10847
    %10849 = vmatmul.f32.gmra.mxu0 %v10026
    %v10850 = vpop.f32.mrf.mxu0
    %v10851 = vadd.f32 %v10738, %v10850
    %10852 = vmatmul.f32.gmra.mxu0 %v10034
    %v10853 = vpop.f32.mrf.mxu0
    %v10854 = vadd.f32 %v10741, %v10853
    %10855 = vmatmul.f32.gmra.mxu0 %v10042
    %v10856 = vpop.f32.mrf.mxu0
    %v10857 = vadd.f32 %v10744, %v10856
    %10858 = vmatmul.f32.gmra.mxu0 %v10050
    %v10859 = vpop.f32.mrf.mxu0
    %v10860 = vadd.f32 %v10747, %v10859
    %10861 = vmatmul.f32.gmra.mxu0 %v10058
    %v10862 = vpop.f32.mrf.mxu0
    %v10863 = vadd.f32 %v10750, %v10862
    %10864 = vmatmul.f32.gmra.mxu0 %v10066
    %v10865 = vpop.f32.mrf.mxu0
    %v10866 = vadd.f32 %v10753, %v10865
    %10867 = vmatmul.f32.gmra.mxu0 %v10074
    %v10868 = vpop.f32.mrf.mxu0
    %v10869 = vadd.f32 %v10756, %v10868
    %10870 = vmatmul.f32.gmra.mxu0 %v10082
    %v10871 = vpop.f32.mrf.mxu0
    %v10872 = vadd.f32 %v10759, %v10871
    %10873 = vmatmul.f32.gmra.mxu0 %v10090
    %v10874 = vpop.f32.mrf.mxu0
    %v10875 = vadd.f32 %v10762, %v10874
    %10876 = vmatmul.f32.gmra.mxu0 %v10098
    %v10877 = vpop.f32.mrf.mxu0
    %v10878 = vadd.f32 %v10765, %v10877
    %10879 = vmatmul.f32.gmra.mxu0 %v10106
    %v10880 = vpop.f32.mrf.mxu0
    %v10881 = vadd.f32 %v10768, %v10880
    %10882 = vmatmul.f32.gmra.mxu0 %v10114
    %v10883 = vpop.f32.mrf.mxu0
    %v10884 = vadd.f32 %v10771, %v10883
    %10885 = vmatmul.f32.gmra.mxu0 %v10122
    %v10886 = vpop.f32.mrf.mxu0
    %v10887 = vadd.f32 %v10774, %v10886
    %10888 = vmatmul.f32.gmra.mxu0 %v10130
    %v10889 = vpop.f32.mrf.mxu0
    %v10890 = vadd.f32 %v10777, %v10889
    %10891 = vmatmul.f32.gmra.mxu0 %v10138
    %v10892 = vpop.f32.mrf.mxu0
    %v10893 = vadd.f32 %v10780, %v10892
    %10894 = vmatmul.f32.gmra.mxu0 %v10146
    %v10895 = vpop.f32.mrf.mxu0
    %v10896 = vadd.f32 %v10783, %v10895
    %10897 = vmatmul.f32.gmra.mxu0 %v10154
    %v10898 = vpop.f32.mrf.mxu0
    %v10899 = vadd.f32 %v10786, %v10898
    %10900 = vmatmul.f32.gmra.mxu0 %v10162
    %v10901 = vpop.f32.mrf.mxu0
    %v10902 = vadd.f32 %v10789, %v10901
    %10903 = vmatmul.f32.gmra.mxu0 %v10170
    %v10904 = vpop.f32.mrf.mxu0
    %v10905 = vadd.f32 %v10792, %v10904
    %10906 = vmatmul.f32.gmra.mxu0 %v10178
    %v10907 = vpop.f32.mrf.mxu0
    %v10908 = vadd.f32 %v10795, %v10907
    %10909 = vmatmul.f32.gmra.mxu0 %v10186
    %v10910 = vpop.f32.mrf.mxu0
    %v10911 = vadd.f32 %v10798, %v10910
    %10912 = vmatmul.f32.gmra.mxu0 %v10194
    %v10913 = vpop.f32.mrf.mxu0
    %v10914 = vadd.f32 %v10801, %v10913
    %10915 = vmatmul.f32.gmra.mxu0 %v10202
    %v10916 = vpop.f32.mrf.mxu0
    %v10917 = vadd.f32 %v10804, %v10916
    %10918 = vdwg.mxu0
    %10919 = vmatpush.msra.mxu0 %v10414
    %10920 = vmatpush.msra.mxu0 %v10413
    %10921 = vmatpush.msra.mxu0 %v10412
    %10922 = vmatpush.msra.mxu0 %v10411
    %10923 = vmatpush.msra.mxu0 %v10410
    %10924 = vmatpush.msra.mxu0 %v10409
    %10925 = vmatpush.msra.mxu0 %v10408
    %10926 = vmatpush.msra.mxu0 %v10407
    %10927 = vmatpush.msra.mxu0 %v10406
    %10928 = vmatpush.msra.mxu0 %v10405
    %10929 = vmatpush.msra.mxu0 %v10404
    %10930 = vmatpush.msra.mxu0 %v10403
    %10931 = vmatpush.msra.mxu0 %v10402
    %10932 = vmatpush.msra.mxu0 %v10401
    %10933 = vmatpush.msra.mxu0 %v10400
    %10934 = vmatpush.msra.mxu0 %v10399
    %10935 = vmatmul.f32.gmra.mxu0 %v9955
    %v10936 = vpop.f32.mrf.mxu0
    %v10937 = vadd.f32 %v10824, %v10936
    %10938 = vmatmul.f32.gmra.mxu0 %v9963
    %v10939 = vpop.f32.mrf.mxu0
    %v10940 = vadd.f32 %v10827, %v10939
    %10941 = vmatmul.f32.gmra.mxu0 %v9971
    %v10942 = vpop.f32.mrf.mxu0
    %v10943 = vadd.f32 %v10830, %v10942
    %10944 = vmatmul.f32.gmra.mxu0 %v9979
    %v10945 = vpop.f32.mrf.mxu0
    %v10946 = vadd.f32 %v10833, %v10945
    %10947 = vmatmul.f32.gmra.mxu0 %v9987
    %v10948 = vpop.f32.mrf.mxu0
    %v10949 = vadd.f32 %v10836, %v10948
    %10950 = vmatmul.f32.gmra.mxu0 %v9995
    %v10951 = vpop.f32.mrf.mxu0
    %v10952 = vadd.f32 %v10839, %v10951
    %10953 = vmatmul.f32.gmra.mxu0 %v10003
    %v10954 = vpop.f32.mrf.mxu0
    %v10955 = vadd.f32 %v10842, %v10954
    %10956 = vmatmul.f32.gmra.mxu0 %v10011
    %v10957 = vpop.f32.mrf.mxu0
    %v10958 = vadd.f32 %v10845, %v10957
    %10959 = vmatmul.f32.gmra.mxu0 %v10019
    %v10960 = vpop.f32.mrf.mxu0
    %v10961 = vadd.f32 %v10848, %v10960
    %10962 = vmatmul.f32.gmra.mxu0 %v10027
    %v10963 = vpop.f32.mrf.mxu0
    %v10964 = vadd.f32 %v10851, %v10963
    %10965 = vmatmul.f32.gmra.mxu0 %v10035
    %v10966 = vpop.f32.mrf.mxu0
    %v10967 = vadd.f32 %v10854, %v10966
    %10968 = vmatmul.f32.gmra.mxu0 %v10043
    %v10969 = vpop.f32.mrf.mxu0
    %v10970 = vadd.f32 %v10857, %v10969
    %10971 = vmatmul.f32.gmra.mxu0 %v10051
    %v10972 = vpop.f32.mrf.mxu0
    %v10973 = vadd.f32 %v10860, %v10972
    %10974 = vmatmul.f32.gmra.mxu0 %v10059
    %v10975 = vpop.f32.mrf.mxu0
    %v10976 = vadd.f32 %v10863, %v10975
    %10977 = vmatmul.f32.gmra.mxu0 %v10067
    %v10978 = vpop.f32.mrf.mxu0
    %v10979 = vadd.f32 %v10866, %v10978
    %10980 = vmatmul.f32.gmra.mxu0 %v10075
    %v10981 = vpop.f32.mrf.mxu0
    %v10982 = vadd.f32 %v10869, %v10981
    %10983 = vmatmul.f32.gmra.mxu0 %v10083
    %v10984 = vpop.f32.mrf.mxu0
    %v10985 = vadd.f32 %v10872, %v10984
    %10986 = vmatmul.f32.gmra.mxu0 %v10091
    %v10987 = vpop.f32.mrf.mxu0
    %v10988 = vadd.f32 %v10875, %v10987
    %10989 = vmatmul.f32.gmra.mxu0 %v10099
    %v10990 = vpop.f32.mrf.mxu0
    %v10991 = vadd.f32 %v10878, %v10990
    %10992 = vmatmul.f32.gmra.mxu0 %v10107
    %v10993 = vpop.f32.mrf.mxu0
    %v10994 = vadd.f32 %v10881, %v10993
    %10995 = vmatmul.f32.gmra.mxu0 %v10115
    %v10996 = vpop.f32.mrf.mxu0
    %v10997 = vadd.f32 %v10884, %v10996
    %10998 = vmatmul.f32.gmra.mxu0 %v10123
    %v10999 = vpop.f32.mrf.mxu0
    %v11000 = vadd.f32 %v10887, %v10999
    %11001 = vmatmul.f32.gmra.mxu0 %v10131
    %v11002 = vpop.f32.mrf.mxu0
    %v11003 = vadd.f32 %v10890, %v11002
    %11004 = vmatmul.f32.gmra.mxu0 %v10139
    %v11005 = vpop.f32.mrf.mxu0
    %v11006 = vadd.f32 %v10893, %v11005
    %11007 = vmatmul.f32.gmra.mxu0 %v10147
    %v11008 = vpop.f32.mrf.mxu0
    %v11009 = vadd.f32 %v10896, %v11008
    %11010 = vmatmul.f32.gmra.mxu0 %v10155
    %v11011 = vpop.f32.mrf.mxu0
    %v11012 = vadd.f32 %v10899, %v11011
    %11013 = vmatmul.f32.gmra.mxu0 %v10163
    %v11014 = vpop.f32.mrf.mxu0
    %v11015 = vadd.f32 %v10902, %v11014
    %11016 = vmatmul.f32.gmra.mxu0 %v10171
    %v11017 = vpop.f32.mrf.mxu0
    %v11018 = vadd.f32 %v10905, %v11017
    %11019 = vmatmul.f32.gmra.mxu0 %v10179
    %v11020 = vpop.f32.mrf.mxu0
    %v11021 = vadd.f32 %v10908, %v11020
    %11022 = vmatmul.f32.gmra.mxu0 %v10187
    %v11023 = vpop.f32.mrf.mxu0
    %v11024 = vadd.f32 %v10911, %v11023
    %11025 = vmatmul.f32.gmra.mxu0 %v10195
    %v11026 = vpop.f32.mrf.mxu0
    %v11027 = vadd.f32 %v10914, %v11026
    %11028 = vmatmul.f32.gmra.mxu0 %v10203
    %v11029 = vpop.f32.mrf.mxu0
    %v11030 = vadd.f32 %v10917, %v11029
    %11031 = vdwg.mxu0
    %11032 = vmatpush.msra.mxu0 %v10430
    %11033 = vmatpush.msra.mxu0 %v10429
    %11034 = vmatpush.msra.mxu0 %v10428
    %11035 = vmatpush.msra.mxu0 %v10427
    %11036 = vmatpush.msra.mxu0 %v10426
    %11037 = vmatpush.msra.mxu0 %v10425
    %11038 = vmatpush.msra.mxu0 %v10424
    %11039 = vmatpush.msra.mxu0 %v10423
    %11040 = vmatpush.msra.mxu0 %v10422
    %11041 = vmatpush.msra.mxu0 %v10421
    %11042 = vmatpush.msra.mxu0 %v10420
    %11043 = vmatpush.msra.mxu0 %v10419
    %11044 = vmatpush.msra.mxu0 %v10418
    %11045 = vmatpush.msra.mxu0 %v10417
    %11046 = vmatpush.msra.mxu0 %v10416
    %11047 = vmatpush.msra.mxu0 %v10415
    %11048 = vmatmul.f32.gmra.mxu0 %v9956
    %v11049 = vpop.f32.mrf.mxu0
    %v11050 = vadd.f32 %v10937, %v11049
    %11051 = vmatmul.f32.gmra.mxu0 %v9964
    %v11052 = vpop.f32.mrf.mxu0
    %v11053 = vadd.f32 %v10940, %v11052
    %11054 = vmatmul.f32.gmra.mxu0 %v9972
    %v11055 = vpop.f32.mrf.mxu0
    %v11056 = vadd.f32 %v10943, %v11055
    %11057 = vmatmul.f32.gmra.mxu0 %v9980
    %v11058 = vpop.f32.mrf.mxu0
    %v11059 = vadd.f32 %v10946, %v11058
    %11060 = vmatmul.f32.gmra.mxu0 %v9988
    %v11061 = vpop.f32.mrf.mxu0
    %v11062 = vadd.f32 %v10949, %v11061
    %11063 = vmatmul.f32.gmra.mxu0 %v9996
    %v11064 = vpop.f32.mrf.mxu0
    %v11065 = vadd.f32 %v10952, %v11064
    %11066 = vmatmul.f32.gmra.mxu0 %v10004
    %v11067 = vpop.f32.mrf.mxu0
    %v11068 = vadd.f32 %v10955, %v11067
    %11069 = vmatmul.f32.gmra.mxu0 %v10012
    %v11070 = vpop.f32.mrf.mxu0
    %v11071 = vadd.f32 %v10958, %v11070
    %11072 = vmatmul.f32.gmra.mxu0 %v10020
    %v11073 = vpop.f32.mrf.mxu0
    %v11074 = vadd.f32 %v10961, %v11073
    %11075 = vmatmul.f32.gmra.mxu0 %v10028
    %v11076 = vpop.f32.mrf.mxu0
    %v11077 = vadd.f32 %v10964, %v11076
    %11078 = vmatmul.f32.gmra.mxu0 %v10036
    %v11079 = vpop.f32.mrf.mxu0
    %v11080 = vadd.f32 %v10967, %v11079
    %11081 = vmatmul.f32.gmra.mxu0 %v10044
    %v11082 = vpop.f32.mrf.mxu0
    %v11083 = vadd.f32 %v10970, %v11082
    %11084 = vmatmul.f32.gmra.mxu0 %v10052
    %v11085 = vpop.f32.mrf.mxu0
    %v11086 = vadd.f32 %v10973, %v11085
    %11087 = vmatmul.f32.gmra.mxu0 %v10060
    %v11088 = vpop.f32.mrf.mxu0
    %v11089 = vadd.f32 %v10976, %v11088
    %11090 = vmatmul.f32.gmra.mxu0 %v10068
    %v11091 = vpop.f32.mrf.mxu0
    %v11092 = vadd.f32 %v10979, %v11091
    %11093 = vmatmul.f32.gmra.mxu0 %v10076
    %v11094 = vpop.f32.mrf.mxu0
    %v11095 = vadd.f32 %v10982, %v11094
    %11096 = vmatmul.f32.gmra.mxu0 %v10084
    %v11097 = vpop.f32.mrf.mxu0
    %v11098 = vadd.f32 %v10985, %v11097
    %11099 = vmatmul.f32.gmra.mxu0 %v10092
    %v11100 = vpop.f32.mrf.mxu0
    %v11101 = vadd.f32 %v10988, %v11100
    %11102 = vmatmul.f32.gmra.mxu0 %v10100
    %v11103 = vpop.f32.mrf.mxu0
    %v11104 = vadd.f32 %v10991, %v11103
    %11105 = vmatmul.f32.gmra.mxu0 %v10108
    %v11106 = vpop.f32.mrf.mxu0
    %v11107 = vadd.f32 %v10994, %v11106
    %11108 = vmatmul.f32.gmra.mxu0 %v10116
    %v11109 = vpop.f32.mrf.mxu0
    %v11110 = vadd.f32 %v10997, %v11109
    %11111 = vmatmul.f32.gmra.mxu0 %v10124
    %v11112 = vpop.f32.mrf.mxu0
    %v11113 = vadd.f32 %v11000, %v11112
    %11114 = vmatmul.f32.gmra.mxu0 %v10132
    %v11115 = vpop.f32.mrf.mxu0
    %v11116 = vadd.f32 %v11003, %v11115
    %11117 = vmatmul.f32.gmra.mxu0 %v10140
    %v11118 = vpop.f32.mrf.mxu0
    %v11119 = vadd.f32 %v11006, %v11118
    %11120 = vmatmul.f32.gmra.mxu0 %v10148
    %v11121 = vpop.f32.mrf.mxu0
    %v11122 = vadd.f32 %v11009, %v11121
    %11123 = vmatmul.f32.gmra.mxu0 %v10156
    %v11124 = vpop.f32.mrf.mxu0
    %v11125 = vadd.f32 %v11012, %v11124
    %11126 = vmatmul.f32.gmra.mxu0 %v10164
    %v11127 = vpop.f32.mrf.mxu0
    %v11128 = vadd.f32 %v11015, %v11127
    %11129 = vmatmul.f32.gmra.mxu0 %v10172
    %v11130 = vpop.f32.mrf.mxu0
    %v11131 = vadd.f32 %v11018, %v11130
    %11132 = vmatmul.f32.gmra.mxu0 %v10180
    %v11133 = vpop.f32.mrf.mxu0
    %v11134 = vadd.f32 %v11021, %v11133
    %11135 = vmatmul.f32.gmra.mxu0 %v10188
    %v11136 = vpop.f32.mrf.mxu0
    %v11137 = vadd.f32 %v11024, %v11136
    %11138 = vmatmul.f32.gmra.mxu0 %v10196
    %v11139 = vpop.f32.mrf.mxu0
    %v11140 = vadd.f32 %v11027, %v11139
    %11141 = vmatmul.f32.gmra.mxu0 %v10204
    %v11142 = vpop.f32.mrf.mxu0
    %v11143 = vadd.f32 %v11030, %v11142
    %11144 = vdwg.mxu0
    %11145 = vmatpush.msra.mxu0 %v10446
    %11146 = vmatpush.msra.mxu0 %v10445
    %11147 = vmatpush.msra.mxu0 %v10444
    %11148 = vmatpush.msra.mxu0 %v10443
    %11149 = vmatpush.msra.mxu0 %v10442
    %11150 = vmatpush.msra.mxu0 %v10441
    %11151 = vmatpush.msra.mxu0 %v10440
    %11152 = vmatpush.msra.mxu0 %v10439
    %11153 = vmatpush.msra.mxu0 %v10438
    %11154 = vmatpush.msra.mxu0 %v10437
    %11155 = vmatpush.msra.mxu0 %v10436
    %11156 = vmatpush.msra.mxu0 %v10435
    %11157 = vmatpush.msra.mxu0 %v10434
    %11158 = vmatpush.msra.mxu0 %v10433
    %11159 = vmatpush.msra.mxu0 %v10432
    %11160 = vmatpush.msra.mxu0 %v10431
    %11161 = vmatmul.f32.gmra.mxu0 %v9957
    %v11162 = vpop.f32.mrf.mxu0
    %v11163 = vadd.f32 %v11050, %v11162
    %11164 = vmatmul.f32.gmra.mxu0 %v9965
    %v11165 = vpop.f32.mrf.mxu0
    %v11166 = vadd.f32 %v11053, %v11165
    %11167 = vmatmul.f32.gmra.mxu0 %v9973
    %v11168 = vpop.f32.mrf.mxu0
    %v11169 = vadd.f32 %v11056, %v11168
    %11170 = vmatmul.f32.gmra.mxu0 %v9981
    %v11171 = vpop.f32.mrf.mxu0
    %v11172 = vadd.f32 %v11059, %v11171
    %11173 = vmatmul.f32.gmra.mxu0 %v9989
    %v11174 = vpop.f32.mrf.mxu0
    %v11175 = vadd.f32 %v11062, %v11174
    %11176 = vmatmul.f32.gmra.mxu0 %v9997
    %v11177 = vpop.f32.mrf.mxu0
    %v11178 = vadd.f32 %v11065, %v11177
    %11179 = vmatmul.f32.gmra.mxu0 %v10005
    %v11180 = vpop.f32.mrf.mxu0
    %v11181 = vadd.f32 %v11068, %v11180
    %11182 = vmatmul.f32.gmra.mxu0 %v10013
    %v11183 = vpop.f32.mrf.mxu0
    %v11184 = vadd.f32 %v11071, %v11183
    %11185 = vmatmul.f32.gmra.mxu0 %v10021
    %v11186 = vpop.f32.mrf.mxu0
    %v11187 = vadd.f32 %v11074, %v11186
    %11188 = vmatmul.f32.gmra.mxu0 %v10029
    %v11189 = vpop.f32.mrf.mxu0
    %v11190 = vadd.f32 %v11077, %v11189
    %11191 = vmatmul.f32.gmra.mxu0 %v10037
    %v11192 = vpop.f32.mrf.mxu0
    %v11193 = vadd.f32 %v11080, %v11192
    %11194 = vmatmul.f32.gmra.mxu0 %v10045
    %v11195 = vpop.f32.mrf.mxu0
    %v11196 = vadd.f32 %v11083, %v11195
    %11197 = vmatmul.f32.gmra.mxu0 %v10053
    %v11198 = vpop.f32.mrf.mxu0
    %v11199 = vadd.f32 %v11086, %v11198
    %11200 = vmatmul.f32.gmra.mxu0 %v10061
    %v11201 = vpop.f32.mrf.mxu0
    %v11202 = vadd.f32 %v11089, %v11201
    %11203 = vmatmul.f32.gmra.mxu0 %v10069
    %v11204 = vpop.f32.mrf.mxu0
    %v11205 = vadd.f32 %v11092, %v11204
    %11206 = vmatmul.f32.gmra.mxu0 %v10077
    %v11207 = vpop.f32.mrf.mxu0
    %v11208 = vadd.f32 %v11095, %v11207
    %11209 = vmatmul.f32.gmra.mxu0 %v10085
    %v11210 = vpop.f32.mrf.mxu0
    %v11211 = vadd.f32 %v11098, %v11210
    %11212 = vmatmul.f32.gmra.mxu0 %v10093
    %v11213 = vpop.f32.mrf.mxu0
    %v11214 = vadd.f32 %v11101, %v11213
    %11215 = vmatmul.f32.gmra.mxu0 %v10101
    %v11216 = vpop.f32.mrf.mxu0
    %v11217 = vadd.f32 %v11104, %v11216
    %11218 = vmatmul.f32.gmra.mxu0 %v10109
    %v11219 = vpop.f32.mrf.mxu0
    %v11220 = vadd.f32 %v11107, %v11219
    %11221 = vmatmul.f32.gmra.mxu0 %v10117
    %v11222 = vpop.f32.mrf.mxu0
    %v11223 = vadd.f32 %v11110, %v11222
    %11224 = vmatmul.f32.gmra.mxu0 %v10125
    %v11225 = vpop.f32.mrf.mxu0
    %v11226 = vadd.f32 %v11113, %v11225
    %11227 = vmatmul.f32.gmra.mxu0 %v10133
    %v11228 = vpop.f32.mrf.mxu0
    %v11229 = vadd.f32 %v11116, %v11228
    %11230 = vmatmul.f32.gmra.mxu0 %v10141
    %v11231 = vpop.f32.mrf.mxu0
    %v11232 = vadd.f32 %v11119, %v11231
    %11233 = vmatmul.f32.gmra.mxu0 %v10149
    %v11234 = vpop.f32.mrf.mxu0
    %v11235 = vadd.f32 %v11122, %v11234
    %11236 = vmatmul.f32.gmra.mxu0 %v10157
    %v11237 = vpop.f32.mrf.mxu0
    %v11238 = vadd.f32 %v11125, %v11237
    %11239 = vmatmul.f32.gmra.mxu0 %v10165
    %v11240 = vpop.f32.mrf.mxu0
    %v11241 = vadd.f32 %v11128, %v11240
    %11242 = vmatmul.f32.gmra.mxu0 %v10173
    %v11243 = vpop.f32.mrf.mxu0
    %v11244 = vadd.f32 %v11131, %v11243
    %11245 = vmatmul.f32.gmra.mxu0 %v10181
    %v11246 = vpop.f32.mrf.mxu0
    %v11247 = vadd.f32 %v11134, %v11246
    %11248 = vmatmul.f32.gmra.mxu0 %v10189
    %v11249 = vpop.f32.mrf.mxu0
    %v11250 = vadd.f32 %v11137, %v11249
    %11251 = vmatmul.f32.gmra.mxu0 %v10197
    %v11252 = vpop.f32.mrf.mxu0
    %v11253 = vadd.f32 %v11140, %v11252
    %11254 = vmatmul.f32.gmra.mxu0 %v10205
    %v11255 = vpop.f32.mrf.mxu0
    %v11256 = vadd.f32 %v11143, %v11255
    %11257 = vdwg.mxu0
    %11258 = vmatpush.msra.mxu0 %v10462
    %11259 = vmatpush.msra.mxu0 %v10461
    %11260 = vmatpush.msra.mxu0 %v10460
    %11261 = vmatpush.msra.mxu0 %v10459
    %11262 = vmatpush.msra.mxu0 %v10458
    %11263 = vmatpush.msra.mxu0 %v10457
    %11264 = vmatpush.msra.mxu0 %v10456
    %11265 = vmatpush.msra.mxu0 %v10455
    %11266 = vmatpush.msra.mxu0 %v10454
    %11267 = vmatpush.msra.mxu0 %v10453
    %11268 = vmatpush.msra.mxu0 %v10452
    %11269 = vmatpush.msra.mxu0 %v10451
    %11270 = vmatpush.msra.mxu0 %v10450
    %11271 = vmatpush.msra.mxu0 %v10449
    %11272 = vmatpush.msra.mxu0 %v10448
    %11273 = vmatpush.msra.mxu0 %v10447
    %11274 = vmatmul.f32.gmra.mxu0 %v9958
    %v11275 = vpop.f32.mrf.mxu0
    %v11276 = vadd.f32 %v11163, %v11275
    %11277 = vmatmul.f32.gmra.mxu0 %v9966
    %v11278 = vpop.f32.mrf.mxu0
    %v11279 = vadd.f32 %v11166, %v11278
    %11280 = vmatmul.f32.gmra.mxu0 %v9974
    %v11281 = vpop.f32.mrf.mxu0
    %v11282 = vadd.f32 %v11169, %v11281
    %11283 = vmatmul.f32.gmra.mxu0 %v9982
    %v11284 = vpop.f32.mrf.mxu0
    %v11285 = vadd.f32 %v11172, %v11284
    %11286 = vmatmul.f32.gmra.mxu0 %v9990
    %v11287 = vpop.f32.mrf.mxu0
    %v11288 = vadd.f32 %v11175, %v11287
    %11289 = vmatmul.f32.gmra.mxu0 %v9998
    %v11290 = vpop.f32.mrf.mxu0
    %v11291 = vadd.f32 %v11178, %v11290
    %11292 = vmatmul.f32.gmra.mxu0 %v10006
    %v11293 = vpop.f32.mrf.mxu0
    %v11294 = vadd.f32 %v11181, %v11293
    %11295 = vmatmul.f32.gmra.mxu0 %v10014
    %v11296 = vpop.f32.mrf.mxu0
    %v11297 = vadd.f32 %v11184, %v11296
    %11298 = vmatmul.f32.gmra.mxu0 %v10022
    %v11299 = vpop.f32.mrf.mxu0
    %v11300 = vadd.f32 %v11187, %v11299
    %11301 = vmatmul.f32.gmra.mxu0 %v10030
    %v11302 = vpop.f32.mrf.mxu0
    %v11303 = vadd.f32 %v11190, %v11302
    %11304 = vmatmul.f32.gmra.mxu0 %v10038
    %v11305 = vpop.f32.mrf.mxu0
    %v11306 = vadd.f32 %v11193, %v11305
    %11307 = vmatmul.f32.gmra.mxu0 %v10046
    %v11308 = vpop.f32.mrf.mxu0
    %v11309 = vadd.f32 %v11196, %v11308
    %11310 = vmatmul.f32.gmra.mxu0 %v10054
    %v11311 = vpop.f32.mrf.mxu0
    %v11312 = vadd.f32 %v11199, %v11311
    %11313 = vmatmul.f32.gmra.mxu0 %v10062
    %v11314 = vpop.f32.mrf.mxu0
    %v11315 = vadd.f32 %v11202, %v11314
    %11316 = vmatmul.f32.gmra.mxu0 %v10070
    %v11317 = vpop.f32.mrf.mxu0
    %v11318 = vadd.f32 %v11205, %v11317
    %11319 = vmatmul.f32.gmra.mxu0 %v10078
    %v11320 = vpop.f32.mrf.mxu0
    %v11321 = vadd.f32 %v11208, %v11320
    %11322 = vmatmul.f32.gmra.mxu0 %v10086
    %v11323 = vpop.f32.mrf.mxu0
    %v11324 = vadd.f32 %v11211, %v11323
    %11325 = vmatmul.f32.gmra.mxu0 %v10094
    %v11326 = vpop.f32.mrf.mxu0
    %v11327 = vadd.f32 %v11214, %v11326
    %11328 = vmatmul.f32.gmra.mxu0 %v10102
    %v11329 = vpop.f32.mrf.mxu0
    %v11330 = vadd.f32 %v11217, %v11329
    %11331 = vmatmul.f32.gmra.mxu0 %v10110
    %v11332 = vpop.f32.mrf.mxu0
    %v11333 = vadd.f32 %v11220, %v11332
    %11334 = vmatmul.f32.gmra.mxu0 %v10118
    %v11335 = vpop.f32.mrf.mxu0
    %v11336 = vadd.f32 %v11223, %v11335
    %11337 = vmatmul.f32.gmra.mxu0 %v10126
    %v11338 = vpop.f32.mrf.mxu0
    %v11339 = vadd.f32 %v11226, %v11338
    %11340 = vmatmul.f32.gmra.mxu0 %v10134
    %v11341 = vpop.f32.mrf.mxu0
    %v11342 = vadd.f32 %v11229, %v11341
    %11343 = vmatmul.f32.gmra.mxu0 %v10142
    %v11344 = vpop.f32.mrf.mxu0
    %v11345 = vadd.f32 %v11232, %v11344
    %11346 = vmatmul.f32.gmra.mxu0 %v10150
    %v11347 = vpop.f32.mrf.mxu0
    %v11348 = vadd.f32 %v11235, %v11347
    %11349 = vmatmul.f32.gmra.mxu0 %v10158
    %v11350 = vpop.f32.mrf.mxu0
    %v11351 = vadd.f32 %v11238, %v11350
    %11352 = vmatmul.f32.gmra.mxu0 %v10166
    %v11353 = vpop.f32.mrf.mxu0
    %v11354 = vadd.f32 %v11241, %v11353
    %11355 = vmatmul.f32.gmra.mxu0 %v10174
    %v11356 = vpop.f32.mrf.mxu0
    %v11357 = vadd.f32 %v11244, %v11356
    %11358 = vmatmul.f32.gmra.mxu0 %v10182
    %v11359 = vpop.f32.mrf.mxu0
    %v11360 = vadd.f32 %v11247, %v11359
    %11361 = vmatmul.f32.gmra.mxu0 %v10190
    %v11362 = vpop.f32.mrf.mxu0
    %v11363 = vadd.f32 %v11250, %v11362
    %11364 = vmatmul.f32.gmra.mxu0 %v10198
    %v11365 = vpop.f32.mrf.mxu0
    %v11366 = vadd.f32 %v11253, %v11365
    %11367 = vmatmul.f32.gmra.mxu0 %v10206
    %v11368 = vpop.f32.mrf.mxu0
    %v11369 = vadd.f32 %v11256, %v11368
    %11370 = vdwg.mxu0
    %v11371 = vtanh.pop %v11276
    %v11372 = vtanh.pop %v11279
    %v11373 = vtanh.pop %v11282
    %v11374 = vtanh.pop %v11285
    %v11375 = vtanh.pop %v11288
    %v11376 = vtanh.pop %v11291
    %v11377 = vtanh.pop %v11294
    %v11378 = vtanh.pop %v11297
    %v11379 = vtanh.pop %v11300
    %v11380 = vtanh.pop %v11303
    %v11381 = vtanh.pop %v11306
    %v11382 = vtanh.pop %v11309
    %v11383 = vtanh.pop %v11312
    %v11384 = vtanh.pop %v11315
    %v11385 = vtanh.pop %v11318
    %v11386 = vtanh.pop %v11321
    %v11387 = vtanh.pop %v11324
    %v11388 = vtanh.pop %v11327
    %v11389 = vtanh.pop %v11330
    %v11390 = vtanh.pop %v11333
    %v11391 = vtanh.pop %v11336
    %v11392 = vtanh.pop %v11339
    %v11393 = vtanh.pop %v11342
    %v11394 = vtanh.pop %v11345
    %v11395 = vtanh.pop %v11348
    %v11396 = vtanh.pop %v11351
    %v11397 = vtanh.pop %v11354
    %v11398 = vtanh.pop %v11357
    %v11399 = vtanh.pop %v11360
    %v11400 = vtanh.pop %v11363
    %v11401 = vtanh.pop %v11366
    %v11402 = vtanh.pop %v11369
    %11403 = vst [vmem:[%s16] sm:$0xff] %v11371
    %11404 = vst [vmem:[%s16 + $0x8] sm:$0xff] %v11372
    %11405 = vst [vmem:[%s16 + $0x10] sm:$0xff] %v11373
    %11406 = vst [vmem:[%s16 + $0x18] sm:$0xff] %v11374
    %11407 = vst [vmem:[%s16 + $0x20] sm:$0xff] %v11375
    %11408 = vst [vmem:[%s16 + $0x28] sm:$0xff] %v11376
    %11409 = vst [vmem:[%s16 + $0x30] sm:$0xff] %v11377
    %11410 = vst [vmem:[%s16 + $0x38] sm:$0xff] %v11378
    %11411 = vst [vmem:[%s16 + $0x40] sm:$0xff] %v11379
    %11412 = vst [vmem:[%s16 + $0x48] sm:$0xff] %v11380
    %11413 = vst [vmem:[%s16 + $0x50] sm:$0xff] %v11381
    %11414 = vst [vmem:[%s16 + $0x58] sm:$0xff] %v11382
    %11415 = vst [vmem:[%s16 + $0x60] sm:$0xff] %v11383
    %11416 = vst [vmem:[%s16 + $0x68] sm:$0xff] %v11384
    %11417 = vst [vmem:[%s16 + $0x70] sm:$0xff] %v11385
    %11418 = vst [vmem:[%s16 + $0x78] sm:$0xff] %v11386
    %11419 = vst [vmem:[%s16 + $0x80] sm:$0xff] %v11387
    %11420 = vst [vmem:[%s16 + $0x88] sm:$0xff] %v11388
    %11421 = vst [vmem:[%s16 + $0x90] sm:$0xff] %v11389
    %11422 = vst [vmem:[%s16 + $0x98] sm:$0xff] %v11390
    %11423 = vst [vmem:[%s16 + $0xa0] sm:$0xff] %v11391
    %11424 = vst [vmem:[%s16 + $0xa8] sm:$0xff] %v11392
    %11425 = vst [vmem:[%s16 + $0xb0] sm:$0xff] %v11393
    %11426 = vst [vmem:[%s16 + $0xb8] sm:$0xff] %v11394
    %11427 = vst [vmem:[%s16 + $0xc0] sm:$0xff] %v11395
    %11428 = vst [vmem:[%s16 + $0xc8] sm:$0xff] %v11396
    %11429 = vst [vmem:[%s16 + $0xd0] sm:$0xff] %v11397
    %11430 = vst [vmem:[%s16 + $0xd8] sm:$0xff] %v11398
    %11431 = vst [vmem:[%s16 + $0xe0] sm:$0xff] %v11399
    %11432 = vst [vmem:[%s16 + $0xe8] sm:$0xff] %v11400
    %11433 = vst [vmem:[%s16 + $0xf0] sm:$0xff] %v11401
    %11434 = vst [vmem:[%s16 + $0xf8] sm:$0xff] %v11402
    // Predicated region
    $region98: #{generator_forward.1} parent=1 // pred_check
      _
    $region99: #{generator_forward.1} parent=1 // pred_check_branch
      %11436 = sbr.rel (0) target = $region101
    $region100: #{generator_forward.1} parent=1 // pred_region
      _
    $region101: #{generator_forward.1} parent=1 // pred_fallthru
      _
    // Predicated region
    $region102: #{generator_forward.1} parent=1 // pred_check
      _
    $region103: #{generator_forward.1} parent=1 // pred_check_branch
      %11438 = sbr.rel (0) target = $region105
    $region104: #{generator_forward.1} parent=1 // pred_region
      _
    $region105: #{generator_forward.1} parent=1 // pred_fallthru
      _
    %11439 = vsyncpa [#allocation3], 1
    %11440 = vsyncpa [#allocation5], 1
    %11441 = vsyncpa [#allocation8], 1
    %11442 = vsyncpa [#allocation11], 1
    %11443 = vsyncpa [#allocation14], 1

</llo_original>
